<compile_context>
chip_gen: v7x
topology: tpu7x:2x2x1
jax: 0.10.0
libtpu: 0.0.40
codegen_flags: <defaults>
</compile_context>

<pallas_src>
import functools

import jax
import jax.numpy as jnp
from jax import lax
from jax.experimental import pallas as pl
from jax.experimental.pallas import tpu as pltpu

_VMEM_LIMIT_BYTES = 32 * 1024 * 1024   # safe on v5e/v6e (128 MiB) and v7x (64 MiB)
_DEFAULT_BAND_BYTES = 1 << 20          # per-band VMEM budget for row tiling


def _compiler_params():
    return pltpu.CompilerParams(
        dimension_semantics=("parallel",),
        vmem_limit_bytes=_VMEM_LIMIT_BYTES,
    )


# ----------------------------- Pallas kernels -------------------------------

def _haar_kernel(x_ref, t_ref, o_ref):
    # Standalone Haar channel-mix matmul (only used when block_num == 0).
    o_ref[...] = jnp.dot(x_ref[...].astype(jnp.float32), t_ref[...],
                         preferred_element_type=jnp.float32).astype(o_ref.dtype)


def _invblock_kernel(*refs, split1, clamp, halo, img_h, nt, with_mix):
    """Fully fused InvBlockExp.forward(rev=False) on one NHWC row band.

    refs (with_mix=True):  x, mix, wf, bf, whg, bhg | out | xp_scratch, y1p_scratch
    refs (with_mix=False): x,      wf, bf, whg, bhg | out | xp_scratch, y1p_scratch

      x:    (1, TH + 2*halo, W, C)   row band (halo rows present iff halo==2)
      mix:  (C, C)                   Haar channel-mixing matrix (block 0 only)
      wf:   (9, split2, split1)      F conv weights, tap k = kh*3 + kw
      bf:   (1, split1)
      whg:  (9, split1, 2*split2)    [H | G] conv weights concatenated on Cout
      bhg:  (1, 2*split2)
      out:  (1, TH, W, C)            channels [:split1]=y1, [split1:]=y2
      xp:   (TH+4, W+2, C)    f32    zero-bordered padded band scratch
      y1p:  (TH+2, W+2, split1) f32  zero-bordered padded y1 scratch
    """
    if with_mix:
        (x_ref, mix_ref, wf_ref, bf_ref, whg_ref, bhg_ref,
         o_ref, xp_ref, y1p_ref) = refs
    else:
        (x_ref, wf_ref, bf_ref, whg_ref, bhg_ref,
         o_ref, xp_ref, y1p_ref) = refs
        mix_ref = None

    TH, W, C = o_ref.shape[1], o_ref.shape[2], o_ref.shape[3]
    split2 = C - split1
    th_in = x_ref.shape[1]        # TH + 2*halo
    rows1 = TH + 2                # y1 rows incl. a 1-row halo on each side
    ph = 2 - halo                 # zero rows added top/bottom inside VMEM

    # Zero the scratch borders once; the interiors are fully re-written below
    # on every grid step, the borders stay zero for the whole pallas_call.
    @pl.when(pl.program_id(0) == 0)
    def _init():
        xp_ref[...] = jnp.zeros(xp_ref.shape, xp_ref.dtype)
        y1p_ref[...] = jnp.zeros(y1p_ref.shape, y1p_ref.dtype)

    x = x_ref[0].astype(jnp.float32)                        # (th_in, W, C)
    if with_mix:                                            # fused Haar mixing
        x = jnp.dot(x.reshape(th_in * W, C), mix_ref[...],
                    preferred_element_type=jnp.float32).reshape(th_in, W, C)
    xp_ref[ph:ph + th_in, 1:1 + W, :] = x                   # padded band

    band = pl.program_id(0) % nt if nt > 1 else 0
    r0 = band * TH                                          # first output image row

    # ---- y1 (with 1-row halo) = x1 + F(x2): 9 shifted dot-accumulations ----
    accf = jnp.zeros((rows1 * W, split1), jnp.float32) + bf_ref[...]
    for k in range(9):
        kh, kw = divmod(k, 3)
        patch = xp_ref[kh:kh + rows1, kw:kw + W, split1:]
        accf = accf + jnp.dot(patch.reshape(rows1 * W, split2), wf_ref[k],
                              preferred_element_type=jnp.float32)
    x1e = xp_ref[1:1 + rows1, 1:1 + W, :split1].reshape(rows1 * W, split1)
    y1e = (x1e + accf).reshape(rows1, W, split1)

    # Halo rows outside the image must be exact zeros (the H/G conv sees the
    # "same" zero padding of the full image, not F(0) = bias).
    row_img = r0 - 1 + lax.broadcasted_iota(jnp.int32, (rows1, W, split1), 0)
    y1e = jnp.where((row_img >= 0) & (row_img < img_h), y1e, 0.0)
    y1p_ref[:, 1:1 + W, :] = y1e                            # padded y1 band

    # ---- fused H & G conv (concatenated Cout) + invertible coupling --------
    acc = jnp.zeros((TH * W, 2 * split2), jnp.float32) + bhg_ref[...]
    for k in range(9):
        kh, kw = divmod(k, 3)
        patch = y1p_ref[kh:kh + TH, kw:kw + W, :]
        acc = acc + jnp.dot(patch.reshape(TH * W, split1), whg_ref[k],
                            preferred_element_type=jnp.float32)
    s = clamp * (jax.nn.sigmoid(acc[:, :split2]) * 2.0 - 1.0)   # EUP work
    g = acc[:, split2:]
    x2 = xp_ref[2:2 + TH, 1:1 + W, split1:].reshape(TH * W, split2)
    y2 = x2 * jnp.exp(s) + g
    y1 = y1e[1:1 + TH].reshape(TH * W, split1)
    out = jnp.concatenate([y1, y2], axis=-1).reshape(TH, W, C)
    o_ref[0] = out.astype(o_ref.dtype)


# ------------------------------ tile choosers --------------------------------

def _pick_rows(m):
    """Largest nice row-tile that divides m (standalone Haar kernel only)."""
    for t in (2048, 1024, 512, 256, 128, 64, 32, 16, 8):
        if m % t == 0:
            return t
    return m


def _pick_band_rows(h, w, c, budget_bytes):
    """Largest divisor of h whose padded f32 band fits the VMEM budget."""
    best = 1
    for th in range(1, h + 1):
        if h % th == 0 and (th + 4) * (w + 2) * c * 4 <= budget_bytes:
            best = th
    return best


# ------------------------------- wrappers ------------------------------------

def _haar_mix_matrix(c):
    # out[k*C + ch] = sum_p coeff[k, p] * in[p*C + ch] / 4   (p = dh*2 + dw)
    coeff = jnp.array([[1.0, 1.0, 1.0, 1.0],
                       [1.0, -1.0, 1.0, -1.0],
                       [1.0, 1.0, -1.0, -1.0],
                       [1.0, -1.0, -1.0, 1.0]], jnp.float32)
    return 0.25 * jnp.kron(coeff.T, jnp.eye(c, dtype=jnp.float32))


def _haar_apply(xq, mix):
    """Standalone Haar mix kernel (only used when there are no InvBlocks)."""
    B, Hh, Wh, C4 = xq.shape
    M = B * Hh * Wh
    TM = _pick_rows(M)
    out = pl.pallas_call(
        _haar_kernel,
        out_shape=jax.ShapeDtypeStruct((M, C4), xq.dtype),
        grid=(M // TM,),
        in_specs=[pl.BlockSpec((TM, C4), lambda i: (i, 0)),
                  pl.BlockSpec((C4, C4), lambda i: (0, 0))],
        out_specs=pl.BlockSpec((TM, C4), lambda i: (i, 0)),
        compiler_params=_compiler_params(),
    )(xq.reshape(M, C4), mix)
    return out.reshape(B, Hh, Wh, C4)


def _row_bands(x, th, halo):
    """(B, H, W, C) -> (B*nt, th + 2*halo, W, C) row bands (zero halo at edges)."""
    B, H, W, C = x.shape
    nt = H // th
    if nt == 1:
        return x
    xpad = jnp.pad(x, ((0, 0), (halo, halo), (0, 0), (0, 0)))
    bands = jnp.stack(
        [xpad[:, t * th:t * th + th + 2 * halo] for t in range(nt)], axis=1)
    return bands.reshape(B * nt, th + 2 * halo, W, C)


def inv_block_forward(x, bp, split1, clamp, mix=None,
                      band_budget_bytes=_DEFAULT_BAND_BYTES):
    """InvBlockExp.forward(x, rev=False) on NHWC data — one fused pallas_call."""
    B, H, W, C = x.shape
    split2 = C - split1
    th = _pick_band_rows(H, W, C, band_budget_bytes)
    nt = H // th
    halo = 0 if nt == 1 else 2
    th_in = th + 2 * halo
    bands = _row_bands(x, th, halo)
    M = B * nt

    kernel = functools.partial(
        _invblock_kernel, split1=split1, clamp=clamp, halo=halo,
        img_h=H, nt=nt, with_mix=mix is not None)

    in_specs = [pl.BlockSpec((1, th_in, W, C), lambda i: (i, 0, 0, 0))]
    args = [bands]
    if mix is not None:
        in_specs.append(pl.BlockSpec((C, C), lambda i: (0, 0)))
        args.append(mix)
    in_specs += [
        pl.BlockSpec((9, split2, split1), lambda i: (0, 0, 0)),
        pl.BlockSpec((1, split1), lambda i: (0, 0)),
        pl.BlockSpec((9, split1, 2 * split2), lambda i: (0, 0, 0)),
        pl.BlockSpec((1, 2 * split2), lambda i: (0, 0)),
    ]
    args += [bp["f_wt"], bp["f_b2"], bp["hg_wt"], bp["hg_b2"]]

    out = pl.pallas_call(
        kernel,
        out_shape=jax.ShapeDtypeStruct((M, th, W, C), x.dtype),
        grid=(M,),
        in_specs=in_specs,
        out_specs=pl.BlockSpec((1, th, W, C), lambda i: (i, 0, 0, 0)),
        scratch_shapes=[
            pltpu.VMEM((th + 4, W + 2, C), jnp.float32),
            pltpu.VMEM((th + 2, W + 2, split1), jnp.float32),
        ],
        compiler_params=_compiler_params(),
    )(*args)
    return out.reshape(B, H, W, C)


def net_forward(x_nchw, params, band_budget_bytes=_DEFAULT_BAND_BYTES):
    """Net.forward(x, rev=False), model='MIMO-VRN' == InvNN forward (NCHW I/O)."""
    B, C, H, W = x_nchw.shape
    Hh, Wh = H // 2, W // 2
    # One-time layout change: 2x2 de-interleave + NCHW->NHWC (plain XLA glue).
    xq = x_nchw.reshape(B, C, Hh, 2, Wh, 2).transpose(0, 2, 4, 3, 5, 1)
    xq = xq.reshape(B, Hh, Wh, 4 * C)
    mix = _haar_mix_matrix(C)

    blocks = params["blocks"]
    if not blocks:
        out = _haar_apply(xq, mix)
    else:
        out = xq
        for bi, bp in enumerate(blocks):
            out = inv_block_forward(out, bp, params["split1"], params["clamp"],
                                    mix=mix if bi == 0 else None,
                                    band_budget_bytes=band_budget_bytes)
    return out.transpose(0, 3, 1, 2)                 # back to NCHW once


# --------------------------- deterministic params ----------------------------

def _conv_init(key, cout, cin, scale=0.1):
    w = scale * jax.random.normal(key, (cout, cin, 3, 3), jnp.float32)
    w = w / jnp.sqrt(cin * 9.0)
    b = jnp.zeros((cout,), jnp.float32)
    return w, b


def _tap_major(w):
    """(Cout, Cin, 3, 3) torch layout -> (9, Cin, Cout) per-tap matmul layout."""
    return jnp.transpose(w, (2, 3, 1, 0)).reshape(9, w.shape[1], w.shape[0])


def init_params(key, channel_in=3, channel_out=3, block_num=2, down_num=1,
                clamp=1.0):
    channel_num = channel_in * 4 ** down_num
    split1 = channel_out
    split2 = channel_num - split1
    blocks = []
    for _ in range(block_num):
        key, kf, kg, kh = jax.random.split(key, 4)
        fw, fb = _conv_init(kf, split1, split2)   # F: split2 -> split1
        gw, gb = _conv_init(kg, split2, split1)   # G: split1 -> split2
        hw, hb = _conv_init(kh, split2, split1)   # H: split1 -> split2
        blocks.append(dict(
            # raw torch-layout weights (used by the XLA reference check)
            F_w=fw, F_b=fb, G_w=gw, G_b=gb, H_w=hw, H_b=hb,
            # one-time weight prep for the Pallas kernels
            f_wt=_tap_major(fw), f_b2=fb.reshape(1, split1),
            hg_wt=jnp.concatenate([_tap_major(hw), _tap_major(gw)], axis=-1),
            hg_b2=jnp.concatenate([hb, gb]).reshape(1, 2 * split2),
        ))
    return dict(blocks=blocks, split1=split1, clamp=clamp)


# -------------------------- plain-XLA reference ------------------------------

def _haar_weights(c):
    w = jnp.ones((4, 1, 2, 2), jnp.float32)
    w = w.at[1, 0, 0, 1].set(-1.0).at[1, 0, 1, 1].set(-1.0)
    w = w.at[2, 0, 1, 0].set(-1.0).at[2, 0, 1, 1].set(-1.0)
    w = w.at[3, 0, 1, 0].set(-1.0).at[3, 0, 0, 1].set(-1.0)
    return jnp.concatenate([w] * c, axis=0)


def _conv_ref(x, w, b, stride=1, pad=1, groups=1):
    out = lax.conv_general_dilated(
        x, w, window_strides=(stride, stride),
        padding=((pad, pad), (pad, pad)),
        dimension_numbers=("NCHW", "OIHW", "NCHW"),
        feature_group_count=groups)
    if b is not None:
        out = out + b[None, :, None, None]
    return out


def net_forward_ref(x, params):
    B, C, H, W = x.shape
    split1, clamp = params["split1"], params["clamp"]
    out = _conv_ref(x, _haar_weights(C), None, stride=2, pad=0, groups=C) / 4.0
    out = out.reshape(B, C, 4, H // 2, W // 2).transpose(0, 2, 1, 3, 4)
    out = out.reshape(B, 4 * C, H // 2, W // 2)
    for bp in params["blocks"]:
        x1, x2 = out[:, :split1], out[:, split1:]
        y1 = x1 + _conv_ref(x2, bp["F_w"], bp["F_b"])
        s = clamp * (jax.nn.sigmoid(_conv_ref(y1, bp["H_w"], bp["H_b"])) * 2.0 - 1.0)
        y2 = x2 * jnp.exp(s) + _conv_ref(y1, bp["G_w"], bp["G_b"])
        out = jnp.concatenate([y1, y2], axis=1)
    return out


# ---------------------------------- main --------------------------------------

if __name__ == "__main__":
    # MIMO-VRN config: in_nc = out_nc = 3, gop = 1 -> channel_in = channel_out
    # = 3, block_num = [2], down_num = 1.
    key = jax.random.PRNGKey(0)
    kx, kp, kx2 = jax.random.split(key, 3)
    params = init_params(kp, channel_in=3, channel_out=3, block_num=2, down_num=1)

    # ---- primary test: single-band path (whole image per grid step) --------
    x = jax.random.normal(kx, (2, 3, 16, 16), dtype=jnp.float32)
    fwd = jax.jit(lambda inp: net_forward(inp, params))
    out = jax.block_until_ready(fwd(x))
    assert out.shape == (2, 12, 8, 8), out.shape
    assert bool(jnp.all(jnp.isfinite(out)))
    ref = jax.block_until_ready(jax.jit(lambda inp: net_forward_ref(inp, params))(x))
    err = float(jnp.max(jnp.abs(out - ref)))
    assert err < 1e-3, f"single-band path: max abs err vs XLA reference = {err}"

    # ---- secondary test: force the multi-band (row-halo) path --------------
    x2 = jax.random.normal(kx2, (1, 3, 32, 16), dtype=jnp.float32)
    fwd2 = jax.jit(lambda inp: net_forward(inp, params, band_budget_bytes=6 * 1024))
    out2 = jax.block_until_ready(fwd2(x2))
    assert out2.shape == (1, 12, 16, 8), out2.shape
    ref2 = jax.block_until_ready(jax.jit(lambda inp: net_forward_ref(inp, params))(x2))
    err2 = float(jnp.max(jnp.abs(out2 - ref2)))
    assert err2 < 1e-3, f"multi-band path: max abs err vs XLA reference = {err2}"

    print("KERNEL_OK")
</pallas_src>

<mosaic_0001>
module attributes {stable_mosaic.version = 11 : i64} {
  func.func @_invblock_kernel(%arg0: i32, %arg1: memref<1x8x8x12xf32, #tpu.memory_space<vmem>>, %arg2: memref<9x9x3xf32, #tpu.memory_space<vmem>>, %arg3: memref<1x3xf32, #tpu.memory_space<vmem>>, %arg4: memref<9x3x18xf32, #tpu.memory_space<vmem>>, %arg5: memref<1x18xf32, #tpu.memory_space<vmem>>, %arg6: memref<1x8x8x12xf32, #tpu.memory_space<vmem>>, %arg7: memref<12x10x12xf32, #tpu.memory_space<vmem>>, %arg8: memref<10x10x3xf32, #tpu.memory_space<vmem>>) attributes {dimension_semantics = [#tpu.dimension_semantics<parallel>], iteration_bounds = array<i64: 2>, scalar_prefetch = 0 : i64, scratch_operands = 2 : i64, tpu.core_type = #tpu.core_type<tc>, window_params = [{transform_indices = @transform_0, window_bounds = array<i64: 1, 8, 8, 12>}, {pipeline_mode = #tpu.pipeline_mode<synchronous>, transform_indices = @transform_1, window_bounds = array<i64: 9, 9, 3>}, {pipeline_mode = #tpu.pipeline_mode<synchronous>, transform_indices = @transform_2, window_bounds = array<i64: 1, 3>}, {pipeline_mode = #tpu.pipeline_mode<synchronous>, transform_indices = @transform_3, window_bounds = array<i64: 9, 3, 18>}, {pipeline_mode = #tpu.pipeline_mode<synchronous>, transform_indices = @transform_4, window_bounds = array<i64: 1, 18>}, {transform_indices = @transform_5, window_bounds = array<i64: 1, 8, 8, 12>}]} {
    %c0_i32 = arith.constant 0 : i32
    %0 = arith.cmpi eq, %arg0, %c0_i32 : i32
    %1 = arith.extui %0 : i1 to i32
    %c0_i32_0 = arith.constant 0 : i32
    %2 = arith.cmpi ne, %1, %c0_i32_0 : i32
    scf.if %2 {
      %cst_149 = arith.constant 0.000000e+00 : f32
      %162 = vector.broadcast %cst_149 : f32 to vector<12x10x12xf32>
      %c0_150 = arith.constant 0 : index
      %c0_151 = arith.constant 0 : index
      %c0_152 = arith.constant 0 : index
      %163 = vector.load %arg7[%c0_150, %c0_151, %c0_152] : memref<12x10x12xf32, #tpu.memory_space<vmem>>, vector<12x10x12xf32>
      tpu.vector_store %arg7[%c0_150, %c0_151, %c0_152], %162 {strides = array<i32>} : memref<12x10x12xf32, #tpu.memory_space<vmem>>, vector<12x10x12xf32>,
      %cst_153 = arith.constant 0.000000e+00 : f32
      %164 = vector.broadcast %cst_153 : f32 to vector<10x10x3xf32>
      %c0_154 = arith.constant 0 : index
      %c0_155 = arith.constant 0 : index
      %c0_156 = arith.constant 0 : index
      %165 = vector.load %arg8[%c0_154, %c0_155, %c0_156] : memref<10x10x3xf32, #tpu.memory_space<vmem>>, vector<10x10x3xf32>
      tpu.vector_store %arg8[%c0_154, %c0_155, %c0_156], %164 {strides = array<i32>} : memref<10x10x3xf32, #tpu.memory_space<vmem>>, vector<10x10x3xf32>,
    } else {
    }
    %c0 = arith.constant 0 : index
    %c0_1 = arith.constant 0 : index
    %c0_2 = arith.constant 0 : index
    %c0_3 = arith.constant 0 : index
    %3 = vector.load %arg1[%c0, %c0_1, %c0_2, %c0_3] : memref<1x8x8x12xf32, #tpu.memory_space<vmem>>, vector<1x8x8x12xf32>
    %4 = vector.shape_cast %3 : vector<1x8x8x12xf32> to vector<8x8x12xf32>
    %c2 = arith.constant 2 : index
    %c1 = arith.constant 1 : index
    %c0_4 = arith.constant 0 : index
    %5 = vector.load %arg7[%c2, %c1, %c0_4] : memref<12x10x12xf32, #tpu.memory_space<vmem>>, vector<8x8x12xf32>
    tpu.vector_store %arg7[%c2, %c1, %c0_4], %4 {strides = array<i32>} : memref<12x10x12xf32, #tpu.memory_space<vmem>>, vector<8x8x12xf32>,
    %cst = arith.constant 0.000000e+00 : f32
    %6 = vector.broadcast %cst : f32 to vector<80x3xf32>
    %c0_5 = arith.constant 0 : index
    %c0_6 = arith.constant 0 : index
    %7 = vector.load %arg3[%c0_5, %c0_6] : memref<1x3xf32, #tpu.memory_space<vmem>>, vector<1x3xf32>
    %8 = vector.broadcast %7 : vector<1x3xf32> to vector<80x3xf32>
    %9 = arith.addf %6, %8 : vector<80x3xf32>
    %c0_7 = arith.constant 0 : index
    %c0_8 = arith.constant 0 : index
    %c3 = arith.constant 3 : index
    %10 = vector.load %arg7[%c0_7, %c0_8, %c3] : memref<12x10x12xf32, #tpu.memory_space<vmem>>, vector<10x8x9xf32>
    %11 = vector.shape_cast %10 : vector<10x8x9xf32> to vector<80x9xf32>
    %c0_9 = arith.constant 0 : index
    %c0_10 = arith.constant 0 : index
    %c0_11 = arith.constant 0 : index
    %12 = vector.load %arg2[%c0_9, %c0_10, %c0_11] : memref<9x9x3xf32, #tpu.memory_space<vmem>>, vector<1x9x3xf32>
    %13 = vector.shape_cast %12 : vector<1x9x3xf32> to vector<9x3xf32>
    %cst_12 = arith.constant dense<0.000000e+00> : vector<80x3xf32>
    %14 = tpu.matmul %11, %13, %cst_12 {dimension_numbers = #tpu.dot_dimension_numbers<[1], [0], [0], [1], [0, 0, 1, 1], [], []>} : vector<80x9xf32>, vector<9x3xf32>, vector<80x3xf32> -> vector<80x3xf32>
    %15 = arith.addf %9, %14 : vector<80x3xf32>
    %c0_13 = arith.constant 0 : index
    %c1_14 = arith.constant 1 : index
    %c3_15 = arith.constant 3 : index
    %16 = vector.load %arg7[%c0_13, %c1_14, %c3_15] : memref<12x10x12xf32, #tpu.memory_space<vmem>>, vector<10x8x9xf32>
    %17 = vector.shape_cast %16 : vector<10x8x9xf32> to vector<80x9xf32>
    %c1_16 = arith.constant 1 : index
    %c0_17 = arith.constant 0 : index
    %c0_18 = arith.constant 0 : index
    %18 = vector.load %arg2[%c1_16, %c0_17, %c0_18] : memref<9x9x3xf32, #tpu.memory_space<vmem>>, vector<1x9x3xf32>
    %19 = vector.shape_cast %18 : vector<1x9x3xf32> to vector<9x3xf32>
    %cst_19 = arith.constant dense<0.000000e+00> : vector<80x3xf32>
    %20 = tpu.matmul %17, %19, %cst_19 {dimension_numbers = #tpu.dot_dimension_numbers<[1], [0], [0], [1], [0, 0, 1, 1], [], []>} : vector<80x9xf32>, vector<9x3xf32>, vector<80x3xf32> -> vector<80x3xf32>
    %21 = arith.addf %15, %20 : vector<80x3xf32>
    %c0_20 = arith.constant 0 : index
    %c2_21 = arith.constant 2 : index
    %c3_22 = arith.constant 3 : index
    %22 = vector.load %arg7[%c0_20, %c2_21, %c3_22] : memref<12x10x12xf32, #tpu.memory_space<vmem>>, vector<10x8x9xf32>
    %23 = vector.shape_cast %22 : vector<10x8x9xf32> to vector<80x9xf32>
    %c2_23 = arith.constant 2 : index
    %c0_24 = arith.constant 0 : index
    %c0_25 = arith.constant 0 : index
    %24 = vector.load %arg2[%c2_23, %c0_24, %c0_25] : memref<9x9x3xf32, #tpu.memory_space<vmem>>, vector<1x9x3xf32>
    %25 = vector.shape_cast %24 : vector<1x9x3xf32> to vector<9x3xf32>
    %cst_26 = arith.constant dense<0.000000e+00> : vector<80x3xf32>
    %26 = tpu.matmul %23, %25, %cst_26 {dimension_numbers = #tpu.dot_dimension_numbers<[1], [0], [0], [1], [0, 0, 1, 1], [], []>} : vector<80x9xf32>, vector<9x3xf32>, vector<80x3xf32> -> vector<80x3xf32>
    %27 = arith.addf %21, %26 : vector<80x3xf32>
    %c1_27 = arith.constant 1 : index
    %c0_28 = arith.constant 0 : index
    %c3_29 = arith.constant 3 : index
    %28 = vector.load %arg7[%c1_27, %c0_28, %c3_29] : memref<12x10x12xf32, #tpu.memory_space<vmem>>, vector<10x8x9xf32>
    %29 = vector.shape_cast %28 : vector<10x8x9xf32> to vector<80x9xf32>
    %c3_30 = arith.constant 3 : index
    %c0_31 = arith.constant 0 : index
    %c0_32 = arith.constant 0 : index
    %30 = vector.load %arg2[%c3_30, %c0_31, %c0_32] : memref<9x9x3xf32, #tpu.memory_space<vmem>>, vector<1x9x3xf32>
    %31 = vector.shape_cast %30 : vector<1x9x3xf32> to vector<9x3xf32>
    %cst_33 = arith.constant dense<0.000000e+00> : vector<80x3xf32>
    %32 = tpu.matmul %29, %31, %cst_33 {dimension_numbers = #tpu.dot_dimension_numbers<[1], [0], [0], [1], [0, 0, 1, 1], [], []>} : vector<80x9xf32>, vector<9x3xf32>, vector<80x3xf32> -> vector<80x3xf32>
    %33 = arith.addf %27, %32 : vector<80x3xf32>
    %c1_34 = arith.constant 1 : index
    %c1_35 = arith.constant 1 : index
    %c3_36 = arith.constant 3 : index
    %34 = vector.load %arg7[%c1_34, %c1_35, %c3_36] : memref<12x10x12xf32, #tpu.memory_space<vmem>>, vector<10x8x9xf32>
    %35 = vector.shape_cast %34 : vector<10x8x9xf32> to vector<80x9xf32>
    %c4 = arith.constant 4 : index
    %c0_37 = arith.constant 0 : index
    %c0_38 = arith.constant 0 : index
    %36 = vector.load %arg2[%c4, %c0_37, %c0_38] : memref<9x9x3xf32, #tpu.memory_space<vmem>>, vector<1x9x3xf32>
    %37 = vector.shape_cast %36 : vector<1x9x3xf32> to vector<9x3xf32>
    %cst_39 = arith.constant dense<0.000000e+00> : vector<80x3xf32>
    %38 = tpu.matmul %35, %37, %cst_39 {dimension_numbers = #tpu.dot_dimension_numbers<[1], [0], [0], [1], [0, 0, 1, 1], [], []>} : vector<80x9xf32>, vector<9x3xf32>, vector<80x3xf32> -> vector<80x3xf32>
    %39 = arith.addf %33, %38 : vector<80x3xf32>
    %c1_40 = arith.constant 1 : index
    %c2_41 = arith.constant 2 : index
    %c3_42 = arith.constant 3 : index
    %40 = vector.load %arg7[%c1_40, %c2_41, %c3_42] : memref<12x10x12xf32, #tpu.memory_space<vmem>>, vector<10x8x9xf32>
    %41 = vector.shape_cast %40 : vector<10x8x9xf32> to vector<80x9xf32>
    %c5 = arith.constant 5 : index
    %c0_43 = arith.constant 0 : index
    %c0_44 = arith.constant 0 : index
    %42 = vector.load %arg2[%c5, %c0_43, %c0_44] : memref<9x9x3xf32, #tpu.memory_space<vmem>>, vector<1x9x3xf32>
    %43 = vector.shape_cast %42 : vector<1x9x3xf32> to vector<9x3xf32>
    %cst_45 = arith.constant dense<0.000000e+00> : vector<80x3xf32>
    %44 = tpu.matmul %41, %43, %cst_45 {dimension_numbers = #tpu.dot_dimension_numbers<[1], [0], [0], [1], [0, 0, 1, 1], [], []>} : vector<80x9xf32>, vector<9x3xf32>, vector<80x3xf32> -> vector<80x3xf32>
    %45 = arith.addf %39, %44 : vector<80x3xf32>
    %c2_46 = arith.constant 2 : index
    %c0_47 = arith.constant 0 : index
    %c3_48 = arith.constant 3 : index
    %46 = vector.load %arg7[%c2_46, %c0_47, %c3_48] : memref<12x10x12xf32, #tpu.memory_space<vmem>>, vector<10x8x9xf32>
    %47 = vector.shape_cast %46 : vector<10x8x9xf32> to vector<80x9xf32>
    %c6 = arith.constant 6 : index
    %c0_49 = arith.constant 0 : index
    %c0_50 = arith.constant 0 : index
    %48 = vector.load %arg2[%c6, %c0_49, %c0_50] : memref<9x9x3xf32, #tpu.memory_space<vmem>>, vector<1x9x3xf32>
    %49 = vector.shape_cast %48 : vector<1x9x3xf32> to vector<9x3xf32>
    %cst_51 = arith.constant dense<0.000000e+00> : vector<80x3xf32>
    %50 = tpu.matmul %47, %49, %cst_51 {dimension_numbers = #tpu.dot_dimension_numbers<[1], [0], [0], [1], [0, 0, 1, 1], [], []>} : vector<80x9xf32>, vector<9x3xf32>, vector<80x3xf32> -> vector<80x3xf32>
    %51 = arith.addf %45, %50 : vector<80x3xf32>
    %c2_52 = arith.constant 2 : index
    %c1_53 = arith.constant 1 : index
    %c3_54 = arith.constant 3 : index
    %52 = vector.load %arg7[%c2_52, %c1_53, %c3_54] : memref<12x10x12xf32, #tpu.memory_space<vmem>>, vector<10x8x9xf32>
    %53 = vector.shape_cast %52 : vector<10x8x9xf32> to vector<80x9xf32>
    %c7 = arith.constant 7 : index
    %c0_55 = arith.constant 0 : index
    %c0_56 = arith.constant 0 : index
    %54 = vector.load %arg2[%c7, %c0_55, %c0_56] : memref<9x9x3xf32, #tpu.memory_space<vmem>>, vector<1x9x3xf32>
    %55 = vector.shape_cast %54 : vector<1x9x3xf32> to vector<9x3xf32>
    %cst_57 = arith.constant dense<0.000000e+00> : vector<80x3xf32>
    %56 = tpu.matmul %53, %55, %cst_57 {dimension_numbers = #tpu.dot_dimension_numbers<[1], [0], [0], [1], [0, 0, 1, 1], [], []>} : vector<80x9xf32>, vector<9x3xf32>, vector<80x3xf32> -> vector<80x3xf32>
    %57 = arith.addf %51, %56 : vector<80x3xf32>
    %c2_58 = arith.constant 2 : index
    %c2_59 = arith.constant 2 : index
    %c3_60 = arith.constant 3 : index
    %58 = vector.load %arg7[%c2_58, %c2_59, %c3_60] : memref<12x10x12xf32, #tpu.memory_space<vmem>>, vector<10x8x9xf32>
    %59 = vector.shape_cast %58 : vector<10x8x9xf32> to vector<80x9xf32>
    %c8 = arith.constant 8 : index
    %c0_61 = arith.constant 0 : index
    %c0_62 = arith.constant 0 : index
    %60 = vector.load %arg2[%c8, %c0_61, %c0_62] : memref<9x9x3xf32, #tpu.memory_space<vmem>>, vector<1x9x3xf32>
    %61 = vector.shape_cast %60 : vector<1x9x3xf32> to vector<9x3xf32>
    %cst_63 = arith.constant dense<0.000000e+00> : vector<80x3xf32>
    %62 = tpu.matmul %59, %61, %cst_63 {dimension_numbers = #tpu.dot_dimension_numbers<[1], [0], [0], [1], [0, 0, 1, 1], [], []>} : vector<80x9xf32>, vector<9x3xf32>, vector<80x3xf32> -> vector<80x3xf32>
    %63 = arith.addf %57, %62 : vector<80x3xf32>
    %c1_64 = arith.constant 1 : index
    %c1_65 = arith.constant 1 : index
    %c0_66 = arith.constant 0 : index
    %64 = vector.load %arg7[%c1_64, %c1_65, %c0_66] : memref<12x10x12xf32, #tpu.memory_space<vmem>>, vector<10x8x3xf32>
    %65 = vector.shape_cast %64 : vector<10x8x3xf32> to vector<80x3xf32>
    %66 = arith.addf %65, %63 : vector<80x3xf32>
    %67 = vector.shape_cast %66 : vector<80x3xf32> to vector<10x8x3xf32>
    %68 = tpu.iota {dimensions = array<i32: 0>} : vector<10x8x3xi32>
    %c-1_i32 = arith.constant -1 : i32
    %69 = vector.broadcast %c-1_i32 : i32 to vector<10x8x3xi32>
    %70 = arith.addi %69, %68 : vector<10x8x3xi32>
    %c0_i32_67 = arith.constant 0 : i32
    %71 = vector.broadcast %c0_i32_67 : i32 to vector<10x8x3xi32>
    %72 = arith.cmpi sge, %70, %71 : vector<10x8x3xi32>
    %c8_i32 = arith.constant 8 : i32
    %73 = vector.broadcast %c8_i32 : i32 to vector<10x8x3xi32>
    %74 = arith.cmpi slt, %70, %73 : vector<10x8x3xi32>
    %75 = arith.andi %72, %74 : vector<10x8x3xi1>
    %cst_68 = arith.constant 0.000000e+00 : f32
    %76 = vector.broadcast %cst_68 : f32 to vector<10x8x3xf32>
    %77 = arith.select %75, %67, %76 : vector<10x8x3xi1>, vector<10x8x3xf32>
    %c0_69 = arith.constant 0 : index
    %c1_70 = arith.constant 1 : index
    %c0_71 = arith.constant 0 : index
    %78 = vector.load %arg8[%c0_69, %c1_70, %c0_71] : memref<10x10x3xf32, #tpu.memory_space<vmem>>, vector<10x8x3xf32>
    tpu.vector_store %arg8[%c0_69, %c1_70, %c0_71], %77 {strides = array<i32>} : memref<10x10x3xf32, #tpu.memory_space<vmem>>, vector<10x8x3xf32>,
    %cst_72 = arith.constant 0.000000e+00 : f32
    %79 = vector.broadcast %cst_72 : f32 to vector<64x18xf32>
    %c0_73 = arith.constant 0 : index
    %c0_74 = arith.constant 0 : index
    %80 = vector.load %arg5[%c0_73, %c0_74] : memref<1x18xf32, #tpu.memory_space<vmem>>, vector<1x18xf32>
    %81 = vector.broadcast %80 : vector<1x18xf32> to vector<64x18xf32>
    %82 = arith.addf %79, %81 : vector<64x18xf32>
    %c0_75 = arith.constant 0 : index
    %c0_76 = arith.constant 0 : index
    %c0_77 = arith.constant 0 : index
    %83 = vector.load %arg8[%c0_75, %c0_76, %c0_77] : memref<10x10x3xf32, #tpu.memory_space<vmem>>, vector<8x8x3xf32>
    %84 = vector.shape_cast %83 : vector<8x8x3xf32> to vector<64x3xf32>
    %c0_78 = arith.constant 0 : index
    %c0_79 = arith.constant 0 : index
    %c0_80 = arith.constant 0 : index
    %85 = vector.load %arg4[%c0_78, %c0_79, %c0_80] : memref<9x3x18xf32, #tpu.memory_space<vmem>>, vector<1x3x18xf32>
    %86 = vector.shape_cast %85 : vector<1x3x18xf32> to vector<3x18xf32>
    %cst_81 = arith.constant dense<0.000000e+00> : vector<64x18xf32>
    %87 = tpu.matmul %84, %86, %cst_81 {dimension_numbers = #tpu.dot_dimension_numbers<[1], [0], [0], [1], [0, 0, 1, 1], [], []>} : vector<64x3xf32>, vector<3x18xf32>, vector<64x18xf32> -> vector<64x18xf32>
    %88 = arith.addf %82, %87 : vector<64x18xf32>
    %c0_82 = arith.constant 0 : index
    %c1_83 = arith.constant 1 : index
    %c0_84 = arith.constant 0 : index
    %89 = vector.load %arg8[%c0_82, %c1_83, %c0_84] : memref<10x10x3xf32, #tpu.memory_space<vmem>>, vector<8x8x3xf32>
    %90 = vector.shape_cast %89 : vector<8x8x3xf32> to vector<64x3xf32>
    %c1_85 = arith.constant 1 : index
    %c0_86 = arith.constant 0 : index
    %c0_87 = arith.constant 0 : index
    %91 = vector.load %arg4[%c1_85, %c0_86, %c0_87] : memref<9x3x18xf32, #tpu.memory_space<vmem>>, vector<1x3x18xf32>
    %92 = vector.shape_cast %91 : vector<1x3x18xf32> to vector<3x18xf32>
    %cst_88 = arith.constant dense<0.000000e+00> : vector<64x18xf32>
    %93 = tpu.matmul %90, %92, %cst_88 {dimension_numbers = #tpu.dot_dimension_numbers<[1], [0], [0], [1], [0, 0, 1, 1], [], []>} : vector<64x3xf32>, vector<3x18xf32>, vector<64x18xf32> -> vector<64x18xf32>
    %94 = arith.addf %88, %93 : vector<64x18xf32>
    %c0_89 = arith.constant 0 : index
    %c2_90 = arith.constant 2 : index
    %c0_91 = arith.constant 0 : index
    %95 = vector.load %arg8[%c0_89, %c2_90, %c0_91] : memref<10x10x3xf32, #tpu.memory_space<vmem>>, vector<8x8x3xf32>
    %96 = vector.shape_cast %95 : vector<8x8x3xf32> to vector<64x3xf32>
    %c2_92 = arith.constant 2 : index
    %c0_93 = arith.constant 0 : index
    %c0_94 = arith.constant 0 : index
    %97 = vector.load %arg4[%c2_92, %c0_93, %c0_94] : memref<9x3x18xf32, #tpu.memory_space<vmem>>, vector<1x3x18xf32>
    %98 = vector.shape_cast %97 : vector<1x3x18xf32> to vector<3x18xf32>
    %cst_95 = arith.constant dense<0.000000e+00> : vector<64x18xf32>
    %99 = tpu.matmul %96, %98, %cst_95 {dimension_numbers = #tpu.dot_dimension_numbers<[1], [0], [0], [1], [0, 0, 1, 1], [], []>} : vector<64x3xf32>, vector<3x18xf32>, vector<64x18xf32> -> vector<64x18xf32>
    %100 = arith.addf %94, %99 : vector<64x18xf32>
    %c1_96 = arith.constant 1 : index
    %c0_97 = arith.constant 0 : index
    %c0_98 = arith.constant 0 : index
    %101 = vector.load %arg8[%c1_96, %c0_97, %c0_98] : memref<10x10x3xf32, #tpu.memory_space<vmem>>, vector<8x8x3xf32>
    %102 = vector.shape_cast %101 : vector<8x8x3xf32> to vector<64x3xf32>
    %c3_99 = arith.constant 3 : index
    %c0_100 = arith.constant 0 : index
    %c0_101 = arith.constant 0 : index
    %103 = vector.load %arg4[%c3_99, %c0_100, %c0_101] : memref<9x3x18xf32, #tpu.memory_space<vmem>>, vector<1x3x18xf32>
    %104 = vector.shape_cast %103 : vector<1x3x18xf32> to vector<3x18xf32>
    %cst_102 = arith.constant dense<0.000000e+00> : vector<64x18xf32>
    %105 = tpu.matmul %102, %104, %cst_102 {dimension_numbers = #tpu.dot_dimension_numbers<[1], [0], [0], [1], [0, 0, 1, 1], [], []>} : vector<64x3xf32>, vector<3x18xf32>, vector<64x18xf32> -> vector<64x18xf32>
    %106 = arith.addf %100, %105 : vector<64x18xf32>
    %c1_103 = arith.constant 1 : index
    %c1_104 = arith.constant 1 : index
    %c0_105 = arith.constant 0 : index
    %107 = vector.load %arg8[%c1_103, %c1_104, %c0_105] : memref<10x10x3xf32, #tpu.memory_space<vmem>>, vector<8x8x3xf32>
    %108 = vector.shape_cast %107 : vector<8x8x3xf32> to vector<64x3xf32>
    %c4_106 = arith.constant 4 : index
    %c0_107 = arith.constant 0 : index
    %c0_108 = arith.constant 0 : index
    %109 = vector.load %arg4[%c4_106, %c0_107, %c0_108] : memref<9x3x18xf32, #tpu.memory_space<vmem>>, vector<1x3x18xf32>
    %110 = vector.shape_cast %109 : vector<1x3x18xf32> to vector<3x18xf32>
    %cst_109 = arith.constant dense<0.000000e+00> : vector<64x18xf32>
    %111 = tpu.matmul %108, %110, %cst_109 {dimension_numbers = #tpu.dot_dimension_numbers<[1], [0], [0], [1], [0, 0, 1, 1], [], []>} : vector<64x3xf32>, vector<3x18xf32>, vector<64x18xf32> -> vector<64x18xf32>
    %112 = arith.addf %106, %111 : vector<64x18xf32>
    %c1_110 = arith.constant 1 : index
    %c2_111 = arith.constant 2 : index
    %c0_112 = arith.constant 0 : index
    %113 = vector.load %arg8[%c1_110, %c2_111, %c0_112] : memref<10x10x3xf32, #tpu.memory_space<vmem>>, vector<8x8x3xf32>
    %114 = vector.shape_cast %113 : vector<8x8x3xf32> to vector<64x3xf32>
    %c5_113 = arith.constant 5 : index
    %c0_114 = arith.constant 0 : index
    %c0_115 = arith.constant 0 : index
    %115 = vector.load %arg4[%c5_113, %c0_114, %c0_115] : memref<9x3x18xf32, #tpu.memory_space<vmem>>, vector<1x3x18xf32>
    %116 = vector.shape_cast %115 : vector<1x3x18xf32> to vector<3x18xf32>
    %cst_116 = arith.constant dense<0.000000e+00> : vector<64x18xf32>
    %117 = tpu.matmul %114, %116, %cst_116 {dimension_numbers = #tpu.dot_dimension_numbers<[1], [0], [0], [1], [0, 0, 1, 1], [], []>} : vector<64x3xf32>, vector<3x18xf32>, vector<64x18xf32> -> vector<64x18xf32>
    %118 = arith.addf %112, %117 : vector<64x18xf32>
    %c2_117 = arith.constant 2 : index
    %c0_118 = arith.constant 0 : index
    %c0_119 = arith.constant 0 : index
    %119 = vector.load %arg8[%c2_117, %c0_118, %c0_119] : memref<10x10x3xf32, #tpu.memory_space<vmem>>, vector<8x8x3xf32>
    %120 = vector.shape_cast %119 : vector<8x8x3xf32> to vector<64x3xf32>
    %c6_120 = arith.constant 6 : index
    %c0_121 = arith.constant 0 : index
    %c0_122 = arith.constant 0 : index
    %121 = vector.load %arg4[%c6_120, %c0_121, %c0_122] : memref<9x3x18xf32, #tpu.memory_space<vmem>>, vector<1x3x18xf32>
    %122 = vector.shape_cast %121 : vector<1x3x18xf32> to vector<3x18xf32>
    %cst_123 = arith.constant dense<0.000000e+00> : vector<64x18xf32>
    %123 = tpu.matmul %120, %122, %cst_123 {dimension_numbers = #tpu.dot_dimension_numbers<[1], [0], [0], [1], [0, 0, 1, 1], [], []>} : vector<64x3xf32>, vector<3x18xf32>, vector<64x18xf32> -> vector<64x18xf32>
    %124 = arith.addf %118, %123 : vector<64x18xf32>
    %c2_124 = arith.constant 2 : index
    %c1_125 = arith.constant 1 : index
    %c0_126 = arith.constant 0 : index
    %125 = vector.load %arg8[%c2_124, %c1_125, %c0_126] : memref<10x10x3xf32, #tpu.memory_space<vmem>>, vector<8x8x3xf32>
    %126 = vector.shape_cast %125 : vector<8x8x3xf32> to vector<64x3xf32>
    %c7_127 = arith.constant 7 : index
    %c0_128 = arith.constant 0 : index
    %c0_129 = arith.constant 0 : index
    %127 = vector.load %arg4[%c7_127, %c0_128, %c0_129] : memref<9x3x18xf32, #tpu.memory_space<vmem>>, vector<1x3x18xf32>
    %128 = vector.shape_cast %127 : vector<1x3x18xf32> to vector<3x18xf32>
    %cst_130 = arith.constant dense<0.000000e+00> : vector<64x18xf32>
    %129 = tpu.matmul %126, %128, %cst_130 {dimension_numbers = #tpu.dot_dimension_numbers<[1], [0], [0], [1], [0, 0, 1, 1], [], []>} : vector<64x3xf32>, vector<3x18xf32>, vector<64x18xf32> -> vector<64x18xf32>
    %130 = arith.addf %124, %129 : vector<64x18xf32>
    %c2_131 = arith.constant 2 : index
    %c2_132 = arith.constant 2 : index
    %c0_133 = arith.constant 0 : index
    %131 = vector.load %arg8[%c2_131, %c2_132, %c0_133] : memref<10x10x3xf32, #tpu.memory_space<vmem>>, vector<8x8x3xf32>
    %132 = vector.shape_cast %131 : vector<8x8x3xf32> to vector<64x3xf32>
    %c8_134 = arith.constant 8 : index
    %c0_135 = arith.constant 0 : index
    %c0_136 = arith.constant 0 : index
    %133 = vector.load %arg4[%c8_134, %c0_135, %c0_136] : memref<9x3x18xf32, #tpu.memory_space<vmem>>, vector<1x3x18xf32>
    %134 = vector.shape_cast %133 : vector<1x3x18xf32> to vector<3x18xf32>
    %cst_137 = arith.constant dense<0.000000e+00> : vector<64x18xf32>
    %135 = tpu.matmul %132, %134, %cst_137 {dimension_numbers = #tpu.dot_dimension_numbers<[1], [0], [0], [1], [0, 0, 1, 1], [], []>} : vector<64x3xf32>, vector<3x18xf32>, vector<64x18xf32> -> vector<64x18xf32>
    %136 = arith.addf %130, %135 : vector<64x18xf32>
    %137 = vector.extract_strided_slice %136 {offsets = [0, 0], sizes = [64, 9], strides = [1, 1]} : vector<64x18xf32> to vector<64x9xf32>
    %138 = arith.negf %137 : vector<64x9xf32>
    %139 = math.exp %138 : vector<64x9xf32>
    %cst_138 = arith.constant 1.000000e+00 : f32
    %140 = vector.broadcast %cst_138 : f32 to vector<64x9xf32>
    %141 = arith.addf %140, %139 : vector<64x9xf32>
    %142 = arith.divf %140, %141 : vector<64x9xf32>
    %cst_139 = arith.constant 2.000000e+00 : f32
    %143 = vector.broadcast %cst_139 : f32 to vector<64x9xf32>
    %144 = arith.mulf %142, %143 : vector<64x9xf32>
    %cst_140 = arith.constant 1.000000e+00 : f32
    %145 = vector.broadcast %cst_140 : f32 to vector<64x9xf32>
    %146 = arith.subf %144, %145 : vector<64x9xf32>
    %cst_141 = arith.constant 1.000000e+00 : f32
    %147 = vector.broadcast %cst_141 : f32 to vector<64x9xf32>
    %148 = arith.mulf %147, %146 : vector<64x9xf32>
    %149 = vector.extract_strided_slice %136 {offsets = [0, 9], sizes = [64, 9], strides = [1, 1]} : vector<64x18xf32> to vector<64x9xf32>
    %c2_142 = arith.constant 2 : index
    %c1_143 = arith.constant 1 : index
    %c3_144 = arith.constant 3 : index
    %150 = vector.load %arg7[%c2_142, %c1_143, %c3_144] : memref<12x10x12xf32, #tpu.memory_space<vmem>>, vector<8x8x9xf32>
    %151 = vector.shape_cast %150 : vector<8x8x9xf32> to vector<64x9xf32>
    %152 = math.exp %148 : vector<64x9xf32>
    %153 = arith.mulf %151, %152 : vector<64x9xf32>
    %154 = arith.addf %153, %149 : vector<64x9xf32>
    %155 = vector.extract_strided_slice %77 {offsets = [1, 0, 0], sizes = [8, 8, 3], strides = [1, 1, 1]} : vector<10x8x3xf32> to vector<8x8x3xf32>
    %156 = vector.shape_cast %155 : vector<8x8x3xf32> to vector<64x3xf32>
    %157 = tpu.concatenate %156, %154 in 1 : vector<64x3xf32>, vector<64x9xf32> -> vector<64x12xf32>
    %158 = vector.shape_cast %157 : vector<64x12xf32> to vector<8x8x12xf32>
    %c0_145 = arith.constant 0 : index
    %c0_146 = arith.constant 0 : index
    %c0_147 = arith.constant 0 : index
    %c0_148 = arith.constant 0 : index
    %159 = vector.load %arg6[%c0_145, %c0_146, %c0_147, %c0_148] : memref<1x8x8x12xf32, #tpu.memory_space<vmem>>, vector<1x8x8x12xf32>
    %160 = vector.shape_cast %159 : vector<1x8x8x12xf32> to vector<8x8x12xf32>
    %161 = vector.shape_cast %158 : vector<8x8x12xf32> to vector<1x8x8x12xf32>
    tpu.vector_store %arg6[%c0_145, %c0_146, %c0_147, %c0_148], %161 {strides = array<i32>} : memref<1x8x8x12xf32, #tpu.memory_space<vmem>>, vector<1x8x8x12xf32>,
    return
  }
  func.func @transform_0(%arg0: i32) -> (i32, i32, i32, i32) {
    %c0_i32 = arith.constant 0 : i32
    %c0_i32_0 = arith.constant 0 : i32
    %c0_i32_1 = arith.constant 0 : i32
    %c0_i32_2 = arith.constant 0 : i32
    return %arg0, %c0_i32, %c0_i32_0, %c0_i32_1 : i32, i32, i32, i32
  }
  func.func @transform_1(%arg0: i32) -> (i32, i32, i32) {
    %c0_i32 = arith.constant 0 : i32
    %c0_i32_0 = arith.constant 0 : i32
    %c0_i32_1 = arith.constant 0 : i32
    %c0_i32_2 = arith.constant 0 : i32
    return %c0_i32, %c0_i32_0, %c0_i32_1 : i32, i32, i32
  }
  func.func @transform_2(%arg0: i32) -> (i32, i32) {
    %c0_i32 = arith.constant 0 : i32
    %c0_i32_0 = arith.constant 0 : i32
    %c0_i32_1 = arith.constant 0 : i32
    return %c0_i32, %c0_i32_0 : i32, i32
  }
  func.func @transform_3(%arg0: i32) -> (i32, i32, i32) {
    %c0_i32 = arith.constant 0 : i32
    %c0_i32_0 = arith.constant 0 : i32
    %c0_i32_1 = arith.constant 0 : i32
    %c0_i32_2 = arith.constant 0 : i32
    return %c0_i32, %c0_i32_0, %c0_i32_1 : i32, i32, i32
  }
  func.func @transform_4(%arg0: i32) -> (i32, i32) {
    %c0_i32 = arith.constant 0 : i32
    %c0_i32_0 = arith.constant 0 : i32
    %c0_i32_1 = arith.constant 0 : i32
    return %c0_i32, %c0_i32_0 : i32, i32
  }
  func.func @transform_5(%arg0: i32) -> (i32, i32, i32, i32) {
    %c0_i32 = arith.constant 0 : i32
    %c0_i32_0 = arith.constant 0 : i32
    %c0_i32_1 = arith.constant 0 : i32
    %c0_i32_2 = arith.constant 0 : i32
    return %arg0, %c0_i32, %c0_i32_0, %c0_i32_1 : i32, i32, i32, i32
  }
}

module attributes {stable_mosaic.version = 11 : i64} {
  func.func @_invblock_kernel(%arg0: i32, %arg1: memref<1x8x8x12xf32, #tpu.memory_space<vmem>>, %arg2: memref<12x12xf32, #tpu.memory_space<vmem>>, %arg3: memref<9x9x3xf32, #tpu.memory_space<vmem>>, %arg4: memref<1x3xf32, #tpu.memory_space<vmem>>, %arg5: memref<9x3x18xf32, #tpu.memory_space<vmem>>, %arg6: memref<1x18xf32, #tpu.memory_space<vmem>>, %arg7: memref<1x8x8x12xf32, #tpu.memory_space<vmem>>, %arg8: memref<12x10x12xf32, #tpu.memory_space<vmem>>, %arg9: memref<10x10x3xf32, #tpu.memory_space<vmem>>) attributes {dimension_semantics = [#tpu.dimension_semantics<parallel>], iteration_bounds = array<i64: 2>, scalar_prefetch = 0 : i64, scratch_operands = 2 : i64, tpu.core_type = #tpu.core_type<tc>, window_params = [{transform_indices = @transform_0, window_bounds = array<i64: 1, 8, 8, 12>}, {pipeline_mode = #tpu.pipeline_mode<synchronous>, transform_indices = @transform_1, window_bounds = array<i64: 12, 12>}, {pipeline_mode = #tpu.pipeline_mode<synchronous>, transform_indices = @transform_2, window_bounds = array<i64: 9, 9, 3>}, {pipeline_mode = #tpu.pipeline_mode<synchronous>, transform_indices = @transform_3, window_bounds = array<i64: 1, 3>}, {pipeline_mode = #tpu.pipeline_mode<synchronous>, transform_indices = @transform_4, window_bounds = array<i64: 9, 3, 18>}, {pipeline_mode = #tpu.pipeline_mode<synchronous>, transform_indices = @transform_5, window_bounds = array<i64: 1, 18>}, {transform_indices = @transform_6, window_bounds = array<i64: 1, 8, 8, 12>}]} {
    %c0_i32 = arith.constant 0 : i32
    %0 = arith.cmpi eq, %arg0, %c0_i32 : i32
    %1 = arith.extui %0 : i1 to i32
    %c0_i32_0 = arith.constant 0 : i32
    %2 = arith.cmpi ne, %1, %c0_i32_0 : i32
    scf.if %2 {
      %cst_152 = arith.constant 0.000000e+00 : f32
      %166 = vector.broadcast %cst_152 : f32 to vector<12x10x12xf32>
      %c0_153 = arith.constant 0 : index
      %c0_154 = arith.constant 0 : index
      %c0_155 = arith.constant 0 : index
      %167 = vector.load %arg8[%c0_153, %c0_154, %c0_155] : memref<12x10x12xf32, #tpu.memory_space<vmem>>, vector<12x10x12xf32>
      tpu.vector_store %arg8[%c0_153, %c0_154, %c0_155], %166 {strides = array<i32>} : memref<12x10x12xf32, #tpu.memory_space<vmem>>, vector<12x10x12xf32>,
      %cst_156 = arith.constant 0.000000e+00 : f32
      %168 = vector.broadcast %cst_156 : f32 to vector<10x10x3xf32>
      %c0_157 = arith.constant 0 : index
      %c0_158 = arith.constant 0 : index
      %c0_159 = arith.constant 0 : index
      %169 = vector.load %arg9[%c0_157, %c0_158, %c0_159] : memref<10x10x3xf32, #tpu.memory_space<vmem>>, vector<10x10x3xf32>
      tpu.vector_store %arg9[%c0_157, %c0_158, %c0_159], %168 {strides = array<i32>} : memref<10x10x3xf32, #tpu.memory_space<vmem>>, vector<10x10x3xf32>,
    } else {
    }
    %c0 = arith.constant 0 : index
    %c0_1 = arith.constant 0 : index
    %c0_2 = arith.constant 0 : index
    %c0_3 = arith.constant 0 : index
    %3 = vector.load %arg1[%c0, %c0_1, %c0_2, %c0_3] : memref<1x8x8x12xf32, #tpu.memory_space<vmem>>, vector<1x8x8x12xf32>
    %4 = vector.shape_cast %3 : vector<1x8x8x12xf32> to vector<8x8x12xf32>
    %5 = vector.shape_cast %4 : vector<8x8x12xf32> to vector<64x12xf32>
    %c0_4 = arith.constant 0 : index
    %c0_5 = arith.constant 0 : index
    %6 = vector.load %arg2[%c0_4, %c0_5] : memref<12x12xf32, #tpu.memory_space<vmem>>, vector<12x12xf32>
    %cst = arith.constant dense<0.000000e+00> : vector<64x12xf32>
    %7 = tpu.matmul %5, %6, %cst {dimension_numbers = #tpu.dot_dimension_numbers<[1], [0], [0], [1], [0, 0, 1, 1], [], []>} : vector<64x12xf32>, vector<12x12xf32>, vector<64x12xf32> -> vector<64x12xf32>
    %8 = vector.shape_cast %7 : vector<64x12xf32> to vector<8x8x12xf32>
    %c2 = arith.constant 2 : index
    %c1 = arith.constant 1 : index
    %c0_6 = arith.constant 0 : index
    %9 = vector.load %arg8[%c2, %c1, %c0_6] : memref<12x10x12xf32, #tpu.memory_space<vmem>>, vector<8x8x12xf32>
    tpu.vector_store %arg8[%c2, %c1, %c0_6], %8 {strides = array<i32>} : memref<12x10x12xf32, #tpu.memory_space<vmem>>, vector<8x8x12xf32>,
    %cst_7 = arith.constant 0.000000e+00 : f32
    %10 = vector.broadcast %cst_7 : f32 to vector<80x3xf32>
    %c0_8 = arith.constant 0 : index
    %c0_9 = arith.constant 0 : index
    %11 = vector.load %arg4[%c0_8, %c0_9] : memref<1x3xf32, #tpu.memory_space<vmem>>, vector<1x3xf32>
    %12 = vector.broadcast %11 : vector<1x3xf32> to vector<80x3xf32>
    %13 = arith.addf %10, %12 : vector<80x3xf32>
    %c0_10 = arith.constant 0 : index
    %c0_11 = arith.constant 0 : index
    %c3 = arith.constant 3 : index
    %14 = vector.load %arg8[%c0_10, %c0_11, %c3] : memref<12x10x12xf32, #tpu.memory_space<vmem>>, vector<10x8x9xf32>
    %15 = vector.shape_cast %14 : vector<10x8x9xf32> to vector<80x9xf32>
    %c0_12 = arith.constant 0 : index
    %c0_13 = arith.constant 0 : index
    %c0_14 = arith.constant 0 : index
    %16 = vector.load %arg3[%c0_12, %c0_13, %c0_14] : memref<9x9x3xf32, #tpu.memory_space<vmem>>, vector<1x9x3xf32>
    %17 = vector.shape_cast %16 : vector<1x9x3xf32> to vector<9x3xf32>
    %cst_15 = arith.constant dense<0.000000e+00> : vector<80x3xf32>
    %18 = tpu.matmul %15, %17, %cst_15 {dimension_numbers = #tpu.dot_dimension_numbers<[1], [0], [0], [1], [0, 0, 1, 1], [], []>} : vector<80x9xf32>, vector<9x3xf32>, vector<80x3xf32> -> vector<80x3xf32>
    %19 = arith.addf %13, %18 : vector<80x3xf32>
    %c0_16 = arith.constant 0 : index
    %c1_17 = arith.constant 1 : index
    %c3_18 = arith.constant 3 : index
    %20 = vector.load %arg8[%c0_16, %c1_17, %c3_18] : memref<12x10x12xf32, #tpu.memory_space<vmem>>, vector<10x8x9xf32>
    %21 = vector.shape_cast %20 : vector<10x8x9xf32> to vector<80x9xf32>
    %c1_19 = arith.constant 1 : index
    %c0_20 = arith.constant 0 : index
    %c0_21 = arith.constant 0 : index
    %22 = vector.load %arg3[%c1_19, %c0_20, %c0_21] : memref<9x9x3xf32, #tpu.memory_space<vmem>>, vector<1x9x3xf32>
    %23 = vector.shape_cast %22 : vector<1x9x3xf32> to vector<9x3xf32>
    %cst_22 = arith.constant dense<0.000000e+00> : vector<80x3xf32>
    %24 = tpu.matmul %21, %23, %cst_22 {dimension_numbers = #tpu.dot_dimension_numbers<[1], [0], [0], [1], [0, 0, 1, 1], [], []>} : vector<80x9xf32>, vector<9x3xf32>, vector<80x3xf32> -> vector<80x3xf32>
    %25 = arith.addf %19, %24 : vector<80x3xf32>
    %c0_23 = arith.constant 0 : index
    %c2_24 = arith.constant 2 : index
    %c3_25 = arith.constant 3 : index
    %26 = vector.load %arg8[%c0_23, %c2_24, %c3_25] : memref<12x10x12xf32, #tpu.memory_space<vmem>>, vector<10x8x9xf32>
    %27 = vector.shape_cast %26 : vector<10x8x9xf32> to vector<80x9xf32>
    %c2_26 = arith.constant 2 : index
    %c0_27 = arith.constant 0 : index
    %c0_28 = arith.constant 0 : index
    %28 = vector.load %arg3[%c2_26, %c0_27, %c0_28] : memref<9x9x3xf32, #tpu.memory_space<vmem>>, vector<1x9x3xf32>
    %29 = vector.shape_cast %28 : vector<1x9x3xf32> to vector<9x3xf32>
    %cst_29 = arith.constant dense<0.000000e+00> : vector<80x3xf32>
    %30 = tpu.matmul %27, %29, %cst_29 {dimension_numbers = #tpu.dot_dimension_numbers<[1], [0], [0], [1], [0, 0, 1, 1], [], []>} : vector<80x9xf32>, vector<9x3xf32>, vector<80x3xf32> -> vector<80x3xf32>
    %31 = arith.addf %25, %30 : vector<80x3xf32>
    %c1_30 = arith.constant 1 : index
    %c0_31 = arith.constant 0 : index
    %c3_32 = arith.constant 3 : index
    %32 = vector.load %arg8[%c1_30, %c0_31, %c3_32] : memref<12x10x12xf32, #tpu.memory_space<vmem>>, vector<10x8x9xf32>
    %33 = vector.shape_cast %32 : vector<10x8x9xf32> to vector<80x9xf32>
    %c3_33 = arith.constant 3 : index
    %c0_34 = arith.constant 0 : index
    %c0_35 = arith.constant 0 : index
    %34 = vector.load %arg3[%c3_33, %c0_34, %c0_35] : memref<9x9x3xf32, #tpu.memory_space<vmem>>, vector<1x9x3xf32>
    %35 = vector.shape_cast %34 : vector<1x9x3xf32> to vector<9x3xf32>
    %cst_36 = arith.constant dense<0.000000e+00> : vector<80x3xf32>
    %36 = tpu.matmul %33, %35, %cst_36 {dimension_numbers = #tpu.dot_dimension_numbers<[1], [0], [0], [1], [0, 0, 1, 1], [], []>} : vector<80x9xf32>, vector<9x3xf32>, vector<80x3xf32> -> vector<80x3xf32>
    %37 = arith.addf %31, %36 : vector<80x3xf32>
    %c1_37 = arith.constant 1 : index
    %c1_38 = arith.constant 1 : index
    %c3_39 = arith.constant 3 : index
    %38 = vector.load %arg8[%c1_37, %c1_38, %c3_39] : memref<12x10x12xf32, #tpu.memory_space<vmem>>, vector<10x8x9xf32>
    %39 = vector.shape_cast %38 : vector<10x8x9xf32> to vector<80x9xf32>
    %c4 = arith.constant 4 : index
    %c0_40 = arith.constant 0 : index
    %c0_41 = arith.constant 0 : index
    %40 = vector.load %arg3[%c4, %c0_40, %c0_41] : memref<9x9x3xf32, #tpu.memory_space<vmem>>, vector<1x9x3xf32>
    %41 = vector.shape_cast %40 : vector<1x9x3xf32> to vector<9x3xf32>
    %cst_42 = arith.constant dense<0.000000e+00> : vector<80x3xf32>
    %42 = tpu.matmul %39, %41, %cst_42 {dimension_numbers = #tpu.dot_dimension_numbers<[1], [0], [0], [1], [0, 0, 1, 1], [], []>} : vector<80x9xf32>, vector<9x3xf32>, vector<80x3xf32> -> vector<80x3xf32>
    %43 = arith.addf %37, %42 : vector<80x3xf32>
    %c1_43 = arith.constant 1 : index
    %c2_44 = arith.constant 2 : index
    %c3_45 = arith.constant 3 : index
    %44 = vector.load %arg8[%c1_43, %c2_44, %c3_45] : memref<12x10x12xf32, #tpu.memory_space<vmem>>, vector<10x8x9xf32>
    %45 = vector.shape_cast %44 : vector<10x8x9xf32> to vector<80x9xf32>
    %c5 = arith.constant 5 : index
    %c0_46 = arith.constant 0 : index
    %c0_47 = arith.constant 0 : index
    %46 = vector.load %arg3[%c5, %c0_46, %c0_47] : memref<9x9x3xf32, #tpu.memory_space<vmem>>, vector<1x9x3xf32>
    %47 = vector.shape_cast %46 : vector<1x9x3xf32> to vector<9x3xf32>
    %cst_48 = arith.constant dense<0.000000e+00> : vector<80x3xf32>
    %48 = tpu.matmul %45, %47, %cst_48 {dimension_numbers = #tpu.dot_dimension_numbers<[1], [0], [0], [1], [0, 0, 1, 1], [], []>} : vector<80x9xf32>, vector<9x3xf32>, vector<80x3xf32> -> vector<80x3xf32>
    %49 = arith.addf %43, %48 : vector<80x3xf32>
    %c2_49 = arith.constant 2 : index
    %c0_50 = arith.constant 0 : index
    %c3_51 = arith.constant 3 : index
    %50 = vector.load %arg8[%c2_49, %c0_50, %c3_51] : memref<12x10x12xf32, #tpu.memory_space<vmem>>, vector<10x8x9xf32>
    %51 = vector.shape_cast %50 : vector<10x8x9xf32> to vector<80x9xf32>
    %c6 = arith.constant 6 : index
    %c0_52 = arith.constant 0 : index
    %c0_53 = arith.constant 0 : index
    %52 = vector.load %arg3[%c6, %c0_52, %c0_53] : memref<9x9x3xf32, #tpu.memory_space<vmem>>, vector<1x9x3xf32>
    %53 = vector.shape_cast %52 : vector<1x9x3xf32> to vector<9x3xf32>
    %cst_54 = arith.constant dense<0.000000e+00> : vector<80x3xf32>
    %54 = tpu.matmul %51, %53, %cst_54 {dimension_numbers = #tpu.dot_dimension_numbers<[1], [0], [0], [1], [0, 0, 1, 1], [], []>} : vector<80x9xf32>, vector<9x3xf32>, vector<80x3xf32> -> vector<80x3xf32>
    %55 = arith.addf %49, %54 : vector<80x3xf32>
    %c2_55 = arith.constant 2 : index
    %c1_56 = arith.constant 1 : index
    %c3_57 = arith.constant 3 : index
    %56 = vector.load %arg8[%c2_55, %c1_56, %c3_57] : memref<12x10x12xf32, #tpu.memory_space<vmem>>, vector<10x8x9xf32>
    %57 = vector.shape_cast %56 : vector<10x8x9xf32> to vector<80x9xf32>
    %c7 = arith.constant 7 : index
    %c0_58 = arith.constant 0 : index
    %c0_59 = arith.constant 0 : index
    %58 = vector.load %arg3[%c7, %c0_58, %c0_59] : memref<9x9x3xf32, #tpu.memory_space<vmem>>, vector<1x9x3xf32>
    %59 = vector.shape_cast %58 : vector<1x9x3xf32> to vector<9x3xf32>
    %cst_60 = arith.constant dense<0.000000e+00> : vector<80x3xf32>
    %60 = tpu.matmul %57, %59, %cst_60 {dimension_numbers = #tpu.dot_dimension_numbers<[1], [0], [0], [1], [0, 0, 1, 1], [], []>} : vector<80x9xf32>, vector<9x3xf32>, vector<80x3xf32> -> vector<80x3xf32>
    %61 = arith.addf %55, %60 : vector<80x3xf32>
    %c2_61 = arith.constant 2 : index
    %c2_62 = arith.constant 2 : index
    %c3_63 = arith.constant 3 : index
    %62 = vector.load %arg8[%c2_61, %c2_62, %c3_63] : memref<12x10x12xf32, #tpu.memory_space<vmem>>, vector<10x8x9xf32>
    %63 = vector.shape_cast %62 : vector<10x8x9xf32> to vector<80x9xf32>
    %c8 = arith.constant 8 : index
    %c0_64 = arith.constant 0 : index
    %c0_65 = arith.constant 0 : index
    %64 = vector.load %arg3[%c8, %c0_64, %c0_65] : memref<9x9x3xf32, #tpu.memory_space<vmem>>, vector<1x9x3xf32>
    %65 = vector.shape_cast %64 : vector<1x9x3xf32> to vector<9x3xf32>
    %cst_66 = arith.constant dense<0.000000e+00> : vector<80x3xf32>
    %66 = tpu.matmul %63, %65, %cst_66 {dimension_numbers = #tpu.dot_dimension_numbers<[1], [0], [0], [1], [0, 0, 1, 1], [], []>} : vector<80x9xf32>, vector<9x3xf32>, vector<80x3xf32> -> vector<80x3xf32>
    %67 = arith.addf %61, %66 : vector<80x3xf32>
    %c1_67 = arith.constant 1 : index
    %c1_68 = arith.constant 1 : index
    %c0_69 = arith.constant 0 : index
    %68 = vector.load %arg8[%c1_67, %c1_68, %c0_69] : memref<12x10x12xf32, #tpu.memory_space<vmem>>, vector<10x8x3xf32>
    %69 = vector.shape_cast %68 : vector<10x8x3xf32> to vector<80x3xf32>
    %70 = arith.addf %69, %67 : vector<80x3xf32>
    %71 = vector.shape_cast %70 : vector<80x3xf32> to vector<10x8x3xf32>
    %72 = tpu.iota {dimensions = array<i32: 0>} : vector<10x8x3xi32>
    %c-1_i32 = arith.constant -1 : i32
    %73 = vector.broadcast %c-1_i32 : i32 to vector<10x8x3xi32>
    %74 = arith.addi %73, %72 : vector<10x8x3xi32>
    %c0_i32_70 = arith.constant 0 : i32
    %75 = vector.broadcast %c0_i32_70 : i32 to vector<10x8x3xi32>
    %76 = arith.cmpi sge, %74, %75 : vector<10x8x3xi32>
    %c8_i32 = arith.constant 8 : i32
    %77 = vector.broadcast %c8_i32 : i32 to vector<10x8x3xi32>
    %78 = arith.cmpi slt, %74, %77 : vector<10x8x3xi32>
    %79 = arith.andi %76, %78 : vector<10x8x3xi1>
    %cst_71 = arith.constant 0.000000e+00 : f32
    %80 = vector.broadcast %cst_71 : f32 to vector<10x8x3xf32>
    %81 = arith.select %79, %71, %80 : vector<10x8x3xi1>, vector<10x8x3xf32>
    %c0_72 = arith.constant 0 : index
    %c1_73 = arith.constant 1 : index
    %c0_74 = arith.constant 0 : index
    %82 = vector.load %arg9[%c0_72, %c1_73, %c0_74] : memref<10x10x3xf32, #tpu.memory_space<vmem>>, vector<10x8x3xf32>
    tpu.vector_store %arg9[%c0_72, %c1_73, %c0_74], %81 {strides = array<i32>} : memref<10x10x3xf32, #tpu.memory_space<vmem>>, vector<10x8x3xf32>,
    %cst_75 = arith.constant 0.000000e+00 : f32
    %83 = vector.broadcast %cst_75 : f32 to vector<64x18xf32>
    %c0_76 = arith.constant 0 : index
    %c0_77 = arith.constant 0 : index
    %84 = vector.load %arg6[%c0_76, %c0_77] : memref<1x18xf32, #tpu.memory_space<vmem>>, vector<1x18xf32>
    %85 = vector.broadcast %84 : vector<1x18xf32> to vector<64x18xf32>
    %86 = arith.addf %83, %85 : vector<64x18xf32>
    %c0_78 = arith.constant 0 : index
    %c0_79 = arith.constant 0 : index
    %c0_80 = arith.constant 0 : index
    %87 = vector.load %arg9[%c0_78, %c0_79, %c0_80] : memref<10x10x3xf32, #tpu.memory_space<vmem>>, vector<8x8x3xf32>
    %88 = vector.shape_cast %87 : vector<8x8x3xf32> to vector<64x3xf32>
    %c0_81 = arith.constant 0 : index
    %c0_82 = arith.constant 0 : index
    %c0_83 = arith.constant 0 : index
    %89 = vector.load %arg5[%c0_81, %c0_82, %c0_83] : memref<9x3x18xf32, #tpu.memory_space<vmem>>, vector<1x3x18xf32>
    %90 = vector.shape_cast %89 : vector<1x3x18xf32> to vector<3x18xf32>
    %cst_84 = arith.constant dense<0.000000e+00> : vector<64x18xf32>
    %91 = tpu.matmul %88, %90, %cst_84 {dimension_numbers = #tpu.dot_dimension_numbers<[1], [0], [0], [1], [0, 0, 1, 1], [], []>} : vector<64x3xf32>, vector<3x18xf32>, vector<64x18xf32> -> vector<64x18xf32>
    %92 = arith.addf %86, %91 : vector<64x18xf32>
    %c0_85 = arith.constant 0 : index
    %c1_86 = arith.constant 1 : index
    %c0_87 = arith.constant 0 : index
    %93 = vector.load %arg9[%c0_85, %c1_86, %c0_87] : memref<10x10x3xf32, #tpu.memory_space<vmem>>, vector<8x8x3xf32>
    %94 = vector.shape_cast %93 : vector<8x8x3xf32> to vector<64x3xf32>
    %c1_88 = arith.constant 1 : index
    %c0_89 = arith.constant 0 : index
    %c0_90 = arith.constant 0 : index
    %95 = vector.load %arg5[%c1_88, %c0_89, %c0_90] : memref<9x3x18xf32, #tpu.memory_space<vmem>>, vector<1x3x18xf32>
    %96 = vector.shape_cast %95 : vector<1x3x18xf32> to vector<3x18xf32>
    %cst_91 = arith.constant dense<0.000000e+00> : vector<64x18xf32>
    %97 = tpu.matmul %94, %96, %cst_91 {dimension_numbers = #tpu.dot_dimension_numbers<[1], [0], [0], [1], [0, 0, 1, 1], [], []>} : vector<64x3xf32>, vector<3x18xf32>, vector<64x18xf32> -> vector<64x18xf32>
    %98 = arith.addf %92, %97 : vector<64x18xf32>
    %c0_92 = arith.constant 0 : index
    %c2_93 = arith.constant 2 : index
    %c0_94 = arith.constant 0 : index
    %99 = vector.load %arg9[%c0_92, %c2_93, %c0_94] : memref<10x10x3xf32, #tpu.memory_space<vmem>>, vector<8x8x3xf32>
    %100 = vector.shape_cast %99 : vector<8x8x3xf32> to vector<64x3xf32>
    %c2_95 = arith.constant 2 : index
    %c0_96 = arith.constant 0 : index
    %c0_97 = arith.constant 0 : index
    %101 = vector.load %arg5[%c2_95, %c0_96, %c0_97] : memref<9x3x18xf32, #tpu.memory_space<vmem>>, vector<1x3x18xf32>
    %102 = vector.shape_cast %101 : vector<1x3x18xf32> to vector<3x18xf32>
    %cst_98 = arith.constant dense<0.000000e+00> : vector<64x18xf32>
    %103 = tpu.matmul %100, %102, %cst_98 {dimension_numbers = #tpu.dot_dimension_numbers<[1], [0], [0], [1], [0, 0, 1, 1], [], []>} : vector<64x3xf32>, vector<3x18xf32>, vector<64x18xf32> -> vector<64x18xf32>
    %104 = arith.addf %98, %103 : vector<64x18xf32>
    %c1_99 = arith.constant 1 : index
    %c0_100 = arith.constant 0 : index
    %c0_101 = arith.constant 0 : index
    %105 = vector.load %arg9[%c1_99, %c0_100, %c0_101] : memref<10x10x3xf32, #tpu.memory_space<vmem>>, vector<8x8x3xf32>
    %106 = vector.shape_cast %105 : vector<8x8x3xf32> to vector<64x3xf32>
    %c3_102 = arith.constant 3 : index
    %c0_103 = arith.constant 0 : index
    %c0_104 = arith.constant 0 : index
    %107 = vector.load %arg5[%c3_102, %c0_103, %c0_104] : memref<9x3x18xf32, #tpu.memory_space<vmem>>, vector<1x3x18xf32>
    %108 = vector.shape_cast %107 : vector<1x3x18xf32> to vector<3x18xf32>
    %cst_105 = arith.constant dense<0.000000e+00> : vector<64x18xf32>
    %109 = tpu.matmul %106, %108, %cst_105 {dimension_numbers = #tpu.dot_dimension_numbers<[1], [0], [0], [1], [0, 0, 1, 1], [], []>} : vector<64x3xf32>, vector<3x18xf32>, vector<64x18xf32> -> vector<64x18xf32>
    %110 = arith.addf %104, %109 : vector<64x18xf32>
    %c1_106 = arith.constant 1 : index
    %c1_107 = arith.constant 1 : index
    %c0_108 = arith.constant 0 : index
    %111 = vector.load %arg9[%c1_106, %c1_107, %c0_108] : memref<10x10x3xf32, #tpu.memory_space<vmem>>, vector<8x8x3xf32>
    %112 = vector.shape_cast %111 : vector<8x8x3xf32> to vector<64x3xf32>
    %c4_109 = arith.constant 4 : index
    %c0_110 = arith.constant 0 : index
    %c0_111 = arith.constant 0 : index
    %113 = vector.load %arg5[%c4_109, %c0_110, %c0_111] : memref<9x3x18xf32, #tpu.memory_space<vmem>>, vector<1x3x18xf32>
    %114 = vector.shape_cast %113 : vector<1x3x18xf32> to vector<3x18xf32>
    %cst_112 = arith.constant dense<0.000000e+00> : vector<64x18xf32>
    %115 = tpu.matmul %112, %114, %cst_112 {dimension_numbers = #tpu.dot_dimension_numbers<[1], [0], [0], [1], [0, 0, 1, 1], [], []>} : vector<64x3xf32>, vector<3x18xf32>, vector<64x18xf32> -> vector<64x18xf32>
    %116 = arith.addf %110, %115 : vector<64x18xf32>
    %c1_113 = arith.constant 1 : index
    %c2_114 = arith.constant 2 : index
    %c0_115 = arith.constant 0 : index
    %117 = vector.load %arg9[%c1_113, %c2_114, %c0_115] : memref<10x10x3xf32, #tpu.memory_space<vmem>>, vector<8x8x3xf32>
    %118 = vector.shape_cast %117 : vector<8x8x3xf32> to vector<64x3xf32>
    %c5_116 = arith.constant 5 : index
    %c0_117 = arith.constant 0 : index
    %c0_118 = arith.constant 0 : index
    %119 = vector.load %arg5[%c5_116, %c0_117, %c0_118] : memref<9x3x18xf32, #tpu.memory_space<vmem>>, vector<1x3x18xf32>
    %120 = vector.shape_cast %119 : vector<1x3x18xf32> to vector<3x18xf32>
    %cst_119 = arith.constant dense<0.000000e+00> : vector<64x18xf32>
    %121 = tpu.matmul %118, %120, %cst_119 {dimension_numbers = #tpu.dot_dimension_numbers<[1], [0], [0], [1], [0, 0, 1, 1], [], []>} : vector<64x3xf32>, vector<3x18xf32>, vector<64x18xf32> -> vector<64x18xf32>
    %122 = arith.addf %116, %121 : vector<64x18xf32>
    %c2_120 = arith.constant 2 : index
    %c0_121 = arith.constant 0 : index
    %c0_122 = arith.constant 0 : index
    %123 = vector.load %arg9[%c2_120, %c0_121, %c0_122] : memref<10x10x3xf32, #tpu.memory_space<vmem>>, vector<8x8x3xf32>
    %124 = vector.shape_cast %123 : vector<8x8x3xf32> to vector<64x3xf32>
    %c6_123 = arith.constant 6 : index
    %c0_124 = arith.constant 0 : index
    %c0_125 = arith.constant 0 : index
    %125 = vector.load %arg5[%c6_123, %c0_124, %c0_125] : memref<9x3x18xf32, #tpu.memory_space<vmem>>, vector<1x3x18xf32>
    %126 = vector.shape_cast %125 : vector<1x3x18xf32> to vector<3x18xf32>
    %cst_126 = arith.constant dense<0.000000e+00> : vector<64x18xf32>
    %127 = tpu.matmul %124, %126, %cst_126 {dimension_numbers = #tpu.dot_dimension_numbers<[1], [0], [0], [1], [0, 0, 1, 1], [], []>} : vector<64x3xf32>, vector<3x18xf32>, vector<64x18xf32> -> vector<64x18xf32>
    %128 = arith.addf %122, %127 : vector<64x18xf32>
    %c2_127 = arith.constant 2 : index
    %c1_128 = arith.constant 1 : index
    %c0_129 = arith.constant 0 : index
    %129 = vector.load %arg9[%c2_127, %c1_128, %c0_129] : memref<10x10x3xf32, #tpu.memory_space<vmem>>, vector<8x8x3xf32>
    %130 = vector.shape_cast %129 : vector<8x8x3xf32> to vector<64x3xf32>
    %c7_130 = arith.constant 7 : index
    %c0_131 = arith.constant 0 : index
    %c0_132 = arith.constant 0 : index
    %131 = vector.load %arg5[%c7_130, %c0_131, %c0_132] : memref<9x3x18xf32, #tpu.memory_space<vmem>>, vector<1x3x18xf32>
    %132 = vector.shape_cast %131 : vector<1x3x18xf32> to vector<3x18xf32>
    %cst_133 = arith.constant dense<0.000000e+00> : vector<64x18xf32>
    %133 = tpu.matmul %130, %132, %cst_133 {dimension_numbers = #tpu.dot_dimension_numbers<[1], [0], [0], [1], [0, 0, 1, 1], [], []>} : vector<64x3xf32>, vector<3x18xf32>, vector<64x18xf32> -> vector<64x18xf32>
    %134 = arith.addf %128, %133 : vector<64x18xf32>
    %c2_134 = arith.constant 2 : index
    %c2_135 = arith.constant 2 : index
    %c0_136 = arith.constant 0 : index
    %135 = vector.load %arg9[%c2_134, %c2_135, %c0_136] : memref<10x10x3xf32, #tpu.memory_space<vmem>>, vector<8x8x3xf32>
    %136 = vector.shape_cast %135 : vector<8x8x3xf32> to vector<64x3xf32>
    %c8_137 = arith.constant 8 : index
    %c0_138 = arith.constant 0 : index
    %c0_139 = arith.constant 0 : index
    %137 = vector.load %arg5[%c8_137, %c0_138, %c0_139] : memref<9x3x18xf32, #tpu.memory_space<vmem>>, vector<1x3x18xf32>
    %138 = vector.shape_cast %137 : vector<1x3x18xf32> to vector<3x18xf32>
    %cst_140 = arith.constant dense<0.000000e+00> : vector<64x18xf32>
    %139 = tpu.matmul %136, %138, %cst_140 {dimension_numbers = #tpu.dot_dimension_numbers<[1], [0], [0], [1], [0, 0, 1, 1], [], []>} : vector<64x3xf32>, vector<3x18xf32>, vector<64x18xf32> -> vector<64x18xf32>
    %140 = arith.addf %134, %139 : vector<64x18xf32>
    %141 = vector.extract_strided_slice %140 {offsets = [0, 0], sizes = [64, 9], strides = [1, 1]} : vector<64x18xf32> to vector<64x9xf32>
    %142 = arith.negf %141 : vector<64x9xf32>
    %143 = math.exp %142 : vector<64x9xf32>
    %cst_141 = arith.constant 1.000000e+00 : f32
    %144 = vector.broadcast %cst_141 : f32 to vector<64x9xf32>
    %145 = arith.addf %144, %143 : vector<64x9xf32>
    %146 = arith.divf %144, %145 : vector<64x9xf32>
    %cst_142 = arith.constant 2.000000e+00 : f32
    %147 = vector.broadcast %cst_142 : f32 to vector<64x9xf32>
    %148 = arith.mulf %146, %147 : vector<64x9xf32>
    %cst_143 = arith.constant 1.000000e+00 : f32
    %149 = vector.broadcast %cst_143 : f32 to vector<64x9xf32>
    %150 = arith.subf %148, %149 : vector<64x9xf32>
    %cst_144 = arith.constant 1.000000e+00 : f32
    %151 = vector.broadcast %cst_144 : f32 to vector<64x9xf32>
    %152 = arith.mulf %151, %150 : vector<64x9xf32>
    %153 = vector.extract_strided_slice %140 {offsets = [0, 9], sizes = [64, 9], strides = [1, 1]} : vector<64x18xf32> to vector<64x9xf32>
    %c2_145 = arith.constant 2 : index
    %c1_146 = arith.constant 1 : index
    %c3_147 = arith.constant 3 : index
    %154 = vector.load %arg8[%c2_145, %c1_146, %c3_147] : memref<12x10x12xf32, #tpu.memory_space<vmem>>, vector<8x8x9xf32>
    %155 = vector.shape_cast %154 : vector<8x8x9xf32> to vector<64x9xf32>
    %156 = math.exp %152 : vector<64x9xf32>
    %157 = arith.mulf %155, %156 : vector<64x9xf32>
    %158 = arith.addf %157, %153 : vector<64x9xf32>
    %159 = vector.extract_strided_slice %81 {offsets = [1, 0, 0], sizes = [8, 8, 3], strides = [1, 1, 1]} : vector<10x8x3xf32> to vector<8x8x3xf32>
    %160 = vector.shape_cast %159 : vector<8x8x3xf32> to vector<64x3xf32>
    %161 = tpu.concatenate %160, %158 in 1 : vector<64x3xf32>, vector<64x9xf32> -> vector<64x12xf32>
    %162 = vector.shape_cast %161 : vector<64x12xf32> to vector<8x8x12xf32>
    %c0_148 = arith.constant 0 : index
    %c0_149 = arith.constant 0 : index
    %c0_150 = arith.constant 0 : index
    %c0_151 = arith.constant 0 : index
    %163 = vector.load %arg7[%c0_148, %c0_149, %c0_150, %c0_151] : memref<1x8x8x12xf32, #tpu.memory_space<vmem>>, vector<1x8x8x12xf32>
    %164 = vector.shape_cast %163 : vector<1x8x8x12xf32> to vector<8x8x12xf32>
    %165 = vector.shape_cast %162 : vector<8x8x12xf32> to vector<1x8x8x12xf32>
    tpu.vector_store %arg7[%c0_148, %c0_149, %c0_150, %c0_151], %165 {strides = array<i32>} : memref<1x8x8x12xf32, #tpu.memory_space<vmem>>, vector<1x8x8x12xf32>,
    return
  }
  func.func @transform_0(%arg0: i32) -> (i32, i32, i32, i32) {
    %c0_i32 = arith.constant 0 : i32
    %c0_i32_0 = arith.constant 0 : i32
    %c0_i32_1 = arith.constant 0 : i32
    %c0_i32_2 = arith.constant 0 : i32
    return %arg0, %c0_i32, %c0_i32_0, %c0_i32_1 : i32, i32, i32, i32
  }
  func.func @transform_1(%arg0: i32) -> (i32, i32) {
    %c0_i32 = arith.constant 0 : i32
    %c0_i32_0 = arith.constant 0 : i32
    %c0_i32_1 = arith.constant 0 : i32
    return %c0_i32, %c0_i32_0 : i32, i32
  }
  func.func @transform_2(%arg0: i32) -> (i32, i32, i32) {
    %c0_i32 = arith.constant 0 : i32
    %c0_i32_0 = arith.constant 0 : i32
    %c0_i32_1 = arith.constant 0 : i32
    %c0_i32_2 = arith.constant 0 : i32
    return %c0_i32, %c0_i32_0, %c0_i32_1 : i32, i32, i32
  }
  func.func @transform_3(%arg0: i32) -> (i32, i32) {
    %c0_i32 = arith.constant 0 : i32
    %c0_i32_0 = arith.constant 0 : i32
    %c0_i32_1 = arith.constant 0 : i32
    return %c0_i32, %c0_i32_0 : i32, i32
  }
  func.func @transform_4(%arg0: i32) -> (i32, i32, i32) {
    %c0_i32 = arith.constant 0 : i32
    %c0_i32_0 = arith.constant 0 : i32
    %c0_i32_1 = arith.constant 0 : i32
    %c0_i32_2 = arith.constant 0 : i32
    return %c0_i32, %c0_i32_0, %c0_i32_1 : i32, i32, i32
  }
  func.func @transform_5(%arg0: i32) -> (i32, i32) {
    %c0_i32 = arith.constant 0 : i32
    %c0_i32_0 = arith.constant 0 : i32
    %c0_i32_1 = arith.constant 0 : i32
    return %c0_i32, %c0_i32_0 : i32, i32
  }
  func.func @transform_6(%arg0: i32) -> (i32, i32, i32, i32) {
    %c0_i32 = arith.constant 0 : i32
    %c0_i32_0 = arith.constant 0 : i32
    %c0_i32_1 = arith.constant 0 : i32
    %c0_i32_2 = arith.constant 0 : i32
    return %arg0, %c0_i32, %c0_i32_0, %c0_i32_1 : i32, i32, i32, i32
  }
}

</mosaic_0001>

<llo_original>
// kernel: _lambda_.3
$region0: #{_lambda_.3}
  #allocation0 [shape = 'u32[]', space=smem, size = 0x4, offset = 0x4, fixed_abs, tag = 'smem constant byte address 0x4 - core index']
  #allocation1 [shape = 'u32[144,128]{1,0:T(1,128)}', space=vmem, size = 0x12000, scoped, tag = 'internal scratch']
  #allocation2 [shape = 'f32[12,10,12]{2,1,0:T(8,128)}', space=vmem, size = 0x18000, scoped, tag = 'scratch operand']
  #allocation3 [shape = 'f32[10,10,3]{2,1,0:T(8,128)}', space=vmem, size = 0x14000, scoped, tag = 'scratch operand']
  %s0 = inlined_call_operand.vmem [shape: f32[2,8,8,12], index: 0, kind: input, shape index: {}]
  %s1 = inlined_call_operand.vmem [shape: f32[9,9,3], index: 1, kind: input, shape index: {}]
  %s2 = inlined_call_operand.vmem [shape: f32[1,3], index: 2, kind: input, shape index: {}]
  %s3 = inlined_call_operand.vmem [shape: f32[9,3,18], index: 3, kind: input, shape index: {}]
  %s4 = inlined_call_operand.vmem [shape: f32[1,18], index: 4, kind: input, shape index: {}]
  %s5 = inlined_call_operand.hbm [shape: f32[2,8,8,12], index: 5, kind: output, shape index: {}]
  %s6 = sld [smem:[#allocation0]]
  $region57: #{_lambda_.3} parent=0
    _
  %s8 = ssub.s32 1, %s6
  %s9 = scalar_select 0, %s8, %s6
  $region1: #{_lambda_.3} parent=0
    #allocation4 [shape = 'u8[65536]{0}', space=vmem, size = 0x10000, scoped, tag = 'output window, operand 0']
    #allocation5 [shape = 's32[2]{0}', space=sflag, size = 0x8, scoped, tag = 'scoped memory for _lambda_.3']
    %10 = vsyncpa [#allocation5], 0
    %s11 = scalar_lea.sflag [#allocation5], 1
    %12 = vsyncpa %s11, 0
    loop: start=0, step=1, limit=4
    $region2: #{_lambda_.3} parent=1 // loop_pre_header
      _
    $region3: #{_lambda_.3} parent=1 // loop_header
      %s14 = sphi 0, %s18
      %p15 = scmp.ge.s32.totalorder %s14, 4
      %s24 = sphi 0, %s26
      %s27 = sphi 0, %s24
      %s28 = sphi 0, %s27
      %s44 = sphi 0, %s28
      %s48 = sphi 0, %s48
      %s50 = sphi 0, %s48
      %s51 = sphi 0, %s50
      %s65 = sphi 0, %s51
      %s69 = sphi 0, %s69
      %s71 = sphi 0, %s69
      %s72 = sphi 0, %s71
      %s86 = sphi 0, %s72
      %s90 = sphi 0, %s90
      %s92 = sphi 0, %s90
      %s93 = sphi 0, %s92
      %s107 = sphi 0, %s93
      %s111 = sphi 0, %s111
      %s113 = sphi 0, %s111
      %s114 = sphi 0, %s113
      %s128 = sphi 0, %s114
      %s134 = sphi 0, %s136
      %s137 = sphi 0, %s134
      %s138 = sphi 0, %s137
      %s154 = sphi 0, %s138
    $region4: #{_lambda_.3} parent=1 // loop_header_branch
      %17 = sbr.rel (%p15) target = $region8
    $region5: #{_lambda_.3} parent=1 // loop_body
      %s19 = ssub.s32 %s14, 1
      %s20 = ssub.s32 %s14, 2
      %s21 = sadd.s32 %s14, 1
      %s22 = ssub.s32 %s14, %s21
      %p23 = scmp.eq.s32.totalorder %s22, 0
      %s25 = sadd.s32 %s24, 1
      %s26 = scalar_select %p23, %s24, %s25
      %p29 = pneg %p23
      %p30 = scmp.eq.s32.totalorder %s14, 1
      %p31 = por %p29, %p30
      %p32 = scmp.ne.s32.totalorder %s24, %s27
      %p33 = scmp.eq.s32.totalorder %s14, 0
      %p34 = por %p32, %p33
      %p35 = scmp.ne.s32.totalorder %s24, %s27
      %p36 = scmp.eq.s32.totalorder %s19, 1
      %p37 = por %p35, %p36
      %p38 = scmp.ne.s32.totalorder %s27, %s28
      %p39 = scmp.eq.s32.totalorder %s19, 0
      %p40 = por %p38, %p39
      %p41 = scmp.ne.s32.totalorder %s27, %s28
      %p42 = scmp.eq.s32.totalorder %s20, 1
      %p43 = por %p41, %p42
      %p45 = scmp.ne.s32.totalorder %s28, %s44
      %p46 = scmp.eq.s32.totalorder %s20, 0
      %p47 = por %p45, %p46
      %s49 = sadd.s32 %s48, 1
      %p52 = scmp.eq.s32.totalorder %s14, 1
      %p53 = scmp.ne.s32.totalorder %s48, %s50
      %p54 = scmp.eq.s32.totalorder %s14, 0
      %p55 = por %p53, %p54
      %p56 = scmp.ne.s32.totalorder %s48, %s50
      %p57 = scmp.eq.s32.totalorder %s19, 1
      %p58 = por %p56, %p57
      %p59 = scmp.ne.s32.totalorder %s50, %s51
      %p60 = scmp.eq.s32.totalorder %s19, 0
      %p61 = por %p59, %p60
      %p62 = scmp.ne.s32.totalorder %s50, %s51
      %p63 = scmp.eq.s32.totalorder %s20, 1
      %p64 = por %p62, %p63
      %p66 = scmp.ne.s32.totalorder %s51, %s65
      %p67 = scmp.eq.s32.totalorder %s20, 0
      %p68 = por %p66, %p67
      %s70 = sadd.s32 %s69, 1
      %p73 = scmp.eq.s32.totalorder %s14, 1
      %p74 = scmp.ne.s32.totalorder %s69, %s71
      %p75 = scmp.eq.s32.totalorder %s14, 0
      %p76 = por %p74, %p75
      %p77 = scmp.ne.s32.totalorder %s69, %s71
      %p78 = scmp.eq.s32.totalorder %s19, 1
      %p79 = por %p77, %p78
      %p80 = scmp.ne.s32.totalorder %s71, %s72
      %p81 = scmp.eq.s32.totalorder %s19, 0
      %p82 = por %p80, %p81
      %p83 = scmp.ne.s32.totalorder %s71, %s72
      %p84 = scmp.eq.s32.totalorder %s20, 1
      %p85 = por %p83, %p84
      %p87 = scmp.ne.s32.totalorder %s72, %s86
      %p88 = scmp.eq.s32.totalorder %s20, 0
      %p89 = por %p87, %p88
      %s91 = sadd.s32 %s90, 1
      %p94 = scmp.eq.s32.totalorder %s14, 1
      %p95 = scmp.ne.s32.totalorder %s90, %s92
      %p96 = scmp.eq.s32.totalorder %s14, 0
      %p97 = por %p95, %p96
      %p98 = scmp.ne.s32.totalorder %s90, %s92
      %p99 = scmp.eq.s32.totalorder %s19, 1
      %p100 = por %p98, %p99
      %p101 = scmp.ne.s32.totalorder %s92, %s93
      %p102 = scmp.eq.s32.totalorder %s19, 0
      %p103 = por %p101, %p102
      %p104 = scmp.ne.s32.totalorder %s92, %s93
      %p105 = scmp.eq.s32.totalorder %s20, 1
      %p106 = por %p104, %p105
      %p108 = scmp.ne.s32.totalorder %s93, %s107
      %p109 = scmp.eq.s32.totalorder %s20, 0
      %p110 = por %p108, %p109
      %s112 = sadd.s32 %s111, 1
      %p115 = scmp.eq.s32.totalorder %s14, 1
      %p116 = scmp.ne.s32.totalorder %s111, %s113
      %p117 = scmp.eq.s32.totalorder %s14, 0
      %p118 = por %p116, %p117
      %p119 = scmp.ne.s32.totalorder %s111, %s113
      %p120 = scmp.eq.s32.totalorder %s19, 1
      %p121 = por %p119, %p120
      %p122 = scmp.ne.s32.totalorder %s113, %s114
      %p123 = scmp.eq.s32.totalorder %s19, 0
      %p124 = por %p122, %p123
      %p125 = scmp.ne.s32.totalorder %s113, %s114
      %p126 = scmp.eq.s32.totalorder %s20, 1
      %p127 = por %p125, %p126
      %p129 = scmp.ne.s32.totalorder %s114, %s128
      %p130 = scmp.eq.s32.totalorder %s20, 0
      %p131 = por %p129, %p130
      %s132 = ssub.s32 %s14, %s21
      %p133 = scmp.eq.s32.totalorder %s132, 0
      %s135 = sadd.s32 %s134, 1
      %s136 = scalar_select %p133, %s134, %s135
      %p139 = pneg %p133
      %p140 = scmp.eq.s32.totalorder %s14, 1
      %p141 = por %p139, %p140
      %p142 = scmp.ne.s32.totalorder %s134, %s137
      %p143 = scmp.eq.s32.totalorder %s14, 0
      %p144 = por %p142, %p143
      %p145 = scmp.ne.s32.totalorder %s134, %s137
      %p146 = scmp.eq.s32.totalorder %s19, 1
      %p147 = por %p145, %p146
      %p148 = scmp.ne.s32.totalorder %s137, %s138
      %p149 = scmp.eq.s32.totalorder %s19, 0
      %p150 = por %p148, %p149
      %p151 = scmp.ne.s32.totalorder %s137, %s138
      %p152 = scmp.eq.s32.totalorder %s20, 1
      %p153 = por %p151, %p152
      %p155 = scmp.ne.s32.totalorder %s138, %s154
      %p156 = scmp.eq.s32.totalorder %s20, 0
      %p157 = por %p155, %p156
      %p158 = scmp.le.s32.totalorder 1, %s14
      %p159 = scmp.lt.s32.totalorder %s14, 3
      %p160 = pnand %p158, %p159
      %p161 = pneg %p160
      // Predicated region
      $region9: #{_lambda_.3} parent=5 // pred_check
        _
      $region10: #{_lambda_.3} parent=5 // pred_check_branch
        %163 = sbr.rel (%p160) target = $region12
      $region11: #{_lambda_.3} parent=5 // pred_region
        %s164 = ssub.s32 %s14, 1
        // Predicated region
        $region13: #{_lambda_.3} parent=11 // pred_check
          %p165 = pneg %p61
        $region14: #{_lambda_.3} parent=11 // pred_check_branch
          %167 = sbr.rel (%p165) target = $region16
        $region15: #{_lambda_.3} parent=11 // pred_region
          _
        $region16: #{_lambda_.3} parent=11 // pred_fallthru
          _
        // Predicated region
        $region17: #{_lambda_.3} parent=11 // pred_check
          %p168 = pneg %p82
        $region18: #{_lambda_.3} parent=11 // pred_check_branch
          %170 = sbr.rel (%p168) target = $region20
        $region19: #{_lambda_.3} parent=11 // pred_region
          _
        $region20: #{_lambda_.3} parent=11 // pred_fallthru
          _
        // Predicated region
        $region21: #{_lambda_.3} parent=11 // pred_check
          %p171 = pneg %p103
        $region22: #{_lambda_.3} parent=11 // pred_check_branch
          %173 = sbr.rel (%p171) target = $region24
        $region23: #{_lambda_.3} parent=11 // pred_region
          _
        $region24: #{_lambda_.3} parent=11 // pred_fallthru
          _
        // Predicated region
        $region25: #{_lambda_.3} parent=11 // pred_check
          %p174 = pneg %p124
        $region26: #{_lambda_.3} parent=11 // pred_check_branch
          %176 = sbr.rel (%p174) target = $region28
        $region27: #{_lambda_.3} parent=11 // pred_region
          _
        $region28: #{_lambda_.3} parent=11 // pred_fallthru
          _
      $region12: #{_lambda_.3} parent=5 // pred_fallthru
        _
      %p177 = scmp.lt.s32.totalorder %s14, 2
      // Predicated region
      $region29: #{_lambda_.3} parent=5 // pred_check
        %p178 = pneg %p177
      $region30: #{_lambda_.3} parent=5 // pred_check_branch
        %180 = sbr.rel (%p178) target = $region32
      $region31: #{_lambda_.3} parent=5 // pred_region
        // Predicated region
        $region33: #{_lambda_.3} parent=31 // pred_check
          %p181 = pneg %p34
        $region34: #{_lambda_.3} parent=31 // pred_check_branch
          %183 = sbr.rel (%p181) target = $region36
        $region35: #{_lambda_.3} parent=31 // pred_region
          %p184 = scmp.lt.s32.totalorder %s14, 1
          %s185 = scalar_select %p184, %s14, 1
          %s186 = smul.addr %s185, 8
          %s187 = smul.addr %s186, 8
          %s188 = scalar_lea.vmem %s0, %s187
        $region36: #{_lambda_.3} parent=31 // pred_fallthru
          _
      $region32: #{_lambda_.3} parent=5 // pred_fallthru
        _
      %p189 = scmp.le.s32.totalorder 1, %s14
      %p190 = scmp.lt.s32.totalorder %s14, 3
      %p191 = pnand %p189, %p190
      %p192 = pneg %p191
      // Predicated region
      $region37: #{_lambda_.3} parent=5 // pred_check
        _
      $region38: #{_lambda_.3} parent=5 // pred_check_branch
        %194 = sbr.rel (%p191) target = $region40
      $region39: #{_lambda_.3} parent=5 // pred_region
        %s195 = ssub.s32 %s14, 1
        %p196 = scmp.lt.s32.totalorder %s19, 1
        %s197 = scalar_select %p196, %s19, 1
        %s198 = smul.addr %s197, 8
        %s199 = smul.addr %s198, 8
        %s200 = scalar_lea.vmem %s0, %s199
        %p201 = pneg %p40
        %p202 = pneg %p37
        %p203 = pneg %p61
        %p204 = pneg %p58
        %p205 = pneg %p82
        %p206 = pneg %p79
        %p207 = pneg %p103
        %p208 = pneg %p100
        %p209 = pneg %p124
        %p210 = pneg %p121
        %p211 = pneg %p150
        %p212 = pneg %p147
        %s213 = sand.u32 %s137, 1
        %s214 = scalar_lea.sflag [#allocation5], %s213
        %s215 = sand.u32 %s137, 1
        %s216 = smul.addr %s215, 64
        %s217 = scalar_lea.vmem [#allocation4], %s216
        %p218 = scmp.lt.s32.totalorder %s19, 1
        %s219 = scalar_select %p218, %s19, 1
        %s220 = smul.addr %s219, 8
        %s221 = smul.addr %s220, 8
        %s222 = scalar_lea.vmem %s0, %s221
        %p223 = scmp.eq.s32.totalorder %s19, 0
        // Predicated region
        $region41: #{_lambda_.3} parent=39 // pred_check
          %p224 = pneg %p223
        $region42: #{_lambda_.3} parent=39 // pred_check_branch
          %226 = sbr.rel (%p224) target = $region44
        $region43: #{_lambda_.3} parent=39 // pred_region
          %vm227 = vcmask 97280
          %228 = vst.msk [vmem:[#allocation2] sm:$0xff] %vm227, 0.0
          %vm229 = vcmask 91136
          %230 = vst.msk [vmem:[#allocation2 + $0x8] sm:$0x3] %vm229, 0.0
          %231 = vst.msk [vmem:[#allocation2 + $0x10] sm:$0xff] %vm227, 0.0
          %232 = vst.msk [vmem:[#allocation2 + $0x18] sm:$0x3] %vm229, 0.0
          %233 = vst.msk [vmem:[#allocation2 + $0x20] sm:$0xff] %vm227, 0.0
          %234 = vst.msk [vmem:[#allocation2 + $0x28] sm:$0x3] %vm229, 0.0
          %235 = vst.msk [vmem:[#allocation2 + $0x30] sm:$0xff] %vm227, 0.0
          %236 = vst.msk [vmem:[#allocation2 + $0x38] sm:$0x3] %vm229, 0.0
          %237 = vst.msk [vmem:[#allocation2 + $0x40] sm:$0xff] %vm227, 0.0
          %238 = vst.msk [vmem:[#allocation2 + $0x48] sm:$0x3] %vm229, 0.0
          %239 = vst.msk [vmem:[#allocation2 + $0x50] sm:$0xff] %vm227, 0.0
          %240 = vst.msk [vmem:[#allocation2 + $0x58] sm:$0x3] %vm229, 0.0
          %241 = vst.msk [vmem:[#allocation2 + $0x60] sm:$0xff] %vm227, 0.0
          %242 = vst.msk [vmem:[#allocation2 + $0x68] sm:$0x3] %vm229, 0.0
          %243 = vst.msk [vmem:[#allocation2 + $0x70] sm:$0xff] %vm227, 0.0
          %244 = vst.msk [vmem:[#allocation2 + $0x78] sm:$0x3] %vm229, 0.0
          %245 = vst.msk [vmem:[#allocation2 + $0x80] sm:$0xff] %vm227, 0.0
          %246 = vst.msk [vmem:[#allocation2 + $0x88] sm:$0x3] %vm229, 0.0
          %247 = vst.msk [vmem:[#allocation2 + $0x90] sm:$0xff] %vm227, 0.0
          %248 = vst.msk [vmem:[#allocation2 + $0x98] sm:$0x3] %vm229, 0.0
          %249 = vst.msk [vmem:[#allocation2 + $0xa0] sm:$0xff] %vm227, 0.0
          %250 = vst.msk [vmem:[#allocation2 + $0xa8] sm:$0x3] %vm229, 0.0
          %251 = vst.msk [vmem:[#allocation2 + $0xb0] sm:$0xff] %vm227, 0.0
          %252 = vst.msk [vmem:[#allocation2 + $0xb8] sm:$0x3] %vm229, 0.0
          %vm253 = vcmask 23552
          %254 = vst.msk [vmem:[#allocation3] sm:$0xff] %vm253, 0.0
          %vm255 = vcmask 17408
          %256 = vst.msk [vmem:[#allocation3 + $0x8] sm:$0x3] %vm255, 0.0
          %257 = vst.msk [vmem:[#allocation3 + $0x10] sm:$0xff] %vm253, 0.0
          %258 = vst.msk [vmem:[#allocation3 + $0x18] sm:$0x3] %vm255, 0.0
          %259 = vst.msk [vmem:[#allocation3 + $0x20] sm:$0xff] %vm253, 0.0
          %260 = vst.msk [vmem:[#allocation3 + $0x28] sm:$0x3] %vm255, 0.0
          %261 = vst.msk [vmem:[#allocation3 + $0x30] sm:$0xff] %vm253, 0.0
          %262 = vst.msk [vmem:[#allocation3 + $0x38] sm:$0x3] %vm255, 0.0
          %263 = vst.msk [vmem:[#allocation3 + $0x40] sm:$0xff] %vm253, 0.0
          %264 = vst.msk [vmem:[#allocation3 + $0x48] sm:$0x3] %vm255, 0.0
          %265 = vst.msk [vmem:[#allocation3 + $0x50] sm:$0xff] %vm253, 0.0
          %266 = vst.msk [vmem:[#allocation3 + $0x58] sm:$0x3] %vm255, 0.0
          %267 = vst.msk [vmem:[#allocation3 + $0x60] sm:$0xff] %vm253, 0.0
          %268 = vst.msk [vmem:[#allocation3 + $0x68] sm:$0x3] %vm255, 0.0
          %269 = vst.msk [vmem:[#allocation3 + $0x70] sm:$0xff] %vm253, 0.0
          %270 = vst.msk [vmem:[#allocation3 + $0x78] sm:$0x3] %vm255, 0.0
          %271 = vst.msk [vmem:[#allocation3 + $0x80] sm:$0xff] %vm253, 0.0
          %272 = vst.msk [vmem:[#allocation3 + $0x88] sm:$0x3] %vm255, 0.0
          %273 = vst.msk [vmem:[#allocation3 + $0x90] sm:$0xff] %vm253, 0.0
          %274 = vst.msk [vmem:[#allocation3 + $0x98] sm:$0x3] %vm255, 0.0
        $region44: #{_lambda_.3} parent=39 // pred_fallthru
          _
        %v275 = vld [vmem:[%s222] sm:$0xff]
        %v276 = vld [vmem:[%s222 + $0x8] sm:$0xff]
        %v277 = vld [vmem:[%s222 + $0x10] sm:$0xff]
        %v278 = vld [vmem:[%s222 + $0x18] sm:$0xff]
        %v279 = vld [vmem:[%s222 + $0x20] sm:$0xff]
        %v280 = vld [vmem:[%s222 + $0x28] sm:$0xff]
        %v281 = vld [vmem:[%s222 + $0x30] sm:$0xff]
        %v282 = vld [vmem:[%s222 + $0x38] sm:$0xff]
        %s283 = scalar_lea.vmem [#allocation2], 32
        %vm284 = vcmask 97280
        %285 = vst.msk [vmem:[%s283 + $0x1] sm:$0xff] %vm284, %v275
        %286 = vst.msk [vmem:[%s283 + $0x11] sm:$0xff] %vm284, %v276
        %287 = vst.msk [vmem:[%s283 + $0x21] sm:$0xff] %vm284, %v277
        %288 = vst.msk [vmem:[%s283 + $0x31] sm:$0xff] %vm284, %v278
        %289 = vst.msk [vmem:[%s283 + $0x41] sm:$0xff] %vm284, %v279
        %290 = vst.msk [vmem:[%s283 + $0x51] sm:$0xff] %vm284, %v280
        %291 = vst.msk [vmem:[%s283 + $0x61] sm:$0xff] %vm284, %v281
        %292 = vst.msk [vmem:[%s283 + $0x71] sm:$0xff] %vm284, %v282
        %v293 = vld [vmem:[%s2] sm:$0x1]
        %v295 = vlaneseq
        %v296 = vshrl.u32 %v295, 7
        %v297 = vsub.s32 0, %v296
        %v298 = vrot.slane %v293, %v297
        %v300 = vadd.f32 %v298, 0.0
        %v301 = vld [vmem:[#allocation2] sm:$0xff]
        %v302 = vld [vmem:[#allocation2 + $0x10] sm:$0xff]
        %v303 = vld [vmem:[#allocation2 + $0x20] sm:$0xff]
        %v304 = vld [vmem:[#allocation2 + $0x30] sm:$0xff]
        %v305 = vld [vmem:[#allocation2 + $0x40] sm:$0xff]
        %v306 = vld [vmem:[#allocation2 + $0x50] sm:$0xff]
        %v307 = vld [vmem:[#allocation2 + $0x60] sm:$0xff]
        %v308 = vld [vmem:[#allocation2 + $0x70] sm:$0xff]
        %v309 = vld [vmem:[#allocation2 + $0x80] sm:$0xff]
        %v310 = vld [vmem:[#allocation2 + $0x90] sm:$0xff]
        %v311 = vld [vmem:[%s1] sm:$0xff]
        %v312 = vld [vmem:[%s1 + $0x8] sm:$0x1]
        %323 = vrot.lane.b32.xlu0 %v301, 125
        %v324 = vpop.permute.xlu0 %323
        %325 = vrot.lane.b32.xlu0 %v302, 125
        %v326 = vpop.permute.xlu0 %325
        %327 = vrot.lane.b32.xlu0 %v303, 125
        %v328 = vpop.permute.xlu0 %327
        %329 = vrot.lane.b32.xlu0 %v304, 125
        %v330 = vpop.permute.xlu0 %329
        %331 = vrot.lane.b32.xlu0 %v305, 125
        %v332 = vpop.permute.xlu0 %331
        %333 = vrot.lane.b32.xlu0 %v306, 125
        %v334 = vpop.permute.xlu0 %333
        %335 = vrot.lane.b32.xlu0 %v307, 125
        %v336 = vpop.permute.xlu0 %335
        %337 = vrot.lane.b32.xlu0 %v308, 125
        %v338 = vpop.permute.xlu0 %337
        %339 = vrot.lane.b32.xlu0 %v309, 125
        %v340 = vpop.permute.xlu0 %339
        %341 = vrot.lane.b32.xlu0 %v310, 125
        %v342 = vpop.permute.xlu0 %341
        %vm343 = vcmask 72704
        %v344 = vsel %vm343, %v324, 0
        %v346 = vsel %vm343, %v326, 0
        %v348 = vsel %vm343, %v328, 0
        %v350 = vsel %vm343, %v330, 0
        %v352 = vsel %vm343, %v332, 0
        %v354 = vsel %vm343, %v334, 0
        %v356 = vsel %vm343, %v336, 0
        %v358 = vsel %vm343, %v338, 0
        %v360 = vsel %vm343, %v340, 0
        %v362 = vsel %vm343, %v342, 0
        %vm364 = vcmask 1040384
        %v366 = vsel %vm364, %v312, 0
        %368 = vmatprep.subr.mxu0 0.0
        %369 = vmatpush1.msra.mxu0 %v311
        %370 = vmatprep.subr.mxu0 0.0
        %371 = vmatpush1.msra.mxu0 %v366
        %372 = vmatprep.subr.mxu0 0.0
        %373 = vmatpush1.msra.mxu0 0.0
        %374 = vmatprep.subr.mxu0 0.0
        %375 = vmatpush1.msra.mxu0 0.0
        %376 = vmatprep.subr.mxu0 0.0
        %377 = vmatpush1.msra.mxu0 0.0
        %378 = vmatprep.subr.mxu0 0.0
        %379 = vmatpush1.msra.mxu0 0.0
        %380 = vmatprep.subr.mxu0 0.0
        %381 = vmatpush1.msra.mxu0 0.0
        %382 = vmatprep.subr.mxu0 0.0
        %383 = vmatpush1.msra.mxu0 0.0
        %384 = vmatprep.subr.mxu0 0.0
        %385 = vmatpush1.msra.mxu0 0.0
        %386 = vmatprep.subr.mxu0 0.0
        %387 = vmatpush1.msra.mxu0 0.0
        %388 = vmatprep.subr.mxu0 0.0
        %389 = vmatpush1.msra.mxu0 0.0
        %390 = vmatprep.subr.mxu0 0.0
        %391 = vmatpush1.msra.mxu0 0.0
        %392 = vmatprep.subr.mxu0 0.0
        %393 = vmatpush1.msra.mxu0 0.0
        %394 = vmatprep.subr.mxu0 0.0
        %395 = vmatpush1.msra.mxu0 0.0
        %396 = vmatprep.subr.mxu0 0.0
        %397 = vmatpush1.msra.mxu0 0.0
        %398 = vmatprep.subr.mxu0 0.0
        %399 = vmatpush1.msra.mxu0 0.0
        %400 = vmatprep.subr.mxu0 0.0
        %401 = vmatpush1.msra.mxu0 0.0
        %402 = vmatprep.subr.mxu0 0.0
        %403 = vmatpush1.msra.mxu0 0.0
        %404 = vmatprep.subr.mxu0 0.0
        %405 = vmatpush1.msra.mxu0 0.0
        %406 = vmatprep.subr.mxu0 0.0
        %407 = vmatpush1.msra.mxu0 0.0
        %408 = vmatprep.subr.mxu0 0.0
        %409 = vmatpush1.msra.mxu0 0.0
        %410 = vmatprep.subr.mxu0 0.0
        %411 = vmatpush1.msra.mxu0 0.0
        %412 = vmatprep.subr.mxu0 0.0
        %413 = vmatpush1.msra.mxu0 0.0
        %414 = vmatprep.subr.mxu0 0.0
        %415 = vmatpush1.msra.mxu0 0.0
        %416 = vmatprep.subr.mxu0 0.0
        %417 = vmatpush1.msra.mxu0 0.0
        %418 = vmatprep.subr.mxu0 0.0
        %419 = vmatpush1.msra.mxu0 0.0
        %420 = vmatprep.subr.mxu0 0.0
        %421 = vmatpush1.msra.mxu0 0.0
        %422 = vmatprep.subr.mxu0 0.0
        %423 = vmatpush1.msra.mxu0 0.0
        %424 = vmatprep.subr.mxu0 0.0
        %425 = vmatpush1.msra.mxu0 0.0
        %426 = vmatprep.subr.mxu0 0.0
        %427 = vmatpush1.msra.mxu0 0.0
        %428 = vmatprep.subr.mxu0 0.0
        %429 = vmatpush1.msra.mxu0 0.0
        %430 = vmatprep.subr.mxu0 0.0
        %431 = vmatpush1.msra.mxu0 0.0
        %432 = vmatprep.mubr.f32.mxu0 0.0
        %433 = vmatmul.mubr.f32.gmra.mrb[0].mxu0 %v344
        %v434 = vpop.f32.mrb[0].mxu0
        %v435 = vadd.f32 0.0, %v434
        %v436 = vpop.f32.mrb[0].mxu0
        %437 = vmatprep.mubr.f32.mxu0 0.0
        %438 = vmatmul.mubr.f32.gmra.mrb[0].mxu0 %v346
        %v439 = vpop.f32.mrb[0].mxu0
        %v440 = vadd.f32 0.0, %v439
        %v441 = vpop.f32.mrb[0].mxu0
        %442 = vmatprep.mubr.f32.mxu0 0.0
        %443 = vmatmul.mubr.f32.gmra.mrb[0].mxu0 %v348
        %v444 = vpop.f32.mrb[0].mxu0
        %v445 = vadd.f32 0.0, %v444
        %v446 = vpop.f32.mrb[0].mxu0
        %447 = vmatprep.mubr.f32.mxu0 0.0
        %448 = vmatmul.mubr.f32.gmra.mrb[0].mxu0 %v350
        %v449 = vpop.f32.mrb[0].mxu0
        %v450 = vadd.f32 0.0, %v449
        %v451 = vpop.f32.mrb[0].mxu0
        %452 = vmatprep.mubr.f32.mxu0 0.0
        %453 = vmatmul.mubr.f32.gmra.mrb[0].mxu0 %v352
        %v454 = vpop.f32.mrb[0].mxu0
        %v455 = vadd.f32 0.0, %v454
        %v456 = vpop.f32.mrb[0].mxu0
        %457 = vmatprep.mubr.f32.mxu0 0.0
        %458 = vmatmul.mubr.f32.gmra.mrb[0].mxu0 %v354
        %v459 = vpop.f32.mrb[0].mxu0
        %v460 = vadd.f32 0.0, %v459
        %v461 = vpop.f32.mrb[0].mxu0
        %462 = vmatprep.mubr.f32.mxu0 0.0
        %463 = vmatmul.mubr.f32.gmra.mrb[0].mxu0 %v356
        %v464 = vpop.f32.mrb[0].mxu0
        %v465 = vadd.f32 0.0, %v464
        %v466 = vpop.f32.mrb[0].mxu0
        %467 = vmatprep.mubr.f32.mxu0 0.0
        %468 = vmatmul.mubr.f32.gmra.mrb[0].mxu0 %v358
        %v469 = vpop.f32.mrb[0].mxu0
        %v470 = vadd.f32 0.0, %v469
        %v471 = vpop.f32.mrb[0].mxu0
        %472 = vmatprep.mubr.f32.mxu0 0.0
        %473 = vmatmul.mubr.f32.gmra.mrb[0].mxu0 %v360
        %v474 = vpop.f32.mrb[0].mxu0
        %v475 = vadd.f32 0.0, %v474
        %v476 = vpop.f32.mrb[0].mxu0
        %477 = vmatprep.mubr.f32.mxu0 0.0
        %478 = vmatmul.mubr.f32.gmra.mrb[0].mxu0 %v362
        %v479 = vpop.f32.mrb[0].mxu0
        %v480 = vadd.f32 0.0, %v479
        %v481 = vpop.f32.mrb[0].mxu0
        %482 = vdwg.mxu0
        %v483 = vadd.f32 %v300, %v435
        %v484 = vadd.f32 %v300, %v440
        %v485 = vadd.f32 %v300, %v445
        %v486 = vadd.f32 %v300, %v450
        %v487 = vadd.f32 %v300, %v455
        %v488 = vadd.f32 %v300, %v460
        %v489 = vadd.f32 %v300, %v465
        %v490 = vadd.f32 %v300, %v470
        %v491 = vadd.f32 %v300, %v475
        %v492 = vadd.f32 %v300, %v480
        %v493 = vld [vmem:[#allocation2 + $0x1] sm:$0xff]
        %v494 = vld [vmem:[#allocation2 + $0x11] sm:$0xff]
        %v495 = vld [vmem:[#allocation2 + $0x21] sm:$0xff]
        %v496 = vld [vmem:[#allocation2 + $0x31] sm:$0xff]
        %v497 = vld [vmem:[#allocation2 + $0x41] sm:$0xff]
        %v498 = vld [vmem:[#allocation2 + $0x51] sm:$0xff]
        %v499 = vld [vmem:[#allocation2 + $0x61] sm:$0xff]
        %v500 = vld [vmem:[#allocation2 + $0x71] sm:$0xff]
        %v501 = vld [vmem:[#allocation2 + $0x81] sm:$0xff]
        %v502 = vld [vmem:[#allocation2 + $0x91] sm:$0xff]
        %s503 = scalar_lea.vmem %s1, 16
        %v504 = vld [vmem:[%s503] sm:$0xff]
        %v505 = vld [vmem:[%s503 + $0x8] sm:$0x1]
        %516 = vrot.lane.b32.xlu0 %v493, 125
        %v517 = vpop.permute.xlu0 %516
        %518 = vrot.lane.b32.xlu0 %v494, 125
        %v519 = vpop.permute.xlu0 %518
        %520 = vrot.lane.b32.xlu0 %v495, 125
        %v521 = vpop.permute.xlu0 %520
        %522 = vrot.lane.b32.xlu0 %v496, 125
        %v523 = vpop.permute.xlu0 %522
        %524 = vrot.lane.b32.xlu0 %v497, 125
        %v525 = vpop.permute.xlu0 %524
        %526 = vrot.lane.b32.xlu0 %v498, 125
        %v527 = vpop.permute.xlu0 %526
        %528 = vrot.lane.b32.xlu0 %v499, 125
        %v529 = vpop.permute.xlu0 %528
        %530 = vrot.lane.b32.xlu0 %v500, 125
        %v531 = vpop.permute.xlu0 %530
        %532 = vrot.lane.b32.xlu0 %v501, 125
        %v533 = vpop.permute.xlu0 %532
        %534 = vrot.lane.b32.xlu0 %v502, 125
        %v535 = vpop.permute.xlu0 %534
        %v536 = vsel %vm343, %v517, 0
        %v538 = vsel %vm343, %v519, 0
        %v540 = vsel %vm343, %v521, 0
        %v542 = vsel %vm343, %v523, 0
        %v544 = vsel %vm343, %v525, 0
        %v546 = vsel %vm343, %v527, 0
        %v548 = vsel %vm343, %v529, 0
        %v550 = vsel %vm343, %v531, 0
        %v552 = vsel %vm343, %v533, 0
        %v554 = vsel %vm343, %v535, 0
        %v557 = vsel %vm364, %v505, 0
        %559 = vmatprep.subr.mxu0 0.0
        %560 = vmatpush1.msra.mxu0 %v504
        %561 = vmatprep.subr.mxu0 0.0
        %562 = vmatpush1.msra.mxu0 %v557
        %563 = vmatprep.subr.mxu0 0.0
        %564 = vmatpush1.msra.mxu0 0.0
        %565 = vmatprep.subr.mxu0 0.0
        %566 = vmatpush1.msra.mxu0 0.0
        %567 = vmatprep.subr.mxu0 0.0
        %568 = vmatpush1.msra.mxu0 0.0
        %569 = vmatprep.subr.mxu0 0.0
        %570 = vmatpush1.msra.mxu0 0.0
        %571 = vmatprep.subr.mxu0 0.0
        %572 = vmatpush1.msra.mxu0 0.0
        %573 = vmatprep.subr.mxu0 0.0
        %574 = vmatpush1.msra.mxu0 0.0
        %575 = vmatprep.subr.mxu0 0.0
        %576 = vmatpush1.msra.mxu0 0.0
        %577 = vmatprep.subr.mxu0 0.0
        %578 = vmatpush1.msra.mxu0 0.0
        %579 = vmatprep.subr.mxu0 0.0
        %580 = vmatpush1.msra.mxu0 0.0
        %581 = vmatprep.subr.mxu0 0.0
        %582 = vmatpush1.msra.mxu0 0.0
        %583 = vmatprep.subr.mxu0 0.0
        %584 = vmatpush1.msra.mxu0 0.0
        %585 = vmatprep.subr.mxu0 0.0
        %586 = vmatpush1.msra.mxu0 0.0
        %587 = vmatprep.subr.mxu0 0.0
        %588 = vmatpush1.msra.mxu0 0.0
        %589 = vmatprep.subr.mxu0 0.0
        %590 = vmatpush1.msra.mxu0 0.0
        %591 = vmatprep.subr.mxu0 0.0
        %592 = vmatpush1.msra.mxu0 0.0
        %593 = vmatprep.subr.mxu0 0.0
        %594 = vmatpush1.msra.mxu0 0.0
        %595 = vmatprep.subr.mxu0 0.0
        %596 = vmatpush1.msra.mxu0 0.0
        %597 = vmatprep.subr.mxu0 0.0
        %598 = vmatpush1.msra.mxu0 0.0
        %599 = vmatprep.subr.mxu0 0.0
        %600 = vmatpush1.msra.mxu0 0.0
        %601 = vmatprep.subr.mxu0 0.0
        %602 = vmatpush1.msra.mxu0 0.0
        %603 = vmatprep.subr.mxu0 0.0
        %604 = vmatpush1.msra.mxu0 0.0
        %605 = vmatprep.subr.mxu0 0.0
        %606 = vmatpush1.msra.mxu0 0.0
        %607 = vmatprep.subr.mxu0 0.0
        %608 = vmatpush1.msra.mxu0 0.0
        %609 = vmatprep.subr.mxu0 0.0
        %610 = vmatpush1.msra.mxu0 0.0
        %611 = vmatprep.subr.mxu0 0.0
        %612 = vmatpush1.msra.mxu0 0.0
        %613 = vmatprep.subr.mxu0 0.0
        %614 = vmatpush1.msra.mxu0 0.0
        %615 = vmatprep.subr.mxu0 0.0
        %616 = vmatpush1.msra.mxu0 0.0
        %617 = vmatprep.subr.mxu0 0.0
        %618 = vmatpush1.msra.mxu0 0.0
        %619 = vmatprep.subr.mxu0 0.0
        %620 = vmatpush1.msra.mxu0 0.0
        %621 = vmatprep.subr.mxu0 0.0
        %622 = vmatpush1.msra.mxu0 0.0
        %623 = vmatprep.mubr.f32.mxu0 0.0
        %624 = vmatmul.mubr.f32.gmra.mrb[0].mxu0 %v536
        %v625 = vpop.f32.mrb[0].mxu0
        %v626 = vadd.f32 0.0, %v625
        %v627 = vpop.f32.mrb[0].mxu0
        %628 = vmatprep.mubr.f32.mxu0 0.0
        %629 = vmatmul.mubr.f32.gmra.mrb[0].mxu0 %v538
        %v630 = vpop.f32.mrb[0].mxu0
        %v631 = vadd.f32 0.0, %v630
        %v632 = vpop.f32.mrb[0].mxu0
        %633 = vmatprep.mubr.f32.mxu0 0.0
        %634 = vmatmul.mubr.f32.gmra.mrb[0].mxu0 %v540
        %v635 = vpop.f32.mrb[0].mxu0
        %v636 = vadd.f32 0.0, %v635
        %v637 = vpop.f32.mrb[0].mxu0
        %638 = vmatprep.mubr.f32.mxu0 0.0
        %639 = vmatmul.mubr.f32.gmra.mrb[0].mxu0 %v542
        %v640 = vpop.f32.mrb[0].mxu0
        %v641 = vadd.f32 0.0, %v640
        %v642 = vpop.f32.mrb[0].mxu0
        %643 = vmatprep.mubr.f32.mxu0 0.0
        %644 = vmatmul.mubr.f32.gmra.mrb[0].mxu0 %v544
        %v645 = vpop.f32.mrb[0].mxu0
        %v646 = vadd.f32 0.0, %v645
        %v647 = vpop.f32.mrb[0].mxu0
        %648 = vmatprep.mubr.f32.mxu0 0.0
        %649 = vmatmul.mubr.f32.gmra.mrb[0].mxu0 %v546
        %v650 = vpop.f32.mrb[0].mxu0
        %v651 = vadd.f32 0.0, %v650
        %v652 = vpop.f32.mrb[0].mxu0
        %653 = vmatprep.mubr.f32.mxu0 0.0
        %654 = vmatmul.mubr.f32.gmra.mrb[0].mxu0 %v548
        %v655 = vpop.f32.mrb[0].mxu0
        %v656 = vadd.f32 0.0, %v655
        %v657 = vpop.f32.mrb[0].mxu0
        %658 = vmatprep.mubr.f32.mxu0 0.0
        %659 = vmatmul.mubr.f32.gmra.mrb[0].mxu0 %v550
        %v660 = vpop.f32.mrb[0].mxu0
        %v661 = vadd.f32 0.0, %v660
        %v662 = vpop.f32.mrb[0].mxu0
        %663 = vmatprep.mubr.f32.mxu0 0.0
        %664 = vmatmul.mubr.f32.gmra.mrb[0].mxu0 %v552
        %v665 = vpop.f32.mrb[0].mxu0
        %v666 = vadd.f32 0.0, %v665
        %v667 = vpop.f32.mrb[0].mxu0
        %668 = vmatprep.mubr.f32.mxu0 0.0
        %669 = vmatmul.mubr.f32.gmra.mrb[0].mxu0 %v554
        %v670 = vpop.f32.mrb[0].mxu0
        %v671 = vadd.f32 0.0, %v670
        %v672 = vpop.f32.mrb[0].mxu0
        %673 = vdwg.mxu0
        %v674 = vadd.f32 %v483, %v626
        %v675 = vadd.f32 %v484, %v631
        %v676 = vadd.f32 %v485, %v636
        %v677 = vadd.f32 %v486, %v641
        %v678 = vadd.f32 %v487, %v646
        %v679 = vadd.f32 %v488, %v651
        %v680 = vadd.f32 %v489, %v656
        %v681 = vadd.f32 %v490, %v661
        %v682 = vadd.f32 %v491, %v666
        %v683 = vadd.f32 %v492, %v671
        %v684 = vld [vmem:[#allocation2 + $0x2] sm:$0xff]
        %v685 = vld [vmem:[#allocation2 + $0x12] sm:$0xff]
        %v686 = vld [vmem:[#allocation2 + $0x22] sm:$0xff]
        %v687 = vld [vmem:[#allocation2 + $0x32] sm:$0xff]
        %v688 = vld [vmem:[#allocation2 + $0x42] sm:$0xff]
        %v689 = vld [vmem:[#allocation2 + $0x52] sm:$0xff]
        %v690 = vld [vmem:[#allocation2 + $0x62] sm:$0xff]
        %v691 = vld [vmem:[#allocation2 + $0x72] sm:$0xff]
        %v692 = vld [vmem:[#allocation2 + $0x82] sm:$0xff]
        %v693 = vld [vmem:[#allocation2 + $0x92] sm:$0xff]
        %s694 = scalar_lea.vmem %s1, 32
        %v695 = vld [vmem:[%s694] sm:$0xff]
        %v696 = vld [vmem:[%s694 + $0x8] sm:$0x1]
        %707 = vrot.lane.b32.xlu0 %v684, 125
        %v708 = vpop.permute.xlu0 %707
        %709 = vrot.lane.b32.xlu0 %v685, 125
        %v710 = vpop.permute.xlu0 %709
        %711 = vrot.lane.b32.xlu0 %v686, 125
        %v712 = vpop.permute.xlu0 %711
        %713 = vrot.lane.b32.xlu0 %v687, 125
        %v714 = vpop.permute.xlu0 %713
        %715 = vrot.lane.b32.xlu0 %v688, 125
        %v716 = vpop.permute.xlu0 %715
        %717 = vrot.lane.b32.xlu0 %v689, 125
        %v718 = vpop.permute.xlu0 %717
        %719 = vrot.lane.b32.xlu0 %v690, 125
        %v720 = vpop.permute.xlu0 %719
        %721 = vrot.lane.b32.xlu0 %v691, 125
        %v722 = vpop.permute.xlu0 %721
        %723 = vrot.lane.b32.xlu0 %v692, 125
        %v724 = vpop.permute.xlu0 %723
        %725 = vrot.lane.b32.xlu0 %v693, 125
        %v726 = vpop.permute.xlu0 %725
        %v727 = vsel %vm343, %v708, 0
        %v729 = vsel %vm343, %v710, 0
        %v731 = vsel %vm343, %v712, 0
        %v733 = vsel %vm343, %v714, 0
        %v735 = vsel %vm343, %v716, 0
        %v737 = vsel %vm343, %v718, 0
        %v739 = vsel %vm343, %v720, 0
        %v741 = vsel %vm343, %v722, 0
        %v743 = vsel %vm343, %v724, 0
        %v745 = vsel %vm343, %v726, 0
        %v748 = vsel %vm364, %v696, 0
        %750 = vmatprep.subr.mxu0 0.0
        %751 = vmatpush1.msra.mxu0 %v695
        %752 = vmatprep.subr.mxu0 0.0
        %753 = vmatpush1.msra.mxu0 %v748
        %754 = vmatprep.subr.mxu0 0.0
        %755 = vmatpush1.msra.mxu0 0.0
        %756 = vmatprep.subr.mxu0 0.0
        %757 = vmatpush1.msra.mxu0 0.0
        %758 = vmatprep.subr.mxu0 0.0
        %759 = vmatpush1.msra.mxu0 0.0
        %760 = vmatprep.subr.mxu0 0.0
        %761 = vmatpush1.msra.mxu0 0.0
        %762 = vmatprep.subr.mxu0 0.0
        %763 = vmatpush1.msra.mxu0 0.0
        %764 = vmatprep.subr.mxu0 0.0
        %765 = vmatpush1.msra.mxu0 0.0
        %766 = vmatprep.subr.mxu0 0.0
        %767 = vmatpush1.msra.mxu0 0.0
        %768 = vmatprep.subr.mxu0 0.0
        %769 = vmatpush1.msra.mxu0 0.0
        %770 = vmatprep.subr.mxu0 0.0
        %771 = vmatpush1.msra.mxu0 0.0
        %772 = vmatprep.subr.mxu0 0.0
        %773 = vmatpush1.msra.mxu0 0.0
        %774 = vmatprep.subr.mxu0 0.0
        %775 = vmatpush1.msra.mxu0 0.0
        %776 = vmatprep.subr.mxu0 0.0
        %777 = vmatpush1.msra.mxu0 0.0
        %778 = vmatprep.subr.mxu0 0.0
        %779 = vmatpush1.msra.mxu0 0.0
        %780 = vmatprep.subr.mxu0 0.0
        %781 = vmatpush1.msra.mxu0 0.0
        %782 = vmatprep.subr.mxu0 0.0
        %783 = vmatpush1.msra.mxu0 0.0
        %784 = vmatprep.subr.mxu0 0.0
        %785 = vmatpush1.msra.mxu0 0.0
        %786 = vmatprep.subr.mxu0 0.0
        %787 = vmatpush1.msra.mxu0 0.0
        %788 = vmatprep.subr.mxu0 0.0
        %789 = vmatpush1.msra.mxu0 0.0
        %790 = vmatprep.subr.mxu0 0.0
        %791 = vmatpush1.msra.mxu0 0.0
        %792 = vmatprep.subr.mxu0 0.0
        %793 = vmatpush1.msra.mxu0 0.0
        %794 = vmatprep.subr.mxu0 0.0
        %795 = vmatpush1.msra.mxu0 0.0
        %796 = vmatprep.subr.mxu0 0.0
        %797 = vmatpush1.msra.mxu0 0.0
        %798 = vmatprep.subr.mxu0 0.0
        %799 = vmatpush1.msra.mxu0 0.0
        %800 = vmatprep.subr.mxu0 0.0
        %801 = vmatpush1.msra.mxu0 0.0
        %802 = vmatprep.subr.mxu0 0.0
        %803 = vmatpush1.msra.mxu0 0.0
        %804 = vmatprep.subr.mxu0 0.0
        %805 = vmatpush1.msra.mxu0 0.0
        %806 = vmatprep.subr.mxu0 0.0
        %807 = vmatpush1.msra.mxu0 0.0
        %808 = vmatprep.subr.mxu0 0.0
        %809 = vmatpush1.msra.mxu0 0.0
        %810 = vmatprep.subr.mxu0 0.0
        %811 = vmatpush1.msra.mxu0 0.0
        %812 = vmatprep.subr.mxu0 0.0
        %813 = vmatpush1.msra.mxu0 0.0
        %814 = vmatprep.mubr.f32.mxu0 0.0
        %815 = vmatmul.mubr.f32.gmra.mrb[0].mxu0 %v727
        %v816 = vpop.f32.mrb[0].mxu0
        %v817 = vadd.f32 0.0, %v816
        %v818 = vpop.f32.mrb[0].mxu0
        %819 = vmatprep.mubr.f32.mxu0 0.0
        %820 = vmatmul.mubr.f32.gmra.mrb[0].mxu0 %v729
        %v821 = vpop.f32.mrb[0].mxu0
        %v822 = vadd.f32 0.0, %v821
        %v823 = vpop.f32.mrb[0].mxu0
        %824 = vmatprep.mubr.f32.mxu0 0.0
        %825 = vmatmul.mubr.f32.gmra.mrb[0].mxu0 %v731
        %v826 = vpop.f32.mrb[0].mxu0
        %v827 = vadd.f32 0.0, %v826
        %v828 = vpop.f32.mrb[0].mxu0
        %829 = vmatprep.mubr.f32.mxu0 0.0
        %830 = vmatmul.mubr.f32.gmra.mrb[0].mxu0 %v733
        %v831 = vpop.f32.mrb[0].mxu0
        %v832 = vadd.f32 0.0, %v831
        %v833 = vpop.f32.mrb[0].mxu0
        %834 = vmatprep.mubr.f32.mxu0 0.0
        %835 = vmatmul.mubr.f32.gmra.mrb[0].mxu0 %v735
        %v836 = vpop.f32.mrb[0].mxu0
        %v837 = vadd.f32 0.0, %v836
        %v838 = vpop.f32.mrb[0].mxu0
        %839 = vmatprep.mubr.f32.mxu0 0.0
        %840 = vmatmul.mubr.f32.gmra.mrb[0].mxu0 %v737
        %v841 = vpop.f32.mrb[0].mxu0
        %v842 = vadd.f32 0.0, %v841
        %v843 = vpop.f32.mrb[0].mxu0
        %844 = vmatprep.mubr.f32.mxu0 0.0
        %845 = vmatmul.mubr.f32.gmra.mrb[0].mxu0 %v739
        %v846 = vpop.f32.mrb[0].mxu0
        %v847 = vadd.f32 0.0, %v846
        %v848 = vpop.f32.mrb[0].mxu0
        %849 = vmatprep.mubr.f32.mxu0 0.0
        %850 = vmatmul.mubr.f32.gmra.mrb[0].mxu0 %v741
        %v851 = vpop.f32.mrb[0].mxu0
        %v852 = vadd.f32 0.0, %v851
        %v853 = vpop.f32.mrb[0].mxu0
        %854 = vmatprep.mubr.f32.mxu0 0.0
        %855 = vmatmul.mubr.f32.gmra.mrb[0].mxu0 %v743
        %v856 = vpop.f32.mrb[0].mxu0
        %v857 = vadd.f32 0.0, %v856
        %v858 = vpop.f32.mrb[0].mxu0
        %859 = vmatprep.mubr.f32.mxu0 0.0
        %860 = vmatmul.mubr.f32.gmra.mrb[0].mxu0 %v745
        %v861 = vpop.f32.mrb[0].mxu0
        %v862 = vadd.f32 0.0, %v861
        %v863 = vpop.f32.mrb[0].mxu0
        %864 = vdwg.mxu0
        %v865 = vadd.f32 %v674, %v817
        %v866 = vadd.f32 %v675, %v822
        %v867 = vadd.f32 %v676, %v827
        %v868 = vadd.f32 %v677, %v832
        %v869 = vadd.f32 %v678, %v837
        %v870 = vadd.f32 %v679, %v842
        %v871 = vadd.f32 %v680, %v847
        %v872 = vadd.f32 %v681, %v852
        %v873 = vadd.f32 %v682, %v857
        %v874 = vadd.f32 %v683, %v862
        %s875 = scalar_lea.vmem [#allocation2], 16
        %v876 = vld [vmem:[%s875] sm:$0xff]
        %v877 = vld [vmem:[%s875 + $0x10] sm:$0xff]
        %v878 = vld [vmem:[%s875 + $0x20] sm:$0xff]
        %v879 = vld [vmem:[%s875 + $0x30] sm:$0xff]
        %v880 = vld [vmem:[%s875 + $0x40] sm:$0xff]
        %v881 = vld [vmem:[%s875 + $0x50] sm:$0xff]
        %v882 = vld [vmem:[%s875 + $0x60] sm:$0xff]
        %v883 = vld [vmem:[%s875 + $0x70] sm:$0xff]
        %v884 = vld [vmem:[%s875 + $0x80] sm:$0xff]
        %v885 = vld [vmem:[%s875 + $0x90] sm:$0xff]
        %s886 = scalar_lea.vmem %s1, 48
        %v887 = vld [vmem:[%s886] sm:$0xff]
        %v888 = vld [vmem:[%s886 + $0x8] sm:$0x1]
        %899 = vrot.lane.b32.xlu0 %v876, 125
        %v900 = vpop.permute.xlu0 %899
        %901 = vrot.lane.b32.xlu0 %v877, 125
        %v902 = vpop.permute.xlu0 %901
        %903 = vrot.lane.b32.xlu0 %v878, 125
        %v904 = vpop.permute.xlu0 %903
        %905 = vrot.lane.b32.xlu0 %v879, 125
        %v906 = vpop.permute.xlu0 %905
        %907 = vrot.lane.b32.xlu0 %v880, 125
        %v908 = vpop.permute.xlu0 %907
        %909 = vrot.lane.b32.xlu0 %v881, 125
        %v910 = vpop.permute.xlu0 %909
        %911 = vrot.lane.b32.xlu0 %v882, 125
        %v912 = vpop.permute.xlu0 %911
        %913 = vrot.lane.b32.xlu0 %v883, 125
        %v914 = vpop.permute.xlu0 %913
        %915 = vrot.lane.b32.xlu0 %v884, 125
        %v916 = vpop.permute.xlu0 %915
        %917 = vrot.lane.b32.xlu0 %v885, 125
        %v918 = vpop.permute.xlu0 %917
        %v919 = vsel %vm343, %v900, 0
        %v921 = vsel %vm343, %v902, 0
        %v923 = vsel %vm343, %v904, 0
        %v925 = vsel %vm343, %v906, 0
        %v927 = vsel %vm343, %v908, 0
        %v929 = vsel %vm343, %v910, 0
        %v931 = vsel %vm343, %v912, 0
        %v933 = vsel %vm343, %v914, 0
        %v935 = vsel %vm343, %v916, 0
        %v937 = vsel %vm343, %v918, 0
        %v940 = vsel %vm364, %v888, 0
        %942 = vmatprep.subr.mxu0 0.0
        %943 = vmatpush1.msra.mxu0 %v887
        %944 = vmatprep.subr.mxu0 0.0
        %945 = vmatpush1.msra.mxu0 %v940
        %946 = vmatprep.subr.mxu0 0.0
        %947 = vmatpush1.msra.mxu0 0.0
        %948 = vmatprep.subr.mxu0 0.0
        %949 = vmatpush1.msra.mxu0 0.0
        %950 = vmatprep.subr.mxu0 0.0
        %951 = vmatpush1.msra.mxu0 0.0
        %952 = vmatprep.subr.mxu0 0.0
        %953 = vmatpush1.msra.mxu0 0.0
        %954 = vmatprep.subr.mxu0 0.0
        %955 = vmatpush1.msra.mxu0 0.0
        %956 = vmatprep.subr.mxu0 0.0
        %957 = vmatpush1.msra.mxu0 0.0
        %958 = vmatprep.subr.mxu0 0.0
        %959 = vmatpush1.msra.mxu0 0.0
        %960 = vmatprep.subr.mxu0 0.0
        %961 = vmatpush1.msra.mxu0 0.0
        %962 = vmatprep.subr.mxu0 0.0
        %963 = vmatpush1.msra.mxu0 0.0
        %964 = vmatprep.subr.mxu0 0.0
        %965 = vmatpush1.msra.mxu0 0.0
        %966 = vmatprep.subr.mxu0 0.0
        %967 = vmatpush1.msra.mxu0 0.0
        %968 = vmatprep.subr.mxu0 0.0
        %969 = vmatpush1.msra.mxu0 0.0
        %970 = vmatprep.subr.mxu0 0.0
        %971 = vmatpush1.msra.mxu0 0.0
        %972 = vmatprep.subr.mxu0 0.0
        %973 = vmatpush1.msra.mxu0 0.0
        %974 = vmatprep.subr.mxu0 0.0
        %975 = vmatpush1.msra.mxu0 0.0
        %976 = vmatprep.subr.mxu0 0.0
        %977 = vmatpush1.msra.mxu0 0.0
        %978 = vmatprep.subr.mxu0 0.0
        %979 = vmatpush1.msra.mxu0 0.0
        %980 = vmatprep.subr.mxu0 0.0
        %981 = vmatpush1.msra.mxu0 0.0
        %982 = vmatprep.subr.mxu0 0.0
        %983 = vmatpush1.msra.mxu0 0.0
        %984 = vmatprep.subr.mxu0 0.0
        %985 = vmatpush1.msra.mxu0 0.0
        %986 = vmatprep.subr.mxu0 0.0
        %987 = vmatpush1.msra.mxu0 0.0
        %988 = vmatprep.subr.mxu0 0.0
        %989 = vmatpush1.msra.mxu0 0.0
        %990 = vmatprep.subr.mxu0 0.0
        %991 = vmatpush1.msra.mxu0 0.0
        %992 = vmatprep.subr.mxu0 0.0
        %993 = vmatpush1.msra.mxu0 0.0
        %994 = vmatprep.subr.mxu0 0.0
        %995 = vmatpush1.msra.mxu0 0.0
        %996 = vmatprep.subr.mxu0 0.0
        %997 = vmatpush1.msra.mxu0 0.0
        %998 = vmatprep.subr.mxu0 0.0
        %999 = vmatpush1.msra.mxu0 0.0
        %1000 = vmatprep.subr.mxu0 0.0
        %1001 = vmatpush1.msra.mxu0 0.0
        %1002 = vmatprep.subr.mxu0 0.0
        %1003 = vmatpush1.msra.mxu0 0.0
        %1004 = vmatprep.subr.mxu0 0.0
        %1005 = vmatpush1.msra.mxu0 0.0
        %1006 = vmatprep.mubr.f32.mxu0 0.0
        %1007 = vmatmul.mubr.f32.gmra.mrb[0].mxu0 %v919
        %v1008 = vpop.f32.mrb[0].mxu0
        %v1009 = vadd.f32 0.0, %v1008
        %v1010 = vpop.f32.mrb[0].mxu0
        %1011 = vmatprep.mubr.f32.mxu0 0.0
        %1012 = vmatmul.mubr.f32.gmra.mrb[0].mxu0 %v921
        %v1013 = vpop.f32.mrb[0].mxu0
        %v1014 = vadd.f32 0.0, %v1013
        %v1015 = vpop.f32.mrb[0].mxu0
        %1016 = vmatprep.mubr.f32.mxu0 0.0
        %1017 = vmatmul.mubr.f32.gmra.mrb[0].mxu0 %v923
        %v1018 = vpop.f32.mrb[0].mxu0
        %v1019 = vadd.f32 0.0, %v1018
        %v1020 = vpop.f32.mrb[0].mxu0
        %1021 = vmatprep.mubr.f32.mxu0 0.0
        %1022 = vmatmul.mubr.f32.gmra.mrb[0].mxu0 %v925
        %v1023 = vpop.f32.mrb[0].mxu0
        %v1024 = vadd.f32 0.0, %v1023
        %v1025 = vpop.f32.mrb[0].mxu0
        %1026 = vmatprep.mubr.f32.mxu0 0.0
        %1027 = vmatmul.mubr.f32.gmra.mrb[0].mxu0 %v927
        %v1028 = vpop.f32.mrb[0].mxu0
        %v1029 = vadd.f32 0.0, %v1028
        %v1030 = vpop.f32.mrb[0].mxu0
        %1031 = vmatprep.mubr.f32.mxu0 0.0
        %1032 = vmatmul.mubr.f32.gmra.mrb[0].mxu0 %v929
        %v1033 = vpop.f32.mrb[0].mxu0
        %v1034 = vadd.f32 0.0, %v1033
        %v1035 = vpop.f32.mrb[0].mxu0
        %1036 = vmatprep.mubr.f32.mxu0 0.0
        %1037 = vmatmul.mubr.f32.gmra.mrb[0].mxu0 %v931
        %v1038 = vpop.f32.mrb[0].mxu0
        %v1039 = vadd.f32 0.0, %v1038
        %v1040 = vpop.f32.mrb[0].mxu0
        %1041 = vmatprep.mubr.f32.mxu0 0.0
        %1042 = vmatmul.mubr.f32.gmra.mrb[0].mxu0 %v933
        %v1043 = vpop.f32.mrb[0].mxu0
        %v1044 = vadd.f32 0.0, %v1043
        %v1045 = vpop.f32.mrb[0].mxu0
        %1046 = vmatprep.mubr.f32.mxu0 0.0
        %1047 = vmatmul.mubr.f32.gmra.mrb[0].mxu0 %v935
        %v1048 = vpop.f32.mrb[0].mxu0
        %v1049 = vadd.f32 0.0, %v1048
        %v1050 = vpop.f32.mrb[0].mxu0
        %1051 = vmatprep.mubr.f32.mxu0 0.0
        %1052 = vmatmul.mubr.f32.gmra.mrb[0].mxu0 %v937
        %v1053 = vpop.f32.mrb[0].mxu0
        %v1054 = vadd.f32 0.0, %v1053
        %v1055 = vpop.f32.mrb[0].mxu0
        %1056 = vdwg.mxu0
        %v1057 = vadd.f32 %v865, %v1009
        %v1058 = vadd.f32 %v866, %v1014
        %v1059 = vadd.f32 %v867, %v1019
        %v1060 = vadd.f32 %v868, %v1024
        %v1061 = vadd.f32 %v869, %v1029
        %v1062 = vadd.f32 %v870, %v1034
        %v1063 = vadd.f32 %v871, %v1039
        %v1064 = vadd.f32 %v872, %v1044
        %v1065 = vadd.f32 %v873, %v1049
        %v1066 = vadd.f32 %v874, %v1054
        %v1067 = vld [vmem:[%s875 + $0x1] sm:$0xff]
        %v1068 = vld [vmem:[%s875 + $0x11] sm:$0xff]
        %v1069 = vld [vmem:[%s875 + $0x21] sm:$0xff]
        %v1070 = vld [vmem:[%s875 + $0x31] sm:$0xff]
        %v1071 = vld [vmem:[%s875 + $0x41] sm:$0xff]
        %v1072 = vld [vmem:[%s875 + $0x51] sm:$0xff]
        %v1073 = vld [vmem:[%s875 + $0x61] sm:$0xff]
        %v1074 = vld [vmem:[%s875 + $0x71] sm:$0xff]
        %v1075 = vld [vmem:[%s875 + $0x81] sm:$0xff]
        %v1076 = vld [vmem:[%s875 + $0x91] sm:$0xff]
        %s1077 = scalar_lea.vmem %s1, 64
        %v1078 = vld [vmem:[%s1077] sm:$0xff]
        %v1079 = vld [vmem:[%s1077 + $0x8] sm:$0x1]
        %1090 = vrot.lane.b32.xlu0 %v1067, 125
        %v1091 = vpop.permute.xlu0 %1090
        %1092 = vrot.lane.b32.xlu0 %v1068, 125
        %v1093 = vpop.permute.xlu0 %1092
        %1094 = vrot.lane.b32.xlu0 %v1069, 125
        %v1095 = vpop.permute.xlu0 %1094
        %1096 = vrot.lane.b32.xlu0 %v1070, 125
        %v1097 = vpop.permute.xlu0 %1096
        %1098 = vrot.lane.b32.xlu0 %v1071, 125
        %v1099 = vpop.permute.xlu0 %1098
        %1100 = vrot.lane.b32.xlu0 %v1072, 125
        %v1101 = vpop.permute.xlu0 %1100
        %1102 = vrot.lane.b32.xlu0 %v1073, 125
        %v1103 = vpop.permute.xlu0 %1102
        %1104 = vrot.lane.b32.xlu0 %v1074, 125
        %v1105 = vpop.permute.xlu0 %1104
        %1106 = vrot.lane.b32.xlu0 %v1075, 125
        %v1107 = vpop.permute.xlu0 %1106
        %1108 = vrot.lane.b32.xlu0 %v1076, 125
        %v1109 = vpop.permute.xlu0 %1108
        %v1110 = vsel %vm343, %v1091, 0
        %v1112 = vsel %vm343, %v1093, 0
        %v1114 = vsel %vm343, %v1095, 0
        %v1116 = vsel %vm343, %v1097, 0
        %v1118 = vsel %vm343, %v1099, 0
        %v1120 = vsel %vm343, %v1101, 0
        %v1122 = vsel %vm343, %v1103, 0
        %v1124 = vsel %vm343, %v1105, 0
        %v1126 = vsel %vm343, %v1107, 0
        %v1128 = vsel %vm343, %v1109, 0
        %v1131 = vsel %vm364, %v1079, 0
        %1133 = vmatprep.subr.mxu0 0.0
        %1134 = vmatpush1.msra.mxu0 %v1078
        %1135 = vmatprep.subr.mxu0 0.0
        %1136 = vmatpush1.msra.mxu0 %v1131
        %1137 = vmatprep.subr.mxu0 0.0
        %1138 = vmatpush1.msra.mxu0 0.0
        %1139 = vmatprep.subr.mxu0 0.0
        %1140 = vmatpush1.msra.mxu0 0.0
        %1141 = vmatprep.subr.mxu0 0.0
        %1142 = vmatpush1.msra.mxu0 0.0
        %1143 = vmatprep.subr.mxu0 0.0
        %1144 = vmatpush1.msra.mxu0 0.0
        %1145 = vmatprep.subr.mxu0 0.0
        %1146 = vmatpush1.msra.mxu0 0.0
        %1147 = vmatprep.subr.mxu0 0.0
        %1148 = vmatpush1.msra.mxu0 0.0
        %1149 = vmatprep.subr.mxu0 0.0
        %1150 = vmatpush1.msra.mxu0 0.0
        %1151 = vmatprep.subr.mxu0 0.0
        %1152 = vmatpush1.msra.mxu0 0.0
        %1153 = vmatprep.subr.mxu0 0.0
        %1154 = vmatpush1.msra.mxu0 0.0
        %1155 = vmatprep.subr.mxu0 0.0
        %1156 = vmatpush1.msra.mxu0 0.0
        %1157 = vmatprep.subr.mxu0 0.0
        %1158 = vmatpush1.msra.mxu0 0.0
        %1159 = vmatprep.subr.mxu0 0.0
        %1160 = vmatpush1.msra.mxu0 0.0
        %1161 = vmatprep.subr.mxu0 0.0
        %1162 = vmatpush1.msra.mxu0 0.0
        %1163 = vmatprep.subr.mxu0 0.0
        %1164 = vmatpush1.msra.mxu0 0.0
        %1165 = vmatprep.subr.mxu0 0.0
        %1166 = vmatpush1.msra.mxu0 0.0
        %1167 = vmatprep.subr.mxu0 0.0
        %1168 = vmatpush1.msra.mxu0 0.0
        %1169 = vmatprep.subr.mxu0 0.0
        %1170 = vmatpush1.msra.mxu0 0.0
        %1171 = vmatprep.subr.mxu0 0.0
        %1172 = vmatpush1.msra.mxu0 0.0
        %1173 = vmatprep.subr.mxu0 0.0
        %1174 = vmatpush1.msra.mxu0 0.0
        %1175 = vmatprep.subr.mxu0 0.0
        %1176 = vmatpush1.msra.mxu0 0.0
        %1177 = vmatprep.subr.mxu0 0.0
        %1178 = vmatpush1.msra.mxu0 0.0
        %1179 = vmatprep.subr.mxu0 0.0
        %1180 = vmatpush1.msra.mxu0 0.0
        %1181 = vmatprep.subr.mxu0 0.0
        %1182 = vmatpush1.msra.mxu0 0.0
        %1183 = vmatprep.subr.mxu0 0.0
        %1184 = vmatpush1.msra.mxu0 0.0
        %1185 = vmatprep.subr.mxu0 0.0
        %1186 = vmatpush1.msra.mxu0 0.0
        %1187 = vmatprep.subr.mxu0 0.0
        %1188 = vmatpush1.msra.mxu0 0.0
        %1189 = vmatprep.subr.mxu0 0.0
        %1190 = vmatpush1.msra.mxu0 0.0
        %1191 = vmatprep.subr.mxu0 0.0
        %1192 = vmatpush1.msra.mxu0 0.0
        %1193 = vmatprep.subr.mxu0 0.0
        %1194 = vmatpush1.msra.mxu0 0.0
        %1195 = vmatprep.subr.mxu0 0.0
        %1196 = vmatpush1.msra.mxu0 0.0
        %1197 = vmatprep.mubr.f32.mxu0 0.0
        %1198 = vmatmul.mubr.f32.gmra.mrb[0].mxu0 %v1110
        %v1199 = vpop.f32.mrb[0].mxu0
        %v1200 = vadd.f32 0.0, %v1199
        %v1201 = vpop.f32.mrb[0].mxu0
        %1202 = vmatprep.mubr.f32.mxu0 0.0
        %1203 = vmatmul.mubr.f32.gmra.mrb[0].mxu0 %v1112
        %v1204 = vpop.f32.mrb[0].mxu0
        %v1205 = vadd.f32 0.0, %v1204
        %v1206 = vpop.f32.mrb[0].mxu0
        %1207 = vmatprep.mubr.f32.mxu0 0.0
        %1208 = vmatmul.mubr.f32.gmra.mrb[0].mxu0 %v1114
        %v1209 = vpop.f32.mrb[0].mxu0
        %v1210 = vadd.f32 0.0, %v1209
        %v1211 = vpop.f32.mrb[0].mxu0
        %1212 = vmatprep.mubr.f32.mxu0 0.0
        %1213 = vmatmul.mubr.f32.gmra.mrb[0].mxu0 %v1116
        %v1214 = vpop.f32.mrb[0].mxu0
        %v1215 = vadd.f32 0.0, %v1214
        %v1216 = vpop.f32.mrb[0].mxu0
        %1217 = vmatprep.mubr.f32.mxu0 0.0
        %1218 = vmatmul.mubr.f32.gmra.mrb[0].mxu0 %v1118
        %v1219 = vpop.f32.mrb[0].mxu0
        %v1220 = vadd.f32 0.0, %v1219
        %v1221 = vpop.f32.mrb[0].mxu0
        %1222 = vmatprep.mubr.f32.mxu0 0.0
        %1223 = vmatmul.mubr.f32.gmra.mrb[0].mxu0 %v1120
        %v1224 = vpop.f32.mrb[0].mxu0
        %v1225 = vadd.f32 0.0, %v1224
        %v1226 = vpop.f32.mrb[0].mxu0
        %1227 = vmatprep.mubr.f32.mxu0 0.0
        %1228 = vmatmul.mubr.f32.gmra.mrb[0].mxu0 %v1122
        %v1229 = vpop.f32.mrb[0].mxu0
        %v1230 = vadd.f32 0.0, %v1229
        %v1231 = vpop.f32.mrb[0].mxu0
        %1232 = vmatprep.mubr.f32.mxu0 0.0
        %1233 = vmatmul.mubr.f32.gmra.mrb[0].mxu0 %v1124
        %v1234 = vpop.f32.mrb[0].mxu0
        %v1235 = vadd.f32 0.0, %v1234
        %v1236 = vpop.f32.mrb[0].mxu0
        %1237 = vmatprep.mubr.f32.mxu0 0.0
        %1238 = vmatmul.mubr.f32.gmra.mrb[0].mxu0 %v1126
        %v1239 = vpop.f32.mrb[0].mxu0
        %v1240 = vadd.f32 0.0, %v1239
        %v1241 = vpop.f32.mrb[0].mxu0
        %1242 = vmatprep.mubr.f32.mxu0 0.0
        %1243 = vmatmul.mubr.f32.gmra.mrb[0].mxu0 %v1128
        %v1244 = vpop.f32.mrb[0].mxu0
        %v1245 = vadd.f32 0.0, %v1244
        %v1246 = vpop.f32.mrb[0].mxu0
        %1247 = vdwg.mxu0
        %v1248 = vadd.f32 %v1057, %v1200
        %v1249 = vadd.f32 %v1058, %v1205
        %v1250 = vadd.f32 %v1059, %v1210
        %v1251 = vadd.f32 %v1060, %v1215
        %v1252 = vadd.f32 %v1061, %v1220
        %v1253 = vadd.f32 %v1062, %v1225
        %v1254 = vadd.f32 %v1063, %v1230
        %v1255 = vadd.f32 %v1064, %v1235
        %v1256 = vadd.f32 %v1065, %v1240
        %v1257 = vadd.f32 %v1066, %v1245
        %v1258 = vld [vmem:[%s875 + $0x2] sm:$0xff]
        %v1259 = vld [vmem:[%s875 + $0x12] sm:$0xff]
        %v1260 = vld [vmem:[%s875 + $0x22] sm:$0xff]
        %v1261 = vld [vmem:[%s875 + $0x32] sm:$0xff]
        %v1262 = vld [vmem:[%s875 + $0x42] sm:$0xff]
        %v1263 = vld [vmem:[%s875 + $0x52] sm:$0xff]
        %v1264 = vld [vmem:[%s875 + $0x62] sm:$0xff]
        %v1265 = vld [vmem:[%s875 + $0x72] sm:$0xff]
        %v1266 = vld [vmem:[%s875 + $0x82] sm:$0xff]
        %v1267 = vld [vmem:[%s875 + $0x92] sm:$0xff]
        %s1268 = scalar_lea.vmem %s1, 80
        %v1269 = vld [vmem:[%s1268] sm:$0xff]
        %v1270 = vld [vmem:[%s1268 + $0x8] sm:$0x1]
        %1281 = vrot.lane.b32.xlu0 %v1258, 125
        %v1282 = vpop.permute.xlu0 %1281
        %1283 = vrot.lane.b32.xlu0 %v1259, 125
        %v1284 = vpop.permute.xlu0 %1283
        %1285 = vrot.lane.b32.xlu0 %v1260, 125
        %v1286 = vpop.permute.xlu0 %1285
        %1287 = vrot.lane.b32.xlu0 %v1261, 125
        %v1288 = vpop.permute.xlu0 %1287
        %1289 = vrot.lane.b32.xlu0 %v1262, 125
        %v1290 = vpop.permute.xlu0 %1289
        %1291 = vrot.lane.b32.xlu0 %v1263, 125
        %v1292 = vpop.permute.xlu0 %1291
        %1293 = vrot.lane.b32.xlu0 %v1264, 125
        %v1294 = vpop.permute.xlu0 %1293
        %1295 = vrot.lane.b32.xlu0 %v1265, 125
        %v1296 = vpop.permute.xlu0 %1295
        %1297 = vrot.lane.b32.xlu0 %v1266, 125
        %v1298 = vpop.permute.xlu0 %1297
        %1299 = vrot.lane.b32.xlu0 %v1267, 125
        %v1300 = vpop.permute.xlu0 %1299
        %v1301 = vsel %vm343, %v1282, 0
        %v1303 = vsel %vm343, %v1284, 0
        %v1305 = vsel %vm343, %v1286, 0
        %v1307 = vsel %vm343, %v1288, 0
        %v1309 = vsel %vm343, %v1290, 0
        %v1311 = vsel %vm343, %v1292, 0
        %v1313 = vsel %vm343, %v1294, 0
        %v1315 = vsel %vm343, %v1296, 0
        %v1317 = vsel %vm343, %v1298, 0
        %v1319 = vsel %vm343, %v1300, 0
        %v1322 = vsel %vm364, %v1270, 0
        %1324 = vmatprep.subr.mxu0 0.0
        %1325 = vmatpush1.msra.mxu0 %v1269
        %1326 = vmatprep.subr.mxu0 0.0
        %1327 = vmatpush1.msra.mxu0 %v1322
        %1328 = vmatprep.subr.mxu0 0.0
        %1329 = vmatpush1.msra.mxu0 0.0
        %1330 = vmatprep.subr.mxu0 0.0
        %1331 = vmatpush1.msra.mxu0 0.0
        %1332 = vmatprep.subr.mxu0 0.0
        %1333 = vmatpush1.msra.mxu0 0.0
        %1334 = vmatprep.subr.mxu0 0.0
        %1335 = vmatpush1.msra.mxu0 0.0
        %1336 = vmatprep.subr.mxu0 0.0
        %1337 = vmatpush1.msra.mxu0 0.0
        %1338 = vmatprep.subr.mxu0 0.0
        %1339 = vmatpush1.msra.mxu0 0.0
        %1340 = vmatprep.subr.mxu0 0.0
        %1341 = vmatpush1.msra.mxu0 0.0
        %1342 = vmatprep.subr.mxu0 0.0
        %1343 = vmatpush1.msra.mxu0 0.0
        %1344 = vmatprep.subr.mxu0 0.0
        %1345 = vmatpush1.msra.mxu0 0.0
        %1346 = vmatprep.subr.mxu0 0.0
        %1347 = vmatpush1.msra.mxu0 0.0
        %1348 = vmatprep.subr.mxu0 0.0
        %1349 = vmatpush1.msra.mxu0 0.0
        %1350 = vmatprep.subr.mxu0 0.0
        %1351 = vmatpush1.msra.mxu0 0.0
        %1352 = vmatprep.subr.mxu0 0.0
        %1353 = vmatpush1.msra.mxu0 0.0
        %1354 = vmatprep.subr.mxu0 0.0
        %1355 = vmatpush1.msra.mxu0 0.0
        %1356 = vmatprep.subr.mxu0 0.0
        %1357 = vmatpush1.msra.mxu0 0.0
        %1358 = vmatprep.subr.mxu0 0.0
        %1359 = vmatpush1.msra.mxu0 0.0
        %1360 = vmatprep.subr.mxu0 0.0
        %1361 = vmatpush1.msra.mxu0 0.0
        %1362 = vmatprep.subr.mxu0 0.0
        %1363 = vmatpush1.msra.mxu0 0.0
        %1364 = vmatprep.subr.mxu0 0.0
        %1365 = vmatpush1.msra.mxu0 0.0
        %1366 = vmatprep.subr.mxu0 0.0
        %1367 = vmatpush1.msra.mxu0 0.0
        %1368 = vmatprep.subr.mxu0 0.0
        %1369 = vmatpush1.msra.mxu0 0.0
        %1370 = vmatprep.subr.mxu0 0.0
        %1371 = vmatpush1.msra.mxu0 0.0
        %1372 = vmatprep.subr.mxu0 0.0
        %1373 = vmatpush1.msra.mxu0 0.0
        %1374 = vmatprep.subr.mxu0 0.0
        %1375 = vmatpush1.msra.mxu0 0.0
        %1376 = vmatprep.subr.mxu0 0.0
        %1377 = vmatpush1.msra.mxu0 0.0
        %1378 = vmatprep.subr.mxu0 0.0
        %1379 = vmatpush1.msra.mxu0 0.0
        %1380 = vmatprep.subr.mxu0 0.0
        %1381 = vmatpush1.msra.mxu0 0.0
        %1382 = vmatprep.subr.mxu0 0.0
        %1383 = vmatpush1.msra.mxu0 0.0
        %1384 = vmatprep.subr.mxu0 0.0
        %1385 = vmatpush1.msra.mxu0 0.0
        %1386 = vmatprep.subr.mxu0 0.0
        %1387 = vmatpush1.msra.mxu0 0.0
        %1388 = vmatprep.mubr.f32.mxu0 0.0
        %1389 = vmatmul.mubr.f32.gmra.mrb[0].mxu0 %v1301
        %v1390 = vpop.f32.mrb[0].mxu0
        %v1391 = vadd.f32 0.0, %v1390
        %v1392 = vpop.f32.mrb[0].mxu0
        %1393 = vmatprep.mubr.f32.mxu0 0.0
        %1394 = vmatmul.mubr.f32.gmra.mrb[0].mxu0 %v1303
        %v1395 = vpop.f32.mrb[0].mxu0
        %v1396 = vadd.f32 0.0, %v1395
        %v1397 = vpop.f32.mrb[0].mxu0
        %1398 = vmatprep.mubr.f32.mxu0 0.0
        %1399 = vmatmul.mubr.f32.gmra.mrb[0].mxu0 %v1305
        %v1400 = vpop.f32.mrb[0].mxu0
        %v1401 = vadd.f32 0.0, %v1400
        %v1402 = vpop.f32.mrb[0].mxu0
        %1403 = vmatprep.mubr.f32.mxu0 0.0
        %1404 = vmatmul.mubr.f32.gmra.mrb[0].mxu0 %v1307
        %v1405 = vpop.f32.mrb[0].mxu0
        %v1406 = vadd.f32 0.0, %v1405
        %v1407 = vpop.f32.mrb[0].mxu0
        %1408 = vmatprep.mubr.f32.mxu0 0.0
        %1409 = vmatmul.mubr.f32.gmra.mrb[0].mxu0 %v1309
        %v1410 = vpop.f32.mrb[0].mxu0
        %v1411 = vadd.f32 0.0, %v1410
        %v1412 = vpop.f32.mrb[0].mxu0
        %1413 = vmatprep.mubr.f32.mxu0 0.0
        %1414 = vmatmul.mubr.f32.gmra.mrb[0].mxu0 %v1311
        %v1415 = vpop.f32.mrb[0].mxu0
        %v1416 = vadd.f32 0.0, %v1415
        %v1417 = vpop.f32.mrb[0].mxu0
        %1418 = vmatprep.mubr.f32.mxu0 0.0
        %1419 = vmatmul.mubr.f32.gmra.mrb[0].mxu0 %v1313
        %v1420 = vpop.f32.mrb[0].mxu0
        %v1421 = vadd.f32 0.0, %v1420
        %v1422 = vpop.f32.mrb[0].mxu0
        %1423 = vmatprep.mubr.f32.mxu0 0.0
        %1424 = vmatmul.mubr.f32.gmra.mrb[0].mxu0 %v1315
        %v1425 = vpop.f32.mrb[0].mxu0
        %v1426 = vadd.f32 0.0, %v1425
        %v1427 = vpop.f32.mrb[0].mxu0
        %1428 = vmatprep.mubr.f32.mxu0 0.0
        %1429 = vmatmul.mubr.f32.gmra.mrb[0].mxu0 %v1317
        %v1430 = vpop.f32.mrb[0].mxu0
        %v1431 = vadd.f32 0.0, %v1430
        %v1432 = vpop.f32.mrb[0].mxu0
        %1433 = vmatprep.mubr.f32.mxu0 0.0
        %1434 = vmatmul.mubr.f32.gmra.mrb[0].mxu0 %v1319
        %v1435 = vpop.f32.mrb[0].mxu0
        %v1436 = vadd.f32 0.0, %v1435
        %v1437 = vpop.f32.mrb[0].mxu0
        %1438 = vdwg.mxu0
        %v1439 = vadd.f32 %v1248, %v1391
        %v1440 = vadd.f32 %v1249, %v1396
        %v1441 = vadd.f32 %v1250, %v1401
        %v1442 = vadd.f32 %v1251, %v1406
        %v1443 = vadd.f32 %v1252, %v1411
        %v1444 = vadd.f32 %v1253, %v1416
        %v1445 = vadd.f32 %v1254, %v1421
        %v1446 = vadd.f32 %v1255, %v1426
        %v1447 = vadd.f32 %v1256, %v1431
        %v1448 = vadd.f32 %v1257, %v1436
        %v1449 = vld [vmem:[%s283] sm:$0xff]
        %v1450 = vld [vmem:[%s283 + $0x10] sm:$0xff]
        %v1451 = vld [vmem:[%s283 + $0x20] sm:$0xff]
        %v1452 = vld [vmem:[%s283 + $0x30] sm:$0xff]
        %v1453 = vld [vmem:[%s283 + $0x40] sm:$0xff]
        %v1454 = vld [vmem:[%s283 + $0x50] sm:$0xff]
        %v1455 = vld [vmem:[%s283 + $0x60] sm:$0xff]
        %v1456 = vld [vmem:[%s283 + $0x70] sm:$0xff]
        %v1457 = vld [vmem:[%s283 + $0x80] sm:$0xff]
        %v1458 = vld [vmem:[%s283 + $0x90] sm:$0xff]
        %s1459 = scalar_lea.vmem %s1, 96
        %v1460 = vld [vmem:[%s1459] sm:$0xff]
        %v1461 = vld [vmem:[%s1459 + $0x8] sm:$0x1]
        %1472 = vrot.lane.b32.xlu0 %v1449, 125
        %v1473 = vpop.permute.xlu0 %1472
        %1474 = vrot.lane.b32.xlu0 %v1450, 125
        %v1475 = vpop.permute.xlu0 %1474
        %1476 = vrot.lane.b32.xlu0 %v1451, 125
        %v1477 = vpop.permute.xlu0 %1476
        %1478 = vrot.lane.b32.xlu0 %v1452, 125
        %v1479 = vpop.permute.xlu0 %1478
        %1480 = vrot.lane.b32.xlu0 %v1453, 125
        %v1481 = vpop.permute.xlu0 %1480
        %1482 = vrot.lane.b32.xlu0 %v1454, 125
        %v1483 = vpop.permute.xlu0 %1482
        %1484 = vrot.lane.b32.xlu0 %v1455, 125
        %v1485 = vpop.permute.xlu0 %1484
        %1486 = vrot.lane.b32.xlu0 %v1456, 125
        %v1487 = vpop.permute.xlu0 %1486
        %1488 = vrot.lane.b32.xlu0 %v1457, 125
        %v1489 = vpop.permute.xlu0 %1488
        %1490 = vrot.lane.b32.xlu0 %v1458, 125
        %v1491 = vpop.permute.xlu0 %1490
        %v1492 = vsel %vm343, %v1473, 0
        %v1494 = vsel %vm343, %v1475, 0
        %v1496 = vsel %vm343, %v1477, 0
        %v1498 = vsel %vm343, %v1479, 0
        %v1500 = vsel %vm343, %v1481, 0
        %v1502 = vsel %vm343, %v1483, 0
        %v1504 = vsel %vm343, %v1485, 0
        %v1506 = vsel %vm343, %v1487, 0
        %v1508 = vsel %vm343, %v1489, 0
        %v1510 = vsel %vm343, %v1491, 0
        %v1513 = vsel %vm364, %v1461, 0
        %1515 = vmatprep.subr.mxu0 0.0
        %1516 = vmatpush1.msra.mxu0 %v1460
        %1517 = vmatprep.subr.mxu0 0.0
        %1518 = vmatpush1.msra.mxu0 %v1513
        %1519 = vmatprep.subr.mxu0 0.0
        %1520 = vmatpush1.msra.mxu0 0.0
        %1521 = vmatprep.subr.mxu0 0.0
        %1522 = vmatpush1.msra.mxu0 0.0
        %1523 = vmatprep.subr.mxu0 0.0
        %1524 = vmatpush1.msra.mxu0 0.0
        %1525 = vmatprep.subr.mxu0 0.0
        %1526 = vmatpush1.msra.mxu0 0.0
        %1527 = vmatprep.subr.mxu0 0.0
        %1528 = vmatpush1.msra.mxu0 0.0
        %1529 = vmatprep.subr.mxu0 0.0
        %1530 = vmatpush1.msra.mxu0 0.0
        %1531 = vmatprep.subr.mxu0 0.0
        %1532 = vmatpush1.msra.mxu0 0.0
        %1533 = vmatprep.subr.mxu0 0.0
        %1534 = vmatpush1.msra.mxu0 0.0
        %1535 = vmatprep.subr.mxu0 0.0
        %1536 = vmatpush1.msra.mxu0 0.0
        %1537 = vmatprep.subr.mxu0 0.0
        %1538 = vmatpush1.msra.mxu0 0.0
        %1539 = vmatprep.subr.mxu0 0.0
        %1540 = vmatpush1.msra.mxu0 0.0
        %1541 = vmatprep.subr.mxu0 0.0
        %1542 = vmatpush1.msra.mxu0 0.0
        %1543 = vmatprep.subr.mxu0 0.0
        %1544 = vmatpush1.msra.mxu0 0.0
        %1545 = vmatprep.subr.mxu0 0.0
        %1546 = vmatpush1.msra.mxu0 0.0
        %1547 = vmatprep.subr.mxu0 0.0
        %1548 = vmatpush1.msra.mxu0 0.0
        %1549 = vmatprep.subr.mxu0 0.0
        %1550 = vmatpush1.msra.mxu0 0.0
        %1551 = vmatprep.subr.mxu0 0.0
        %1552 = vmatpush1.msra.mxu0 0.0
        %1553 = vmatprep.subr.mxu0 0.0
        %1554 = vmatpush1.msra.mxu0 0.0
        %1555 = vmatprep.subr.mxu0 0.0
        %1556 = vmatpush1.msra.mxu0 0.0
        %1557 = vmatprep.subr.mxu0 0.0
        %1558 = vmatpush1.msra.mxu0 0.0
        %1559 = vmatprep.subr.mxu0 0.0
        %1560 = vmatpush1.msra.mxu0 0.0
        %1561 = vmatprep.subr.mxu0 0.0
        %1562 = vmatpush1.msra.mxu0 0.0
        %1563 = vmatprep.subr.mxu0 0.0
        %1564 = vmatpush1.msra.mxu0 0.0
        %1565 = vmatprep.subr.mxu0 0.0
        %1566 = vmatpush1.msra.mxu0 0.0
        %1567 = vmatprep.subr.mxu0 0.0
        %1568 = vmatpush1.msra.mxu0 0.0
        %1569 = vmatprep.subr.mxu0 0.0
        %1570 = vmatpush1.msra.mxu0 0.0
        %1571 = vmatprep.subr.mxu0 0.0
        %1572 = vmatpush1.msra.mxu0 0.0
        %1573 = vmatprep.subr.mxu0 0.0
        %1574 = vmatpush1.msra.mxu0 0.0
        %1575 = vmatprep.subr.mxu0 0.0
        %1576 = vmatpush1.msra.mxu0 0.0
        %1577 = vmatprep.subr.mxu0 0.0
        %1578 = vmatpush1.msra.mxu0 0.0
        %1579 = vmatprep.mubr.f32.mxu0 0.0
        %1580 = vmatmul.mubr.f32.gmra.mrb[0].mxu0 %v1492
        %v1581 = vpop.f32.mrb[0].mxu0
        %v1582 = vadd.f32 0.0, %v1581
        %v1583 = vpop.f32.mrb[0].mxu0
        %1584 = vmatprep.mubr.f32.mxu0 0.0
        %1585 = vmatmul.mubr.f32.gmra.mrb[0].mxu0 %v1494
        %v1586 = vpop.f32.mrb[0].mxu0
        %v1587 = vadd.f32 0.0, %v1586
        %v1588 = vpop.f32.mrb[0].mxu0
        %1589 = vmatprep.mubr.f32.mxu0 0.0
        %1590 = vmatmul.mubr.f32.gmra.mrb[0].mxu0 %v1496
        %v1591 = vpop.f32.mrb[0].mxu0
        %v1592 = vadd.f32 0.0, %v1591
        %v1593 = vpop.f32.mrb[0].mxu0
        %1594 = vmatprep.mubr.f32.mxu0 0.0
        %1595 = vmatmul.mubr.f32.gmra.mrb[0].mxu0 %v1498
        %v1596 = vpop.f32.mrb[0].mxu0
        %v1597 = vadd.f32 0.0, %v1596
        %v1598 = vpop.f32.mrb[0].mxu0
        %1599 = vmatprep.mubr.f32.mxu0 0.0
        %1600 = vmatmul.mubr.f32.gmra.mrb[0].mxu0 %v1500
        %v1601 = vpop.f32.mrb[0].mxu0
        %v1602 = vadd.f32 0.0, %v1601
        %v1603 = vpop.f32.mrb[0].mxu0
        %1604 = vmatprep.mubr.f32.mxu0 0.0
        %1605 = vmatmul.mubr.f32.gmra.mrb[0].mxu0 %v1502
        %v1606 = vpop.f32.mrb[0].mxu0
        %v1607 = vadd.f32 0.0, %v1606
        %v1608 = vpop.f32.mrb[0].mxu0
        %1609 = vmatprep.mubr.f32.mxu0 0.0
        %1610 = vmatmul.mubr.f32.gmra.mrb[0].mxu0 %v1504
        %v1611 = vpop.f32.mrb[0].mxu0
        %v1612 = vadd.f32 0.0, %v1611
        %v1613 = vpop.f32.mrb[0].mxu0
        %1614 = vmatprep.mubr.f32.mxu0 0.0
        %1615 = vmatmul.mubr.f32.gmra.mrb[0].mxu0 %v1506
        %v1616 = vpop.f32.mrb[0].mxu0
        %v1617 = vadd.f32 0.0, %v1616
        %v1618 = vpop.f32.mrb[0].mxu0
        %1619 = vmatprep.mubr.f32.mxu0 0.0
        %1620 = vmatmul.mubr.f32.gmra.mrb[0].mxu0 %v1508
        %v1621 = vpop.f32.mrb[0].mxu0
        %v1622 = vadd.f32 0.0, %v1621
        %v1623 = vpop.f32.mrb[0].mxu0
        %1624 = vmatprep.mubr.f32.mxu0 0.0
        %1625 = vmatmul.mubr.f32.gmra.mrb[0].mxu0 %v1510
        %v1626 = vpop.f32.mrb[0].mxu0
        %v1627 = vadd.f32 0.0, %v1626
        %v1628 = vpop.f32.mrb[0].mxu0
        %1629 = vdwg.mxu0
        %v1630 = vadd.f32 %v1439, %v1582
        %v1631 = vadd.f32 %v1440, %v1587
        %v1632 = vadd.f32 %v1441, %v1592
        %v1633 = vadd.f32 %v1442, %v1597
        %v1634 = vadd.f32 %v1443, %v1602
        %v1635 = vadd.f32 %v1444, %v1607
        %v1636 = vadd.f32 %v1445, %v1612
        %v1637 = vadd.f32 %v1446, %v1617
        %v1638 = vadd.f32 %v1447, %v1622
        %v1639 = vadd.f32 %v1448, %v1627
        %v1640 = vld [vmem:[%s283 + $0x1] sm:$0xff]
        %v1641 = vld [vmem:[%s283 + $0x11] sm:$0xff]
        %v1642 = vld [vmem:[%s283 + $0x21] sm:$0xff]
        %v1643 = vld [vmem:[%s283 + $0x31] sm:$0xff]
        %v1644 = vld [vmem:[%s283 + $0x41] sm:$0xff]
        %v1645 = vld [vmem:[%s283 + $0x51] sm:$0xff]
        %v1646 = vld [vmem:[%s283 + $0x61] sm:$0xff]
        %v1647 = vld [vmem:[%s283 + $0x71] sm:$0xff]
        %v1648 = vld [vmem:[%s283 + $0x81] sm:$0xff]
        %v1649 = vld [vmem:[%s283 + $0x91] sm:$0xff]
        %s1650 = scalar_lea.vmem %s1, 112
        %v1651 = vld [vmem:[%s1650] sm:$0xff]
        %v1652 = vld [vmem:[%s1650 + $0x8] sm:$0x1]
        %1663 = vrot.lane.b32.xlu0 %v1640, 125
        %v1664 = vpop.permute.xlu0 %1663
        %1665 = vrot.lane.b32.xlu0 %v1641, 125
        %v1666 = vpop.permute.xlu0 %1665
        %1667 = vrot.lane.b32.xlu0 %v1642, 125
        %v1668 = vpop.permute.xlu0 %1667
        %1669 = vrot.lane.b32.xlu0 %v1643, 125
        %v1670 = vpop.permute.xlu0 %1669
        %1671 = vrot.lane.b32.xlu0 %v1644, 125
        %v1672 = vpop.permute.xlu0 %1671
        %1673 = vrot.lane.b32.xlu0 %v1645, 125
        %v1674 = vpop.permute.xlu0 %1673
        %1675 = vrot.lane.b32.xlu0 %v1646, 125
        %v1676 = vpop.permute.xlu0 %1675
        %1677 = vrot.lane.b32.xlu0 %v1647, 125
        %v1678 = vpop.permute.xlu0 %1677
        %1679 = vrot.lane.b32.xlu0 %v1648, 125
        %v1680 = vpop.permute.xlu0 %1679
        %1681 = vrot.lane.b32.xlu0 %v1649, 125
        %v1682 = vpop.permute.xlu0 %1681
        %v1683 = vsel %vm343, %v1664, 0
        %v1685 = vsel %vm343, %v1666, 0
        %v1687 = vsel %vm343, %v1668, 0
        %v1689 = vsel %vm343, %v1670, 0
        %v1691 = vsel %vm343, %v1672, 0
        %v1693 = vsel %vm343, %v1674, 0
        %v1695 = vsel %vm343, %v1676, 0
        %v1697 = vsel %vm343, %v1678, 0
        %v1699 = vsel %vm343, %v1680, 0
        %v1701 = vsel %vm343, %v1682, 0
        %v1704 = vsel %vm364, %v1652, 0
        %1706 = vmatprep.subr.mxu0 0.0
        %1707 = vmatpush1.msra.mxu0 %v1651
        %1708 = vmatprep.subr.mxu0 0.0
        %1709 = vmatpush1.msra.mxu0 %v1704
        %1710 = vmatprep.subr.mxu0 0.0
        %1711 = vmatpush1.msra.mxu0 0.0
        %1712 = vmatprep.subr.mxu0 0.0
        %1713 = vmatpush1.msra.mxu0 0.0
        %1714 = vmatprep.subr.mxu0 0.0
        %1715 = vmatpush1.msra.mxu0 0.0
        %1716 = vmatprep.subr.mxu0 0.0
        %1717 = vmatpush1.msra.mxu0 0.0
        %1718 = vmatprep.subr.mxu0 0.0
        %1719 = vmatpush1.msra.mxu0 0.0
        %1720 = vmatprep.subr.mxu0 0.0
        %1721 = vmatpush1.msra.mxu0 0.0
        %1722 = vmatprep.subr.mxu0 0.0
        %1723 = vmatpush1.msra.mxu0 0.0
        %1724 = vmatprep.subr.mxu0 0.0
        %1725 = vmatpush1.msra.mxu0 0.0
        %1726 = vmatprep.subr.mxu0 0.0
        %1727 = vmatpush1.msra.mxu0 0.0
        %1728 = vmatprep.subr.mxu0 0.0
        %1729 = vmatpush1.msra.mxu0 0.0
        %1730 = vmatprep.subr.mxu0 0.0
        %1731 = vmatpush1.msra.mxu0 0.0
        %1732 = vmatprep.subr.mxu0 0.0
        %1733 = vmatpush1.msra.mxu0 0.0
        %1734 = vmatprep.subr.mxu0 0.0
        %1735 = vmatpush1.msra.mxu0 0.0
        %1736 = vmatprep.subr.mxu0 0.0
        %1737 = vmatpush1.msra.mxu0 0.0
        %1738 = vmatprep.subr.mxu0 0.0
        %1739 = vmatpush1.msra.mxu0 0.0
        %1740 = vmatprep.subr.mxu0 0.0
        %1741 = vmatpush1.msra.mxu0 0.0
        %1742 = vmatprep.subr.mxu0 0.0
        %1743 = vmatpush1.msra.mxu0 0.0
        %1744 = vmatprep.subr.mxu0 0.0
        %1745 = vmatpush1.msra.mxu0 0.0
        %1746 = vmatprep.subr.mxu0 0.0
        %1747 = vmatpush1.msra.mxu0 0.0
        %1748 = vmatprep.subr.mxu0 0.0
        %1749 = vmatpush1.msra.mxu0 0.0
        %1750 = vmatprep.subr.mxu0 0.0
        %1751 = vmatpush1.msra.mxu0 0.0
        %1752 = vmatprep.subr.mxu0 0.0
        %1753 = vmatpush1.msra.mxu0 0.0
        %1754 = vmatprep.subr.mxu0 0.0
        %1755 = vmatpush1.msra.mxu0 0.0
        %1756 = vmatprep.subr.mxu0 0.0
        %1757 = vmatpush1.msra.mxu0 0.0
        %1758 = vmatprep.subr.mxu0 0.0
        %1759 = vmatpush1.msra.mxu0 0.0
        %1760 = vmatprep.subr.mxu0 0.0
        %1761 = vmatpush1.msra.mxu0 0.0
        %1762 = vmatprep.subr.mxu0 0.0
        %1763 = vmatpush1.msra.mxu0 0.0
        %1764 = vmatprep.subr.mxu0 0.0
        %1765 = vmatpush1.msra.mxu0 0.0
        %1766 = vmatprep.subr.mxu0 0.0
        %1767 = vmatpush1.msra.mxu0 0.0
        %1768 = vmatprep.subr.mxu0 0.0
        %1769 = vmatpush1.msra.mxu0 0.0
        %1770 = vmatprep.mubr.f32.mxu0 0.0
        %1771 = vmatmul.mubr.f32.gmra.mrb[0].mxu0 %v1683
        %v1772 = vpop.f32.mrb[0].mxu0
        %v1773 = vadd.f32 0.0, %v1772
        %v1774 = vpop.f32.mrb[0].mxu0
        %1775 = vmatprep.mubr.f32.mxu0 0.0
        %1776 = vmatmul.mubr.f32.gmra.mrb[0].mxu0 %v1685
        %v1777 = vpop.f32.mrb[0].mxu0
        %v1778 = vadd.f32 0.0, %v1777
        %v1779 = vpop.f32.mrb[0].mxu0
        %1780 = vmatprep.mubr.f32.mxu0 0.0
        %1781 = vmatmul.mubr.f32.gmra.mrb[0].mxu0 %v1687
        %v1782 = vpop.f32.mrb[0].mxu0
        %v1783 = vadd.f32 0.0, %v1782
        %v1784 = vpop.f32.mrb[0].mxu0
        %1785 = vmatprep.mubr.f32.mxu0 0.0
        %1786 = vmatmul.mubr.f32.gmra.mrb[0].mxu0 %v1689
        %v1787 = vpop.f32.mrb[0].mxu0
        %v1788 = vadd.f32 0.0, %v1787
        %v1789 = vpop.f32.mrb[0].mxu0
        %1790 = vmatprep.mubr.f32.mxu0 0.0
        %1791 = vmatmul.mubr.f32.gmra.mrb[0].mxu0 %v1691
        %v1792 = vpop.f32.mrb[0].mxu0
        %v1793 = vadd.f32 0.0, %v1792
        %v1794 = vpop.f32.mrb[0].mxu0
        %1795 = vmatprep.mubr.f32.mxu0 0.0
        %1796 = vmatmul.mubr.f32.gmra.mrb[0].mxu0 %v1693
        %v1797 = vpop.f32.mrb[0].mxu0
        %v1798 = vadd.f32 0.0, %v1797
        %v1799 = vpop.f32.mrb[0].mxu0
        %1800 = vmatprep.mubr.f32.mxu0 0.0
        %1801 = vmatmul.mubr.f32.gmra.mrb[0].mxu0 %v1695
        %v1802 = vpop.f32.mrb[0].mxu0
        %v1803 = vadd.f32 0.0, %v1802
        %v1804 = vpop.f32.mrb[0].mxu0
        %1805 = vmatprep.mubr.f32.mxu0 0.0
        %1806 = vmatmul.mubr.f32.gmra.mrb[0].mxu0 %v1697
        %v1807 = vpop.f32.mrb[0].mxu0
        %v1808 = vadd.f32 0.0, %v1807
        %v1809 = vpop.f32.mrb[0].mxu0
        %1810 = vmatprep.mubr.f32.mxu0 0.0
        %1811 = vmatmul.mubr.f32.gmra.mrb[0].mxu0 %v1699
        %v1812 = vpop.f32.mrb[0].mxu0
        %v1813 = vadd.f32 0.0, %v1812
        %v1814 = vpop.f32.mrb[0].mxu0
        %1815 = vmatprep.mubr.f32.mxu0 0.0
        %1816 = vmatmul.mubr.f32.gmra.mrb[0].mxu0 %v1701
        %v1817 = vpop.f32.mrb[0].mxu0
        %v1818 = vadd.f32 0.0, %v1817
        %v1819 = vpop.f32.mrb[0].mxu0
        %1820 = vdwg.mxu0
        %v1821 = vadd.f32 %v1630, %v1773
        %v1822 = vadd.f32 %v1631, %v1778
        %v1823 = vadd.f32 %v1632, %v1783
        %v1824 = vadd.f32 %v1633, %v1788
        %v1825 = vadd.f32 %v1634, %v1793
        %v1826 = vadd.f32 %v1635, %v1798
        %v1827 = vadd.f32 %v1636, %v1803
        %v1828 = vadd.f32 %v1637, %v1808
        %v1829 = vadd.f32 %v1638, %v1813
        %v1830 = vadd.f32 %v1639, %v1818
        %v1831 = vld [vmem:[%s283 + $0x2] sm:$0xff]
        %v1832 = vld [vmem:[%s283 + $0x12] sm:$0xff]
        %v1833 = vld [vmem:[%s283 + $0x22] sm:$0xff]
        %v1834 = vld [vmem:[%s283 + $0x32] sm:$0xff]
        %v1835 = vld [vmem:[%s283 + $0x42] sm:$0xff]
        %v1836 = vld [vmem:[%s283 + $0x52] sm:$0xff]
        %v1837 = vld [vmem:[%s283 + $0x62] sm:$0xff]
        %v1838 = vld [vmem:[%s283 + $0x72] sm:$0xff]
        %v1839 = vld [vmem:[%s283 + $0x82] sm:$0xff]
        %v1840 = vld [vmem:[%s283 + $0x92] sm:$0xff]
        %s1841 = scalar_lea.vmem %s1, 128
        %v1842 = vld [vmem:[%s1841] sm:$0xff]
        %v1843 = vld [vmem:[%s1841 + $0x8] sm:$0x1]
        %1854 = vrot.lane.b32.xlu0 %v1831, 125
        %v1855 = vpop.permute.xlu0 %1854
        %1856 = vrot.lane.b32.xlu0 %v1832, 125
        %v1857 = vpop.permute.xlu0 %1856
        %1858 = vrot.lane.b32.xlu0 %v1833, 125
        %v1859 = vpop.permute.xlu0 %1858
        %1860 = vrot.lane.b32.xlu0 %v1834, 125
        %v1861 = vpop.permute.xlu0 %1860
        %1862 = vrot.lane.b32.xlu0 %v1835, 125
        %v1863 = vpop.permute.xlu0 %1862
        %1864 = vrot.lane.b32.xlu0 %v1836, 125
        %v1865 = vpop.permute.xlu0 %1864
        %1866 = vrot.lane.b32.xlu0 %v1837, 125
        %v1867 = vpop.permute.xlu0 %1866
        %1868 = vrot.lane.b32.xlu0 %v1838, 125
        %v1869 = vpop.permute.xlu0 %1868
        %1870 = vrot.lane.b32.xlu0 %v1839, 125
        %v1871 = vpop.permute.xlu0 %1870
        %1872 = vrot.lane.b32.xlu0 %v1840, 125
        %v1873 = vpop.permute.xlu0 %1872
        %v1874 = vsel %vm343, %v1855, 0
        %v1876 = vsel %vm343, %v1857, 0
        %v1878 = vsel %vm343, %v1859, 0
        %v1880 = vsel %vm343, %v1861, 0
        %v1882 = vsel %vm343, %v1863, 0
        %v1884 = vsel %vm343, %v1865, 0
        %v1886 = vsel %vm343, %v1867, 0
        %v1888 = vsel %vm343, %v1869, 0
        %v1890 = vsel %vm343, %v1871, 0
        %v1892 = vsel %vm343, %v1873, 0
        %v1895 = vsel %vm364, %v1843, 0
        %1897 = vmatprep.subr.mxu0 0.0
        %1898 = vmatpush1.msra.mxu0 %v1842
        %1899 = vmatprep.subr.mxu0 0.0
        %1900 = vmatpush1.msra.mxu0 %v1895
        %1901 = vmatprep.subr.mxu0 0.0
        %1902 = vmatpush1.msra.mxu0 0.0
        %1903 = vmatprep.subr.mxu0 0.0
        %1904 = vmatpush1.msra.mxu0 0.0
        %1905 = vmatprep.subr.mxu0 0.0
        %1906 = vmatpush1.msra.mxu0 0.0
        %1907 = vmatprep.subr.mxu0 0.0
        %1908 = vmatpush1.msra.mxu0 0.0
        %1909 = vmatprep.subr.mxu0 0.0
        %1910 = vmatpush1.msra.mxu0 0.0
        %1911 = vmatprep.subr.mxu0 0.0
        %1912 = vmatpush1.msra.mxu0 0.0
        %1913 = vmatprep.subr.mxu0 0.0
        %1914 = vmatpush1.msra.mxu0 0.0
        %1915 = vmatprep.subr.mxu0 0.0
        %1916 = vmatpush1.msra.mxu0 0.0
        %1917 = vmatprep.subr.mxu0 0.0
        %1918 = vmatpush1.msra.mxu0 0.0
        %1919 = vmatprep.subr.mxu0 0.0
        %1920 = vmatpush1.msra.mxu0 0.0
        %1921 = vmatprep.subr.mxu0 0.0
        %1922 = vmatpush1.msra.mxu0 0.0
        %1923 = vmatprep.subr.mxu0 0.0
        %1924 = vmatpush1.msra.mxu0 0.0
        %1925 = vmatprep.subr.mxu0 0.0
        %1926 = vmatpush1.msra.mxu0 0.0
        %1927 = vmatprep.subr.mxu0 0.0
        %1928 = vmatpush1.msra.mxu0 0.0
        %1929 = vmatprep.subr.mxu0 0.0
        %1930 = vmatpush1.msra.mxu0 0.0
        %1931 = vmatprep.subr.mxu0 0.0
        %1932 = vmatpush1.msra.mxu0 0.0
        %1933 = vmatprep.subr.mxu0 0.0
        %1934 = vmatpush1.msra.mxu0 0.0
        %1935 = vmatprep.subr.mxu0 0.0
        %1936 = vmatpush1.msra.mxu0 0.0
        %1937 = vmatprep.subr.mxu0 0.0
        %1938 = vmatpush1.msra.mxu0 0.0
        %1939 = vmatprep.subr.mxu0 0.0
        %1940 = vmatpush1.msra.mxu0 0.0
        %1941 = vmatprep.subr.mxu0 0.0
        %1942 = vmatpush1.msra.mxu0 0.0
        %1943 = vmatprep.subr.mxu0 0.0
        %1944 = vmatpush1.msra.mxu0 0.0
        %1945 = vmatprep.subr.mxu0 0.0
        %1946 = vmatpush1.msra.mxu0 0.0
        %1947 = vmatprep.subr.mxu0 0.0
        %1948 = vmatpush1.msra.mxu0 0.0
        %1949 = vmatprep.subr.mxu0 0.0
        %1950 = vmatpush1.msra.mxu0 0.0
        %1951 = vmatprep.subr.mxu0 0.0
        %1952 = vmatpush1.msra.mxu0 0.0
        %1953 = vmatprep.subr.mxu0 0.0
        %1954 = vmatpush1.msra.mxu0 0.0
        %1955 = vmatprep.subr.mxu0 0.0
        %1956 = vmatpush1.msra.mxu0 0.0
        %1957 = vmatprep.subr.mxu0 0.0
        %1958 = vmatpush1.msra.mxu0 0.0
        %1959 = vmatprep.subr.mxu0 0.0
        %1960 = vmatpush1.msra.mxu0 0.0
        %1961 = vmatprep.mubr.f32.mxu0 0.0
        %1962 = vmatmul.mubr.f32.gmra.mrb[0].mxu0 %v1874
        %v1963 = vpop.f32.mrb[0].mxu0
        %v1964 = vadd.f32 0.0, %v1963
        %v1965 = vpop.f32.mrb[0].mxu0
        %1966 = vmatprep.mubr.f32.mxu0 0.0
        %1967 = vmatmul.mubr.f32.gmra.mrb[0].mxu0 %v1876
        %v1968 = vpop.f32.mrb[0].mxu0
        %v1969 = vadd.f32 0.0, %v1968
        %v1970 = vpop.f32.mrb[0].mxu0
        %1971 = vmatprep.mubr.f32.mxu0 0.0
        %1972 = vmatmul.mubr.f32.gmra.mrb[0].mxu0 %v1878
        %v1973 = vpop.f32.mrb[0].mxu0
        %v1974 = vadd.f32 0.0, %v1973
        %v1975 = vpop.f32.mrb[0].mxu0
        %1976 = vmatprep.mubr.f32.mxu0 0.0
        %1977 = vmatmul.mubr.f32.gmra.mrb[0].mxu0 %v1880
        %v1978 = vpop.f32.mrb[0].mxu0
        %v1979 = vadd.f32 0.0, %v1978
        %v1980 = vpop.f32.mrb[0].mxu0
        %1981 = vmatprep.mubr.f32.mxu0 0.0
        %1982 = vmatmul.mubr.f32.gmra.mrb[0].mxu0 %v1882
        %v1983 = vpop.f32.mrb[0].mxu0
        %v1984 = vadd.f32 0.0, %v1983
        %v1985 = vpop.f32.mrb[0].mxu0
        %1986 = vmatprep.mubr.f32.mxu0 0.0
        %1987 = vmatmul.mubr.f32.gmra.mrb[0].mxu0 %v1884
        %v1988 = vpop.f32.mrb[0].mxu0
        %v1989 = vadd.f32 0.0, %v1988
        %v1990 = vpop.f32.mrb[0].mxu0
        %1991 = vmatprep.mubr.f32.mxu0 0.0
        %1992 = vmatmul.mubr.f32.gmra.mrb[0].mxu0 %v1886
        %v1993 = vpop.f32.mrb[0].mxu0
        %v1994 = vadd.f32 0.0, %v1993
        %v1995 = vpop.f32.mrb[0].mxu0
        %1996 = vmatprep.mubr.f32.mxu0 0.0
        %1997 = vmatmul.mubr.f32.gmra.mrb[0].mxu0 %v1888
        %v1998 = vpop.f32.mrb[0].mxu0
        %v1999 = vadd.f32 0.0, %v1998
        %v2000 = vpop.f32.mrb[0].mxu0
        %2001 = vmatprep.mubr.f32.mxu0 0.0
        %2002 = vmatmul.mubr.f32.gmra.mrb[0].mxu0 %v1890
        %v2003 = vpop.f32.mrb[0].mxu0
        %v2004 = vadd.f32 0.0, %v2003
        %v2005 = vpop.f32.mrb[0].mxu0
        %2006 = vmatprep.mubr.f32.mxu0 0.0
        %2007 = vmatmul.mubr.f32.gmra.mrb[0].mxu0 %v1892
        %v2008 = vpop.f32.mrb[0].mxu0
        %v2009 = vadd.f32 0.0, %v2008
        %v2010 = vpop.f32.mrb[0].mxu0
        %2011 = vdwg.mxu0
        %v2012 = vadd.f32 %v1821, %v1964
        %v2013 = vadd.f32 %v1822, %v1969
        %v2014 = vadd.f32 %v1823, %v1974
        %v2015 = vadd.f32 %v1824, %v1979
        %v2016 = vadd.f32 %v1825, %v1984
        %v2017 = vadd.f32 %v1826, %v1989
        %v2018 = vadd.f32 %v1827, %v1994
        %v2019 = vadd.f32 %v1828, %v1999
        %v2020 = vadd.f32 %v1829, %v2004
        %v2021 = vadd.f32 %v1830, %v2009
        %v2022 = vadd.f32 %v1067, %v2012
        %v2023 = vadd.f32 %v1068, %v2013
        %v2024 = vadd.f32 %v1069, %v2014
        %v2025 = vadd.f32 %v1070, %v2015
        %v2026 = vadd.f32 %v1071, %v2016
        %v2027 = vadd.f32 %v1072, %v2017
        %v2028 = vadd.f32 %v1073, %v2018
        %v2029 = vadd.f32 %v1074, %v2019
        %v2030 = vadd.f32 %v1075, %v2020
        %v2031 = vadd.f32 %v1076, %v2021
        %v2032 = vsel 0, %v2022, 0.0
        %v2033 = vsel 1, %v2023, 0.0
        %v2034 = vsel 1, %v2024, 0.0
        %v2035 = vsel 1, %v2025, 0.0
        %v2036 = vsel 1, %v2026, 0.0
        %v2037 = vsel 1, %v2027, 0.0
        %v2038 = vsel 1, %v2028, 0.0
        %v2039 = vsel 1, %v2029, 0.0
        %v2040 = vsel 1, %v2030, 0.0
        %v2041 = vsel 0, %v2031, 0.0
        %vm2042 = vcmask 23552
        %2043 = vst.msk [vmem:[#allocation3 + $0x1] sm:$0xff] %vm2042, %v2032
        %2044 = vst.msk [vmem:[#allocation3 + $0x11] sm:$0xff] %vm2042, %v2033
        %2045 = vst.msk [vmem:[#allocation3 + $0x21] sm:$0xff] %vm2042, %v2034
        %2046 = vst.msk [vmem:[#allocation3 + $0x31] sm:$0xff] %vm2042, %v2035
        %2047 = vst.msk [vmem:[#allocation3 + $0x41] sm:$0xff] %vm2042, %v2036
        %2048 = vst.msk [vmem:[#allocation3 + $0x51] sm:$0xff] %vm2042, %v2037
        %2049 = vst.msk [vmem:[#allocation3 + $0x61] sm:$0xff] %vm2042, %v2038
        %2050 = vst.msk [vmem:[#allocation3 + $0x71] sm:$0xff] %vm2042, %v2039
        %2051 = vst.msk [vmem:[#allocation3 + $0x81] sm:$0xff] %vm2042, %v2040
        %2052 = vst.msk [vmem:[#allocation3 + $0x91] sm:$0xff] %vm2042, %v2041
        %v2053 = vld [vmem:[%s4] sm:$0x1]
        %v2055 = vlaneseq
        %v2056 = vshrl.u32 %v2055, 7
        %v2057 = vsub.s32 0, %v2056
        %v2058 = vrot.slane %v2053, %v2057
        %v2060 = vadd.f32 %v2058, 0.0
        %v2061 = vld [vmem:[#allocation3] sm:$0xff]
        %v2062 = vld [vmem:[#allocation3 + $0x10] sm:$0xff]
        %v2063 = vld [vmem:[#allocation3 + $0x20] sm:$0xff]
        %v2064 = vld [vmem:[#allocation3 + $0x30] sm:$0xff]
        %v2065 = vld [vmem:[#allocation3 + $0x40] sm:$0xff]
        %v2066 = vld [vmem:[#allocation3 + $0x50] sm:$0xff]
        %v2067 = vld [vmem:[#allocation3 + $0x60] sm:$0xff]
        %v2068 = vld [vmem:[#allocation3 + $0x70] sm:$0xff]
        %v2069 = vld [vmem:[%s3] sm:$0x7]
        %v2071 = vsel %vm2042, %v2061, 0
        %v2074 = vsel %vm2042, %v2062, 0
        %v2077 = vsel %vm2042, %v2063, 0
        %v2080 = vsel %vm2042, %v2064, 0
        %v2083 = vsel %vm2042, %v2065, 0
        %v2086 = vsel %vm2042, %v2066, 0
        %v2089 = vsel %vm2042, %v2067, 0
        %v2092 = vsel %vm2042, %v2068, 0
        %vm2094 = vcmask 1042432
        %v2096 = vsel %vm2094, %v2069, 0
        %2098 = vmatprep.subr.mxu0 0.0
        %2099 = vmatpush1.msra.mxu0 %v2096
        %2100 = vmatprep.subr.mxu0 0.0
        %2101 = vmatpush1.msra.mxu0 0.0
        %2102 = vmatprep.subr.mxu0 0.0
        %2103 = vmatpush1.msra.mxu0 0.0
        %2104 = vmatprep.subr.mxu0 0.0
        %2105 = vmatpush1.msra.mxu0 0.0
        %2106 = vmatprep.subr.mxu0 0.0
        %2107 = vmatpush1.msra.mxu0 0.0
        %2108 = vmatprep.subr.mxu0 0.0
        %2109 = vmatpush1.msra.mxu0 0.0
        %2110 = vmatprep.subr.mxu0 0.0
        %2111 = vmatpush1.msra.mxu0 0.0
        %2112 = vmatprep.subr.mxu0 0.0
        %2113 = vmatpush1.msra.mxu0 0.0
        %2114 = vmatprep.subr.mxu0 0.0
        %2115 = vmatpush1.msra.mxu0 0.0
        %2116 = vmatprep.subr.mxu0 0.0
        %2117 = vmatpush1.msra.mxu0 0.0
        %2118 = vmatprep.subr.mxu0 0.0
        %2119 = vmatpush1.msra.mxu0 0.0
        %2120 = vmatprep.subr.mxu0 0.0
        %2121 = vmatpush1.msra.mxu0 0.0
        %2122 = vmatprep.subr.mxu0 0.0
        %2123 = vmatpush1.msra.mxu0 0.0
        %2124 = vmatprep.subr.mxu0 0.0
        %2125 = vmatpush1.msra.mxu0 0.0
        %2126 = vmatprep.subr.mxu0 0.0
        %2127 = vmatpush1.msra.mxu0 0.0
        %2128 = vmatprep.subr.mxu0 0.0
        %2129 = vmatpush1.msra.mxu0 0.0
        %2130 = vmatprep.subr.mxu0 0.0
        %2131 = vmatpush1.msra.mxu0 0.0
        %2132 = vmatprep.subr.mxu0 0.0
        %2133 = vmatpush1.msra.mxu0 0.0
        %2134 = vmatprep.subr.mxu0 0.0
        %2135 = vmatpush1.msra.mxu0 0.0
        %2136 = vmatprep.subr.mxu0 0.0
        %2137 = vmatpush1.msra.mxu0 0.0
        %2138 = vmatprep.subr.mxu0 0.0
        %2139 = vmatpush1.msra.mxu0 0.0
        %2140 = vmatprep.subr.mxu0 0.0
        %2141 = vmatpush1.msra.mxu0 0.0
        %2142 = vmatprep.subr.mxu0 0.0
        %2143 = vmatpush1.msra.mxu0 0.0
        %2144 = vmatprep.subr.mxu0 0.0
        %2145 = vmatpush1.msra.mxu0 0.0
        %2146 = vmatprep.subr.mxu0 0.0
        %2147 = vmatpush1.msra.mxu0 0.0
        %2148 = vmatprep.subr.mxu0 0.0
        %2149 = vmatpush1.msra.mxu0 0.0
        %2150 = vmatprep.subr.mxu0 0.0
        %2151 = vmatpush1.msra.mxu0 0.0
        %2152 = vmatprep.subr.mxu0 0.0
        %2153 = vmatpush1.msra.mxu0 0.0
        %2154 = vmatprep.subr.mxu0 0.0
        %2155 = vmatpush1.msra.mxu0 0.0
        %2156 = vmatprep.subr.mxu0 0.0
        %2157 = vmatpush1.msra.mxu0 0.0
        %2158 = vmatprep.subr.mxu0 0.0
        %2159 = vmatpush1.msra.mxu0 0.0
        %2160 = vmatprep.subr.mxu0 0.0
        %2161 = vmatpush1.msra.mxu0 0.0
        %2162 = vmatprep.mubr.f32.mxu0 0.0
        %2163 = vmatmul.mubr.f32.gmra.mrb[0].mxu0 %v2071
        %v2164 = vpop.f32.mrb[0].mxu0
        %v2165 = vadd.f32 0.0, %v2164
        %v2166 = vpop.f32.mrb[0].mxu0
        %2167 = vmatprep.mubr.f32.mxu0 0.0
        %2168 = vmatmul.mubr.f32.gmra.mrb[0].mxu0 %v2074
        %v2169 = vpop.f32.mrb[0].mxu0
        %v2170 = vadd.f32 0.0, %v2169
        %v2171 = vpop.f32.mrb[0].mxu0
        %2172 = vmatprep.mubr.f32.mxu0 0.0
        %2173 = vmatmul.mubr.f32.gmra.mrb[0].mxu0 %v2077
        %v2174 = vpop.f32.mrb[0].mxu0
        %v2175 = vadd.f32 0.0, %v2174
        %v2176 = vpop.f32.mrb[0].mxu0
        %2177 = vmatprep.mubr.f32.mxu0 0.0
        %2178 = vmatmul.mubr.f32.gmra.mrb[0].mxu0 %v2080
        %v2179 = vpop.f32.mrb[0].mxu0
        %v2180 = vadd.f32 0.0, %v2179
        %v2181 = vpop.f32.mrb[0].mxu0
        %2182 = vmatprep.mubr.f32.mxu0 0.0
        %2183 = vmatmul.mubr.f32.gmra.mrb[0].mxu0 %v2083
        %v2184 = vpop.f32.mrb[0].mxu0
        %v2185 = vadd.f32 0.0, %v2184
        %v2186 = vpop.f32.mrb[0].mxu0
        %2187 = vmatprep.mubr.f32.mxu0 0.0
        %2188 = vmatmul.mubr.f32.gmra.mrb[0].mxu0 %v2086
        %v2189 = vpop.f32.mrb[0].mxu0
        %v2190 = vadd.f32 0.0, %v2189
        %v2191 = vpop.f32.mrb[0].mxu0
        %2192 = vmatprep.mubr.f32.mxu0 0.0
        %2193 = vmatmul.mubr.f32.gmra.mrb[0].mxu0 %v2089
        %v2194 = vpop.f32.mrb[0].mxu0
        %v2195 = vadd.f32 0.0, %v2194
        %v2196 = vpop.f32.mrb[0].mxu0
        %2197 = vmatprep.mubr.f32.mxu0 0.0
        %2198 = vmatmul.mubr.f32.gmra.mrb[0].mxu0 %v2092
        %v2199 = vpop.f32.mrb[0].mxu0
        %v2200 = vadd.f32 0.0, %v2199
        %v2201 = vpop.f32.mrb[0].mxu0
        %2202 = vdwg.mxu0
        %v2203 = vadd.f32 %v2060, %v2165
        %v2204 = vadd.f32 %v2060, %v2170
        %v2205 = vadd.f32 %v2060, %v2175
        %v2206 = vadd.f32 %v2060, %v2180
        %v2207 = vadd.f32 %v2060, %v2185
        %v2208 = vadd.f32 %v2060, %v2190
        %v2209 = vadd.f32 %v2060, %v2195
        %v2210 = vadd.f32 %v2060, %v2200
        %v2211 = vld [vmem:[#allocation3 + $0x1] sm:$0xff]
        %v2212 = vld [vmem:[#allocation3 + $0x11] sm:$0xff]
        %v2213 = vld [vmem:[#allocation3 + $0x21] sm:$0xff]
        %v2214 = vld [vmem:[#allocation3 + $0x31] sm:$0xff]
        %v2215 = vld [vmem:[#allocation3 + $0x41] sm:$0xff]
        %v2216 = vld [vmem:[#allocation3 + $0x51] sm:$0xff]
        %v2217 = vld [vmem:[#allocation3 + $0x61] sm:$0xff]
        %v2218 = vld [vmem:[#allocation3 + $0x71] sm:$0xff]
        %s2219 = scalar_lea.vmem %s3, 4
        %v2220 = vld [vmem:[%s2219] sm:$0x7]
        %v2222 = vsel %vm2042, %v2211, 0
        %v2225 = vsel %vm2042, %v2212, 0
        %v2228 = vsel %vm2042, %v2213, 0
        %v2231 = vsel %vm2042, %v2214, 0
        %v2234 = vsel %vm2042, %v2215, 0
        %v2237 = vsel %vm2042, %v2216, 0
        %v2240 = vsel %vm2042, %v2217, 0
        %v2243 = vsel %vm2042, %v2218, 0
        %v2246 = vsel %vm2094, %v2220, 0
        %2248 = vmatprep.subr.mxu0 0.0
        %2249 = vmatpush1.msra.mxu0 %v2246
        %2250 = vmatprep.subr.mxu0 0.0
        %2251 = vmatpush1.msra.mxu0 0.0
        %2252 = vmatprep.subr.mxu0 0.0
        %2253 = vmatpush1.msra.mxu0 0.0
        %2254 = vmatprep.subr.mxu0 0.0
        %2255 = vmatpush1.msra.mxu0 0.0
        %2256 = vmatprep.subr.mxu0 0.0
        %2257 = vmatpush1.msra.mxu0 0.0
        %2258 = vmatprep.subr.mxu0 0.0
        %2259 = vmatpush1.msra.mxu0 0.0
        %2260 = vmatprep.subr.mxu0 0.0
        %2261 = vmatpush1.msra.mxu0 0.0
        %2262 = vmatprep.subr.mxu0 0.0
        %2263 = vmatpush1.msra.mxu0 0.0
        %2264 = vmatprep.subr.mxu0 0.0
        %2265 = vmatpush1.msra.mxu0 0.0
        %2266 = vmatprep.subr.mxu0 0.0
        %2267 = vmatpush1.msra.mxu0 0.0
        %2268 = vmatprep.subr.mxu0 0.0
        %2269 = vmatpush1.msra.mxu0 0.0
        %2270 = vmatprep.subr.mxu0 0.0
        %2271 = vmatpush1.msra.mxu0 0.0
        %2272 = vmatprep.subr.mxu0 0.0
        %2273 = vmatpush1.msra.mxu0 0.0
        %2274 = vmatprep.subr.mxu0 0.0
        %2275 = vmatpush1.msra.mxu0 0.0
        %2276 = vmatprep.subr.mxu0 0.0
        %2277 = vmatpush1.msra.mxu0 0.0
        %2278 = vmatprep.subr.mxu0 0.0
        %2279 = vmatpush1.msra.mxu0 0.0
        %2280 = vmatprep.subr.mxu0 0.0
        %2281 = vmatpush1.msra.mxu0 0.0
        %2282 = vmatprep.subr.mxu0 0.0
        %2283 = vmatpush1.msra.mxu0 0.0
        %2284 = vmatprep.subr.mxu0 0.0
        %2285 = vmatpush1.msra.mxu0 0.0
        %2286 = vmatprep.subr.mxu0 0.0
        %2287 = vmatpush1.msra.mxu0 0.0
        %2288 = vmatprep.subr.mxu0 0.0
        %2289 = vmatpush1.msra.mxu0 0.0
        %2290 = vmatprep.subr.mxu0 0.0
        %2291 = vmatpush1.msra.mxu0 0.0
        %2292 = vmatprep.subr.mxu0 0.0
        %2293 = vmatpush1.msra.mxu0 0.0
        %2294 = vmatprep.subr.mxu0 0.0
        %2295 = vmatpush1.msra.mxu0 0.0
        %2296 = vmatprep.subr.mxu0 0.0
        %2297 = vmatpush1.msra.mxu0 0.0
        %2298 = vmatprep.subr.mxu0 0.0
        %2299 = vmatpush1.msra.mxu0 0.0
        %2300 = vmatprep.subr.mxu0 0.0
        %2301 = vmatpush1.msra.mxu0 0.0
        %2302 = vmatprep.subr.mxu0 0.0
        %2303 = vmatpush1.msra.mxu0 0.0
        %2304 = vmatprep.subr.mxu0 0.0
        %2305 = vmatpush1.msra.mxu0 0.0
        %2306 = vmatprep.subr.mxu0 0.0
        %2307 = vmatpush1.msra.mxu0 0.0
        %2308 = vmatprep.subr.mxu0 0.0
        %2309 = vmatpush1.msra.mxu0 0.0
        %2310 = vmatprep.subr.mxu0 0.0
        %2311 = vmatpush1.msra.mxu0 0.0
        %2312 = vmatprep.mubr.f32.mxu0 0.0
        %2313 = vmatmul.mubr.f32.gmra.mrb[0].mxu0 %v2222
        %v2314 = vpop.f32.mrb[0].mxu0
        %v2315 = vadd.f32 0.0, %v2314
        %v2316 = vpop.f32.mrb[0].mxu0
        %2317 = vmatprep.mubr.f32.mxu0 0.0
        %2318 = vmatmul.mubr.f32.gmra.mrb[0].mxu0 %v2225
        %v2319 = vpop.f32.mrb[0].mxu0
        %v2320 = vadd.f32 0.0, %v2319
        %v2321 = vpop.f32.mrb[0].mxu0
        %2322 = vmatprep.mubr.f32.mxu0 0.0
        %2323 = vmatmul.mubr.f32.gmra.mrb[0].mxu0 %v2228
        %v2324 = vpop.f32.mrb[0].mxu0
        %v2325 = vadd.f32 0.0, %v2324
        %v2326 = vpop.f32.mrb[0].mxu0
        %2327 = vmatprep.mubr.f32.mxu0 0.0
        %2328 = vmatmul.mubr.f32.gmra.mrb[0].mxu0 %v2231
        %v2329 = vpop.f32.mrb[0].mxu0
        %v2330 = vadd.f32 0.0, %v2329
        %v2331 = vpop.f32.mrb[0].mxu0
        %2332 = vmatprep.mubr.f32.mxu0 0.0
        %2333 = vmatmul.mubr.f32.gmra.mrb[0].mxu0 %v2234
        %v2334 = vpop.f32.mrb[0].mxu0
        %v2335 = vadd.f32 0.0, %v2334
        %v2336 = vpop.f32.mrb[0].mxu0
        %2337 = vmatprep.mubr.f32.mxu0 0.0
        %2338 = vmatmul.mubr.f32.gmra.mrb[0].mxu0 %v2237
        %v2339 = vpop.f32.mrb[0].mxu0
        %v2340 = vadd.f32 0.0, %v2339
        %v2341 = vpop.f32.mrb[0].mxu0
        %2342 = vmatprep.mubr.f32.mxu0 0.0
        %2343 = vmatmul.mubr.f32.gmra.mrb[0].mxu0 %v2240
        %v2344 = vpop.f32.mrb[0].mxu0
        %v2345 = vadd.f32 0.0, %v2344
        %v2346 = vpop.f32.mrb[0].mxu0
        %2347 = vmatprep.mubr.f32.mxu0 0.0
        %2348 = vmatmul.mubr.f32.gmra.mrb[0].mxu0 %v2243
        %v2349 = vpop.f32.mrb[0].mxu0
        %v2350 = vadd.f32 0.0, %v2349
        %v2351 = vpop.f32.mrb[0].mxu0
        %2352 = vdwg.mxu0
        %v2353 = vadd.f32 %v2203, %v2315
        %v2354 = vadd.f32 %v2204, %v2320
        %v2355 = vadd.f32 %v2205, %v2325
        %v2356 = vadd.f32 %v2206, %v2330
        %v2357 = vadd.f32 %v2207, %v2335
        %v2358 = vadd.f32 %v2208, %v2340
        %v2359 = vadd.f32 %v2209, %v2345
        %v2360 = vadd.f32 %v2210, %v2350
        %v2361 = vld [vmem:[#allocation3 + $0x2] sm:$0xff]
        %v2362 = vld [vmem:[#allocation3 + $0x12] sm:$0xff]
        %v2363 = vld [vmem:[#allocation3 + $0x22] sm:$0xff]
        %v2364 = vld [vmem:[#allocation3 + $0x32] sm:$0xff]
        %v2365 = vld [vmem:[#allocation3 + $0x42] sm:$0xff]
        %v2366 = vld [vmem:[#allocation3 + $0x52] sm:$0xff]
        %v2367 = vld [vmem:[#allocation3 + $0x62] sm:$0xff]
        %v2368 = vld [vmem:[#allocation3 + $0x72] sm:$0xff]
        %s2369 = scalar_lea.vmem %s3, 8
        %v2370 = vld [vmem:[%s2369] sm:$0x7]
        %v2372 = vsel %vm2042, %v2361, 0
        %v2375 = vsel %vm2042, %v2362, 0
        %v2378 = vsel %vm2042, %v2363, 0
        %v2381 = vsel %vm2042, %v2364, 0
        %v2384 = vsel %vm2042, %v2365, 0
        %v2387 = vsel %vm2042, %v2366, 0
        %v2390 = vsel %vm2042, %v2367, 0
        %v2393 = vsel %vm2042, %v2368, 0
        %v2396 = vsel %vm2094, %v2370, 0
        %2398 = vmatprep.subr.mxu0 0.0
        %2399 = vmatpush1.msra.mxu0 %v2396
        %2400 = vmatprep.subr.mxu0 0.0
        %2401 = vmatpush1.msra.mxu0 0.0
        %2402 = vmatprep.subr.mxu0 0.0
        %2403 = vmatpush1.msra.mxu0 0.0
        %2404 = vmatprep.subr.mxu0 0.0
        %2405 = vmatpush1.msra.mxu0 0.0
        %2406 = vmatprep.subr.mxu0 0.0
        %2407 = vmatpush1.msra.mxu0 0.0
        %2408 = vmatprep.subr.mxu0 0.0
        %2409 = vmatpush1.msra.mxu0 0.0
        %2410 = vmatprep.subr.mxu0 0.0
        %2411 = vmatpush1.msra.mxu0 0.0
        %2412 = vmatprep.subr.mxu0 0.0
        %2413 = vmatpush1.msra.mxu0 0.0
        %2414 = vmatprep.subr.mxu0 0.0
        %2415 = vmatpush1.msra.mxu0 0.0
        %2416 = vmatprep.subr.mxu0 0.0
        %2417 = vmatpush1.msra.mxu0 0.0
        %2418 = vmatprep.subr.mxu0 0.0
        %2419 = vmatpush1.msra.mxu0 0.0
        %2420 = vmatprep.subr.mxu0 0.0
        %2421 = vmatpush1.msra.mxu0 0.0
        %2422 = vmatprep.subr.mxu0 0.0
        %2423 = vmatpush1.msra.mxu0 0.0
        %2424 = vmatprep.subr.mxu0 0.0
        %2425 = vmatpush1.msra.mxu0 0.0
        %2426 = vmatprep.subr.mxu0 0.0
        %2427 = vmatpush1.msra.mxu0 0.0
        %2428 = vmatprep.subr.mxu0 0.0
        %2429 = vmatpush1.msra.mxu0 0.0
        %2430 = vmatprep.subr.mxu0 0.0
        %2431 = vmatpush1.msra.mxu0 0.0
        %2432 = vmatprep.subr.mxu0 0.0
        %2433 = vmatpush1.msra.mxu0 0.0
        %2434 = vmatprep.subr.mxu0 0.0
        %2435 = vmatpush1.msra.mxu0 0.0
        %2436 = vmatprep.subr.mxu0 0.0
        %2437 = vmatpush1.msra.mxu0 0.0
        %2438 = vmatprep.subr.mxu0 0.0
        %2439 = vmatpush1.msra.mxu0 0.0
        %2440 = vmatprep.subr.mxu0 0.0
        %2441 = vmatpush1.msra.mxu0 0.0
        %2442 = vmatprep.subr.mxu0 0.0
        %2443 = vmatpush1.msra.mxu0 0.0
        %2444 = vmatprep.subr.mxu0 0.0
        %2445 = vmatpush1.msra.mxu0 0.0
        %2446 = vmatprep.subr.mxu0 0.0
        %2447 = vmatpush1.msra.mxu0 0.0
        %2448 = vmatprep.subr.mxu0 0.0
        %2449 = vmatpush1.msra.mxu0 0.0
        %2450 = vmatprep.subr.mxu0 0.0
        %2451 = vmatpush1.msra.mxu0 0.0
        %2452 = vmatprep.subr.mxu0 0.0
        %2453 = vmatpush1.msra.mxu0 0.0
        %2454 = vmatprep.subr.mxu0 0.0
        %2455 = vmatpush1.msra.mxu0 0.0
        %2456 = vmatprep.subr.mxu0 0.0
        %2457 = vmatpush1.msra.mxu0 0.0
        %2458 = vmatprep.subr.mxu0 0.0
        %2459 = vmatpush1.msra.mxu0 0.0
        %2460 = vmatprep.subr.mxu0 0.0
        %2461 = vmatpush1.msra.mxu0 0.0
        %2462 = vmatprep.mubr.f32.mxu0 0.0
        %2463 = vmatmul.mubr.f32.gmra.mrb[0].mxu0 %v2372
        %v2464 = vpop.f32.mrb[0].mxu0
        %v2465 = vadd.f32 0.0, %v2464
        %v2466 = vpop.f32.mrb[0].mxu0
        %2467 = vmatprep.mubr.f32.mxu0 0.0
        %2468 = vmatmul.mubr.f32.gmra.mrb[0].mxu0 %v2375
        %v2469 = vpop.f32.mrb[0].mxu0
        %v2470 = vadd.f32 0.0, %v2469
        %v2471 = vpop.f32.mrb[0].mxu0
        %2472 = vmatprep.mubr.f32.mxu0 0.0
        %2473 = vmatmul.mubr.f32.gmra.mrb[0].mxu0 %v2378
        %v2474 = vpop.f32.mrb[0].mxu0
        %v2475 = vadd.f32 0.0, %v2474
        %v2476 = vpop.f32.mrb[0].mxu0
        %2477 = vmatprep.mubr.f32.mxu0 0.0
        %2478 = vmatmul.mubr.f32.gmra.mrb[0].mxu0 %v2381
        %v2479 = vpop.f32.mrb[0].mxu0
        %v2480 = vadd.f32 0.0, %v2479
        %v2481 = vpop.f32.mrb[0].mxu0
        %2482 = vmatprep.mubr.f32.mxu0 0.0
        %2483 = vmatmul.mubr.f32.gmra.mrb[0].mxu0 %v2384
        %v2484 = vpop.f32.mrb[0].mxu0
        %v2485 = vadd.f32 0.0, %v2484
        %v2486 = vpop.f32.mrb[0].mxu0
        %2487 = vmatprep.mubr.f32.mxu0 0.0
        %2488 = vmatmul.mubr.f32.gmra.mrb[0].mxu0 %v2387
        %v2489 = vpop.f32.mrb[0].mxu0
        %v2490 = vadd.f32 0.0, %v2489
        %v2491 = vpop.f32.mrb[0].mxu0
        %2492 = vmatprep.mubr.f32.mxu0 0.0
        %2493 = vmatmul.mubr.f32.gmra.mrb[0].mxu0 %v2390
        %v2494 = vpop.f32.mrb[0].mxu0
        %v2495 = vadd.f32 0.0, %v2494
        %v2496 = vpop.f32.mrb[0].mxu0
        %2497 = vmatprep.mubr.f32.mxu0 0.0
        %2498 = vmatmul.mubr.f32.gmra.mrb[0].mxu0 %v2393
        %v2499 = vpop.f32.mrb[0].mxu0
        %v2500 = vadd.f32 0.0, %v2499
        %v2501 = vpop.f32.mrb[0].mxu0
        %2502 = vdwg.mxu0
        %v2503 = vadd.f32 %v2353, %v2465
        %v2504 = vadd.f32 %v2354, %v2470
        %v2505 = vadd.f32 %v2355, %v2475
        %v2506 = vadd.f32 %v2356, %v2480
        %v2507 = vadd.f32 %v2357, %v2485
        %v2508 = vadd.f32 %v2358, %v2490
        %v2509 = vadd.f32 %v2359, %v2495
        %v2510 = vadd.f32 %v2360, %v2500
        %s2511 = scalar_lea.vmem [#allocation3], 16
        %v2512 = vld [vmem:[%s2511] sm:$0xff]
        %v2513 = vld [vmem:[%s2511 + $0x10] sm:$0xff]
        %v2514 = vld [vmem:[%s2511 + $0x20] sm:$0xff]
        %v2515 = vld [vmem:[%s2511 + $0x30] sm:$0xff]
        %v2516 = vld [vmem:[%s2511 + $0x40] sm:$0xff]
        %v2517 = vld [vmem:[%s2511 + $0x50] sm:$0xff]
        %v2518 = vld [vmem:[%s2511 + $0x60] sm:$0xff]
        %v2519 = vld [vmem:[%s2511 + $0x70] sm:$0xff]
        %s2520 = scalar_lea.vmem %s3, 12
        %v2521 = vld [vmem:[%s2520] sm:$0x7]
        %v2523 = vsel %vm2042, %v2512, 0
        %v2526 = vsel %vm2042, %v2513, 0
        %v2529 = vsel %vm2042, %v2514, 0
        %v2532 = vsel %vm2042, %v2515, 0
        %v2535 = vsel %vm2042, %v2516, 0
        %v2538 = vsel %vm2042, %v2517, 0
        %v2541 = vsel %vm2042, %v2518, 0
        %v2544 = vsel %vm2042, %v2519, 0
        %v2547 = vsel %vm2094, %v2521, 0
        %2549 = vmatprep.subr.mxu0 0.0
        %2550 = vmatpush1.msra.mxu0 %v2547
        %2551 = vmatprep.subr.mxu0 0.0
        %2552 = vmatpush1.msra.mxu0 0.0
        %2553 = vmatprep.subr.mxu0 0.0
        %2554 = vmatpush1.msra.mxu0 0.0
        %2555 = vmatprep.subr.mxu0 0.0
        %2556 = vmatpush1.msra.mxu0 0.0
        %2557 = vmatprep.subr.mxu0 0.0
        %2558 = vmatpush1.msra.mxu0 0.0
        %2559 = vmatprep.subr.mxu0 0.0
        %2560 = vmatpush1.msra.mxu0 0.0
        %2561 = vmatprep.subr.mxu0 0.0
        %2562 = vmatpush1.msra.mxu0 0.0
        %2563 = vmatprep.subr.mxu0 0.0
        %2564 = vmatpush1.msra.mxu0 0.0
        %2565 = vmatprep.subr.mxu0 0.0
        %2566 = vmatpush1.msra.mxu0 0.0
        %2567 = vmatprep.subr.mxu0 0.0
        %2568 = vmatpush1.msra.mxu0 0.0
        %2569 = vmatprep.subr.mxu0 0.0
        %2570 = vmatpush1.msra.mxu0 0.0
        %2571 = vmatprep.subr.mxu0 0.0
        %2572 = vmatpush1.msra.mxu0 0.0
        %2573 = vmatprep.subr.mxu0 0.0
        %2574 = vmatpush1.msra.mxu0 0.0
        %2575 = vmatprep.subr.mxu0 0.0
        %2576 = vmatpush1.msra.mxu0 0.0
        %2577 = vmatprep.subr.mxu0 0.0
        %2578 = vmatpush1.msra.mxu0 0.0
        %2579 = vmatprep.subr.mxu0 0.0
        %2580 = vmatpush1.msra.mxu0 0.0
        %2581 = vmatprep.subr.mxu0 0.0
        %2582 = vmatpush1.msra.mxu0 0.0
        %2583 = vmatprep.subr.mxu0 0.0
        %2584 = vmatpush1.msra.mxu0 0.0
        %2585 = vmatprep.subr.mxu0 0.0
        %2586 = vmatpush1.msra.mxu0 0.0
        %2587 = vmatprep.subr.mxu0 0.0
        %2588 = vmatpush1.msra.mxu0 0.0
        %2589 = vmatprep.subr.mxu0 0.0
        %2590 = vmatpush1.msra.mxu0 0.0
        %2591 = vmatprep.subr.mxu0 0.0
        %2592 = vmatpush1.msra.mxu0 0.0
        %2593 = vmatprep.subr.mxu0 0.0
        %2594 = vmatpush1.msra.mxu0 0.0
        %2595 = vmatprep.subr.mxu0 0.0
        %2596 = vmatpush1.msra.mxu0 0.0
        %2597 = vmatprep.subr.mxu0 0.0
        %2598 = vmatpush1.msra.mxu0 0.0
        %2599 = vmatprep.subr.mxu0 0.0
        %2600 = vmatpush1.msra.mxu0 0.0
        %2601 = vmatprep.subr.mxu0 0.0
        %2602 = vmatpush1.msra.mxu0 0.0
        %2603 = vmatprep.subr.mxu0 0.0
        %2604 = vmatpush1.msra.mxu0 0.0
        %2605 = vmatprep.subr.mxu0 0.0
        %2606 = vmatpush1.msra.mxu0 0.0
        %2607 = vmatprep.subr.mxu0 0.0
        %2608 = vmatpush1.msra.mxu0 0.0
        %2609 = vmatprep.subr.mxu0 0.0
        %2610 = vmatpush1.msra.mxu0 0.0
        %2611 = vmatprep.subr.mxu0 0.0
        %2612 = vmatpush1.msra.mxu0 0.0
        %2613 = vmatprep.mubr.f32.mxu0 0.0
        %2614 = vmatmul.mubr.f32.gmra.mrb[0].mxu0 %v2523
        %v2615 = vpop.f32.mrb[0].mxu0
        %v2616 = vadd.f32 0.0, %v2615
        %v2617 = vpop.f32.mrb[0].mxu0
        %2618 = vmatprep.mubr.f32.mxu0 0.0
        %2619 = vmatmul.mubr.f32.gmra.mrb[0].mxu0 %v2526
        %v2620 = vpop.f32.mrb[0].mxu0
        %v2621 = vadd.f32 0.0, %v2620
        %v2622 = vpop.f32.mrb[0].mxu0
        %2623 = vmatprep.mubr.f32.mxu0 0.0
        %2624 = vmatmul.mubr.f32.gmra.mrb[0].mxu0 %v2529
        %v2625 = vpop.f32.mrb[0].mxu0
        %v2626 = vadd.f32 0.0, %v2625
        %v2627 = vpop.f32.mrb[0].mxu0
        %2628 = vmatprep.mubr.f32.mxu0 0.0
        %2629 = vmatmul.mubr.f32.gmra.mrb[0].mxu0 %v2532
        %v2630 = vpop.f32.mrb[0].mxu0
        %v2631 = vadd.f32 0.0, %v2630
        %v2632 = vpop.f32.mrb[0].mxu0
        %2633 = vmatprep.mubr.f32.mxu0 0.0
        %2634 = vmatmul.mubr.f32.gmra.mrb[0].mxu0 %v2535
        %v2635 = vpop.f32.mrb[0].mxu0
        %v2636 = vadd.f32 0.0, %v2635
        %v2637 = vpop.f32.mrb[0].mxu0
        %2638 = vmatprep.mubr.f32.mxu0 0.0
        %2639 = vmatmul.mubr.f32.gmra.mrb[0].mxu0 %v2538
        %v2640 = vpop.f32.mrb[0].mxu0
        %v2641 = vadd.f32 0.0, %v2640
        %v2642 = vpop.f32.mrb[0].mxu0
        %2643 = vmatprep.mubr.f32.mxu0 0.0
        %2644 = vmatmul.mubr.f32.gmra.mrb[0].mxu0 %v2541
        %v2645 = vpop.f32.mrb[0].mxu0
        %v2646 = vadd.f32 0.0, %v2645
        %v2647 = vpop.f32.mrb[0].mxu0
        %2648 = vmatprep.mubr.f32.mxu0 0.0
        %2649 = vmatmul.mubr.f32.gmra.mrb[0].mxu0 %v2544
        %v2650 = vpop.f32.mrb[0].mxu0
        %v2651 = vadd.f32 0.0, %v2650
        %v2652 = vpop.f32.mrb[0].mxu0
        %2653 = vdwg.mxu0
        %v2654 = vadd.f32 %v2503, %v2616
        %v2655 = vadd.f32 %v2504, %v2621
        %v2656 = vadd.f32 %v2505, %v2626
        %v2657 = vadd.f32 %v2506, %v2631
        %v2658 = vadd.f32 %v2507, %v2636
        %v2659 = vadd.f32 %v2508, %v2641
        %v2660 = vadd.f32 %v2509, %v2646
        %v2661 = vadd.f32 %v2510, %v2651
        %v2662 = vld [vmem:[%s2511 + $0x1] sm:$0xff]
        %v2663 = vld [vmem:[%s2511 + $0x11] sm:$0xff]
        %v2664 = vld [vmem:[%s2511 + $0x21] sm:$0xff]
        %v2665 = vld [vmem:[%s2511 + $0x31] sm:$0xff]
        %v2666 = vld [vmem:[%s2511 + $0x41] sm:$0xff]
        %v2667 = vld [vmem:[%s2511 + $0x51] sm:$0xff]
        %v2668 = vld [vmem:[%s2511 + $0x61] sm:$0xff]
        %v2669 = vld [vmem:[%s2511 + $0x71] sm:$0xff]
        %s2670 = scalar_lea.vmem %s3, 16
        %v2671 = vld [vmem:[%s2670] sm:$0x7]
        %v2673 = vsel %vm2042, %v2662, 0
        %v2676 = vsel %vm2042, %v2663, 0
        %v2679 = vsel %vm2042, %v2664, 0
        %v2682 = vsel %vm2042, %v2665, 0
        %v2685 = vsel %vm2042, %v2666, 0
        %v2688 = vsel %vm2042, %v2667, 0
        %v2691 = vsel %vm2042, %v2668, 0
        %v2694 = vsel %vm2042, %v2669, 0
        %v2697 = vsel %vm2094, %v2671, 0
        %2699 = vmatprep.subr.mxu0 0.0
        %2700 = vmatpush1.msra.mxu0 %v2697
        %2701 = vmatprep.subr.mxu0 0.0
        %2702 = vmatpush1.msra.mxu0 0.0
        %2703 = vmatprep.subr.mxu0 0.0
        %2704 = vmatpush1.msra.mxu0 0.0
        %2705 = vmatprep.subr.mxu0 0.0
        %2706 = vmatpush1.msra.mxu0 0.0
        %2707 = vmatprep.subr.mxu0 0.0
        %2708 = vmatpush1.msra.mxu0 0.0
        %2709 = vmatprep.subr.mxu0 0.0
        %2710 = vmatpush1.msra.mxu0 0.0
        %2711 = vmatprep.subr.mxu0 0.0
        %2712 = vmatpush1.msra.mxu0 0.0
        %2713 = vmatprep.subr.mxu0 0.0
        %2714 = vmatpush1.msra.mxu0 0.0
        %2715 = vmatprep.subr.mxu0 0.0
        %2716 = vmatpush1.msra.mxu0 0.0
        %2717 = vmatprep.subr.mxu0 0.0
        %2718 = vmatpush1.msra.mxu0 0.0
        %2719 = vmatprep.subr.mxu0 0.0
        %2720 = vmatpush1.msra.mxu0 0.0
        %2721 = vmatprep.subr.mxu0 0.0
        %2722 = vmatpush1.msra.mxu0 0.0
        %2723 = vmatprep.subr.mxu0 0.0
        %2724 = vmatpush1.msra.mxu0 0.0
        %2725 = vmatprep.subr.mxu0 0.0
        %2726 = vmatpush1.msra.mxu0 0.0
        %2727 = vmatprep.subr.mxu0 0.0
        %2728 = vmatpush1.msra.mxu0 0.0
        %2729 = vmatprep.subr.mxu0 0.0
        %2730 = vmatpush1.msra.mxu0 0.0
        %2731 = vmatprep.subr.mxu0 0.0
        %2732 = vmatpush1.msra.mxu0 0.0
        %2733 = vmatprep.subr.mxu0 0.0
        %2734 = vmatpush1.msra.mxu0 0.0
        %2735 = vmatprep.subr.mxu0 0.0
        %2736 = vmatpush1.msra.mxu0 0.0
        %2737 = vmatprep.subr.mxu0 0.0
        %2738 = vmatpush1.msra.mxu0 0.0
        %2739 = vmatprep.subr.mxu0 0.0
        %2740 = vmatpush1.msra.mxu0 0.0
        %2741 = vmatprep.subr.mxu0 0.0
        %2742 = vmatpush1.msra.mxu0 0.0
        %2743 = vmatprep.subr.mxu0 0.0
        %2744 = vmatpush1.msra.mxu0 0.0
        %2745 = vmatprep.subr.mxu0 0.0
        %2746 = vmatpush1.msra.mxu0 0.0
        %2747 = vmatprep.subr.mxu0 0.0
        %2748 = vmatpush1.msra.mxu0 0.0
        %2749 = vmatprep.subr.mxu0 0.0
        %2750 = vmatpush1.msra.mxu0 0.0
        %2751 = vmatprep.subr.mxu0 0.0
        %2752 = vmatpush1.msra.mxu0 0.0
        %2753 = vmatprep.subr.mxu0 0.0
        %2754 = vmatpush1.msra.mxu0 0.0
        %2755 = vmatprep.subr.mxu0 0.0
        %2756 = vmatpush1.msra.mxu0 0.0
        %2757 = vmatprep.subr.mxu0 0.0
        %2758 = vmatpush1.msra.mxu0 0.0
        %2759 = vmatprep.subr.mxu0 0.0
        %2760 = vmatpush1.msra.mxu0 0.0
        %2761 = vmatprep.subr.mxu0 0.0
        %2762 = vmatpush1.msra.mxu0 0.0
        %2763 = vmatprep.mubr.f32.mxu0 0.0
        %2764 = vmatmul.mubr.f32.gmra.mrb[0].mxu0 %v2673
        %v2765 = vpop.f32.mrb[0].mxu0
        %v2766 = vadd.f32 0.0, %v2765
        %v2767 = vpop.f32.mrb[0].mxu0
        %2768 = vmatprep.mubr.f32.mxu0 0.0
        %2769 = vmatmul.mubr.f32.gmra.mrb[0].mxu0 %v2676
        %v2770 = vpop.f32.mrb[0].mxu0
        %v2771 = vadd.f32 0.0, %v2770
        %v2772 = vpop.f32.mrb[0].mxu0
        %2773 = vmatprep.mubr.f32.mxu0 0.0
        %2774 = vmatmul.mubr.f32.gmra.mrb[0].mxu0 %v2679
        %v2775 = vpop.f32.mrb[0].mxu0
        %v2776 = vadd.f32 0.0, %v2775
        %v2777 = vpop.f32.mrb[0].mxu0
        %2778 = vmatprep.mubr.f32.mxu0 0.0
        %2779 = vmatmul.mubr.f32.gmra.mrb[0].mxu0 %v2682
        %v2780 = vpop.f32.mrb[0].mxu0
        %v2781 = vadd.f32 0.0, %v2780
        %v2782 = vpop.f32.mrb[0].mxu0
        %2783 = vmatprep.mubr.f32.mxu0 0.0
        %2784 = vmatmul.mubr.f32.gmra.mrb[0].mxu0 %v2685
        %v2785 = vpop.f32.mrb[0].mxu0
        %v2786 = vadd.f32 0.0, %v2785
        %v2787 = vpop.f32.mrb[0].mxu0
        %2788 = vmatprep.mubr.f32.mxu0 0.0
        %2789 = vmatmul.mubr.f32.gmra.mrb[0].mxu0 %v2688
        %v2790 = vpop.f32.mrb[0].mxu0
        %v2791 = vadd.f32 0.0, %v2790
        %v2792 = vpop.f32.mrb[0].mxu0
        %2793 = vmatprep.mubr.f32.mxu0 0.0
        %2794 = vmatmul.mubr.f32.gmra.mrb[0].mxu0 %v2691
        %v2795 = vpop.f32.mrb[0].mxu0
        %v2796 = vadd.f32 0.0, %v2795
        %v2797 = vpop.f32.mrb[0].mxu0
        %2798 = vmatprep.mubr.f32.mxu0 0.0
        %2799 = vmatmul.mubr.f32.gmra.mrb[0].mxu0 %v2694
        %v2800 = vpop.f32.mrb[0].mxu0
        %v2801 = vadd.f32 0.0, %v2800
        %v2802 = vpop.f32.mrb[0].mxu0
        %2803 = vdwg.mxu0
        %v2804 = vadd.f32 %v2654, %v2766
        %v2805 = vadd.f32 %v2655, %v2771
        %v2806 = vadd.f32 %v2656, %v2776
        %v2807 = vadd.f32 %v2657, %v2781
        %v2808 = vadd.f32 %v2658, %v2786
        %v2809 = vadd.f32 %v2659, %v2791
        %v2810 = vadd.f32 %v2660, %v2796
        %v2811 = vadd.f32 %v2661, %v2801
        %v2812 = vld [vmem:[%s2511 + $0x2] sm:$0xff]
        %v2813 = vld [vmem:[%s2511 + $0x12] sm:$0xff]
        %v2814 = vld [vmem:[%s2511 + $0x22] sm:$0xff]
        %v2815 = vld [vmem:[%s2511 + $0x32] sm:$0xff]
        %v2816 = vld [vmem:[%s2511 + $0x42] sm:$0xff]
        %v2817 = vld [vmem:[%s2511 + $0x52] sm:$0xff]
        %v2818 = vld [vmem:[%s2511 + $0x62] sm:$0xff]
        %v2819 = vld [vmem:[%s2511 + $0x72] sm:$0xff]
        %s2820 = scalar_lea.vmem %s3, 20
        %v2821 = vld [vmem:[%s2820] sm:$0x7]
        %v2823 = vsel %vm2042, %v2812, 0
        %v2826 = vsel %vm2042, %v2813, 0
        %v2829 = vsel %vm2042, %v2814, 0
        %v2832 = vsel %vm2042, %v2815, 0
        %v2835 = vsel %vm2042, %v2816, 0
        %v2838 = vsel %vm2042, %v2817, 0
        %v2841 = vsel %vm2042, %v2818, 0
        %v2844 = vsel %vm2042, %v2819, 0
        %v2847 = vsel %vm2094, %v2821, 0
        %2849 = vmatprep.subr.mxu0 0.0
        %2850 = vmatpush1.msra.mxu0 %v2847
        %2851 = vmatprep.subr.mxu0 0.0
        %2852 = vmatpush1.msra.mxu0 0.0
        %2853 = vmatprep.subr.mxu0 0.0
        %2854 = vmatpush1.msra.mxu0 0.0
        %2855 = vmatprep.subr.mxu0 0.0
        %2856 = vmatpush1.msra.mxu0 0.0
        %2857 = vmatprep.subr.mxu0 0.0
        %2858 = vmatpush1.msra.mxu0 0.0
        %2859 = vmatprep.subr.mxu0 0.0
        %2860 = vmatpush1.msra.mxu0 0.0
        %2861 = vmatprep.subr.mxu0 0.0
        %2862 = vmatpush1.msra.mxu0 0.0
        %2863 = vmatprep.subr.mxu0 0.0
        %2864 = vmatpush1.msra.mxu0 0.0
        %2865 = vmatprep.subr.mxu0 0.0
        %2866 = vmatpush1.msra.mxu0 0.0
        %2867 = vmatprep.subr.mxu0 0.0
        %2868 = vmatpush1.msra.mxu0 0.0
        %2869 = vmatprep.subr.mxu0 0.0
        %2870 = vmatpush1.msra.mxu0 0.0
        %2871 = vmatprep.subr.mxu0 0.0
        %2872 = vmatpush1.msra.mxu0 0.0
        %2873 = vmatprep.subr.mxu0 0.0
        %2874 = vmatpush1.msra.mxu0 0.0
        %2875 = vmatprep.subr.mxu0 0.0
        %2876 = vmatpush1.msra.mxu0 0.0
        %2877 = vmatprep.subr.mxu0 0.0
        %2878 = vmatpush1.msra.mxu0 0.0
        %2879 = vmatprep.subr.mxu0 0.0
        %2880 = vmatpush1.msra.mxu0 0.0
        %2881 = vmatprep.subr.mxu0 0.0
        %2882 = vmatpush1.msra.mxu0 0.0
        %2883 = vmatprep.subr.mxu0 0.0
        %2884 = vmatpush1.msra.mxu0 0.0
        %2885 = vmatprep.subr.mxu0 0.0
        %2886 = vmatpush1.msra.mxu0 0.0
        %2887 = vmatprep.subr.mxu0 0.0
        %2888 = vmatpush1.msra.mxu0 0.0
        %2889 = vmatprep.subr.mxu0 0.0
        %2890 = vmatpush1.msra.mxu0 0.0
        %2891 = vmatprep.subr.mxu0 0.0
        %2892 = vmatpush1.msra.mxu0 0.0
        %2893 = vmatprep.subr.mxu0 0.0
        %2894 = vmatpush1.msra.mxu0 0.0
        %2895 = vmatprep.subr.mxu0 0.0
        %2896 = vmatpush1.msra.mxu0 0.0
        %2897 = vmatprep.subr.mxu0 0.0
        %2898 = vmatpush1.msra.mxu0 0.0
        %2899 = vmatprep.subr.mxu0 0.0
        %2900 = vmatpush1.msra.mxu0 0.0
        %2901 = vmatprep.subr.mxu0 0.0
        %2902 = vmatpush1.msra.mxu0 0.0
        %2903 = vmatprep.subr.mxu0 0.0
        %2904 = vmatpush1.msra.mxu0 0.0
        %2905 = vmatprep.subr.mxu0 0.0
        %2906 = vmatpush1.msra.mxu0 0.0
        %2907 = vmatprep.subr.mxu0 0.0
        %2908 = vmatpush1.msra.mxu0 0.0
        %2909 = vmatprep.subr.mxu0 0.0
        %2910 = vmatpush1.msra.mxu0 0.0
        %2911 = vmatprep.subr.mxu0 0.0
        %2912 = vmatpush1.msra.mxu0 0.0
        %2913 = vmatprep.mubr.f32.mxu0 0.0
        %2914 = vmatmul.mubr.f32.gmra.mrb[0].mxu0 %v2823
        %v2915 = vpop.f32.mrb[0].mxu0
        %v2916 = vadd.f32 0.0, %v2915
        %v2917 = vpop.f32.mrb[0].mxu0
        %2918 = vmatprep.mubr.f32.mxu0 0.0
        %2919 = vmatmul.mubr.f32.gmra.mrb[0].mxu0 %v2826
        %v2920 = vpop.f32.mrb[0].mxu0
        %v2921 = vadd.f32 0.0, %v2920
        %v2922 = vpop.f32.mrb[0].mxu0
        %2923 = vmatprep.mubr.f32.mxu0 0.0
        %2924 = vmatmul.mubr.f32.gmra.mrb[0].mxu0 %v2829
        %v2925 = vpop.f32.mrb[0].mxu0
        %v2926 = vadd.f32 0.0, %v2925
        %v2927 = vpop.f32.mrb[0].mxu0
        %2928 = vmatprep.mubr.f32.mxu0 0.0
        %2929 = vmatmul.mubr.f32.gmra.mrb[0].mxu0 %v2832
        %v2930 = vpop.f32.mrb[0].mxu0
        %v2931 = vadd.f32 0.0, %v2930
        %v2932 = vpop.f32.mrb[0].mxu0
        %2933 = vmatprep.mubr.f32.mxu0 0.0
        %2934 = vmatmul.mubr.f32.gmra.mrb[0].mxu0 %v2835
        %v2935 = vpop.f32.mrb[0].mxu0
        %v2936 = vadd.f32 0.0, %v2935
        %v2937 = vpop.f32.mrb[0].mxu0
        %2938 = vmatprep.mubr.f32.mxu0 0.0
        %2939 = vmatmul.mubr.f32.gmra.mrb[0].mxu0 %v2838
        %v2940 = vpop.f32.mrb[0].mxu0
        %v2941 = vadd.f32 0.0, %v2940
        %v2942 = vpop.f32.mrb[0].mxu0
        %2943 = vmatprep.mubr.f32.mxu0 0.0
        %2944 = vmatmul.mubr.f32.gmra.mrb[0].mxu0 %v2841
        %v2945 = vpop.f32.mrb[0].mxu0
        %v2946 = vadd.f32 0.0, %v2945
        %v2947 = vpop.f32.mrb[0].mxu0
        %2948 = vmatprep.mubr.f32.mxu0 0.0
        %2949 = vmatmul.mubr.f32.gmra.mrb[0].mxu0 %v2844
        %v2950 = vpop.f32.mrb[0].mxu0
        %v2951 = vadd.f32 0.0, %v2950
        %v2952 = vpop.f32.mrb[0].mxu0
        %2953 = vdwg.mxu0
        %v2954 = vadd.f32 %v2804, %v2916
        %v2955 = vadd.f32 %v2805, %v2921
        %v2956 = vadd.f32 %v2806, %v2926
        %v2957 = vadd.f32 %v2807, %v2931
        %v2958 = vadd.f32 %v2808, %v2936
        %v2959 = vadd.f32 %v2809, %v2941
        %v2960 = vadd.f32 %v2810, %v2946
        %v2961 = vadd.f32 %v2811, %v2951
        %s2962 = scalar_lea.vmem [#allocation3], 32
        %v2963 = vld [vmem:[%s2962] sm:$0xff]
        %v2964 = vld [vmem:[%s2962 + $0x10] sm:$0xff]
        %v2965 = vld [vmem:[%s2962 + $0x20] sm:$0xff]
        %v2966 = vld [vmem:[%s2962 + $0x30] sm:$0xff]
        %v2967 = vld [vmem:[%s2962 + $0x40] sm:$0xff]
        %v2968 = vld [vmem:[%s2962 + $0x50] sm:$0xff]
        %v2969 = vld [vmem:[%s2962 + $0x60] sm:$0xff]
        %v2970 = vld [vmem:[%s2962 + $0x70] sm:$0xff]
        %s2971 = scalar_lea.vmem %s3, 24
        %v2972 = vld [vmem:[%s2971] sm:$0x7]
        %v2974 = vsel %vm2042, %v2963, 0
        %v2977 = vsel %vm2042, %v2964, 0
        %v2980 = vsel %vm2042, %v2965, 0
        %v2983 = vsel %vm2042, %v2966, 0
        %v2986 = vsel %vm2042, %v2967, 0
        %v2989 = vsel %vm2042, %v2968, 0
        %v2992 = vsel %vm2042, %v2969, 0
        %v2995 = vsel %vm2042, %v2970, 0
        %v2998 = vsel %vm2094, %v2972, 0
        %3000 = vmatprep.subr.mxu0 0.0
        %3001 = vmatpush1.msra.mxu0 %v2998
        %3002 = vmatprep.subr.mxu0 0.0
        %3003 = vmatpush1.msra.mxu0 0.0
        %3004 = vmatprep.subr.mxu0 0.0
        %3005 = vmatpush1.msra.mxu0 0.0
        %3006 = vmatprep.subr.mxu0 0.0
        %3007 = vmatpush1.msra.mxu0 0.0
        %3008 = vmatprep.subr.mxu0 0.0
        %3009 = vmatpush1.msra.mxu0 0.0
        %3010 = vmatprep.subr.mxu0 0.0
        %3011 = vmatpush1.msra.mxu0 0.0
        %3012 = vmatprep.subr.mxu0 0.0
        %3013 = vmatpush1.msra.mxu0 0.0
        %3014 = vmatprep.subr.mxu0 0.0
        %3015 = vmatpush1.msra.mxu0 0.0
        %3016 = vmatprep.subr.mxu0 0.0
        %3017 = vmatpush1.msra.mxu0 0.0
        %3018 = vmatprep.subr.mxu0 0.0
        %3019 = vmatpush1.msra.mxu0 0.0
        %3020 = vmatprep.subr.mxu0 0.0
        %3021 = vmatpush1.msra.mxu0 0.0
        %3022 = vmatprep.subr.mxu0 0.0
        %3023 = vmatpush1.msra.mxu0 0.0
        %3024 = vmatprep.subr.mxu0 0.0
        %3025 = vmatpush1.msra.mxu0 0.0
        %3026 = vmatprep.subr.mxu0 0.0
        %3027 = vmatpush1.msra.mxu0 0.0
        %3028 = vmatprep.subr.mxu0 0.0
        %3029 = vmatpush1.msra.mxu0 0.0
        %3030 = vmatprep.subr.mxu0 0.0
        %3031 = vmatpush1.msra.mxu0 0.0
        %3032 = vmatprep.subr.mxu0 0.0
        %3033 = vmatpush1.msra.mxu0 0.0
        %3034 = vmatprep.subr.mxu0 0.0
        %3035 = vmatpush1.msra.mxu0 0.0
        %3036 = vmatprep.subr.mxu0 0.0
        %3037 = vmatpush1.msra.mxu0 0.0
        %3038 = vmatprep.subr.mxu0 0.0
        %3039 = vmatpush1.msra.mxu0 0.0
        %3040 = vmatprep.subr.mxu0 0.0
        %3041 = vmatpush1.msra.mxu0 0.0
        %3042 = vmatprep.subr.mxu0 0.0
        %3043 = vmatpush1.msra.mxu0 0.0
        %3044 = vmatprep.subr.mxu0 0.0
        %3045 = vmatpush1.msra.mxu0 0.0
        %3046 = vmatprep.subr.mxu0 0.0
        %3047 = vmatpush1.msra.mxu0 0.0
        %3048 = vmatprep.subr.mxu0 0.0
        %3049 = vmatpush1.msra.mxu0 0.0
        %3050 = vmatprep.subr.mxu0 0.0
        %3051 = vmatpush1.msra.mxu0 0.0
        %3052 = vmatprep.subr.mxu0 0.0
        %3053 = vmatpush1.msra.mxu0 0.0
        %3054 = vmatprep.subr.mxu0 0.0
        %3055 = vmatpush1.msra.mxu0 0.0
        %3056 = vmatprep.subr.mxu0 0.0
        %3057 = vmatpush1.msra.mxu0 0.0
        %3058 = vmatprep.subr.mxu0 0.0
        %3059 = vmatpush1.msra.mxu0 0.0
        %3060 = vmatprep.subr.mxu0 0.0
        %3061 = vmatpush1.msra.mxu0 0.0
        %3062 = vmatprep.subr.mxu0 0.0
        %3063 = vmatpush1.msra.mxu0 0.0
        %3064 = vmatprep.mubr.f32.mxu0 0.0
        %3065 = vmatmul.mubr.f32.gmra.mrb[0].mxu0 %v2974
        %v3066 = vpop.f32.mrb[0].mxu0
        %v3067 = vadd.f32 0.0, %v3066
        %v3068 = vpop.f32.mrb[0].mxu0
        %3069 = vmatprep.mubr.f32.mxu0 0.0
        %3070 = vmatmul.mubr.f32.gmra.mrb[0].mxu0 %v2977
        %v3071 = vpop.f32.mrb[0].mxu0
        %v3072 = vadd.f32 0.0, %v3071
        %v3073 = vpop.f32.mrb[0].mxu0
        %3074 = vmatprep.mubr.f32.mxu0 0.0
        %3075 = vmatmul.mubr.f32.gmra.mrb[0].mxu0 %v2980
        %v3076 = vpop.f32.mrb[0].mxu0
        %v3077 = vadd.f32 0.0, %v3076
        %v3078 = vpop.f32.mrb[0].mxu0
        %3079 = vmatprep.mubr.f32.mxu0 0.0
        %3080 = vmatmul.mubr.f32.gmra.mrb[0].mxu0 %v2983
        %v3081 = vpop.f32.mrb[0].mxu0
        %v3082 = vadd.f32 0.0, %v3081
        %v3083 = vpop.f32.mrb[0].mxu0
        %3084 = vmatprep.mubr.f32.mxu0 0.0
        %3085 = vmatmul.mubr.f32.gmra.mrb[0].mxu0 %v2986
        %v3086 = vpop.f32.mrb[0].mxu0
        %v3087 = vadd.f32 0.0, %v3086
        %v3088 = vpop.f32.mrb[0].mxu0
        %3089 = vmatprep.mubr.f32.mxu0 0.0
        %3090 = vmatmul.mubr.f32.gmra.mrb[0].mxu0 %v2989
        %v3091 = vpop.f32.mrb[0].mxu0
        %v3092 = vadd.f32 0.0, %v3091
        %v3093 = vpop.f32.mrb[0].mxu0
        %3094 = vmatprep.mubr.f32.mxu0 0.0
        %3095 = vmatmul.mubr.f32.gmra.mrb[0].mxu0 %v2992
        %v3096 = vpop.f32.mrb[0].mxu0
        %v3097 = vadd.f32 0.0, %v3096
        %v3098 = vpop.f32.mrb[0].mxu0
        %3099 = vmatprep.mubr.f32.mxu0 0.0
        %3100 = vmatmul.mubr.f32.gmra.mrb[0].mxu0 %v2995
        %v3101 = vpop.f32.mrb[0].mxu0
        %v3102 = vadd.f32 0.0, %v3101
        %v3103 = vpop.f32.mrb[0].mxu0
        %3104 = vdwg.mxu0
        %v3105 = vadd.f32 %v2954, %v3067
        %v3106 = vadd.f32 %v2955, %v3072
        %v3107 = vadd.f32 %v2956, %v3077
        %v3108 = vadd.f32 %v2957, %v3082
        %v3109 = vadd.f32 %v2958, %v3087
        %v3110 = vadd.f32 %v2959, %v3092
        %v3111 = vadd.f32 %v2960, %v3097
        %v3112 = vadd.f32 %v2961, %v3102
        %v3113 = vld [vmem:[%s2962 + $0x1] sm:$0xff]
        %v3114 = vld [vmem:[%s2962 + $0x11] sm:$0xff]
        %v3115 = vld [vmem:[%s2962 + $0x21] sm:$0xff]
        %v3116 = vld [vmem:[%s2962 + $0x31] sm:$0xff]
        %v3117 = vld [vmem:[%s2962 + $0x41] sm:$0xff]
        %v3118 = vld [vmem:[%s2962 + $0x51] sm:$0xff]
        %v3119 = vld [vmem:[%s2962 + $0x61] sm:$0xff]
        %v3120 = vld [vmem:[%s2962 + $0x71] sm:$0xff]
        %s3121 = scalar_lea.vmem %s3, 28
        %v3122 = vld [vmem:[%s3121] sm:$0x7]
        %v3124 = vsel %vm2042, %v3113, 0
        %v3127 = vsel %vm2042, %v3114, 0
        %v3130 = vsel %vm2042, %v3115, 0
        %v3133 = vsel %vm2042, %v3116, 0
        %v3136 = vsel %vm2042, %v3117, 0
        %v3139 = vsel %vm2042, %v3118, 0
        %v3142 = vsel %vm2042, %v3119, 0
        %v3145 = vsel %vm2042, %v3120, 0
        %v3148 = vsel %vm2094, %v3122, 0
        %3150 = vmatprep.subr.mxu0 0.0
        %3151 = vmatpush1.msra.mxu0 %v3148
        %3152 = vmatprep.subr.mxu0 0.0
        %3153 = vmatpush1.msra.mxu0 0.0
        %3154 = vmatprep.subr.mxu0 0.0
        %3155 = vmatpush1.msra.mxu0 0.0
        %3156 = vmatprep.subr.mxu0 0.0
        %3157 = vmatpush1.msra.mxu0 0.0
        %3158 = vmatprep.subr.mxu0 0.0
        %3159 = vmatpush1.msra.mxu0 0.0
        %3160 = vmatprep.subr.mxu0 0.0
        %3161 = vmatpush1.msra.mxu0 0.0
        %3162 = vmatprep.subr.mxu0 0.0
        %3163 = vmatpush1.msra.mxu0 0.0
        %3164 = vmatprep.subr.mxu0 0.0
        %3165 = vmatpush1.msra.mxu0 0.0
        %3166 = vmatprep.subr.mxu0 0.0
        %3167 = vmatpush1.msra.mxu0 0.0
        %3168 = vmatprep.subr.mxu0 0.0
        %3169 = vmatpush1.msra.mxu0 0.0
        %3170 = vmatprep.subr.mxu0 0.0
        %3171 = vmatpush1.msra.mxu0 0.0
        %3172 = vmatprep.subr.mxu0 0.0
        %3173 = vmatpush1.msra.mxu0 0.0
        %3174 = vmatprep.subr.mxu0 0.0
        %3175 = vmatpush1.msra.mxu0 0.0
        %3176 = vmatprep.subr.mxu0 0.0
        %3177 = vmatpush1.msra.mxu0 0.0
        %3178 = vmatprep.subr.mxu0 0.0
        %3179 = vmatpush1.msra.mxu0 0.0
        %3180 = vmatprep.subr.mxu0 0.0
        %3181 = vmatpush1.msra.mxu0 0.0
        %3182 = vmatprep.subr.mxu0 0.0
        %3183 = vmatpush1.msra.mxu0 0.0
        %3184 = vmatprep.subr.mxu0 0.0
        %3185 = vmatpush1.msra.mxu0 0.0
        %3186 = vmatprep.subr.mxu0 0.0
        %3187 = vmatpush1.msra.mxu0 0.0
        %3188 = vmatprep.subr.mxu0 0.0
        %3189 = vmatpush1.msra.mxu0 0.0
        %3190 = vmatprep.subr.mxu0 0.0
        %3191 = vmatpush1.msra.mxu0 0.0
        %3192 = vmatprep.subr.mxu0 0.0
        %3193 = vmatpush1.msra.mxu0 0.0
        %3194 = vmatprep.subr.mxu0 0.0
        %3195 = vmatpush1.msra.mxu0 0.0
        %3196 = vmatprep.subr.mxu0 0.0
        %3197 = vmatpush1.msra.mxu0 0.0
        %3198 = vmatprep.subr.mxu0 0.0
        %3199 = vmatpush1.msra.mxu0 0.0
        %3200 = vmatprep.subr.mxu0 0.0
        %3201 = vmatpush1.msra.mxu0 0.0
        %3202 = vmatprep.subr.mxu0 0.0
        %3203 = vmatpush1.msra.mxu0 0.0
        %3204 = vmatprep.subr.mxu0 0.0
        %3205 = vmatpush1.msra.mxu0 0.0
        %3206 = vmatprep.subr.mxu0 0.0
        %3207 = vmatpush1.msra.mxu0 0.0
        %3208 = vmatprep.subr.mxu0 0.0
        %3209 = vmatpush1.msra.mxu0 0.0
        %3210 = vmatprep.subr.mxu0 0.0
        %3211 = vmatpush1.msra.mxu0 0.0
        %3212 = vmatprep.subr.mxu0 0.0
        %3213 = vmatpush1.msra.mxu0 0.0
        %3214 = vmatprep.mubr.f32.mxu0 0.0
        %3215 = vmatmul.mubr.f32.gmra.mrb[0].mxu0 %v3124
        %v3216 = vpop.f32.mrb[0].mxu0
        %v3217 = vadd.f32 0.0, %v3216
        %v3218 = vpop.f32.mrb[0].mxu0
        %3219 = vmatprep.mubr.f32.mxu0 0.0
        %3220 = vmatmul.mubr.f32.gmra.mrb[0].mxu0 %v3127
        %v3221 = vpop.f32.mrb[0].mxu0
        %v3222 = vadd.f32 0.0, %v3221
        %v3223 = vpop.f32.mrb[0].mxu0
        %3224 = vmatprep.mubr.f32.mxu0 0.0
        %3225 = vmatmul.mubr.f32.gmra.mrb[0].mxu0 %v3130
        %v3226 = vpop.f32.mrb[0].mxu0
        %v3227 = vadd.f32 0.0, %v3226
        %v3228 = vpop.f32.mrb[0].mxu0
        %3229 = vmatprep.mubr.f32.mxu0 0.0
        %3230 = vmatmul.mubr.f32.gmra.mrb[0].mxu0 %v3133
        %v3231 = vpop.f32.mrb[0].mxu0
        %v3232 = vadd.f32 0.0, %v3231
        %v3233 = vpop.f32.mrb[0].mxu0
        %3234 = vmatprep.mubr.f32.mxu0 0.0
        %3235 = vmatmul.mubr.f32.gmra.mrb[0].mxu0 %v3136
        %v3236 = vpop.f32.mrb[0].mxu0
        %v3237 = vadd.f32 0.0, %v3236
        %v3238 = vpop.f32.mrb[0].mxu0
        %3239 = vmatprep.mubr.f32.mxu0 0.0
        %3240 = vmatmul.mubr.f32.gmra.mrb[0].mxu0 %v3139
        %v3241 = vpop.f32.mrb[0].mxu0
        %v3242 = vadd.f32 0.0, %v3241
        %v3243 = vpop.f32.mrb[0].mxu0
        %3244 = vmatprep.mubr.f32.mxu0 0.0
        %3245 = vmatmul.mubr.f32.gmra.mrb[0].mxu0 %v3142
        %v3246 = vpop.f32.mrb[0].mxu0
        %v3247 = vadd.f32 0.0, %v3246
        %v3248 = vpop.f32.mrb[0].mxu0
        %3249 = vmatprep.mubr.f32.mxu0 0.0
        %3250 = vmatmul.mubr.f32.gmra.mrb[0].mxu0 %v3145
        %v3251 = vpop.f32.mrb[0].mxu0
        %v3252 = vadd.f32 0.0, %v3251
        %v3253 = vpop.f32.mrb[0].mxu0
        %3254 = vdwg.mxu0
        %v3255 = vadd.f32 %v3105, %v3217
        %v3256 = vadd.f32 %v3106, %v3222
        %v3257 = vadd.f32 %v3107, %v3227
        %v3258 = vadd.f32 %v3108, %v3232
        %v3259 = vadd.f32 %v3109, %v3237
        %v3260 = vadd.f32 %v3110, %v3242
        %v3261 = vadd.f32 %v3111, %v3247
        %v3262 = vadd.f32 %v3112, %v3252
        %v3263 = vld [vmem:[%s2962 + $0x2] sm:$0xff]
        %v3264 = vld [vmem:[%s2962 + $0x12] sm:$0xff]
        %v3265 = vld [vmem:[%s2962 + $0x22] sm:$0xff]
        %v3266 = vld [vmem:[%s2962 + $0x32] sm:$0xff]
        %v3267 = vld [vmem:[%s2962 + $0x42] sm:$0xff]
        %v3268 = vld [vmem:[%s2962 + $0x52] sm:$0xff]
        %v3269 = vld [vmem:[%s2962 + $0x62] sm:$0xff]
        %v3270 = vld [vmem:[%s2962 + $0x72] sm:$0xff]
        %s3271 = scalar_lea.vmem %s3, 32
        %v3272 = vld [vmem:[%s3271] sm:$0x7]
        %v3274 = vsel %vm2042, %v3263, 0
        %v3277 = vsel %vm2042, %v3264, 0
        %v3280 = vsel %vm2042, %v3265, 0
        %v3283 = vsel %vm2042, %v3266, 0
        %v3286 = vsel %vm2042, %v3267, 0
        %v3289 = vsel %vm2042, %v3268, 0
        %v3292 = vsel %vm2042, %v3269, 0
        %v3295 = vsel %vm2042, %v3270, 0
        %v3298 = vsel %vm2094, %v3272, 0
        %3300 = vmatprep.subr.mxu0 0.0
        %3301 = vmatpush1.msra.mxu0 %v3298
        %3302 = vmatprep.subr.mxu0 0.0
        %3303 = vmatpush1.msra.mxu0 0.0
        %3304 = vmatprep.subr.mxu0 0.0
        %3305 = vmatpush1.msra.mxu0 0.0
        %3306 = vmatprep.subr.mxu0 0.0
        %3307 = vmatpush1.msra.mxu0 0.0
        %3308 = vmatprep.subr.mxu0 0.0
        %3309 = vmatpush1.msra.mxu0 0.0
        %3310 = vmatprep.subr.mxu0 0.0
        %3311 = vmatpush1.msra.mxu0 0.0
        %3312 = vmatprep.subr.mxu0 0.0
        %3313 = vmatpush1.msra.mxu0 0.0
        %3314 = vmatprep.subr.mxu0 0.0
        %3315 = vmatpush1.msra.mxu0 0.0
        %3316 = vmatprep.subr.mxu0 0.0
        %3317 = vmatpush1.msra.mxu0 0.0
        %3318 = vmatprep.subr.mxu0 0.0
        %3319 = vmatpush1.msra.mxu0 0.0
        %3320 = vmatprep.subr.mxu0 0.0
        %3321 = vmatpush1.msra.mxu0 0.0
        %3322 = vmatprep.subr.mxu0 0.0
        %3323 = vmatpush1.msra.mxu0 0.0
        %3324 = vmatprep.subr.mxu0 0.0
        %3325 = vmatpush1.msra.mxu0 0.0
        %3326 = vmatprep.subr.mxu0 0.0
        %3327 = vmatpush1.msra.mxu0 0.0
        %3328 = vmatprep.subr.mxu0 0.0
        %3329 = vmatpush1.msra.mxu0 0.0
        %3330 = vmatprep.subr.mxu0 0.0
        %3331 = vmatpush1.msra.mxu0 0.0
        %3332 = vmatprep.subr.mxu0 0.0
        %3333 = vmatpush1.msra.mxu0 0.0
        %3334 = vmatprep.subr.mxu0 0.0
        %3335 = vmatpush1.msra.mxu0 0.0
        %3336 = vmatprep.subr.mxu0 0.0
        %3337 = vmatpush1.msra.mxu0 0.0
        %3338 = vmatprep.subr.mxu0 0.0
        %3339 = vmatpush1.msra.mxu0 0.0
        %3340 = vmatprep.subr.mxu0 0.0
        %3341 = vmatpush1.msra.mxu0 0.0
        %3342 = vmatprep.subr.mxu0 0.0
        %3343 = vmatpush1.msra.mxu0 0.0
        %3344 = vmatprep.subr.mxu0 0.0
        %3345 = vmatpush1.msra.mxu0 0.0
        %3346 = vmatprep.subr.mxu0 0.0
        %3347 = vmatpush1.msra.mxu0 0.0
        %3348 = vmatprep.subr.mxu0 0.0
        %3349 = vmatpush1.msra.mxu0 0.0
        %3350 = vmatprep.subr.mxu0 0.0
        %3351 = vmatpush1.msra.mxu0 0.0
        %3352 = vmatprep.subr.mxu0 0.0
        %3353 = vmatpush1.msra.mxu0 0.0
        %3354 = vmatprep.subr.mxu0 0.0
        %3355 = vmatpush1.msra.mxu0 0.0
        %3356 = vmatprep.subr.mxu0 0.0
        %3357 = vmatpush1.msra.mxu0 0.0
        %3358 = vmatprep.subr.mxu0 0.0
        %3359 = vmatpush1.msra.mxu0 0.0
        %3360 = vmatprep.subr.mxu0 0.0
        %3361 = vmatpush1.msra.mxu0 0.0
        %3362 = vmatprep.subr.mxu0 0.0
        %3363 = vmatpush1.msra.mxu0 0.0
        %3364 = vmatprep.mubr.f32.mxu0 0.0
        %3365 = vmatmul.mubr.f32.gmra.mrb[0].mxu0 %v3274
        %v3366 = vpop.f32.mrb[0].mxu0
        %v3367 = vadd.f32 0.0, %v3366
        %v3368 = vpop.f32.mrb[0].mxu0
        %3369 = vmatprep.mubr.f32.mxu0 0.0
        %3370 = vmatmul.mubr.f32.gmra.mrb[0].mxu0 %v3277
        %v3371 = vpop.f32.mrb[0].mxu0
        %v3372 = vadd.f32 0.0, %v3371
        %v3373 = vpop.f32.mrb[0].mxu0
        %3374 = vmatprep.mubr.f32.mxu0 0.0
        %3375 = vmatmul.mubr.f32.gmra.mrb[0].mxu0 %v3280
        %v3376 = vpop.f32.mrb[0].mxu0
        %v3377 = vadd.f32 0.0, %v3376
        %v3378 = vpop.f32.mrb[0].mxu0
        %3379 = vmatprep.mubr.f32.mxu0 0.0
        %3380 = vmatmul.mubr.f32.gmra.mrb[0].mxu0 %v3283
        %v3381 = vpop.f32.mrb[0].mxu0
        %v3382 = vadd.f32 0.0, %v3381
        %v3383 = vpop.f32.mrb[0].mxu0
        %3384 = vmatprep.mubr.f32.mxu0 0.0
        %3385 = vmatmul.mubr.f32.gmra.mrb[0].mxu0 %v3286
        %v3386 = vpop.f32.mrb[0].mxu0
        %v3387 = vadd.f32 0.0, %v3386
        %v3388 = vpop.f32.mrb[0].mxu0
        %3389 = vmatprep.mubr.f32.mxu0 0.0
        %3390 = vmatmul.mubr.f32.gmra.mrb[0].mxu0 %v3289
        %v3391 = vpop.f32.mrb[0].mxu0
        %v3392 = vadd.f32 0.0, %v3391
        %v3393 = vpop.f32.mrb[0].mxu0
        %3394 = vmatprep.mubr.f32.mxu0 0.0
        %3395 = vmatmul.mubr.f32.gmra.mrb[0].mxu0 %v3292
        %v3396 = vpop.f32.mrb[0].mxu0
        %v3397 = vadd.f32 0.0, %v3396
        %v3398 = vpop.f32.mrb[0].mxu0
        %3399 = vmatprep.mubr.f32.mxu0 0.0
        %3400 = vmatmul.mubr.f32.gmra.mrb[0].mxu0 %v3295
        %v3401 = vpop.f32.mrb[0].mxu0
        %v3402 = vadd.f32 0.0, %v3401
        %v3403 = vpop.f32.mrb[0].mxu0
        %3404 = vdwg.mxu0
        %v3405 = vadd.f32 %v3255, %v3367
        %v3406 = vadd.f32 %v3256, %v3372
        %v3407 = vadd.f32 %v3257, %v3377
        %v3408 = vadd.f32 %v3258, %v3382
        %v3409 = vadd.f32 %v3259, %v3387
        %v3410 = vadd.f32 %v3260, %v3392
        %v3411 = vadd.f32 %v3261, %v3397
        %v3412 = vadd.f32 %v3262, %v3402
        %v3413 = vxor.u32 %v3405, 2147483648
        %v3414 = vxor.u32 %v3406, 2147483648
        %v3415 = vxor.u32 %v3407, 2147483648
        %v3416 = vxor.u32 %v3408, 2147483648
        %v3417 = vxor.u32 %v3409, 2147483648
        %v3418 = vxor.u32 %v3410, 2147483648
        %v3419 = vxor.u32 %v3411, 2147483648
        %v3420 = vxor.u32 %v3412, 2147483648
        %v3421 = vmul.f32 %v3413, 1.442695
        %v3422 = vpow.pop %v3421
        %v3423 = vmul.f32 %v3414, 1.442695
        %v3424 = vpow.pop %v3423
        %v3425 = vmul.f32 %v3415, 1.442695
        %v3426 = vpow.pop %v3425
        %v3427 = vmul.f32 %v3416, 1.442695
        %v3428 = vpow.pop %v3427
        %v3429 = vmul.f32 %v3417, 1.442695
        %v3430 = vpow.pop %v3429
        %v3431 = vmul.f32 %v3418, 1.442695
        %v3432 = vpow.pop %v3431
        %v3433 = vmul.f32 %v3419, 1.442695
        %v3434 = vpow.pop %v3433
        %v3435 = vmul.f32 %v3420, 1.442695
        %v3436 = vpow.pop %v3435
        %v3437 = vadd.f32 %v3422, 1.0
        %v3438 = vadd.f32 %v3424, 1.0
        %v3439 = vadd.f32 %v3426, 1.0
        %v3440 = vadd.f32 %v3428, 1.0
        %v3441 = vadd.f32 %v3430, 1.0
        %v3442 = vadd.f32 %v3432, 1.0
        %v3443 = vadd.f32 %v3434, 1.0
        %v3444 = vadd.f32 %v3436, 1.0
        %v3445 = vrcp.pop %v3437
        %v3446 = vmul.f32 1.0, %v3445
        %v3447 = vrcp.pop %v3438
        %v3448 = vmul.f32 1.0, %v3447
        %v3449 = vrcp.pop %v3439
        %v3450 = vmul.f32 1.0, %v3449
        %v3451 = vrcp.pop %v3440
        %v3452 = vmul.f32 1.0, %v3451
        %v3453 = vrcp.pop %v3441
        %v3454 = vmul.f32 1.0, %v3453
        %v3455 = vrcp.pop %v3442
        %v3456 = vmul.f32 1.0, %v3455
        %v3457 = vrcp.pop %v3443
        %v3458 = vmul.f32 1.0, %v3457
        %v3459 = vrcp.pop %v3444
        %v3460 = vmul.f32 1.0, %v3459
        %v3461 = vmul.f32 %v3446, 2.0
        %v3462 = vmul.f32 %v3448, 2.0
        %v3463 = vmul.f32 %v3450, 2.0
        %v3464 = vmul.f32 %v3452, 2.0
        %v3465 = vmul.f32 %v3454, 2.0
        %v3466 = vmul.f32 %v3456, 2.0
        %v3467 = vmul.f32 %v3458, 2.0
        %v3468 = vmul.f32 %v3460, 2.0
        %v3469 = vsub.f32 %v3461, 1.0
        %v3470 = vsub.f32 %v3462, 1.0
        %v3471 = vsub.f32 %v3463, 1.0
        %v3472 = vsub.f32 %v3464, 1.0
        %v3473 = vsub.f32 %v3465, 1.0
        %v3474 = vsub.f32 %v3466, 1.0
        %v3475 = vsub.f32 %v3467, 1.0
        %v3476 = vsub.f32 %v3468, 1.0
        %v3477 = vld [vmem:[%s283 + $0x1] sm:$0xff]
        %v3478 = vld [vmem:[%s283 + $0x11] sm:$0xff]
        %v3479 = vld [vmem:[%s283 + $0x21] sm:$0xff]
        %v3480 = vld [vmem:[%s283 + $0x31] sm:$0xff]
        %v3481 = vld [vmem:[%s283 + $0x41] sm:$0xff]
        %v3482 = vld [vmem:[%s283 + $0x51] sm:$0xff]
        %v3483 = vld [vmem:[%s283 + $0x61] sm:$0xff]
        %v3484 = vld [vmem:[%s283 + $0x71] sm:$0xff]
        %v3485 = vmul.f32 %v3469, 1.442695
        %v3486 = vpow.pop %v3485
        %v3487 = vmul.f32 %v3470, 1.442695
        %v3488 = vpow.pop %v3487
        %v3489 = vmul.f32 %v3471, 1.442695
        %v3490 = vpow.pop %v3489
        %v3491 = vmul.f32 %v3472, 1.442695
        %v3492 = vpow.pop %v3491
        %v3493 = vmul.f32 %v3473, 1.442695
        %v3494 = vpow.pop %v3493
        %v3495 = vmul.f32 %v3474, 1.442695
        %v3496 = vpow.pop %v3495
        %v3497 = vmul.f32 %v3475, 1.442695
        %v3498 = vpow.pop %v3497
        %v3499 = vmul.f32 %v3476, 1.442695
        %v3500 = vpow.pop %v3499
        %3509 = vrot.lane.b32.xlu0 %v3486, 3
        %v3510 = vpop.permute.xlu0 %3509
        %3511 = vrot.lane.b32.xlu0 %v3488, 3
        %v3512 = vpop.permute.xlu0 %3511
        %3513 = vrot.lane.b32.xlu0 %v3490, 3
        %v3514 = vpop.permute.xlu0 %3513
        %3515 = vrot.lane.b32.xlu0 %v3492, 3
        %v3516 = vpop.permute.xlu0 %3515
        %3517 = vrot.lane.b32.xlu0 %v3494, 3
        %v3518 = vpop.permute.xlu0 %3517
        %3519 = vrot.lane.b32.xlu0 %v3496, 3
        %v3520 = vpop.permute.xlu0 %3519
        %3521 = vrot.lane.b32.xlu0 %v3498, 3
        %v3522 = vpop.permute.xlu0 %3521
        %3523 = vrot.lane.b32.xlu0 %v3500, 3
        %v3524 = vpop.permute.xlu0 %3523
        %v3533 = vmul.f32 %v3477, %v3510
        %v3534 = vmul.f32 %v3478, %v3512
        %v3535 = vmul.f32 %v3479, %v3514
        %v3536 = vmul.f32 %v3480, %v3516
        %v3537 = vmul.f32 %v3481, %v3518
        %v3538 = vmul.f32 %v3482, %v3520
        %v3539 = vmul.f32 %v3483, %v3522
        %v3540 = vmul.f32 %v3484, %v3524
        %3549 = vrot.lane.b32.xlu0 %v3405, 122
        %v3550 = vpop.permute.xlu0 %3549
        %3551 = vrot.lane.b32.xlu0 %v3406, 122
        %v3552 = vpop.permute.xlu0 %3551
        %3553 = vrot.lane.b32.xlu0 %v3407, 122
        %v3554 = vpop.permute.xlu0 %3553
        %3555 = vrot.lane.b32.xlu0 %v3408, 122
        %v3556 = vpop.permute.xlu0 %3555
        %3557 = vrot.lane.b32.xlu0 %v3409, 122
        %v3558 = vpop.permute.xlu0 %3557
        %3559 = vrot.lane.b32.xlu0 %v3410, 122
        %v3560 = vpop.permute.xlu0 %3559
        %3561 = vrot.lane.b32.xlu0 %v3411, 122
        %v3562 = vpop.permute.xlu0 %3561
        %3563 = vrot.lane.b32.xlu0 %v3412, 122
        %v3564 = vpop.permute.xlu0 %3563
        %v3573 = vadd.f32 %v3533, %v3550
        %v3574 = vadd.f32 %v3534, %v3552
        %v3575 = vadd.f32 %v3535, %v3554
        %v3576 = vadd.f32 %v3536, %v3556
        %v3577 = vadd.f32 %v3537, %v3558
        %v3578 = vadd.f32 %v3538, %v3560
        %v3579 = vadd.f32 %v3539, %v3562
        %v3580 = vadd.f32 %v3540, %v3564
        %v3581 = vsel %vm2042, %v2033, %v3573
        %v3582 = vsel %vm2042, %v2034, %v3574
        %v3583 = vsel %vm2042, %v2035, %v3575
        %v3584 = vsel %vm2042, %v2036, %v3576
        %v3585 = vsel %vm2042, %v2037, %v3577
        %v3586 = vsel %vm2042, %v2038, %v3578
        %v3587 = vsel %vm2042, %v2039, %v3579
        %v3588 = vsel %vm2042, %v2040, %v3580
        %3589 = vst.msk [vmem:[%s217] sm:$0xff] %vm284, %v3581
        %3590 = vst.msk [vmem:[%s217 + $0x8] sm:$0xff] %vm284, %v3582
        %3591 = vst.msk [vmem:[%s217 + $0x10] sm:$0xff] %vm284, %v3583
        %3592 = vst.msk [vmem:[%s217 + $0x18] sm:$0xff] %vm284, %v3584
        %3593 = vst.msk [vmem:[%s217 + $0x20] sm:$0xff] %vm284, %v3585
        %3594 = vst.msk [vmem:[%s217 + $0x28] sm:$0xff] %vm284, %v3586
        %3595 = vst.msk [vmem:[%s217 + $0x30] sm:$0xff] %vm284, %v3587
        %3596 = vst.msk [vmem:[%s217 + $0x38] sm:$0xff] %vm284, %v3588
        %s3597 = sand.u32 %s137, 1
        %s3598 = scalar_lea.sflag [#allocation5], %s3597
        %s3599 = sand.u32 %s137, 1
        %s3600 = smul.addr %s3599, 64
        %s3601 = scalar_lea.vmem [#allocation4], %s3600
        // Predicated region
        $region45: #{_lambda_.3} parent=39 // pred_check
          %p3602 = pneg %p147
        $region46: #{_lambda_.3} parent=39 // pred_check_branch
          %3604 = sbr.rel (%p3602) target = $region48
        $region47: #{_lambda_.3} parent=39 // pred_region
          %s3606 = ssub.s32 1024, 1024
          %3607 = vsyncadd %s3598, %s3606
          %s3608 = smul.addr %s19, 8
          %s3609 = smul.addr %s3608, 128
          %s3610 = scalar_lea.hbm %s5, %s3609
          %s3611 = sshll.u32 %s3601, 4
          %s3612 = int_to_ptr.vmem [resolvable:$true] %s3611
          %3617 = dma.vmem_to_hbm [thread:$0]  %s3612, 1024, %s3610, %s3598, 128, 128, 8
        $region48: #{_lambda_.3} parent=39 // pred_fallthru
          _
      $region40: #{_lambda_.3} parent=5 // pred_fallthru
        _
      %p3618 = scmp.le.s32.totalorder 2, %s14
      // Predicated region
      $region49: #{_lambda_.3} parent=5 // pred_check
        %p3619 = pneg %p3618
      $region50: #{_lambda_.3} parent=5 // pred_check_branch
        %3621 = sbr.rel (%p3619) target = $region52
      $region51: #{_lambda_.3} parent=5 // pred_region
        %s3622 = ssub.s32 %s14, 2
        // Predicated region
        $region53: #{_lambda_.3} parent=51 // pred_check
          %p3623 = pneg %p153
        $region54: #{_lambda_.3} parent=51 // pred_check_branch
          %3625 = sbr.rel (%p3623) target = $region56
        $region55: #{_lambda_.3} parent=51 // pred_region
          %s3626 = sand.u32 %s138, 1
          %s3627 = scalar_lea.sflag [#allocation5], %s3626
          %s3628 = sand.u32 %s138, 1
          %s3629 = smul.addr %s3628, 64
          %s3630 = scalar_lea.vmem [#allocation4], %s3629
          %3631 = dma.done %s3627, 1024
        $region56: #{_lambda_.3} parent=51 // pred_fallthru
          _
      $region52: #{_lambda_.3} parent=5 // pred_fallthru
        _
    $region6: #{_lambda_.3} parent=1 // loop_footer
      %s18 = sadd.s32 1, %s14
    $region7: #{_lambda_.3} parent=1 // loop_footer_branch
      %13 = sbr.rel target = $region3
    $region8: #{_lambda_.3} parent=1 // loop_exit
      _
    %3632 = vsyncpa [#allocation5], 1
    %s3633 = scalar_lea.sflag [#allocation5], 1
    %3634 = vsyncpa %s3633, 1

// kernel: _lambda_.2
$region0: #{_lambda_.2}
  #allocation0 [shape = 'u32[]', space=smem, size = 0x4, offset = 0x4, fixed_abs, tag = 'smem constant byte address 0x4 - core index']
  #allocation1 [shape = 'u32[144,128]{1,0:T(1,128)}', space=vmem, size = 0x12000, scoped, tag = 'internal scratch']
  #allocation2 [shape = 'f32[12,10,12]{2,1,0:T(8,128)}', space=vmem, size = 0x18000, scoped, tag = 'scratch operand']
  #allocation3 [shape = 'f32[10,10,3]{2,1,0:T(8,128)}', space=vmem, size = 0x14000, scoped, tag = 'scratch operand']
  %s0 = inlined_call_operand.vmem [shape: f32[2,8,8,12], index: 0, kind: input, shape index: {}]
  %s1 = inlined_call_operand.vmem [shape: f32[12,12], index: 1, kind: input, shape index: {}]
  %s2 = inlined_call_operand.vmem [shape: f32[9,9,3], index: 2, kind: input, shape index: {}]
  %s3 = inlined_call_operand.vmem [shape: f32[1,3], index: 3, kind: input, shape index: {}]
  %s4 = inlined_call_operand.vmem [shape: f32[9,3,18], index: 4, kind: input, shape index: {}]
  %s5 = inlined_call_operand.vmem [shape: f32[1,18], index: 5, kind: input, shape index: {}]
  %s6 = inlined_call_operand.vmem [shape: f32[2,8,8,12], index: 6, kind: output, shape index: {}]
  %s7 = sld [smem:[#allocation0]]
  $region61: #{_lambda_.2} parent=0
    _
  %s9 = ssub.s32 1, %s7
  %s10 = scalar_select 0, %s9, %s7
  loop: start=0, step=1, limit=4
  $region2: #{_lambda_.2} parent=0 // loop_pre_header
    _
  $region3: #{_lambda_.2} parent=0 // loop_header
    %s12 = sphi 0, %s16
    %p13 = scmp.ge.s32.totalorder %s12, 4
    %s22 = sphi 0, %s24
    %s25 = sphi 0, %s22
    %s26 = sphi 0, %s25
    %s42 = sphi 0, %s26
    %s46 = sphi 0, %s46
    %s48 = sphi 0, %s46
    %s49 = sphi 0, %s48
    %s63 = sphi 0, %s49
    %s67 = sphi 0, %s67
    %s69 = sphi 0, %s67
    %s70 = sphi 0, %s69
    %s84 = sphi 0, %s70
    %s88 = sphi 0, %s88
    %s90 = sphi 0, %s88
    %s91 = sphi 0, %s90
    %s105 = sphi 0, %s91
    %s109 = sphi 0, %s109
    %s111 = sphi 0, %s109
    %s112 = sphi 0, %s111
    %s126 = sphi 0, %s112
    %s130 = sphi 0, %s130
    %s132 = sphi 0, %s130
    %s133 = sphi 0, %s132
    %s147 = sphi 0, %s133
    %s153 = sphi 0, %s155
    %s156 = sphi 0, %s153
    %s157 = sphi 0, %s156
    %s173 = sphi 0, %s157
  $region4: #{_lambda_.2} parent=0 // loop_header_branch
    %15 = sbr.rel (%p13) target = $region8
  $region5: #{_lambda_.2} parent=0 // loop_body
    %s17 = ssub.s32 %s12, 1
    %s18 = ssub.s32 %s12, 2
    %s19 = sadd.s32 %s12, 1
    %s20 = ssub.s32 %s12, %s19
    %p21 = scmp.eq.s32.totalorder %s20, 0
    %s23 = sadd.s32 %s22, 1
    %s24 = scalar_select %p21, %s22, %s23
    %p27 = pneg %p21
    %p28 = scmp.eq.s32.totalorder %s12, 1
    %p29 = por %p27, %p28
    %p30 = scmp.ne.s32.totalorder %s22, %s25
    %p31 = scmp.eq.s32.totalorder %s12, 0
    %p32 = por %p30, %p31
    %p33 = scmp.ne.s32.totalorder %s22, %s25
    %p34 = scmp.eq.s32.totalorder %s17, 1
    %p35 = por %p33, %p34
    %p36 = scmp.ne.s32.totalorder %s25, %s26
    %p37 = scmp.eq.s32.totalorder %s17, 0
    %p38 = por %p36, %p37
    %p39 = scmp.ne.s32.totalorder %s25, %s26
    %p40 = scmp.eq.s32.totalorder %s18, 1
    %p41 = por %p39, %p40
    %p43 = scmp.ne.s32.totalorder %s26, %s42
    %p44 = scmp.eq.s32.totalorder %s18, 0
    %p45 = por %p43, %p44
    %s47 = sadd.s32 %s46, 1
    %p50 = scmp.eq.s32.totalorder %s12, 1
    %p51 = scmp.ne.s32.totalorder %s46, %s48
    %p52 = scmp.eq.s32.totalorder %s12, 0
    %p53 = por %p51, %p52
    %p54 = scmp.ne.s32.totalorder %s46, %s48
    %p55 = scmp.eq.s32.totalorder %s17, 1
    %p56 = por %p54, %p55
    %p57 = scmp.ne.s32.totalorder %s48, %s49
    %p58 = scmp.eq.s32.totalorder %s17, 0
    %p59 = por %p57, %p58
    %p60 = scmp.ne.s32.totalorder %s48, %s49
    %p61 = scmp.eq.s32.totalorder %s18, 1
    %p62 = por %p60, %p61
    %p64 = scmp.ne.s32.totalorder %s49, %s63
    %p65 = scmp.eq.s32.totalorder %s18, 0
    %p66 = por %p64, %p65
    %s68 = sadd.s32 %s67, 1
    %p71 = scmp.eq.s32.totalorder %s12, 1
    %p72 = scmp.ne.s32.totalorder %s67, %s69
    %p73 = scmp.eq.s32.totalorder %s12, 0
    %p74 = por %p72, %p73
    %p75 = scmp.ne.s32.totalorder %s67, %s69
    %p76 = scmp.eq.s32.totalorder %s17, 1
    %p77 = por %p75, %p76
    %p78 = scmp.ne.s32.totalorder %s69, %s70
    %p79 = scmp.eq.s32.totalorder %s17, 0
    %p80 = por %p78, %p79
    %p81 = scmp.ne.s32.totalorder %s69, %s70
    %p82 = scmp.eq.s32.totalorder %s18, 1
    %p83 = por %p81, %p82
    %p85 = scmp.ne.s32.totalorder %s70, %s84
    %p86 = scmp.eq.s32.totalorder %s18, 0
    %p87 = por %p85, %p86
    %s89 = sadd.s32 %s88, 1
    %p92 = scmp.eq.s32.totalorder %s12, 1
    %p93 = scmp.ne.s32.totalorder %s88, %s90
    %p94 = scmp.eq.s32.totalorder %s12, 0
    %p95 = por %p93, %p94
    %p96 = scmp.ne.s32.totalorder %s88, %s90
    %p97 = scmp.eq.s32.totalorder %s17, 1
    %p98 = por %p96, %p97
    %p99 = scmp.ne.s32.totalorder %s90, %s91
    %p100 = scmp.eq.s32.totalorder %s17, 0
    %p101 = por %p99, %p100
    %p102 = scmp.ne.s32.totalorder %s90, %s91
    %p103 = scmp.eq.s32.totalorder %s18, 1
    %p104 = por %p102, %p103
    %p106 = scmp.ne.s32.totalorder %s91, %s105
    %p107 = scmp.eq.s32.totalorder %s18, 0
    %p108 = por %p106, %p107
    %s110 = sadd.s32 %s109, 1
    %p113 = scmp.eq.s32.totalorder %s12, 1
    %p114 = scmp.ne.s32.totalorder %s109, %s111
    %p115 = scmp.eq.s32.totalorder %s12, 0
    %p116 = por %p114, %p115
    %p117 = scmp.ne.s32.totalorder %s109, %s111
    %p118 = scmp.eq.s32.totalorder %s17, 1
    %p119 = por %p117, %p118
    %p120 = scmp.ne.s32.totalorder %s111, %s112
    %p121 = scmp.eq.s32.totalorder %s17, 0
    %p122 = por %p120, %p121
    %p123 = scmp.ne.s32.totalorder %s111, %s112
    %p124 = scmp.eq.s32.totalorder %s18, 1
    %p125 = por %p123, %p124
    %p127 = scmp.ne.s32.totalorder %s112, %s126
    %p128 = scmp.eq.s32.totalorder %s18, 0
    %p129 = por %p127, %p128
    %s131 = sadd.s32 %s130, 1
    %p134 = scmp.eq.s32.totalorder %s12, 1
    %p135 = scmp.ne.s32.totalorder %s130, %s132
    %p136 = scmp.eq.s32.totalorder %s12, 0
    %p137 = por %p135, %p136
    %p138 = scmp.ne.s32.totalorder %s130, %s132
    %p139 = scmp.eq.s32.totalorder %s17, 1
    %p140 = por %p138, %p139
    %p141 = scmp.ne.s32.totalorder %s132, %s133
    %p142 = scmp.eq.s32.totalorder %s17, 0
    %p143 = por %p141, %p142
    %p144 = scmp.ne.s32.totalorder %s132, %s133
    %p145 = scmp.eq.s32.totalorder %s18, 1
    %p146 = por %p144, %p145
    %p148 = scmp.ne.s32.totalorder %s133, %s147
    %p149 = scmp.eq.s32.totalorder %s18, 0
    %p150 = por %p148, %p149
    %s151 = ssub.s32 %s12, %s19
    %p152 = scmp.eq.s32.totalorder %s151, 0
    %s154 = sadd.s32 %s153, 1
    %s155 = scalar_select %p152, %s153, %s154
    %p158 = pneg %p152
    %p159 = scmp.eq.s32.totalorder %s12, 1
    %p160 = por %p158, %p159
    %p161 = scmp.ne.s32.totalorder %s153, %s156
    %p162 = scmp.eq.s32.totalorder %s12, 0
    %p163 = por %p161, %p162
    %p164 = scmp.ne.s32.totalorder %s153, %s156
    %p165 = scmp.eq.s32.totalorder %s17, 1
    %p166 = por %p164, %p165
    %p167 = scmp.ne.s32.totalorder %s156, %s157
    %p168 = scmp.eq.s32.totalorder %s17, 0
    %p169 = por %p167, %p168
    %p170 = scmp.ne.s32.totalorder %s156, %s157
    %p171 = scmp.eq.s32.totalorder %s18, 1
    %p172 = por %p170, %p171
    %p174 = scmp.ne.s32.totalorder %s157, %s173
    %p175 = scmp.eq.s32.totalorder %s18, 0
    %p176 = por %p174, %p175
    %p177 = scmp.le.s32.totalorder 1, %s12
    %p178 = scmp.lt.s32.totalorder %s12, 3
    %p179 = pnand %p177, %p178
    %p180 = pneg %p179
    // Predicated region
    $region9: #{_lambda_.2} parent=5 // pred_check
      _
    $region10: #{_lambda_.2} parent=5 // pred_check_branch
      %182 = sbr.rel (%p179) target = $region12
    $region11: #{_lambda_.2} parent=5 // pred_region
      %s183 = ssub.s32 %s12, 1
      // Predicated region
      $region13: #{_lambda_.2} parent=11 // pred_check
        %p184 = pneg %p59
      $region14: #{_lambda_.2} parent=11 // pred_check_branch
        %186 = sbr.rel (%p184) target = $region16
      $region15: #{_lambda_.2} parent=11 // pred_region
        _
      $region16: #{_lambda_.2} parent=11 // pred_fallthru
        _
      // Predicated region
      $region17: #{_lambda_.2} parent=11 // pred_check
        %p187 = pneg %p80
      $region18: #{_lambda_.2} parent=11 // pred_check_branch
        %189 = sbr.rel (%p187) target = $region20
      $region19: #{_lambda_.2} parent=11 // pred_region
        _
      $region20: #{_lambda_.2} parent=11 // pred_fallthru
        _
      // Predicated region
      $region21: #{_lambda_.2} parent=11 // pred_check
        %p190 = pneg %p101
      $region22: #{_lambda_.2} parent=11 // pred_check_branch
        %192 = sbr.rel (%p190) target = $region24
      $region23: #{_lambda_.2} parent=11 // pred_region
        _
      $region24: #{_lambda_.2} parent=11 // pred_fallthru
        _
      // Predicated region
      $region25: #{_lambda_.2} parent=11 // pred_check
        %p193 = pneg %p122
      $region26: #{_lambda_.2} parent=11 // pred_check_branch
        %195 = sbr.rel (%p193) target = $region28
      $region27: #{_lambda_.2} parent=11 // pred_region
        _
      $region28: #{_lambda_.2} parent=11 // pred_fallthru
        _
      // Predicated region
      $region29: #{_lambda_.2} parent=11 // pred_check
        %p196 = pneg %p143
      $region30: #{_lambda_.2} parent=11 // pred_check_branch
        %198 = sbr.rel (%p196) target = $region32
      $region31: #{_lambda_.2} parent=11 // pred_region
        _
      $region32: #{_lambda_.2} parent=11 // pred_fallthru
        _
    $region12: #{_lambda_.2} parent=5 // pred_fallthru
      _
    %p199 = scmp.lt.s32.totalorder %s12, 2
    // Predicated region
    $region33: #{_lambda_.2} parent=5 // pred_check
      %p200 = pneg %p199
    $region34: #{_lambda_.2} parent=5 // pred_check_branch
      %202 = sbr.rel (%p200) target = $region36
    $region35: #{_lambda_.2} parent=5 // pred_region
      // Predicated region
      $region37: #{_lambda_.2} parent=35 // pred_check
        %p203 = pneg %p32
      $region38: #{_lambda_.2} parent=35 // pred_check_branch
        %205 = sbr.rel (%p203) target = $region40
      $region39: #{_lambda_.2} parent=35 // pred_region
        %p206 = scmp.lt.s32.totalorder %s12, 1
        %s207 = scalar_select %p206, %s12, 1
        %s208 = smul.addr %s207, 8
        %s209 = smul.addr %s208, 8
        %s210 = scalar_lea.vmem %s0, %s209
      $region40: #{_lambda_.2} parent=35 // pred_fallthru
        _
    $region36: #{_lambda_.2} parent=5 // pred_fallthru
      _
    %p211 = scmp.le.s32.totalorder 1, %s12
    %p212 = scmp.lt.s32.totalorder %s12, 3
    %p213 = pnand %p211, %p212
    %p214 = pneg %p213
    // Predicated region
    $region41: #{_lambda_.2} parent=5 // pred_check
      _
    $region42: #{_lambda_.2} parent=5 // pred_check_branch
      %216 = sbr.rel (%p213) target = $region44
    $region43: #{_lambda_.2} parent=5 // pred_region
      %s217 = ssub.s32 %s12, 1
      %p218 = scmp.lt.s32.totalorder %s17, 1
      %s219 = scalar_select %p218, %s17, 1
      %s220 = smul.addr %s219, 8
      %s221 = smul.addr %s220, 8
      %s222 = scalar_lea.vmem %s0, %s221
      %p223 = pneg %p38
      %p224 = pneg %p35
      %p225 = pneg %p59
      %p226 = pneg %p56
      %p227 = pneg %p80
      %p228 = pneg %p77
      %p229 = pneg %p101
      %p230 = pneg %p98
      %p231 = pneg %p122
      %p232 = pneg %p119
      %p233 = pneg %p143
      %p234 = pneg %p140
      %p235 = pneg %p169
      %p236 = pneg %p166
      %p237 = scmp.lt.s32.totalorder %s17, 1
      %s238 = scalar_select %p237, %s17, 1
      %s239 = smul.addr %s238, 8
      %s240 = smul.addr %s239, 8
      %s241 = scalar_lea.vmem %s6, %s240
      %p242 = scmp.lt.s32.totalorder %s17, 1
      %s243 = scalar_select %p242, %s17, 1
      %s244 = smul.addr %s243, 8
      %s245 = smul.addr %s244, 8
      %s246 = scalar_lea.vmem %s0, %s245
      %p247 = scmp.lt.s32.totalorder %s17, 1
      %s248 = scalar_select %p247, %s17, 1
      %s249 = smul.addr %s248, 8
      %s250 = smul.addr %s249, 8
      %s251 = scalar_lea.vmem %s6, %s250
      %p252 = scmp.eq.s32.totalorder %s17, 0
      // Predicated region
      $region45: #{_lambda_.2} parent=43 // pred_check
        %p253 = pneg %p252
      $region46: #{_lambda_.2} parent=43 // pred_check_branch
        %255 = sbr.rel (%p253) target = $region48
      $region47: #{_lambda_.2} parent=43 // pred_region
        %vm256 = vcmask 97280
        %257 = vst.msk [vmem:[#allocation2] sm:$0xff] %vm256, 0.0
        %vm258 = vcmask 91136
        %259 = vst.msk [vmem:[#allocation2 + $0x8] sm:$0x3] %vm258, 0.0
        %260 = vst.msk [vmem:[#allocation2 + $0x10] sm:$0xff] %vm256, 0.0
        %261 = vst.msk [vmem:[#allocation2 + $0x18] sm:$0x3] %vm258, 0.0
        %262 = vst.msk [vmem:[#allocation2 + $0x20] sm:$0xff] %vm256, 0.0
        %263 = vst.msk [vmem:[#allocation2 + $0x28] sm:$0x3] %vm258, 0.0
        %264 = vst.msk [vmem:[#allocation2 + $0x30] sm:$0xff] %vm256, 0.0
        %265 = vst.msk [vmem:[#allocation2 + $0x38] sm:$0x3] %vm258, 0.0
        %266 = vst.msk [vmem:[#allocation2 + $0x40] sm:$0xff] %vm256, 0.0
        %267 = vst.msk [vmem:[#allocation2 + $0x48] sm:$0x3] %vm258, 0.0
        %268 = vst.msk [vmem:[#allocation2 + $0x50] sm:$0xff] %vm256, 0.0
        %269 = vst.msk [vmem:[#allocation2 + $0x58] sm:$0x3] %vm258, 0.0
        %270 = vst.msk [vmem:[#allocation2 + $0x60] sm:$0xff] %vm256, 0.0
        %271 = vst.msk [vmem:[#allocation2 + $0x68] sm:$0x3] %vm258, 0.0
        %272 = vst.msk [vmem:[#allocation2 + $0x70] sm:$0xff] %vm256, 0.0
        %273 = vst.msk [vmem:[#allocation2 + $0x78] sm:$0x3] %vm258, 0.0
        %274 = vst.msk [vmem:[#allocation2 + $0x80] sm:$0xff] %vm256, 0.0
        %275 = vst.msk [vmem:[#allocation2 + $0x88] sm:$0x3] %vm258, 0.0
        %276 = vst.msk [vmem:[#allocation2 + $0x90] sm:$0xff] %vm256, 0.0
        %277 = vst.msk [vmem:[#allocation2 + $0x98] sm:$0x3] %vm258, 0.0
        %278 = vst.msk [vmem:[#allocation2 + $0xa0] sm:$0xff] %vm256, 0.0
        %279 = vst.msk [vmem:[#allocation2 + $0xa8] sm:$0x3] %vm258, 0.0
        %280 = vst.msk [vmem:[#allocation2 + $0xb0] sm:$0xff] %vm256, 0.0
        %281 = vst.msk [vmem:[#allocation2 + $0xb8] sm:$0x3] %vm258, 0.0
        %vm282 = vcmask 23552
        %283 = vst.msk [vmem:[#allocation3] sm:$0xff] %vm282, 0.0
        %vm284 = vcmask 17408
        %285 = vst.msk [vmem:[#allocation3 + $0x8] sm:$0x3] %vm284, 0.0
        %286 = vst.msk [vmem:[#allocation3 + $0x10] sm:$0xff] %vm282, 0.0
        %287 = vst.msk [vmem:[#allocation3 + $0x18] sm:$0x3] %vm284, 0.0
        %288 = vst.msk [vmem:[#allocation3 + $0x20] sm:$0xff] %vm282, 0.0
        %289 = vst.msk [vmem:[#allocation3 + $0x28] sm:$0x3] %vm284, 0.0
        %290 = vst.msk [vmem:[#allocation3 + $0x30] sm:$0xff] %vm282, 0.0
        %291 = vst.msk [vmem:[#allocation3 + $0x38] sm:$0x3] %vm284, 0.0
        %292 = vst.msk [vmem:[#allocation3 + $0x40] sm:$0xff] %vm282, 0.0
        %293 = vst.msk [vmem:[#allocation3 + $0x48] sm:$0x3] %vm284, 0.0
        %294 = vst.msk [vmem:[#allocation3 + $0x50] sm:$0xff] %vm282, 0.0
        %295 = vst.msk [vmem:[#allocation3 + $0x58] sm:$0x3] %vm284, 0.0
        %296 = vst.msk [vmem:[#allocation3 + $0x60] sm:$0xff] %vm282, 0.0
        %297 = vst.msk [vmem:[#allocation3 + $0x68] sm:$0x3] %vm284, 0.0
        %298 = vst.msk [vmem:[#allocation3 + $0x70] sm:$0xff] %vm282, 0.0
        %299 = vst.msk [vmem:[#allocation3 + $0x78] sm:$0x3] %vm284, 0.0
        %300 = vst.msk [vmem:[#allocation3 + $0x80] sm:$0xff] %vm282, 0.0
        %301 = vst.msk [vmem:[#allocation3 + $0x88] sm:$0x3] %vm284, 0.0
        %302 = vst.msk [vmem:[#allocation3 + $0x90] sm:$0xff] %vm282, 0.0
        %303 = vst.msk [vmem:[#allocation3 + $0x98] sm:$0x3] %vm284, 0.0
      $region48: #{_lambda_.2} parent=43 // pred_fallthru
        _
      %v304 = vld [vmem:[%s246] sm:$0xff]
      %v305 = vld [vmem:[%s246 + $0x8] sm:$0xff]
      %v306 = vld [vmem:[%s246 + $0x10] sm:$0xff]
      %v307 = vld [vmem:[%s246 + $0x18] sm:$0xff]
      %v308 = vld [vmem:[%s246 + $0x20] sm:$0xff]
      %v309 = vld [vmem:[%s246 + $0x28] sm:$0xff]
      %v310 = vld [vmem:[%s246 + $0x30] sm:$0xff]
      %v311 = vld [vmem:[%s246 + $0x38] sm:$0xff]
      %v312 = vld [vmem:[%s1] sm:$0xff]
      %v313 = vld [vmem:[%s1 + $0x8] sm:$0xf]
      %vm314 = vcmask 97280
      %v316 = vsel %vm314, %v304, 0
      %v319 = vsel %vm314, %v305, 0
      %v322 = vsel %vm314, %v306, 0
      %v325 = vsel %vm314, %v307, 0
      %v328 = vsel %vm314, %v308, 0
      %v331 = vsel %vm314, %v309, 0
      %v334 = vsel %vm314, %v310, 0
      %v337 = vsel %vm314, %v311, 0
      %vm339 = vcmask 1043456
      %v341 = vsel %vm339, %v313, 0
      %343 = vmatprep.subr.mxu0 0.0
      %344 = vmatpush1.msra.mxu0 %v312
      %345 = vmatprep.subr.mxu0 0.0
      %346 = vmatpush1.msra.mxu0 %v341
      %347 = vmatprep.subr.mxu0 0.0
      %348 = vmatpush1.msra.mxu0 0.0
      %349 = vmatprep.subr.mxu0 0.0
      %350 = vmatpush1.msra.mxu0 0.0
      %351 = vmatprep.subr.mxu0 0.0
      %352 = vmatpush1.msra.mxu0 0.0
      %353 = vmatprep.subr.mxu0 0.0
      %354 = vmatpush1.msra.mxu0 0.0
      %355 = vmatprep.subr.mxu0 0.0
      %356 = vmatpush1.msra.mxu0 0.0
      %357 = vmatprep.subr.mxu0 0.0
      %358 = vmatpush1.msra.mxu0 0.0
      %359 = vmatprep.subr.mxu0 0.0
      %360 = vmatpush1.msra.mxu0 0.0
      %361 = vmatprep.subr.mxu0 0.0
      %362 = vmatpush1.msra.mxu0 0.0
      %363 = vmatprep.subr.mxu0 0.0
      %364 = vmatpush1.msra.mxu0 0.0
      %365 = vmatprep.subr.mxu0 0.0
      %366 = vmatpush1.msra.mxu0 0.0
      %367 = vmatprep.subr.mxu0 0.0
      %368 = vmatpush1.msra.mxu0 0.0
      %369 = vmatprep.subr.mxu0 0.0
      %370 = vmatpush1.msra.mxu0 0.0
      %371 = vmatprep.subr.mxu0 0.0
      %372 = vmatpush1.msra.mxu0 0.0
      %373 = vmatprep.subr.mxu0 0.0
      %374 = vmatpush1.msra.mxu0 0.0
      %375 = vmatprep.subr.mxu0 0.0
      %376 = vmatpush1.msra.mxu0 0.0
      %377 = vmatprep.subr.mxu0 0.0
      %378 = vmatpush1.msra.mxu0 0.0
      %379 = vmatprep.subr.mxu0 0.0
      %380 = vmatpush1.msra.mxu0 0.0
      %381 = vmatprep.subr.mxu0 0.0
      %382 = vmatpush1.msra.mxu0 0.0
      %383 = vmatprep.subr.mxu0 0.0
      %384 = vmatpush1.msra.mxu0 0.0
      %385 = vmatprep.subr.mxu0 0.0
      %386 = vmatpush1.msra.mxu0 0.0
      %387 = vmatprep.subr.mxu0 0.0
      %388 = vmatpush1.msra.mxu0 0.0
      %389 = vmatprep.subr.mxu0 0.0
      %390 = vmatpush1.msra.mxu0 0.0
      %391 = vmatprep.subr.mxu0 0.0
      %392 = vmatpush1.msra.mxu0 0.0
      %393 = vmatprep.subr.mxu0 0.0
      %394 = vmatpush1.msra.mxu0 0.0
      %395 = vmatprep.subr.mxu0 0.0
      %396 = vmatpush1.msra.mxu0 0.0
      %397 = vmatprep.subr.mxu0 0.0
      %398 = vmatpush1.msra.mxu0 0.0
      %399 = vmatprep.subr.mxu0 0.0
      %400 = vmatpush1.msra.mxu0 0.0
      %401 = vmatprep.subr.mxu0 0.0
      %402 = vmatpush1.msra.mxu0 0.0
      %403 = vmatprep.subr.mxu0 0.0
      %404 = vmatpush1.msra.mxu0 0.0
      %405 = vmatprep.subr.mxu0 0.0
      %406 = vmatpush1.msra.mxu0 0.0
      %407 = vmatprep.mubr.f32.mxu0 0.0
      %408 = vmatmul.mubr.f32.gmra.mrb[0].mxu0 %v316
      %v409 = vpop.f32.mrb[0].mxu0
      %v410 = vadd.f32 0.0, %v409
      %v411 = vpop.f32.mrb[0].mxu0
      %412 = vmatprep.mubr.f32.mxu0 0.0
      %413 = vmatmul.mubr.f32.gmra.mrb[0].mxu0 %v319
      %v414 = vpop.f32.mrb[0].mxu0
      %v415 = vadd.f32 0.0, %v414
      %v416 = vpop.f32.mrb[0].mxu0
      %417 = vmatprep.mubr.f32.mxu0 0.0
      %418 = vmatmul.mubr.f32.gmra.mrb[0].mxu0 %v322
      %v419 = vpop.f32.mrb[0].mxu0
      %v420 = vadd.f32 0.0, %v419
      %v421 = vpop.f32.mrb[0].mxu0
      %422 = vmatprep.mubr.f32.mxu0 0.0
      %423 = vmatmul.mubr.f32.gmra.mrb[0].mxu0 %v325
      %v424 = vpop.f32.mrb[0].mxu0
      %v425 = vadd.f32 0.0, %v424
      %v426 = vpop.f32.mrb[0].mxu0
      %427 = vmatprep.mubr.f32.mxu0 0.0
      %428 = vmatmul.mubr.f32.gmra.mrb[0].mxu0 %v328
      %v429 = vpop.f32.mrb[0].mxu0
      %v430 = vadd.f32 0.0, %v429
      %v431 = vpop.f32.mrb[0].mxu0
      %432 = vmatprep.mubr.f32.mxu0 0.0
      %433 = vmatmul.mubr.f32.gmra.mrb[0].mxu0 %v331
      %v434 = vpop.f32.mrb[0].mxu0
      %v435 = vadd.f32 0.0, %v434
      %v436 = vpop.f32.mrb[0].mxu0
      %437 = vmatprep.mubr.f32.mxu0 0.0
      %438 = vmatmul.mubr.f32.gmra.mrb[0].mxu0 %v334
      %v439 = vpop.f32.mrb[0].mxu0
      %v440 = vadd.f32 0.0, %v439
      %v441 = vpop.f32.mrb[0].mxu0
      %442 = vmatprep.mubr.f32.mxu0 0.0
      %443 = vmatmul.mubr.f32.gmra.mrb[0].mxu0 %v337
      %v444 = vpop.f32.mrb[0].mxu0
      %v445 = vadd.f32 0.0, %v444
      %v446 = vpop.f32.mrb[0].mxu0
      %447 = vdwg.mxu0
      %s448 = scalar_lea.vmem [#allocation2], 32
      %449 = vst.msk [vmem:[%s448 + $0x1] sm:$0xff] %vm314, %v410
      %450 = vst.msk [vmem:[%s448 + $0x11] sm:$0xff] %vm314, %v415
      %451 = vst.msk [vmem:[%s448 + $0x21] sm:$0xff] %vm314, %v420
      %452 = vst.msk [vmem:[%s448 + $0x31] sm:$0xff] %vm314, %v425
      %453 = vst.msk [vmem:[%s448 + $0x41] sm:$0xff] %vm314, %v430
      %454 = vst.msk [vmem:[%s448 + $0x51] sm:$0xff] %vm314, %v435
      %455 = vst.msk [vmem:[%s448 + $0x61] sm:$0xff] %vm314, %v440
      %456 = vst.msk [vmem:[%s448 + $0x71] sm:$0xff] %vm314, %v445
      %v457 = vld [vmem:[%s3] sm:$0x1]
      %v459 = vlaneseq
      %v460 = vshrl.u32 %v459, 7
      %v461 = vsub.s32 0, %v460
      %v462 = vrot.slane %v457, %v461
      %v464 = vadd.f32 %v462, 0.0
      %v465 = vld [vmem:[#allocation2] sm:$0xff]
      %v466 = vld [vmem:[#allocation2 + $0x10] sm:$0xff]
      %v467 = vld [vmem:[#allocation2 + $0x20] sm:$0xff]
      %v468 = vld [vmem:[#allocation2 + $0x30] sm:$0xff]
      %v469 = vld [vmem:[#allocation2 + $0x40] sm:$0xff]
      %v470 = vld [vmem:[#allocation2 + $0x50] sm:$0xff]
      %v471 = vld [vmem:[#allocation2 + $0x60] sm:$0xff]
      %v472 = vld [vmem:[#allocation2 + $0x70] sm:$0xff]
      %v473 = vld [vmem:[#allocation2 + $0x80] sm:$0xff]
      %v474 = vld [vmem:[#allocation2 + $0x90] sm:$0xff]
      %v475 = vld [vmem:[%s2] sm:$0xff]
      %v476 = vld [vmem:[%s2 + $0x8] sm:$0x1]
      %487 = vrot.lane.b32.xlu0 %v465, 125
      %v488 = vpop.permute.xlu0 %487
      %489 = vrot.lane.b32.xlu0 %v466, 125
      %v490 = vpop.permute.xlu0 %489
      %491 = vrot.lane.b32.xlu0 %v467, 125
      %v492 = vpop.permute.xlu0 %491
      %493 = vrot.lane.b32.xlu0 %v468, 125
      %v494 = vpop.permute.xlu0 %493
      %495 = vrot.lane.b32.xlu0 %v469, 125
      %v496 = vpop.permute.xlu0 %495
      %497 = vrot.lane.b32.xlu0 %v470, 125
      %v498 = vpop.permute.xlu0 %497
      %499 = vrot.lane.b32.xlu0 %v471, 125
      %v500 = vpop.permute.xlu0 %499
      %501 = vrot.lane.b32.xlu0 %v472, 125
      %v502 = vpop.permute.xlu0 %501
      %503 = vrot.lane.b32.xlu0 %v473, 125
      %v504 = vpop.permute.xlu0 %503
      %505 = vrot.lane.b32.xlu0 %v474, 125
      %v506 = vpop.permute.xlu0 %505
      %vm507 = vcmask 72704
      %v508 = vsel %vm507, %v488, 0
      %v510 = vsel %vm507, %v490, 0
      %v512 = vsel %vm507, %v492, 0
      %v514 = vsel %vm507, %v494, 0
      %v516 = vsel %vm507, %v496, 0
      %v518 = vsel %vm507, %v498, 0
      %v520 = vsel %vm507, %v500, 0
      %v522 = vsel %vm507, %v502, 0
      %v524 = vsel %vm507, %v504, 0
      %v526 = vsel %vm507, %v506, 0
      %vm528 = vcmask 1040384
      %v530 = vsel %vm528, %v476, 0
      %532 = vmatprep.subr.mxu0 0.0
      %533 = vmatpush1.msra.mxu0 %v475
      %534 = vmatprep.subr.mxu0 0.0
      %535 = vmatpush1.msra.mxu0 %v530
      %536 = vmatprep.subr.mxu0 0.0
      %537 = vmatpush1.msra.mxu0 0.0
      %538 = vmatprep.subr.mxu0 0.0
      %539 = vmatpush1.msra.mxu0 0.0
      %540 = vmatprep.subr.mxu0 0.0
      %541 = vmatpush1.msra.mxu0 0.0
      %542 = vmatprep.subr.mxu0 0.0
      %543 = vmatpush1.msra.mxu0 0.0
      %544 = vmatprep.subr.mxu0 0.0
      %545 = vmatpush1.msra.mxu0 0.0
      %546 = vmatprep.subr.mxu0 0.0
      %547 = vmatpush1.msra.mxu0 0.0
      %548 = vmatprep.subr.mxu0 0.0
      %549 = vmatpush1.msra.mxu0 0.0
      %550 = vmatprep.subr.mxu0 0.0
      %551 = vmatpush1.msra.mxu0 0.0
      %552 = vmatprep.subr.mxu0 0.0
      %553 = vmatpush1.msra.mxu0 0.0
      %554 = vmatprep.subr.mxu0 0.0
      %555 = vmatpush1.msra.mxu0 0.0
      %556 = vmatprep.subr.mxu0 0.0
      %557 = vmatpush1.msra.mxu0 0.0
      %558 = vmatprep.subr.mxu0 0.0
      %559 = vmatpush1.msra.mxu0 0.0
      %560 = vmatprep.subr.mxu0 0.0
      %561 = vmatpush1.msra.mxu0 0.0
      %562 = vmatprep.subr.mxu0 0.0
      %563 = vmatpush1.msra.mxu0 0.0
      %564 = vmatprep.subr.mxu0 0.0
      %565 = vmatpush1.msra.mxu0 0.0
      %566 = vmatprep.subr.mxu0 0.0
      %567 = vmatpush1.msra.mxu0 0.0
      %568 = vmatprep.subr.mxu0 0.0
      %569 = vmatpush1.msra.mxu0 0.0
      %570 = vmatprep.subr.mxu0 0.0
      %571 = vmatpush1.msra.mxu0 0.0
      %572 = vmatprep.subr.mxu0 0.0
      %573 = vmatpush1.msra.mxu0 0.0
      %574 = vmatprep.subr.mxu0 0.0
      %575 = vmatpush1.msra.mxu0 0.0
      %576 = vmatprep.subr.mxu0 0.0
      %577 = vmatpush1.msra.mxu0 0.0
      %578 = vmatprep.subr.mxu0 0.0
      %579 = vmatpush1.msra.mxu0 0.0
      %580 = vmatprep.subr.mxu0 0.0
      %581 = vmatpush1.msra.mxu0 0.0
      %582 = vmatprep.subr.mxu0 0.0
      %583 = vmatpush1.msra.mxu0 0.0
      %584 = vmatprep.subr.mxu0 0.0
      %585 = vmatpush1.msra.mxu0 0.0
      %586 = vmatprep.subr.mxu0 0.0
      %587 = vmatpush1.msra.mxu0 0.0
      %588 = vmatprep.subr.mxu0 0.0
      %589 = vmatpush1.msra.mxu0 0.0
      %590 = vmatprep.subr.mxu0 0.0
      %591 = vmatpush1.msra.mxu0 0.0
      %592 = vmatprep.subr.mxu0 0.0
      %593 = vmatpush1.msra.mxu0 0.0
      %594 = vmatprep.subr.mxu0 0.0
      %595 = vmatpush1.msra.mxu0 0.0
      %596 = vmatprep.mubr.f32.mxu0 0.0
      %597 = vmatmul.mubr.f32.gmra.mrb[0].mxu0 %v508
      %v598 = vpop.f32.mrb[0].mxu0
      %v599 = vadd.f32 0.0, %v598
      %v600 = vpop.f32.mrb[0].mxu0
      %601 = vmatprep.mubr.f32.mxu0 0.0
      %602 = vmatmul.mubr.f32.gmra.mrb[0].mxu0 %v510
      %v603 = vpop.f32.mrb[0].mxu0
      %v604 = vadd.f32 0.0, %v603
      %v605 = vpop.f32.mrb[0].mxu0
      %606 = vmatprep.mubr.f32.mxu0 0.0
      %607 = vmatmul.mubr.f32.gmra.mrb[0].mxu0 %v512
      %v608 = vpop.f32.mrb[0].mxu0
      %v609 = vadd.f32 0.0, %v608
      %v610 = vpop.f32.mrb[0].mxu0
      %611 = vmatprep.mubr.f32.mxu0 0.0
      %612 = vmatmul.mubr.f32.gmra.mrb[0].mxu0 %v514
      %v613 = vpop.f32.mrb[0].mxu0
      %v614 = vadd.f32 0.0, %v613
      %v615 = vpop.f32.mrb[0].mxu0
      %616 = vmatprep.mubr.f32.mxu0 0.0
      %617 = vmatmul.mubr.f32.gmra.mrb[0].mxu0 %v516
      %v618 = vpop.f32.mrb[0].mxu0
      %v619 = vadd.f32 0.0, %v618
      %v620 = vpop.f32.mrb[0].mxu0
      %621 = vmatprep.mubr.f32.mxu0 0.0
      %622 = vmatmul.mubr.f32.gmra.mrb[0].mxu0 %v518
      %v623 = vpop.f32.mrb[0].mxu0
      %v624 = vadd.f32 0.0, %v623
      %v625 = vpop.f32.mrb[0].mxu0
      %626 = vmatprep.mubr.f32.mxu0 0.0
      %627 = vmatmul.mubr.f32.gmra.mrb[0].mxu0 %v520
      %v628 = vpop.f32.mrb[0].mxu0
      %v629 = vadd.f32 0.0, %v628
      %v630 = vpop.f32.mrb[0].mxu0
      %631 = vmatprep.mubr.f32.mxu0 0.0
      %632 = vmatmul.mubr.f32.gmra.mrb[0].mxu0 %v522
      %v633 = vpop.f32.mrb[0].mxu0
      %v634 = vadd.f32 0.0, %v633
      %v635 = vpop.f32.mrb[0].mxu0
      %636 = vmatprep.mubr.f32.mxu0 0.0
      %637 = vmatmul.mubr.f32.gmra.mrb[0].mxu0 %v524
      %v638 = vpop.f32.mrb[0].mxu0
      %v639 = vadd.f32 0.0, %v638
      %v640 = vpop.f32.mrb[0].mxu0
      %641 = vmatprep.mubr.f32.mxu0 0.0
      %642 = vmatmul.mubr.f32.gmra.mrb[0].mxu0 %v526
      %v643 = vpop.f32.mrb[0].mxu0
      %v644 = vadd.f32 0.0, %v643
      %v645 = vpop.f32.mrb[0].mxu0
      %646 = vdwg.mxu0
      %v647 = vadd.f32 %v464, %v599
      %v648 = vadd.f32 %v464, %v604
      %v649 = vadd.f32 %v464, %v609
      %v650 = vadd.f32 %v464, %v614
      %v651 = vadd.f32 %v464, %v619
      %v652 = vadd.f32 %v464, %v624
      %v653 = vadd.f32 %v464, %v629
      %v654 = vadd.f32 %v464, %v634
      %v655 = vadd.f32 %v464, %v639
      %v656 = vadd.f32 %v464, %v644
      %v657 = vld [vmem:[#allocation2 + $0x1] sm:$0xff]
      %v658 = vld [vmem:[#allocation2 + $0x11] sm:$0xff]
      %v659 = vld [vmem:[#allocation2 + $0x21] sm:$0xff]
      %v660 = vld [vmem:[#allocation2 + $0x31] sm:$0xff]
      %v661 = vld [vmem:[#allocation2 + $0x41] sm:$0xff]
      %v662 = vld [vmem:[#allocation2 + $0x51] sm:$0xff]
      %v663 = vld [vmem:[#allocation2 + $0x61] sm:$0xff]
      %v664 = vld [vmem:[#allocation2 + $0x71] sm:$0xff]
      %v665 = vld [vmem:[#allocation2 + $0x81] sm:$0xff]
      %v666 = vld [vmem:[#allocation2 + $0x91] sm:$0xff]
      %s667 = scalar_lea.vmem %s2, 16
      %v668 = vld [vmem:[%s667] sm:$0xff]
      %v669 = vld [vmem:[%s667 + $0x8] sm:$0x1]
      %680 = vrot.lane.b32.xlu0 %v657, 125
      %v681 = vpop.permute.xlu0 %680
      %682 = vrot.lane.b32.xlu0 %v658, 125
      %v683 = vpop.permute.xlu0 %682
      %684 = vrot.lane.b32.xlu0 %v659, 125
      %v685 = vpop.permute.xlu0 %684
      %686 = vrot.lane.b32.xlu0 %v660, 125
      %v687 = vpop.permute.xlu0 %686
      %688 = vrot.lane.b32.xlu0 %v661, 125
      %v689 = vpop.permute.xlu0 %688
      %690 = vrot.lane.b32.xlu0 %v662, 125
      %v691 = vpop.permute.xlu0 %690
      %692 = vrot.lane.b32.xlu0 %v663, 125
      %v693 = vpop.permute.xlu0 %692
      %694 = vrot.lane.b32.xlu0 %v664, 125
      %v695 = vpop.permute.xlu0 %694
      %696 = vrot.lane.b32.xlu0 %v665, 125
      %v697 = vpop.permute.xlu0 %696
      %698 = vrot.lane.b32.xlu0 %v666, 125
      %v699 = vpop.permute.xlu0 %698
      %v700 = vsel %vm507, %v681, 0
      %v702 = vsel %vm507, %v683, 0
      %v704 = vsel %vm507, %v685, 0
      %v706 = vsel %vm507, %v687, 0
      %v708 = vsel %vm507, %v689, 0
      %v710 = vsel %vm507, %v691, 0
      %v712 = vsel %vm507, %v693, 0
      %v714 = vsel %vm507, %v695, 0
      %v716 = vsel %vm507, %v697, 0
      %v718 = vsel %vm507, %v699, 0
      %v721 = vsel %vm528, %v669, 0
      %723 = vmatprep.subr.mxu0 0.0
      %724 = vmatpush1.msra.mxu0 %v668
      %725 = vmatprep.subr.mxu0 0.0
      %726 = vmatpush1.msra.mxu0 %v721
      %727 = vmatprep.subr.mxu0 0.0
      %728 = vmatpush1.msra.mxu0 0.0
      %729 = vmatprep.subr.mxu0 0.0
      %730 = vmatpush1.msra.mxu0 0.0
      %731 = vmatprep.subr.mxu0 0.0
      %732 = vmatpush1.msra.mxu0 0.0
      %733 = vmatprep.subr.mxu0 0.0
      %734 = vmatpush1.msra.mxu0 0.0
      %735 = vmatprep.subr.mxu0 0.0
      %736 = vmatpush1.msra.mxu0 0.0
      %737 = vmatprep.subr.mxu0 0.0
      %738 = vmatpush1.msra.mxu0 0.0
      %739 = vmatprep.subr.mxu0 0.0
      %740 = vmatpush1.msra.mxu0 0.0
      %741 = vmatprep.subr.mxu0 0.0
      %742 = vmatpush1.msra.mxu0 0.0
      %743 = vmatprep.subr.mxu0 0.0
      %744 = vmatpush1.msra.mxu0 0.0
      %745 = vmatprep.subr.mxu0 0.0
      %746 = vmatpush1.msra.mxu0 0.0
      %747 = vmatprep.subr.mxu0 0.0
      %748 = vmatpush1.msra.mxu0 0.0
      %749 = vmatprep.subr.mxu0 0.0
      %750 = vmatpush1.msra.mxu0 0.0
      %751 = vmatprep.subr.mxu0 0.0
      %752 = vmatpush1.msra.mxu0 0.0
      %753 = vmatprep.subr.mxu0 0.0
      %754 = vmatpush1.msra.mxu0 0.0
      %755 = vmatprep.subr.mxu0 0.0
      %756 = vmatpush1.msra.mxu0 0.0
      %757 = vmatprep.subr.mxu0 0.0
      %758 = vmatpush1.msra.mxu0 0.0
      %759 = vmatprep.subr.mxu0 0.0
      %760 = vmatpush1.msra.mxu0 0.0
      %761 = vmatprep.subr.mxu0 0.0
      %762 = vmatpush1.msra.mxu0 0.0
      %763 = vmatprep.subr.mxu0 0.0
      %764 = vmatpush1.msra.mxu0 0.0
      %765 = vmatprep.subr.mxu0 0.0
      %766 = vmatpush1.msra.mxu0 0.0
      %767 = vmatprep.subr.mxu0 0.0
      %768 = vmatpush1.msra.mxu0 0.0
      %769 = vmatprep.subr.mxu0 0.0
      %770 = vmatpush1.msra.mxu0 0.0
      %771 = vmatprep.subr.mxu0 0.0
      %772 = vmatpush1.msra.mxu0 0.0
      %773 = vmatprep.subr.mxu0 0.0
      %774 = vmatpush1.msra.mxu0 0.0
      %775 = vmatprep.subr.mxu0 0.0
      %776 = vmatpush1.msra.mxu0 0.0
      %777 = vmatprep.subr.mxu0 0.0
      %778 = vmatpush1.msra.mxu0 0.0
      %779 = vmatprep.subr.mxu0 0.0
      %780 = vmatpush1.msra.mxu0 0.0
      %781 = vmatprep.subr.mxu0 0.0
      %782 = vmatpush1.msra.mxu0 0.0
      %783 = vmatprep.subr.mxu0 0.0
      %784 = vmatpush1.msra.mxu0 0.0
      %785 = vmatprep.subr.mxu0 0.0
      %786 = vmatpush1.msra.mxu0 0.0
      %787 = vmatprep.mubr.f32.mxu0 0.0
      %788 = vmatmul.mubr.f32.gmra.mrb[0].mxu0 %v700
      %v789 = vpop.f32.mrb[0].mxu0
      %v790 = vadd.f32 0.0, %v789
      %v791 = vpop.f32.mrb[0].mxu0
      %792 = vmatprep.mubr.f32.mxu0 0.0
      %793 = vmatmul.mubr.f32.gmra.mrb[0].mxu0 %v702
      %v794 = vpop.f32.mrb[0].mxu0
      %v795 = vadd.f32 0.0, %v794
      %v796 = vpop.f32.mrb[0].mxu0
      %797 = vmatprep.mubr.f32.mxu0 0.0
      %798 = vmatmul.mubr.f32.gmra.mrb[0].mxu0 %v704
      %v799 = vpop.f32.mrb[0].mxu0
      %v800 = vadd.f32 0.0, %v799
      %v801 = vpop.f32.mrb[0].mxu0
      %802 = vmatprep.mubr.f32.mxu0 0.0
      %803 = vmatmul.mubr.f32.gmra.mrb[0].mxu0 %v706
      %v804 = vpop.f32.mrb[0].mxu0
      %v805 = vadd.f32 0.0, %v804
      %v806 = vpop.f32.mrb[0].mxu0
      %807 = vmatprep.mubr.f32.mxu0 0.0
      %808 = vmatmul.mubr.f32.gmra.mrb[0].mxu0 %v708
      %v809 = vpop.f32.mrb[0].mxu0
      %v810 = vadd.f32 0.0, %v809
      %v811 = vpop.f32.mrb[0].mxu0
      %812 = vmatprep.mubr.f32.mxu0 0.0
      %813 = vmatmul.mubr.f32.gmra.mrb[0].mxu0 %v710
      %v814 = vpop.f32.mrb[0].mxu0
      %v815 = vadd.f32 0.0, %v814
      %v816 = vpop.f32.mrb[0].mxu0
      %817 = vmatprep.mubr.f32.mxu0 0.0
      %818 = vmatmul.mubr.f32.gmra.mrb[0].mxu0 %v712
      %v819 = vpop.f32.mrb[0].mxu0
      %v820 = vadd.f32 0.0, %v819
      %v821 = vpop.f32.mrb[0].mxu0
      %822 = vmatprep.mubr.f32.mxu0 0.0
      %823 = vmatmul.mubr.f32.gmra.mrb[0].mxu0 %v714
      %v824 = vpop.f32.mrb[0].mxu0
      %v825 = vadd.f32 0.0, %v824
      %v826 = vpop.f32.mrb[0].mxu0
      %827 = vmatprep.mubr.f32.mxu0 0.0
      %828 = vmatmul.mubr.f32.gmra.mrb[0].mxu0 %v716
      %v829 = vpop.f32.mrb[0].mxu0
      %v830 = vadd.f32 0.0, %v829
      %v831 = vpop.f32.mrb[0].mxu0
      %832 = vmatprep.mubr.f32.mxu0 0.0
      %833 = vmatmul.mubr.f32.gmra.mrb[0].mxu0 %v718
      %v834 = vpop.f32.mrb[0].mxu0
      %v835 = vadd.f32 0.0, %v834
      %v836 = vpop.f32.mrb[0].mxu0
      %837 = vdwg.mxu0
      %v838 = vadd.f32 %v647, %v790
      %v839 = vadd.f32 %v648, %v795
      %v840 = vadd.f32 %v649, %v800
      %v841 = vadd.f32 %v650, %v805
      %v842 = vadd.f32 %v651, %v810
      %v843 = vadd.f32 %v652, %v815
      %v844 = vadd.f32 %v653, %v820
      %v845 = vadd.f32 %v654, %v825
      %v846 = vadd.f32 %v655, %v830
      %v847 = vadd.f32 %v656, %v835
      %v848 = vld [vmem:[#allocation2 + $0x2] sm:$0xff]
      %v849 = vld [vmem:[#allocation2 + $0x12] sm:$0xff]
      %v850 = vld [vmem:[#allocation2 + $0x22] sm:$0xff]
      %v851 = vld [vmem:[#allocation2 + $0x32] sm:$0xff]
      %v852 = vld [vmem:[#allocation2 + $0x42] sm:$0xff]
      %v853 = vld [vmem:[#allocation2 + $0x52] sm:$0xff]
      %v854 = vld [vmem:[#allocation2 + $0x62] sm:$0xff]
      %v855 = vld [vmem:[#allocation2 + $0x72] sm:$0xff]
      %v856 = vld [vmem:[#allocation2 + $0x82] sm:$0xff]
      %v857 = vld [vmem:[#allocation2 + $0x92] sm:$0xff]
      %s858 = scalar_lea.vmem %s2, 32
      %v859 = vld [vmem:[%s858] sm:$0xff]
      %v860 = vld [vmem:[%s858 + $0x8] sm:$0x1]
      %871 = vrot.lane.b32.xlu0 %v848, 125
      %v872 = vpop.permute.xlu0 %871
      %873 = vrot.lane.b32.xlu0 %v849, 125
      %v874 = vpop.permute.xlu0 %873
      %875 = vrot.lane.b32.xlu0 %v850, 125
      %v876 = vpop.permute.xlu0 %875
      %877 = vrot.lane.b32.xlu0 %v851, 125
      %v878 = vpop.permute.xlu0 %877
      %879 = vrot.lane.b32.xlu0 %v852, 125
      %v880 = vpop.permute.xlu0 %879
      %881 = vrot.lane.b32.xlu0 %v853, 125
      %v882 = vpop.permute.xlu0 %881
      %883 = vrot.lane.b32.xlu0 %v854, 125
      %v884 = vpop.permute.xlu0 %883
      %885 = vrot.lane.b32.xlu0 %v855, 125
      %v886 = vpop.permute.xlu0 %885
      %887 = vrot.lane.b32.xlu0 %v856, 125
      %v888 = vpop.permute.xlu0 %887
      %889 = vrot.lane.b32.xlu0 %v857, 125
      %v890 = vpop.permute.xlu0 %889
      %v891 = vsel %vm507, %v872, 0
      %v893 = vsel %vm507, %v874, 0
      %v895 = vsel %vm507, %v876, 0
      %v897 = vsel %vm507, %v878, 0
      %v899 = vsel %vm507, %v880, 0
      %v901 = vsel %vm507, %v882, 0
      %v903 = vsel %vm507, %v884, 0
      %v905 = vsel %vm507, %v886, 0
      %v907 = vsel %vm507, %v888, 0
      %v909 = vsel %vm507, %v890, 0
      %v912 = vsel %vm528, %v860, 0
      %914 = vmatprep.subr.mxu0 0.0
      %915 = vmatpush1.msra.mxu0 %v859
      %916 = vmatprep.subr.mxu0 0.0
      %917 = vmatpush1.msra.mxu0 %v912
      %918 = vmatprep.subr.mxu0 0.0
      %919 = vmatpush1.msra.mxu0 0.0
      %920 = vmatprep.subr.mxu0 0.0
      %921 = vmatpush1.msra.mxu0 0.0
      %922 = vmatprep.subr.mxu0 0.0
      %923 = vmatpush1.msra.mxu0 0.0
      %924 = vmatprep.subr.mxu0 0.0
      %925 = vmatpush1.msra.mxu0 0.0
      %926 = vmatprep.subr.mxu0 0.0
      %927 = vmatpush1.msra.mxu0 0.0
      %928 = vmatprep.subr.mxu0 0.0
      %929 = vmatpush1.msra.mxu0 0.0
      %930 = vmatprep.subr.mxu0 0.0
      %931 = vmatpush1.msra.mxu0 0.0
      %932 = vmatprep.subr.mxu0 0.0
      %933 = vmatpush1.msra.mxu0 0.0
      %934 = vmatprep.subr.mxu0 0.0
      %935 = vmatpush1.msra.mxu0 0.0
      %936 = vmatprep.subr.mxu0 0.0
      %937 = vmatpush1.msra.mxu0 0.0
      %938 = vmatprep.subr.mxu0 0.0
      %939 = vmatpush1.msra.mxu0 0.0
      %940 = vmatprep.subr.mxu0 0.0
      %941 = vmatpush1.msra.mxu0 0.0
      %942 = vmatprep.subr.mxu0 0.0
      %943 = vmatpush1.msra.mxu0 0.0
      %944 = vmatprep.subr.mxu0 0.0
      %945 = vmatpush1.msra.mxu0 0.0
      %946 = vmatprep.subr.mxu0 0.0
      %947 = vmatpush1.msra.mxu0 0.0
      %948 = vmatprep.subr.mxu0 0.0
      %949 = vmatpush1.msra.mxu0 0.0
      %950 = vmatprep.subr.mxu0 0.0
      %951 = vmatpush1.msra.mxu0 0.0
      %952 = vmatprep.subr.mxu0 0.0
      %953 = vmatpush1.msra.mxu0 0.0
      %954 = vmatprep.subr.mxu0 0.0
      %955 = vmatpush1.msra.mxu0 0.0
      %956 = vmatprep.subr.mxu0 0.0
      %957 = vmatpush1.msra.mxu0 0.0
      %958 = vmatprep.subr.mxu0 0.0
      %959 = vmatpush1.msra.mxu0 0.0
      %960 = vmatprep.subr.mxu0 0.0
      %961 = vmatpush1.msra.mxu0 0.0
      %962 = vmatprep.subr.mxu0 0.0
      %963 = vmatpush1.msra.mxu0 0.0
      %964 = vmatprep.subr.mxu0 0.0
      %965 = vmatpush1.msra.mxu0 0.0
      %966 = vmatprep.subr.mxu0 0.0
      %967 = vmatpush1.msra.mxu0 0.0
      %968 = vmatprep.subr.mxu0 0.0
      %969 = vmatpush1.msra.mxu0 0.0
      %970 = vmatprep.subr.mxu0 0.0
      %971 = vmatpush1.msra.mxu0 0.0
      %972 = vmatprep.subr.mxu0 0.0
      %973 = vmatpush1.msra.mxu0 0.0
      %974 = vmatprep.subr.mxu0 0.0
      %975 = vmatpush1.msra.mxu0 0.0
      %976 = vmatprep.subr.mxu0 0.0
      %977 = vmatpush1.msra.mxu0 0.0
      %978 = vmatprep.mubr.f32.mxu0 0.0
      %979 = vmatmul.mubr.f32.gmra.mrb[0].mxu0 %v891
      %v980 = vpop.f32.mrb[0].mxu0
      %v981 = vadd.f32 0.0, %v980
      %v982 = vpop.f32.mrb[0].mxu0
      %983 = vmatprep.mubr.f32.mxu0 0.0
      %984 = vmatmul.mubr.f32.gmra.mrb[0].mxu0 %v893
      %v985 = vpop.f32.mrb[0].mxu0
      %v986 = vadd.f32 0.0, %v985
      %v987 = vpop.f32.mrb[0].mxu0
      %988 = vmatprep.mubr.f32.mxu0 0.0
      %989 = vmatmul.mubr.f32.gmra.mrb[0].mxu0 %v895
      %v990 = vpop.f32.mrb[0].mxu0
      %v991 = vadd.f32 0.0, %v990
      %v992 = vpop.f32.mrb[0].mxu0
      %993 = vmatprep.mubr.f32.mxu0 0.0
      %994 = vmatmul.mubr.f32.gmra.mrb[0].mxu0 %v897
      %v995 = vpop.f32.mrb[0].mxu0
      %v996 = vadd.f32 0.0, %v995
      %v997 = vpop.f32.mrb[0].mxu0
      %998 = vmatprep.mubr.f32.mxu0 0.0
      %999 = vmatmul.mubr.f32.gmra.mrb[0].mxu0 %v899
      %v1000 = vpop.f32.mrb[0].mxu0
      %v1001 = vadd.f32 0.0, %v1000
      %v1002 = vpop.f32.mrb[0].mxu0
      %1003 = vmatprep.mubr.f32.mxu0 0.0
      %1004 = vmatmul.mubr.f32.gmra.mrb[0].mxu0 %v901
      %v1005 = vpop.f32.mrb[0].mxu0
      %v1006 = vadd.f32 0.0, %v1005
      %v1007 = vpop.f32.mrb[0].mxu0
      %1008 = vmatprep.mubr.f32.mxu0 0.0
      %1009 = vmatmul.mubr.f32.gmra.mrb[0].mxu0 %v903
      %v1010 = vpop.f32.mrb[0].mxu0
      %v1011 = vadd.f32 0.0, %v1010
      %v1012 = vpop.f32.mrb[0].mxu0
      %1013 = vmatprep.mubr.f32.mxu0 0.0
      %1014 = vmatmul.mubr.f32.gmra.mrb[0].mxu0 %v905
      %v1015 = vpop.f32.mrb[0].mxu0
      %v1016 = vadd.f32 0.0, %v1015
      %v1017 = vpop.f32.mrb[0].mxu0
      %1018 = vmatprep.mubr.f32.mxu0 0.0
      %1019 = vmatmul.mubr.f32.gmra.mrb[0].mxu0 %v907
      %v1020 = vpop.f32.mrb[0].mxu0
      %v1021 = vadd.f32 0.0, %v1020
      %v1022 = vpop.f32.mrb[0].mxu0
      %1023 = vmatprep.mubr.f32.mxu0 0.0
      %1024 = vmatmul.mubr.f32.gmra.mrb[0].mxu0 %v909
      %v1025 = vpop.f32.mrb[0].mxu0
      %v1026 = vadd.f32 0.0, %v1025
      %v1027 = vpop.f32.mrb[0].mxu0
      %1028 = vdwg.mxu0
      %v1029 = vadd.f32 %v838, %v981
      %v1030 = vadd.f32 %v839, %v986
      %v1031 = vadd.f32 %v840, %v991
      %v1032 = vadd.f32 %v841, %v996
      %v1033 = vadd.f32 %v842, %v1001
      %v1034 = vadd.f32 %v843, %v1006
      %v1035 = vadd.f32 %v844, %v1011
      %v1036 = vadd.f32 %v845, %v1016
      %v1037 = vadd.f32 %v846, %v1021
      %v1038 = vadd.f32 %v847, %v1026
      %s1039 = scalar_lea.vmem [#allocation2], 16
      %v1040 = vld [vmem:[%s1039] sm:$0xff]
      %v1041 = vld [vmem:[%s1039 + $0x10] sm:$0xff]
      %v1042 = vld [vmem:[%s1039 + $0x20] sm:$0xff]
      %v1043 = vld [vmem:[%s1039 + $0x30] sm:$0xff]
      %v1044 = vld [vmem:[%s1039 + $0x40] sm:$0xff]
      %v1045 = vld [vmem:[%s1039 + $0x50] sm:$0xff]
      %v1046 = vld [vmem:[%s1039 + $0x60] sm:$0xff]
      %v1047 = vld [vmem:[%s1039 + $0x70] sm:$0xff]
      %v1048 = vld [vmem:[%s1039 + $0x80] sm:$0xff]
      %v1049 = vld [vmem:[%s1039 + $0x90] sm:$0xff]
      %s1050 = scalar_lea.vmem %s2, 48
      %v1051 = vld [vmem:[%s1050] sm:$0xff]
      %v1052 = vld [vmem:[%s1050 + $0x8] sm:$0x1]
      %1063 = vrot.lane.b32.xlu0 %v1040, 125
      %v1064 = vpop.permute.xlu0 %1063
      %1065 = vrot.lane.b32.xlu0 %v1041, 125
      %v1066 = vpop.permute.xlu0 %1065
      %1067 = vrot.lane.b32.xlu0 %v1042, 125
      %v1068 = vpop.permute.xlu0 %1067
      %1069 = vrot.lane.b32.xlu0 %v1043, 125
      %v1070 = vpop.permute.xlu0 %1069
      %1071 = vrot.lane.b32.xlu0 %v1044, 125
      %v1072 = vpop.permute.xlu0 %1071
      %1073 = vrot.lane.b32.xlu0 %v1045, 125
      %v1074 = vpop.permute.xlu0 %1073
      %1075 = vrot.lane.b32.xlu0 %v1046, 125
      %v1076 = vpop.permute.xlu0 %1075
      %1077 = vrot.lane.b32.xlu0 %v1047, 125
      %v1078 = vpop.permute.xlu0 %1077
      %1079 = vrot.lane.b32.xlu0 %v1048, 125
      %v1080 = vpop.permute.xlu0 %1079
      %1081 = vrot.lane.b32.xlu0 %v1049, 125
      %v1082 = vpop.permute.xlu0 %1081
      %v1083 = vsel %vm507, %v1064, 0
      %v1085 = vsel %vm507, %v1066, 0
      %v1087 = vsel %vm507, %v1068, 0
      %v1089 = vsel %vm507, %v1070, 0
      %v1091 = vsel %vm507, %v1072, 0
      %v1093 = vsel %vm507, %v1074, 0
      %v1095 = vsel %vm507, %v1076, 0
      %v1097 = vsel %vm507, %v1078, 0
      %v1099 = vsel %vm507, %v1080, 0
      %v1101 = vsel %vm507, %v1082, 0
      %v1104 = vsel %vm528, %v1052, 0
      %1106 = vmatprep.subr.mxu0 0.0
      %1107 = vmatpush1.msra.mxu0 %v1051
      %1108 = vmatprep.subr.mxu0 0.0
      %1109 = vmatpush1.msra.mxu0 %v1104
      %1110 = vmatprep.subr.mxu0 0.0
      %1111 = vmatpush1.msra.mxu0 0.0
      %1112 = vmatprep.subr.mxu0 0.0
      %1113 = vmatpush1.msra.mxu0 0.0
      %1114 = vmatprep.subr.mxu0 0.0
      %1115 = vmatpush1.msra.mxu0 0.0
      %1116 = vmatprep.subr.mxu0 0.0
      %1117 = vmatpush1.msra.mxu0 0.0
      %1118 = vmatprep.subr.mxu0 0.0
      %1119 = vmatpush1.msra.mxu0 0.0
      %1120 = vmatprep.subr.mxu0 0.0
      %1121 = vmatpush1.msra.mxu0 0.0
      %1122 = vmatprep.subr.mxu0 0.0
      %1123 = vmatpush1.msra.mxu0 0.0
      %1124 = vmatprep.subr.mxu0 0.0
      %1125 = vmatpush1.msra.mxu0 0.0
      %1126 = vmatprep.subr.mxu0 0.0
      %1127 = vmatpush1.msra.mxu0 0.0
      %1128 = vmatprep.subr.mxu0 0.0
      %1129 = vmatpush1.msra.mxu0 0.0
      %1130 = vmatprep.subr.mxu0 0.0
      %1131 = vmatpush1.msra.mxu0 0.0
      %1132 = vmatprep.subr.mxu0 0.0
      %1133 = vmatpush1.msra.mxu0 0.0
      %1134 = vmatprep.subr.mxu0 0.0
      %1135 = vmatpush1.msra.mxu0 0.0
      %1136 = vmatprep.subr.mxu0 0.0
      %1137 = vmatpush1.msra.mxu0 0.0
      %1138 = vmatprep.subr.mxu0 0.0
      %1139 = vmatpush1.msra.mxu0 0.0
      %1140 = vmatprep.subr.mxu0 0.0
      %1141 = vmatpush1.msra.mxu0 0.0
      %1142 = vmatprep.subr.mxu0 0.0
      %1143 = vmatpush1.msra.mxu0 0.0
      %1144 = vmatprep.subr.mxu0 0.0
      %1145 = vmatpush1.msra.mxu0 0.0
      %1146 = vmatprep.subr.mxu0 0.0
      %1147 = vmatpush1.msra.mxu0 0.0
      %1148 = vmatprep.subr.mxu0 0.0
      %1149 = vmatpush1.msra.mxu0 0.0
      %1150 = vmatprep.subr.mxu0 0.0
      %1151 = vmatpush1.msra.mxu0 0.0
      %1152 = vmatprep.subr.mxu0 0.0
      %1153 = vmatpush1.msra.mxu0 0.0
      %1154 = vmatprep.subr.mxu0 0.0
      %1155 = vmatpush1.msra.mxu0 0.0
      %1156 = vmatprep.subr.mxu0 0.0
      %1157 = vmatpush1.msra.mxu0 0.0
      %1158 = vmatprep.subr.mxu0 0.0
      %1159 = vmatpush1.msra.mxu0 0.0
      %1160 = vmatprep.subr.mxu0 0.0
      %1161 = vmatpush1.msra.mxu0 0.0
      %1162 = vmatprep.subr.mxu0 0.0
      %1163 = vmatpush1.msra.mxu0 0.0
      %1164 = vmatprep.subr.mxu0 0.0
      %1165 = vmatpush1.msra.mxu0 0.0
      %1166 = vmatprep.subr.mxu0 0.0
      %1167 = vmatpush1.msra.mxu0 0.0
      %1168 = vmatprep.subr.mxu0 0.0
      %1169 = vmatpush1.msra.mxu0 0.0
      %1170 = vmatprep.mubr.f32.mxu0 0.0
      %1171 = vmatmul.mubr.f32.gmra.mrb[0].mxu0 %v1083
      %v1172 = vpop.f32.mrb[0].mxu0
      %v1173 = vadd.f32 0.0, %v1172
      %v1174 = vpop.f32.mrb[0].mxu0
      %1175 = vmatprep.mubr.f32.mxu0 0.0
      %1176 = vmatmul.mubr.f32.gmra.mrb[0].mxu0 %v1085
      %v1177 = vpop.f32.mrb[0].mxu0
      %v1178 = vadd.f32 0.0, %v1177
      %v1179 = vpop.f32.mrb[0].mxu0
      %1180 = vmatprep.mubr.f32.mxu0 0.0
      %1181 = vmatmul.mubr.f32.gmra.mrb[0].mxu0 %v1087
      %v1182 = vpop.f32.mrb[0].mxu0
      %v1183 = vadd.f32 0.0, %v1182
      %v1184 = vpop.f32.mrb[0].mxu0
      %1185 = vmatprep.mubr.f32.mxu0 0.0
      %1186 = vmatmul.mubr.f32.gmra.mrb[0].mxu0 %v1089
      %v1187 = vpop.f32.mrb[0].mxu0
      %v1188 = vadd.f32 0.0, %v1187
      %v1189 = vpop.f32.mrb[0].mxu0
      %1190 = vmatprep.mubr.f32.mxu0 0.0
      %1191 = vmatmul.mubr.f32.gmra.mrb[0].mxu0 %v1091
      %v1192 = vpop.f32.mrb[0].mxu0
      %v1193 = vadd.f32 0.0, %v1192
      %v1194 = vpop.f32.mrb[0].mxu0
      %1195 = vmatprep.mubr.f32.mxu0 0.0
      %1196 = vmatmul.mubr.f32.gmra.mrb[0].mxu0 %v1093
      %v1197 = vpop.f32.mrb[0].mxu0
      %v1198 = vadd.f32 0.0, %v1197
      %v1199 = vpop.f32.mrb[0].mxu0
      %1200 = vmatprep.mubr.f32.mxu0 0.0
      %1201 = vmatmul.mubr.f32.gmra.mrb[0].mxu0 %v1095
      %v1202 = vpop.f32.mrb[0].mxu0
      %v1203 = vadd.f32 0.0, %v1202
      %v1204 = vpop.f32.mrb[0].mxu0
      %1205 = vmatprep.mubr.f32.mxu0 0.0
      %1206 = vmatmul.mubr.f32.gmra.mrb[0].mxu0 %v1097
      %v1207 = vpop.f32.mrb[0].mxu0
      %v1208 = vadd.f32 0.0, %v1207
      %v1209 = vpop.f32.mrb[0].mxu0
      %1210 = vmatprep.mubr.f32.mxu0 0.0
      %1211 = vmatmul.mubr.f32.gmra.mrb[0].mxu0 %v1099
      %v1212 = vpop.f32.mrb[0].mxu0
      %v1213 = vadd.f32 0.0, %v1212
      %v1214 = vpop.f32.mrb[0].mxu0
      %1215 = vmatprep.mubr.f32.mxu0 0.0
      %1216 = vmatmul.mubr.f32.gmra.mrb[0].mxu0 %v1101
      %v1217 = vpop.f32.mrb[0].mxu0
      %v1218 = vadd.f32 0.0, %v1217
      %v1219 = vpop.f32.mrb[0].mxu0
      %1220 = vdwg.mxu0
      %v1221 = vadd.f32 %v1029, %v1173
      %v1222 = vadd.f32 %v1030, %v1178
      %v1223 = vadd.f32 %v1031, %v1183
      %v1224 = vadd.f32 %v1032, %v1188
      %v1225 = vadd.f32 %v1033, %v1193
      %v1226 = vadd.f32 %v1034, %v1198
      %v1227 = vadd.f32 %v1035, %v1203
      %v1228 = vadd.f32 %v1036, %v1208
      %v1229 = vadd.f32 %v1037, %v1213
      %v1230 = vadd.f32 %v1038, %v1218
      %v1231 = vld [vmem:[%s1039 + $0x1] sm:$0xff]
      %v1232 = vld [vmem:[%s1039 + $0x11] sm:$0xff]
      %v1233 = vld [vmem:[%s1039 + $0x21] sm:$0xff]
      %v1234 = vld [vmem:[%s1039 + $0x31] sm:$0xff]
      %v1235 = vld [vmem:[%s1039 + $0x41] sm:$0xff]
      %v1236 = vld [vmem:[%s1039 + $0x51] sm:$0xff]
      %v1237 = vld [vmem:[%s1039 + $0x61] sm:$0xff]
      %v1238 = vld [vmem:[%s1039 + $0x71] sm:$0xff]
      %v1239 = vld [vmem:[%s1039 + $0x81] sm:$0xff]
      %v1240 = vld [vmem:[%s1039 + $0x91] sm:$0xff]
      %s1241 = scalar_lea.vmem %s2, 64
      %v1242 = vld [vmem:[%s1241] sm:$0xff]
      %v1243 = vld [vmem:[%s1241 + $0x8] sm:$0x1]
      %1254 = vrot.lane.b32.xlu0 %v1231, 125
      %v1255 = vpop.permute.xlu0 %1254
      %1256 = vrot.lane.b32.xlu0 %v1232, 125
      %v1257 = vpop.permute.xlu0 %1256
      %1258 = vrot.lane.b32.xlu0 %v1233, 125
      %v1259 = vpop.permute.xlu0 %1258
      %1260 = vrot.lane.b32.xlu0 %v1234, 125
      %v1261 = vpop.permute.xlu0 %1260
      %1262 = vrot.lane.b32.xlu0 %v1235, 125
      %v1263 = vpop.permute.xlu0 %1262
      %1264 = vrot.lane.b32.xlu0 %v1236, 125
      %v1265 = vpop.permute.xlu0 %1264
      %1266 = vrot.lane.b32.xlu0 %v1237, 125
      %v1267 = vpop.permute.xlu0 %1266
      %1268 = vrot.lane.b32.xlu0 %v1238, 125
      %v1269 = vpop.permute.xlu0 %1268
      %1270 = vrot.lane.b32.xlu0 %v1239, 125
      %v1271 = vpop.permute.xlu0 %1270
      %1272 = vrot.lane.b32.xlu0 %v1240, 125
      %v1273 = vpop.permute.xlu0 %1272
      %v1274 = vsel %vm507, %v1255, 0
      %v1276 = vsel %vm507, %v1257, 0
      %v1278 = vsel %vm507, %v1259, 0
      %v1280 = vsel %vm507, %v1261, 0
      %v1282 = vsel %vm507, %v1263, 0
      %v1284 = vsel %vm507, %v1265, 0
      %v1286 = vsel %vm507, %v1267, 0
      %v1288 = vsel %vm507, %v1269, 0
      %v1290 = vsel %vm507, %v1271, 0
      %v1292 = vsel %vm507, %v1273, 0
      %v1295 = vsel %vm528, %v1243, 0
      %1297 = vmatprep.subr.mxu0 0.0
      %1298 = vmatpush1.msra.mxu0 %v1242
      %1299 = vmatprep.subr.mxu0 0.0
      %1300 = vmatpush1.msra.mxu0 %v1295
      %1301 = vmatprep.subr.mxu0 0.0
      %1302 = vmatpush1.msra.mxu0 0.0
      %1303 = vmatprep.subr.mxu0 0.0
      %1304 = vmatpush1.msra.mxu0 0.0
      %1305 = vmatprep.subr.mxu0 0.0
      %1306 = vmatpush1.msra.mxu0 0.0
      %1307 = vmatprep.subr.mxu0 0.0
      %1308 = vmatpush1.msra.mxu0 0.0
      %1309 = vmatprep.subr.mxu0 0.0
      %1310 = vmatpush1.msra.mxu0 0.0
      %1311 = vmatprep.subr.mxu0 0.0
      %1312 = vmatpush1.msra.mxu0 0.0
      %1313 = vmatprep.subr.mxu0 0.0
      %1314 = vmatpush1.msra.mxu0 0.0
      %1315 = vmatprep.subr.mxu0 0.0
      %1316 = vmatpush1.msra.mxu0 0.0
      %1317 = vmatprep.subr.mxu0 0.0
      %1318 = vmatpush1.msra.mxu0 0.0
      %1319 = vmatprep.subr.mxu0 0.0
      %1320 = vmatpush1.msra.mxu0 0.0
      %1321 = vmatprep.subr.mxu0 0.0
      %1322 = vmatpush1.msra.mxu0 0.0
      %1323 = vmatprep.subr.mxu0 0.0
      %1324 = vmatpush1.msra.mxu0 0.0
      %1325 = vmatprep.subr.mxu0 0.0
      %1326 = vmatpush1.msra.mxu0 0.0
      %1327 = vmatprep.subr.mxu0 0.0
      %1328 = vmatpush1.msra.mxu0 0.0
      %1329 = vmatprep.subr.mxu0 0.0
      %1330 = vmatpush1.msra.mxu0 0.0
      %1331 = vmatprep.subr.mxu0 0.0
      %1332 = vmatpush1.msra.mxu0 0.0
      %1333 = vmatprep.subr.mxu0 0.0
      %1334 = vmatpush1.msra.mxu0 0.0
      %1335 = vmatprep.subr.mxu0 0.0
      %1336 = vmatpush1.msra.mxu0 0.0
      %1337 = vmatprep.subr.mxu0 0.0
      %1338 = vmatpush1.msra.mxu0 0.0
      %1339 = vmatprep.subr.mxu0 0.0
      %1340 = vmatpush1.msra.mxu0 0.0
      %1341 = vmatprep.subr.mxu0 0.0
      %1342 = vmatpush1.msra.mxu0 0.0
      %1343 = vmatprep.subr.mxu0 0.0
      %1344 = vmatpush1.msra.mxu0 0.0
      %1345 = vmatprep.subr.mxu0 0.0
      %1346 = vmatpush1.msra.mxu0 0.0
      %1347 = vmatprep.subr.mxu0 0.0
      %1348 = vmatpush1.msra.mxu0 0.0
      %1349 = vmatprep.subr.mxu0 0.0
      %1350 = vmatpush1.msra.mxu0 0.0
      %1351 = vmatprep.subr.mxu0 0.0
      %1352 = vmatpush1.msra.mxu0 0.0
      %1353 = vmatprep.subr.mxu0 0.0
      %1354 = vmatpush1.msra.mxu0 0.0
      %1355 = vmatprep.subr.mxu0 0.0
      %1356 = vmatpush1.msra.mxu0 0.0
      %1357 = vmatprep.subr.mxu0 0.0
      %1358 = vmatpush1.msra.mxu0 0.0
      %1359 = vmatprep.subr.mxu0 0.0
      %1360 = vmatpush1.msra.mxu0 0.0
      %1361 = vmatprep.mubr.f32.mxu0 0.0
      %1362 = vmatmul.mubr.f32.gmra.mrb[0].mxu0 %v1274
      %v1363 = vpop.f32.mrb[0].mxu0
      %v1364 = vadd.f32 0.0, %v1363
      %v1365 = vpop.f32.mrb[0].mxu0
      %1366 = vmatprep.mubr.f32.mxu0 0.0
      %1367 = vmatmul.mubr.f32.gmra.mrb[0].mxu0 %v1276
      %v1368 = vpop.f32.mrb[0].mxu0
      %v1369 = vadd.f32 0.0, %v1368
      %v1370 = vpop.f32.mrb[0].mxu0
      %1371 = vmatprep.mubr.f32.mxu0 0.0
      %1372 = vmatmul.mubr.f32.gmra.mrb[0].mxu0 %v1278
      %v1373 = vpop.f32.mrb[0].mxu0
      %v1374 = vadd.f32 0.0, %v1373
      %v1375 = vpop.f32.mrb[0].mxu0
      %1376 = vmatprep.mubr.f32.mxu0 0.0
      %1377 = vmatmul.mubr.f32.gmra.mrb[0].mxu0 %v1280
      %v1378 = vpop.f32.mrb[0].mxu0
      %v1379 = vadd.f32 0.0, %v1378
      %v1380 = vpop.f32.mrb[0].mxu0
      %1381 = vmatprep.mubr.f32.mxu0 0.0
      %1382 = vmatmul.mubr.f32.gmra.mrb[0].mxu0 %v1282
      %v1383 = vpop.f32.mrb[0].mxu0
      %v1384 = vadd.f32 0.0, %v1383
      %v1385 = vpop.f32.mrb[0].mxu0
      %1386 = vmatprep.mubr.f32.mxu0 0.0
      %1387 = vmatmul.mubr.f32.gmra.mrb[0].mxu0 %v1284
      %v1388 = vpop.f32.mrb[0].mxu0
      %v1389 = vadd.f32 0.0, %v1388
      %v1390 = vpop.f32.mrb[0].mxu0
      %1391 = vmatprep.mubr.f32.mxu0 0.0
      %1392 = vmatmul.mubr.f32.gmra.mrb[0].mxu0 %v1286
      %v1393 = vpop.f32.mrb[0].mxu0
      %v1394 = vadd.f32 0.0, %v1393
      %v1395 = vpop.f32.mrb[0].mxu0
      %1396 = vmatprep.mubr.f32.mxu0 0.0
      %1397 = vmatmul.mubr.f32.gmra.mrb[0].mxu0 %v1288
      %v1398 = vpop.f32.mrb[0].mxu0
      %v1399 = vadd.f32 0.0, %v1398
      %v1400 = vpop.f32.mrb[0].mxu0
      %1401 = vmatprep.mubr.f32.mxu0 0.0
      %1402 = vmatmul.mubr.f32.gmra.mrb[0].mxu0 %v1290
      %v1403 = vpop.f32.mrb[0].mxu0
      %v1404 = vadd.f32 0.0, %v1403
      %v1405 = vpop.f32.mrb[0].mxu0
      %1406 = vmatprep.mubr.f32.mxu0 0.0
      %1407 = vmatmul.mubr.f32.gmra.mrb[0].mxu0 %v1292
      %v1408 = vpop.f32.mrb[0].mxu0
      %v1409 = vadd.f32 0.0, %v1408
      %v1410 = vpop.f32.mrb[0].mxu0
      %1411 = vdwg.mxu0
      %v1412 = vadd.f32 %v1221, %v1364
      %v1413 = vadd.f32 %v1222, %v1369
      %v1414 = vadd.f32 %v1223, %v1374
      %v1415 = vadd.f32 %v1224, %v1379
      %v1416 = vadd.f32 %v1225, %v1384
      %v1417 = vadd.f32 %v1226, %v1389
      %v1418 = vadd.f32 %v1227, %v1394
      %v1419 = vadd.f32 %v1228, %v1399
      %v1420 = vadd.f32 %v1229, %v1404
      %v1421 = vadd.f32 %v1230, %v1409
      %v1422 = vld [vmem:[%s1039 + $0x2] sm:$0xff]
      %v1423 = vld [vmem:[%s1039 + $0x12] sm:$0xff]
      %v1424 = vld [vmem:[%s1039 + $0x22] sm:$0xff]
      %v1425 = vld [vmem:[%s1039 + $0x32] sm:$0xff]
      %v1426 = vld [vmem:[%s1039 + $0x42] sm:$0xff]
      %v1427 = vld [vmem:[%s1039 + $0x52] sm:$0xff]
      %v1428 = vld [vmem:[%s1039 + $0x62] sm:$0xff]
      %v1429 = vld [vmem:[%s1039 + $0x72] sm:$0xff]
      %v1430 = vld [vmem:[%s1039 + $0x82] sm:$0xff]
      %v1431 = vld [vmem:[%s1039 + $0x92] sm:$0xff]
      %s1432 = scalar_lea.vmem %s2, 80
      %v1433 = vld [vmem:[%s1432] sm:$0xff]
      %v1434 = vld [vmem:[%s1432 + $0x8] sm:$0x1]
      %1445 = vrot.lane.b32.xlu0 %v1422, 125
      %v1446 = vpop.permute.xlu0 %1445
      %1447 = vrot.lane.b32.xlu0 %v1423, 125
      %v1448 = vpop.permute.xlu0 %1447
      %1449 = vrot.lane.b32.xlu0 %v1424, 125
      %v1450 = vpop.permute.xlu0 %1449
      %1451 = vrot.lane.b32.xlu0 %v1425, 125
      %v1452 = vpop.permute.xlu0 %1451
      %1453 = vrot.lane.b32.xlu0 %v1426, 125
      %v1454 = vpop.permute.xlu0 %1453
      %1455 = vrot.lane.b32.xlu0 %v1427, 125
      %v1456 = vpop.permute.xlu0 %1455
      %1457 = vrot.lane.b32.xlu0 %v1428, 125
      %v1458 = vpop.permute.xlu0 %1457
      %1459 = vrot.lane.b32.xlu0 %v1429, 125
      %v1460 = vpop.permute.xlu0 %1459
      %1461 = vrot.lane.b32.xlu0 %v1430, 125
      %v1462 = vpop.permute.xlu0 %1461
      %1463 = vrot.lane.b32.xlu0 %v1431, 125
      %v1464 = vpop.permute.xlu0 %1463
      %v1465 = vsel %vm507, %v1446, 0
      %v1467 = vsel %vm507, %v1448, 0
      %v1469 = vsel %vm507, %v1450, 0
      %v1471 = vsel %vm507, %v1452, 0
      %v1473 = vsel %vm507, %v1454, 0
      %v1475 = vsel %vm507, %v1456, 0
      %v1477 = vsel %vm507, %v1458, 0
      %v1479 = vsel %vm507, %v1460, 0
      %v1481 = vsel %vm507, %v1462, 0
      %v1483 = vsel %vm507, %v1464, 0
      %v1486 = vsel %vm528, %v1434, 0
      %1488 = vmatprep.subr.mxu0 0.0
      %1489 = vmatpush1.msra.mxu0 %v1433
      %1490 = vmatprep.subr.mxu0 0.0
      %1491 = vmatpush1.msra.mxu0 %v1486
      %1492 = vmatprep.subr.mxu0 0.0
      %1493 = vmatpush1.msra.mxu0 0.0
      %1494 = vmatprep.subr.mxu0 0.0
      %1495 = vmatpush1.msra.mxu0 0.0
      %1496 = vmatprep.subr.mxu0 0.0
      %1497 = vmatpush1.msra.mxu0 0.0
      %1498 = vmatprep.subr.mxu0 0.0
      %1499 = vmatpush1.msra.mxu0 0.0
      %1500 = vmatprep.subr.mxu0 0.0
      %1501 = vmatpush1.msra.mxu0 0.0
      %1502 = vmatprep.subr.mxu0 0.0
      %1503 = vmatpush1.msra.mxu0 0.0
      %1504 = vmatprep.subr.mxu0 0.0
      %1505 = vmatpush1.msra.mxu0 0.0
      %1506 = vmatprep.subr.mxu0 0.0
      %1507 = vmatpush1.msra.mxu0 0.0
      %1508 = vmatprep.subr.mxu0 0.0
      %1509 = vmatpush1.msra.mxu0 0.0
      %1510 = vmatprep.subr.mxu0 0.0
      %1511 = vmatpush1.msra.mxu0 0.0
      %1512 = vmatprep.subr.mxu0 0.0
      %1513 = vmatpush1.msra.mxu0 0.0
      %1514 = vmatprep.subr.mxu0 0.0
      %1515 = vmatpush1.msra.mxu0 0.0
      %1516 = vmatprep.subr.mxu0 0.0
      %1517 = vmatpush1.msra.mxu0 0.0
      %1518 = vmatprep.subr.mxu0 0.0
      %1519 = vmatpush1.msra.mxu0 0.0
      %1520 = vmatprep.subr.mxu0 0.0
      %1521 = vmatpush1.msra.mxu0 0.0
      %1522 = vmatprep.subr.mxu0 0.0
      %1523 = vmatpush1.msra.mxu0 0.0
      %1524 = vmatprep.subr.mxu0 0.0
      %1525 = vmatpush1.msra.mxu0 0.0
      %1526 = vmatprep.subr.mxu0 0.0
      %1527 = vmatpush1.msra.mxu0 0.0
      %1528 = vmatprep.subr.mxu0 0.0
      %1529 = vmatpush1.msra.mxu0 0.0
      %1530 = vmatprep.subr.mxu0 0.0
      %1531 = vmatpush1.msra.mxu0 0.0
      %1532 = vmatprep.subr.mxu0 0.0
      %1533 = vmatpush1.msra.mxu0 0.0
      %1534 = vmatprep.subr.mxu0 0.0
      %1535 = vmatpush1.msra.mxu0 0.0
      %1536 = vmatprep.subr.mxu0 0.0
      %1537 = vmatpush1.msra.mxu0 0.0
      %1538 = vmatprep.subr.mxu0 0.0
      %1539 = vmatpush1.msra.mxu0 0.0
      %1540 = vmatprep.subr.mxu0 0.0
      %1541 = vmatpush1.msra.mxu0 0.0
      %1542 = vmatprep.subr.mxu0 0.0
      %1543 = vmatpush1.msra.mxu0 0.0
      %1544 = vmatprep.subr.mxu0 0.0
      %1545 = vmatpush1.msra.mxu0 0.0
      %1546 = vmatprep.subr.mxu0 0.0
      %1547 = vmatpush1.msra.mxu0 0.0
      %1548 = vmatprep.subr.mxu0 0.0
      %1549 = vmatpush1.msra.mxu0 0.0
      %1550 = vmatprep.subr.mxu0 0.0
      %1551 = vmatpush1.msra.mxu0 0.0
      %1552 = vmatprep.mubr.f32.mxu0 0.0
      %1553 = vmatmul.mubr.f32.gmra.mrb[0].mxu0 %v1465
      %v1554 = vpop.f32.mrb[0].mxu0
      %v1555 = vadd.f32 0.0, %v1554
      %v1556 = vpop.f32.mrb[0].mxu0
      %1557 = vmatprep.mubr.f32.mxu0 0.0
      %1558 = vmatmul.mubr.f32.gmra.mrb[0].mxu0 %v1467
      %v1559 = vpop.f32.mrb[0].mxu0
      %v1560 = vadd.f32 0.0, %v1559
      %v1561 = vpop.f32.mrb[0].mxu0
      %1562 = vmatprep.mubr.f32.mxu0 0.0
      %1563 = vmatmul.mubr.f32.gmra.mrb[0].mxu0 %v1469
      %v1564 = vpop.f32.mrb[0].mxu0
      %v1565 = vadd.f32 0.0, %v1564
      %v1566 = vpop.f32.mrb[0].mxu0
      %1567 = vmatprep.mubr.f32.mxu0 0.0
      %1568 = vmatmul.mubr.f32.gmra.mrb[0].mxu0 %v1471
      %v1569 = vpop.f32.mrb[0].mxu0
      %v1570 = vadd.f32 0.0, %v1569
      %v1571 = vpop.f32.mrb[0].mxu0
      %1572 = vmatprep.mubr.f32.mxu0 0.0
      %1573 = vmatmul.mubr.f32.gmra.mrb[0].mxu0 %v1473
      %v1574 = vpop.f32.mrb[0].mxu0
      %v1575 = vadd.f32 0.0, %v1574
      %v1576 = vpop.f32.mrb[0].mxu0
      %1577 = vmatprep.mubr.f32.mxu0 0.0
      %1578 = vmatmul.mubr.f32.gmra.mrb[0].mxu0 %v1475
      %v1579 = vpop.f32.mrb[0].mxu0
      %v1580 = vadd.f32 0.0, %v1579
      %v1581 = vpop.f32.mrb[0].mxu0
      %1582 = vmatprep.mubr.f32.mxu0 0.0
      %1583 = vmatmul.mubr.f32.gmra.mrb[0].mxu0 %v1477
      %v1584 = vpop.f32.mrb[0].mxu0
      %v1585 = vadd.f32 0.0, %v1584
      %v1586 = vpop.f32.mrb[0].mxu0
      %1587 = vmatprep.mubr.f32.mxu0 0.0
      %1588 = vmatmul.mubr.f32.gmra.mrb[0].mxu0 %v1479
      %v1589 = vpop.f32.mrb[0].mxu0
      %v1590 = vadd.f32 0.0, %v1589
      %v1591 = vpop.f32.mrb[0].mxu0
      %1592 = vmatprep.mubr.f32.mxu0 0.0
      %1593 = vmatmul.mubr.f32.gmra.mrb[0].mxu0 %v1481
      %v1594 = vpop.f32.mrb[0].mxu0
      %v1595 = vadd.f32 0.0, %v1594
      %v1596 = vpop.f32.mrb[0].mxu0
      %1597 = vmatprep.mubr.f32.mxu0 0.0
      %1598 = vmatmul.mubr.f32.gmra.mrb[0].mxu0 %v1483
      %v1599 = vpop.f32.mrb[0].mxu0
      %v1600 = vadd.f32 0.0, %v1599
      %v1601 = vpop.f32.mrb[0].mxu0
      %1602 = vdwg.mxu0
      %v1603 = vadd.f32 %v1412, %v1555
      %v1604 = vadd.f32 %v1413, %v1560
      %v1605 = vadd.f32 %v1414, %v1565
      %v1606 = vadd.f32 %v1415, %v1570
      %v1607 = vadd.f32 %v1416, %v1575
      %v1608 = vadd.f32 %v1417, %v1580
      %v1609 = vadd.f32 %v1418, %v1585
      %v1610 = vadd.f32 %v1419, %v1590
      %v1611 = vadd.f32 %v1420, %v1595
      %v1612 = vadd.f32 %v1421, %v1600
      %v1613 = vld [vmem:[%s448] sm:$0xff]
      %v1614 = vld [vmem:[%s448 + $0x10] sm:$0xff]
      %v1615 = vld [vmem:[%s448 + $0x20] sm:$0xff]
      %v1616 = vld [vmem:[%s448 + $0x30] sm:$0xff]
      %v1617 = vld [vmem:[%s448 + $0x40] sm:$0xff]
      %v1618 = vld [vmem:[%s448 + $0x50] sm:$0xff]
      %v1619 = vld [vmem:[%s448 + $0x60] sm:$0xff]
      %v1620 = vld [vmem:[%s448 + $0x70] sm:$0xff]
      %v1621 = vld [vmem:[%s448 + $0x80] sm:$0xff]
      %v1622 = vld [vmem:[%s448 + $0x90] sm:$0xff]
      %s1623 = scalar_lea.vmem %s2, 96
      %v1624 = vld [vmem:[%s1623] sm:$0xff]
      %v1625 = vld [vmem:[%s1623 + $0x8] sm:$0x1]
      %1636 = vrot.lane.b32.xlu0 %v1613, 125
      %v1637 = vpop.permute.xlu0 %1636
      %1638 = vrot.lane.b32.xlu0 %v1614, 125
      %v1639 = vpop.permute.xlu0 %1638
      %1640 = vrot.lane.b32.xlu0 %v1615, 125
      %v1641 = vpop.permute.xlu0 %1640
      %1642 = vrot.lane.b32.xlu0 %v1616, 125
      %v1643 = vpop.permute.xlu0 %1642
      %1644 = vrot.lane.b32.xlu0 %v1617, 125
      %v1645 = vpop.permute.xlu0 %1644
      %1646 = vrot.lane.b32.xlu0 %v1618, 125
      %v1647 = vpop.permute.xlu0 %1646
      %1648 = vrot.lane.b32.xlu0 %v1619, 125
      %v1649 = vpop.permute.xlu0 %1648
      %1650 = vrot.lane.b32.xlu0 %v1620, 125
      %v1651 = vpop.permute.xlu0 %1650
      %1652 = vrot.lane.b32.xlu0 %v1621, 125
      %v1653 = vpop.permute.xlu0 %1652
      %1654 = vrot.lane.b32.xlu0 %v1622, 125
      %v1655 = vpop.permute.xlu0 %1654
      %v1656 = vsel %vm507, %v1637, 0
      %v1658 = vsel %vm507, %v1639, 0
      %v1660 = vsel %vm507, %v1641, 0
      %v1662 = vsel %vm507, %v1643, 0
      %v1664 = vsel %vm507, %v1645, 0
      %v1666 = vsel %vm507, %v1647, 0
      %v1668 = vsel %vm507, %v1649, 0
      %v1670 = vsel %vm507, %v1651, 0
      %v1672 = vsel %vm507, %v1653, 0
      %v1674 = vsel %vm507, %v1655, 0
      %v1677 = vsel %vm528, %v1625, 0
      %1679 = vmatprep.subr.mxu0 0.0
      %1680 = vmatpush1.msra.mxu0 %v1624
      %1681 = vmatprep.subr.mxu0 0.0
      %1682 = vmatpush1.msra.mxu0 %v1677
      %1683 = vmatprep.subr.mxu0 0.0
      %1684 = vmatpush1.msra.mxu0 0.0
      %1685 = vmatprep.subr.mxu0 0.0
      %1686 = vmatpush1.msra.mxu0 0.0
      %1687 = vmatprep.subr.mxu0 0.0
      %1688 = vmatpush1.msra.mxu0 0.0
      %1689 = vmatprep.subr.mxu0 0.0
      %1690 = vmatpush1.msra.mxu0 0.0
      %1691 = vmatprep.subr.mxu0 0.0
      %1692 = vmatpush1.msra.mxu0 0.0
      %1693 = vmatprep.subr.mxu0 0.0
      %1694 = vmatpush1.msra.mxu0 0.0
      %1695 = vmatprep.subr.mxu0 0.0
      %1696 = vmatpush1.msra.mxu0 0.0
      %1697 = vmatprep.subr.mxu0 0.0
      %1698 = vmatpush1.msra.mxu0 0.0
      %1699 = vmatprep.subr.mxu0 0.0
      %1700 = vmatpush1.msra.mxu0 0.0
      %1701 = vmatprep.subr.mxu0 0.0
      %1702 = vmatpush1.msra.mxu0 0.0
      %1703 = vmatprep.subr.mxu0 0.0
      %1704 = vmatpush1.msra.mxu0 0.0
      %1705 = vmatprep.subr.mxu0 0.0
      %1706 = vmatpush1.msra.mxu0 0.0
      %1707 = vmatprep.subr.mxu0 0.0
      %1708 = vmatpush1.msra.mxu0 0.0
      %1709 = vmatprep.subr.mxu0 0.0
      %1710 = vmatpush1.msra.mxu0 0.0
      %1711 = vmatprep.subr.mxu0 0.0
      %1712 = vmatpush1.msra.mxu0 0.0
      %1713 = vmatprep.subr.mxu0 0.0
      %1714 = vmatpush1.msra.mxu0 0.0
      %1715 = vmatprep.subr.mxu0 0.0
      %1716 = vmatpush1.msra.mxu0 0.0
      %1717 = vmatprep.subr.mxu0 0.0
      %1718 = vmatpush1.msra.mxu0 0.0
      %1719 = vmatprep.subr.mxu0 0.0
      %1720 = vmatpush1.msra.mxu0 0.0
      %1721 = vmatprep.subr.mxu0 0.0
      %1722 = vmatpush1.msra.mxu0 0.0
      %1723 = vmatprep.subr.mxu0 0.0
      %1724 = vmatpush1.msra.mxu0 0.0
      %1725 = vmatprep.subr.mxu0 0.0
      %1726 = vmatpush1.msra.mxu0 0.0
      %1727 = vmatprep.subr.mxu0 0.0
      %1728 = vmatpush1.msra.mxu0 0.0
      %1729 = vmatprep.subr.mxu0 0.0
      %1730 = vmatpush1.msra.mxu0 0.0
      %1731 = vmatprep.subr.mxu0 0.0
      %1732 = vmatpush1.msra.mxu0 0.0
      %1733 = vmatprep.subr.mxu0 0.0
      %1734 = vmatpush1.msra.mxu0 0.0
      %1735 = vmatprep.subr.mxu0 0.0
      %1736 = vmatpush1.msra.mxu0 0.0
      %1737 = vmatprep.subr.mxu0 0.0
      %1738 = vmatpush1.msra.mxu0 0.0
      %1739 = vmatprep.subr.mxu0 0.0
      %1740 = vmatpush1.msra.mxu0 0.0
      %1741 = vmatprep.subr.mxu0 0.0
      %1742 = vmatpush1.msra.mxu0 0.0
      %1743 = vmatprep.mubr.f32.mxu0 0.0
      %1744 = vmatmul.mubr.f32.gmra.mrb[0].mxu0 %v1656
      %v1745 = vpop.f32.mrb[0].mxu0
      %v1746 = vadd.f32 0.0, %v1745
      %v1747 = vpop.f32.mrb[0].mxu0
      %1748 = vmatprep.mubr.f32.mxu0 0.0
      %1749 = vmatmul.mubr.f32.gmra.mrb[0].mxu0 %v1658
      %v1750 = vpop.f32.mrb[0].mxu0
      %v1751 = vadd.f32 0.0, %v1750
      %v1752 = vpop.f32.mrb[0].mxu0
      %1753 = vmatprep.mubr.f32.mxu0 0.0
      %1754 = vmatmul.mubr.f32.gmra.mrb[0].mxu0 %v1660
      %v1755 = vpop.f32.mrb[0].mxu0
      %v1756 = vadd.f32 0.0, %v1755
      %v1757 = vpop.f32.mrb[0].mxu0
      %1758 = vmatprep.mubr.f32.mxu0 0.0
      %1759 = vmatmul.mubr.f32.gmra.mrb[0].mxu0 %v1662
      %v1760 = vpop.f32.mrb[0].mxu0
      %v1761 = vadd.f32 0.0, %v1760
      %v1762 = vpop.f32.mrb[0].mxu0
      %1763 = vmatprep.mubr.f32.mxu0 0.0
      %1764 = vmatmul.mubr.f32.gmra.mrb[0].mxu0 %v1664
      %v1765 = vpop.f32.mrb[0].mxu0
      %v1766 = vadd.f32 0.0, %v1765
      %v1767 = vpop.f32.mrb[0].mxu0
      %1768 = vmatprep.mubr.f32.mxu0 0.0
      %1769 = vmatmul.mubr.f32.gmra.mrb[0].mxu0 %v1666
      %v1770 = vpop.f32.mrb[0].mxu0
      %v1771 = vadd.f32 0.0, %v1770
      %v1772 = vpop.f32.mrb[0].mxu0
      %1773 = vmatprep.mubr.f32.mxu0 0.0
      %1774 = vmatmul.mubr.f32.gmra.mrb[0].mxu0 %v1668
      %v1775 = vpop.f32.mrb[0].mxu0
      %v1776 = vadd.f32 0.0, %v1775
      %v1777 = vpop.f32.mrb[0].mxu0
      %1778 = vmatprep.mubr.f32.mxu0 0.0
      %1779 = vmatmul.mubr.f32.gmra.mrb[0].mxu0 %v1670
      %v1780 = vpop.f32.mrb[0].mxu0
      %v1781 = vadd.f32 0.0, %v1780
      %v1782 = vpop.f32.mrb[0].mxu0
      %1783 = vmatprep.mubr.f32.mxu0 0.0
      %1784 = vmatmul.mubr.f32.gmra.mrb[0].mxu0 %v1672
      %v1785 = vpop.f32.mrb[0].mxu0
      %v1786 = vadd.f32 0.0, %v1785
      %v1787 = vpop.f32.mrb[0].mxu0
      %1788 = vmatprep.mubr.f32.mxu0 0.0
      %1789 = vmatmul.mubr.f32.gmra.mrb[0].mxu0 %v1674
      %v1790 = vpop.f32.mrb[0].mxu0
      %v1791 = vadd.f32 0.0, %v1790
      %v1792 = vpop.f32.mrb[0].mxu0
      %1793 = vdwg.mxu0
      %v1794 = vadd.f32 %v1603, %v1746
      %v1795 = vadd.f32 %v1604, %v1751
      %v1796 = vadd.f32 %v1605, %v1756
      %v1797 = vadd.f32 %v1606, %v1761
      %v1798 = vadd.f32 %v1607, %v1766
      %v1799 = vadd.f32 %v1608, %v1771
      %v1800 = vadd.f32 %v1609, %v1776
      %v1801 = vadd.f32 %v1610, %v1781
      %v1802 = vadd.f32 %v1611, %v1786
      %v1803 = vadd.f32 %v1612, %v1791
      %v1804 = vld [vmem:[%s448 + $0x1] sm:$0xff]
      %v1805 = vld [vmem:[%s448 + $0x11] sm:$0xff]
      %v1806 = vld [vmem:[%s448 + $0x21] sm:$0xff]
      %v1807 = vld [vmem:[%s448 + $0x31] sm:$0xff]
      %v1808 = vld [vmem:[%s448 + $0x41] sm:$0xff]
      %v1809 = vld [vmem:[%s448 + $0x51] sm:$0xff]
      %v1810 = vld [vmem:[%s448 + $0x61] sm:$0xff]
      %v1811 = vld [vmem:[%s448 + $0x71] sm:$0xff]
      %v1812 = vld [vmem:[%s448 + $0x81] sm:$0xff]
      %v1813 = vld [vmem:[%s448 + $0x91] sm:$0xff]
      %s1814 = scalar_lea.vmem %s2, 112
      %v1815 = vld [vmem:[%s1814] sm:$0xff]
      %v1816 = vld [vmem:[%s1814 + $0x8] sm:$0x1]
      %1827 = vrot.lane.b32.xlu0 %v1804, 125
      %v1828 = vpop.permute.xlu0 %1827
      %1829 = vrot.lane.b32.xlu0 %v1805, 125
      %v1830 = vpop.permute.xlu0 %1829
      %1831 = vrot.lane.b32.xlu0 %v1806, 125
      %v1832 = vpop.permute.xlu0 %1831
      %1833 = vrot.lane.b32.xlu0 %v1807, 125
      %v1834 = vpop.permute.xlu0 %1833
      %1835 = vrot.lane.b32.xlu0 %v1808, 125
      %v1836 = vpop.permute.xlu0 %1835
      %1837 = vrot.lane.b32.xlu0 %v1809, 125
      %v1838 = vpop.permute.xlu0 %1837
      %1839 = vrot.lane.b32.xlu0 %v1810, 125
      %v1840 = vpop.permute.xlu0 %1839
      %1841 = vrot.lane.b32.xlu0 %v1811, 125
      %v1842 = vpop.permute.xlu0 %1841
      %1843 = vrot.lane.b32.xlu0 %v1812, 125
      %v1844 = vpop.permute.xlu0 %1843
      %1845 = vrot.lane.b32.xlu0 %v1813, 125
      %v1846 = vpop.permute.xlu0 %1845
      %v1847 = vsel %vm507, %v1828, 0
      %v1849 = vsel %vm507, %v1830, 0
      %v1851 = vsel %vm507, %v1832, 0
      %v1853 = vsel %vm507, %v1834, 0
      %v1855 = vsel %vm507, %v1836, 0
      %v1857 = vsel %vm507, %v1838, 0
      %v1859 = vsel %vm507, %v1840, 0
      %v1861 = vsel %vm507, %v1842, 0
      %v1863 = vsel %vm507, %v1844, 0
      %v1865 = vsel %vm507, %v1846, 0
      %v1868 = vsel %vm528, %v1816, 0
      %1870 = vmatprep.subr.mxu0 0.0
      %1871 = vmatpush1.msra.mxu0 %v1815
      %1872 = vmatprep.subr.mxu0 0.0
      %1873 = vmatpush1.msra.mxu0 %v1868
      %1874 = vmatprep.subr.mxu0 0.0
      %1875 = vmatpush1.msra.mxu0 0.0
      %1876 = vmatprep.subr.mxu0 0.0
      %1877 = vmatpush1.msra.mxu0 0.0
      %1878 = vmatprep.subr.mxu0 0.0
      %1879 = vmatpush1.msra.mxu0 0.0
      %1880 = vmatprep.subr.mxu0 0.0
      %1881 = vmatpush1.msra.mxu0 0.0
      %1882 = vmatprep.subr.mxu0 0.0
      %1883 = vmatpush1.msra.mxu0 0.0
      %1884 = vmatprep.subr.mxu0 0.0
      %1885 = vmatpush1.msra.mxu0 0.0
      %1886 = vmatprep.subr.mxu0 0.0
      %1887 = vmatpush1.msra.mxu0 0.0
      %1888 = vmatprep.subr.mxu0 0.0
      %1889 = vmatpush1.msra.mxu0 0.0
      %1890 = vmatprep.subr.mxu0 0.0
      %1891 = vmatpush1.msra.mxu0 0.0
      %1892 = vmatprep.subr.mxu0 0.0
      %1893 = vmatpush1.msra.mxu0 0.0
      %1894 = vmatprep.subr.mxu0 0.0
      %1895 = vmatpush1.msra.mxu0 0.0
      %1896 = vmatprep.subr.mxu0 0.0
      %1897 = vmatpush1.msra.mxu0 0.0
      %1898 = vmatprep.subr.mxu0 0.0
      %1899 = vmatpush1.msra.mxu0 0.0
      %1900 = vmatprep.subr.mxu0 0.0
      %1901 = vmatpush1.msra.mxu0 0.0
      %1902 = vmatprep.subr.mxu0 0.0
      %1903 = vmatpush1.msra.mxu0 0.0
      %1904 = vmatprep.subr.mxu0 0.0
      %1905 = vmatpush1.msra.mxu0 0.0
      %1906 = vmatprep.subr.mxu0 0.0
      %1907 = vmatpush1.msra.mxu0 0.0
      %1908 = vmatprep.subr.mxu0 0.0
      %1909 = vmatpush1.msra.mxu0 0.0
      %1910 = vmatprep.subr.mxu0 0.0
      %1911 = vmatpush1.msra.mxu0 0.0
      %1912 = vmatprep.subr.mxu0 0.0
      %1913 = vmatpush1.msra.mxu0 0.0
      %1914 = vmatprep.subr.mxu0 0.0
      %1915 = vmatpush1.msra.mxu0 0.0
      %1916 = vmatprep.subr.mxu0 0.0
      %1917 = vmatpush1.msra.mxu0 0.0
      %1918 = vmatprep.subr.mxu0 0.0
      %1919 = vmatpush1.msra.mxu0 0.0
      %1920 = vmatprep.subr.mxu0 0.0
      %1921 = vmatpush1.msra.mxu0 0.0
      %1922 = vmatprep.subr.mxu0 0.0
      %1923 = vmatpush1.msra.mxu0 0.0
      %1924 = vmatprep.subr.mxu0 0.0
      %1925 = vmatpush1.msra.mxu0 0.0
      %1926 = vmatprep.subr.mxu0 0.0
      %1927 = vmatpush1.msra.mxu0 0.0
      %1928 = vmatprep.subr.mxu0 0.0
      %1929 = vmatpush1.msra.mxu0 0.0
      %1930 = vmatprep.subr.mxu0 0.0
      %1931 = vmatpush1.msra.mxu0 0.0
      %1932 = vmatprep.subr.mxu0 0.0
      %1933 = vmatpush1.msra.mxu0 0.0
      %1934 = vmatprep.mubr.f32.mxu0 0.0
      %1935 = vmatmul.mubr.f32.gmra.mrb[0].mxu0 %v1847
      %v1936 = vpop.f32.mrb[0].mxu0
      %v1937 = vadd.f32 0.0, %v1936
      %v1938 = vpop.f32.mrb[0].mxu0
      %1939 = vmatprep.mubr.f32.mxu0 0.0
      %1940 = vmatmul.mubr.f32.gmra.mrb[0].mxu0 %v1849
      %v1941 = vpop.f32.mrb[0].mxu0
      %v1942 = vadd.f32 0.0, %v1941
      %v1943 = vpop.f32.mrb[0].mxu0
      %1944 = vmatprep.mubr.f32.mxu0 0.0
      %1945 = vmatmul.mubr.f32.gmra.mrb[0].mxu0 %v1851
      %v1946 = vpop.f32.mrb[0].mxu0
      %v1947 = vadd.f32 0.0, %v1946
      %v1948 = vpop.f32.mrb[0].mxu0
      %1949 = vmatprep.mubr.f32.mxu0 0.0
      %1950 = vmatmul.mubr.f32.gmra.mrb[0].mxu0 %v1853
      %v1951 = vpop.f32.mrb[0].mxu0
      %v1952 = vadd.f32 0.0, %v1951
      %v1953 = vpop.f32.mrb[0].mxu0
      %1954 = vmatprep.mubr.f32.mxu0 0.0
      %1955 = vmatmul.mubr.f32.gmra.mrb[0].mxu0 %v1855
      %v1956 = vpop.f32.mrb[0].mxu0
      %v1957 = vadd.f32 0.0, %v1956
      %v1958 = vpop.f32.mrb[0].mxu0
      %1959 = vmatprep.mubr.f32.mxu0 0.0
      %1960 = vmatmul.mubr.f32.gmra.mrb[0].mxu0 %v1857
      %v1961 = vpop.f32.mrb[0].mxu0
      %v1962 = vadd.f32 0.0, %v1961
      %v1963 = vpop.f32.mrb[0].mxu0
      %1964 = vmatprep.mubr.f32.mxu0 0.0
      %1965 = vmatmul.mubr.f32.gmra.mrb[0].mxu0 %v1859
      %v1966 = vpop.f32.mrb[0].mxu0
      %v1967 = vadd.f32 0.0, %v1966
      %v1968 = vpop.f32.mrb[0].mxu0
      %1969 = vmatprep.mubr.f32.mxu0 0.0
      %1970 = vmatmul.mubr.f32.gmra.mrb[0].mxu0 %v1861
      %v1971 = vpop.f32.mrb[0].mxu0
      %v1972 = vadd.f32 0.0, %v1971
      %v1973 = vpop.f32.mrb[0].mxu0
      %1974 = vmatprep.mubr.f32.mxu0 0.0
      %1975 = vmatmul.mubr.f32.gmra.mrb[0].mxu0 %v1863
      %v1976 = vpop.f32.mrb[0].mxu0
      %v1977 = vadd.f32 0.0, %v1976
      %v1978 = vpop.f32.mrb[0].mxu0
      %1979 = vmatprep.mubr.f32.mxu0 0.0
      %1980 = vmatmul.mubr.f32.gmra.mrb[0].mxu0 %v1865
      %v1981 = vpop.f32.mrb[0].mxu0
      %v1982 = vadd.f32 0.0, %v1981
      %v1983 = vpop.f32.mrb[0].mxu0
      %1984 = vdwg.mxu0
      %v1985 = vadd.f32 %v1794, %v1937
      %v1986 = vadd.f32 %v1795, %v1942
      %v1987 = vadd.f32 %v1796, %v1947
      %v1988 = vadd.f32 %v1797, %v1952
      %v1989 = vadd.f32 %v1798, %v1957
      %v1990 = vadd.f32 %v1799, %v1962
      %v1991 = vadd.f32 %v1800, %v1967
      %v1992 = vadd.f32 %v1801, %v1972
      %v1993 = vadd.f32 %v1802, %v1977
      %v1994 = vadd.f32 %v1803, %v1982
      %v1995 = vld [vmem:[%s448 + $0x2] sm:$0xff]
      %v1996 = vld [vmem:[%s448 + $0x12] sm:$0xff]
      %v1997 = vld [vmem:[%s448 + $0x22] sm:$0xff]
      %v1998 = vld [vmem:[%s448 + $0x32] sm:$0xff]
      %v1999 = vld [vmem:[%s448 + $0x42] sm:$0xff]
      %v2000 = vld [vmem:[%s448 + $0x52] sm:$0xff]
      %v2001 = vld [vmem:[%s448 + $0x62] sm:$0xff]
      %v2002 = vld [vmem:[%s448 + $0x72] sm:$0xff]
      %v2003 = vld [vmem:[%s448 + $0x82] sm:$0xff]
      %v2004 = vld [vmem:[%s448 + $0x92] sm:$0xff]
      %s2005 = scalar_lea.vmem %s2, 128
      %v2006 = vld [vmem:[%s2005] sm:$0xff]
      %v2007 = vld [vmem:[%s2005 + $0x8] sm:$0x1]
      %2018 = vrot.lane.b32.xlu0 %v1995, 125
      %v2019 = vpop.permute.xlu0 %2018
      %2020 = vrot.lane.b32.xlu0 %v1996, 125
      %v2021 = vpop.permute.xlu0 %2020
      %2022 = vrot.lane.b32.xlu0 %v1997, 125
      %v2023 = vpop.permute.xlu0 %2022
      %2024 = vrot.lane.b32.xlu0 %v1998, 125
      %v2025 = vpop.permute.xlu0 %2024
      %2026 = vrot.lane.b32.xlu0 %v1999, 125
      %v2027 = vpop.permute.xlu0 %2026
      %2028 = vrot.lane.b32.xlu0 %v2000, 125
      %v2029 = vpop.permute.xlu0 %2028
      %2030 = vrot.lane.b32.xlu0 %v2001, 125
      %v2031 = vpop.permute.xlu0 %2030
      %2032 = vrot.lane.b32.xlu0 %v2002, 125
      %v2033 = vpop.permute.xlu0 %2032
      %2034 = vrot.lane.b32.xlu0 %v2003, 125
      %v2035 = vpop.permute.xlu0 %2034
      %2036 = vrot.lane.b32.xlu0 %v2004, 125
      %v2037 = vpop.permute.xlu0 %2036
      %v2038 = vsel %vm507, %v2019, 0
      %v2040 = vsel %vm507, %v2021, 0
      %v2042 = vsel %vm507, %v2023, 0
      %v2044 = vsel %vm507, %v2025, 0
      %v2046 = vsel %vm507, %v2027, 0
      %v2048 = vsel %vm507, %v2029, 0
      %v2050 = vsel %vm507, %v2031, 0
      %v2052 = vsel %vm507, %v2033, 0
      %v2054 = vsel %vm507, %v2035, 0
      %v2056 = vsel %vm507, %v2037, 0
      %v2059 = vsel %vm528, %v2007, 0
      %2061 = vmatprep.subr.mxu0 0.0
      %2062 = vmatpush1.msra.mxu0 %v2006
      %2063 = vmatprep.subr.mxu0 0.0
      %2064 = vmatpush1.msra.mxu0 %v2059
      %2065 = vmatprep.subr.mxu0 0.0
      %2066 = vmatpush1.msra.mxu0 0.0
      %2067 = vmatprep.subr.mxu0 0.0
      %2068 = vmatpush1.msra.mxu0 0.0
      %2069 = vmatprep.subr.mxu0 0.0
      %2070 = vmatpush1.msra.mxu0 0.0
      %2071 = vmatprep.subr.mxu0 0.0
      %2072 = vmatpush1.msra.mxu0 0.0
      %2073 = vmatprep.subr.mxu0 0.0
      %2074 = vmatpush1.msra.mxu0 0.0
      %2075 = vmatprep.subr.mxu0 0.0
      %2076 = vmatpush1.msra.mxu0 0.0
      %2077 = vmatprep.subr.mxu0 0.0
      %2078 = vmatpush1.msra.mxu0 0.0
      %2079 = vmatprep.subr.mxu0 0.0
      %2080 = vmatpush1.msra.mxu0 0.0
      %2081 = vmatprep.subr.mxu0 0.0
      %2082 = vmatpush1.msra.mxu0 0.0
      %2083 = vmatprep.subr.mxu0 0.0
      %2084 = vmatpush1.msra.mxu0 0.0
      %2085 = vmatprep.subr.mxu0 0.0
      %2086 = vmatpush1.msra.mxu0 0.0
      %2087 = vmatprep.subr.mxu0 0.0
      %2088 = vmatpush1.msra.mxu0 0.0
      %2089 = vmatprep.subr.mxu0 0.0
      %2090 = vmatpush1.msra.mxu0 0.0
      %2091 = vmatprep.subr.mxu0 0.0
      %2092 = vmatpush1.msra.mxu0 0.0
      %2093 = vmatprep.subr.mxu0 0.0
      %2094 = vmatpush1.msra.mxu0 0.0
      %2095 = vmatprep.subr.mxu0 0.0
      %2096 = vmatpush1.msra.mxu0 0.0
      %2097 = vmatprep.subr.mxu0 0.0
      %2098 = vmatpush1.msra.mxu0 0.0
      %2099 = vmatprep.subr.mxu0 0.0
      %2100 = vmatpush1.msra.mxu0 0.0
      %2101 = vmatprep.subr.mxu0 0.0
      %2102 = vmatpush1.msra.mxu0 0.0
      %2103 = vmatprep.subr.mxu0 0.0
      %2104 = vmatpush1.msra.mxu0 0.0
      %2105 = vmatprep.subr.mxu0 0.0
      %2106 = vmatpush1.msra.mxu0 0.0
      %2107 = vmatprep.subr.mxu0 0.0
      %2108 = vmatpush1.msra.mxu0 0.0
      %2109 = vmatprep.subr.mxu0 0.0
      %2110 = vmatpush1.msra.mxu0 0.0
      %2111 = vmatprep.subr.mxu0 0.0
      %2112 = vmatpush1.msra.mxu0 0.0
      %2113 = vmatprep.subr.mxu0 0.0
      %2114 = vmatpush1.msra.mxu0 0.0
      %2115 = vmatprep.subr.mxu0 0.0
      %2116 = vmatpush1.msra.mxu0 0.0
      %2117 = vmatprep.subr.mxu0 0.0
      %2118 = vmatpush1.msra.mxu0 0.0
      %2119 = vmatprep.subr.mxu0 0.0
      %2120 = vmatpush1.msra.mxu0 0.0
      %2121 = vmatprep.subr.mxu0 0.0
      %2122 = vmatpush1.msra.mxu0 0.0
      %2123 = vmatprep.subr.mxu0 0.0
      %2124 = vmatpush1.msra.mxu0 0.0
      %2125 = vmatprep.mubr.f32.mxu0 0.0
      %2126 = vmatmul.mubr.f32.gmra.mrb[0].mxu0 %v2038
      %v2127 = vpop.f32.mrb[0].mxu0
      %v2128 = vadd.f32 0.0, %v2127
      %v2129 = vpop.f32.mrb[0].mxu0
      %2130 = vmatprep.mubr.f32.mxu0 0.0
      %2131 = vmatmul.mubr.f32.gmra.mrb[0].mxu0 %v2040
      %v2132 = vpop.f32.mrb[0].mxu0
      %v2133 = vadd.f32 0.0, %v2132
      %v2134 = vpop.f32.mrb[0].mxu0
      %2135 = vmatprep.mubr.f32.mxu0 0.0
      %2136 = vmatmul.mubr.f32.gmra.mrb[0].mxu0 %v2042
      %v2137 = vpop.f32.mrb[0].mxu0
      %v2138 = vadd.f32 0.0, %v2137
      %v2139 = vpop.f32.mrb[0].mxu0
      %2140 = vmatprep.mubr.f32.mxu0 0.0
      %2141 = vmatmul.mubr.f32.gmra.mrb[0].mxu0 %v2044
      %v2142 = vpop.f32.mrb[0].mxu0
      %v2143 = vadd.f32 0.0, %v2142
      %v2144 = vpop.f32.mrb[0].mxu0
      %2145 = vmatprep.mubr.f32.mxu0 0.0
      %2146 = vmatmul.mubr.f32.gmra.mrb[0].mxu0 %v2046
      %v2147 = vpop.f32.mrb[0].mxu0
      %v2148 = vadd.f32 0.0, %v2147
      %v2149 = vpop.f32.mrb[0].mxu0
      %2150 = vmatprep.mubr.f32.mxu0 0.0
      %2151 = vmatmul.mubr.f32.gmra.mrb[0].mxu0 %v2048
      %v2152 = vpop.f32.mrb[0].mxu0
      %v2153 = vadd.f32 0.0, %v2152
      %v2154 = vpop.f32.mrb[0].mxu0
      %2155 = vmatprep.mubr.f32.mxu0 0.0
      %2156 = vmatmul.mubr.f32.gmra.mrb[0].mxu0 %v2050
      %v2157 = vpop.f32.mrb[0].mxu0
      %v2158 = vadd.f32 0.0, %v2157
      %v2159 = vpop.f32.mrb[0].mxu0
      %2160 = vmatprep.mubr.f32.mxu0 0.0
      %2161 = vmatmul.mubr.f32.gmra.mrb[0].mxu0 %v2052
      %v2162 = vpop.f32.mrb[0].mxu0
      %v2163 = vadd.f32 0.0, %v2162
      %v2164 = vpop.f32.mrb[0].mxu0
      %2165 = vmatprep.mubr.f32.mxu0 0.0
      %2166 = vmatmul.mubr.f32.gmra.mrb[0].mxu0 %v2054
      %v2167 = vpop.f32.mrb[0].mxu0
      %v2168 = vadd.f32 0.0, %v2167
      %v2169 = vpop.f32.mrb[0].mxu0
      %2170 = vmatprep.mubr.f32.mxu0 0.0
      %2171 = vmatmul.mubr.f32.gmra.mrb[0].mxu0 %v2056
      %v2172 = vpop.f32.mrb[0].mxu0
      %v2173 = vadd.f32 0.0, %v2172
      %v2174 = vpop.f32.mrb[0].mxu0
      %2175 = vdwg.mxu0
      %v2176 = vadd.f32 %v1985, %v2128
      %v2177 = vadd.f32 %v1986, %v2133
      %v2178 = vadd.f32 %v1987, %v2138
      %v2179 = vadd.f32 %v1988, %v2143
      %v2180 = vadd.f32 %v1989, %v2148
      %v2181 = vadd.f32 %v1990, %v2153
      %v2182 = vadd.f32 %v1991, %v2158
      %v2183 = vadd.f32 %v1992, %v2163
      %v2184 = vadd.f32 %v1993, %v2168
      %v2185 = vadd.f32 %v1994, %v2173
      %v2186 = vadd.f32 %v1231, %v2176
      %v2187 = vadd.f32 %v1232, %v2177
      %v2188 = vadd.f32 %v1233, %v2178
      %v2189 = vadd.f32 %v1234, %v2179
      %v2190 = vadd.f32 %v1235, %v2180
      %v2191 = vadd.f32 %v1236, %v2181
      %v2192 = vadd.f32 %v1237, %v2182
      %v2193 = vadd.f32 %v1238, %v2183
      %v2194 = vadd.f32 %v1239, %v2184
      %v2195 = vadd.f32 %v1240, %v2185
      %v2196 = vsel 0, %v2186, 0.0
      %v2197 = vsel 1, %v2187, 0.0
      %v2198 = vsel 1, %v2188, 0.0
      %v2199 = vsel 1, %v2189, 0.0
      %v2200 = vsel 1, %v2190, 0.0
      %v2201 = vsel 1, %v2191, 0.0
      %v2202 = vsel 1, %v2192, 0.0
      %v2203 = vsel 1, %v2193, 0.0
      %v2204 = vsel 1, %v2194, 0.0
      %v2205 = vsel 0, %v2195, 0.0
      %vm2206 = vcmask 23552
      %2207 = vst.msk [vmem:[#allocation3 + $0x1] sm:$0xff] %vm2206, %v2196
      %2208 = vst.msk [vmem:[#allocation3 + $0x11] sm:$0xff] %vm2206, %v2197
      %2209 = vst.msk [vmem:[#allocation3 + $0x21] sm:$0xff] %vm2206, %v2198
      %2210 = vst.msk [vmem:[#allocation3 + $0x31] sm:$0xff] %vm2206, %v2199
      %2211 = vst.msk [vmem:[#allocation3 + $0x41] sm:$0xff] %vm2206, %v2200
      %2212 = vst.msk [vmem:[#allocation3 + $0x51] sm:$0xff] %vm2206, %v2201
      %2213 = vst.msk [vmem:[#allocation3 + $0x61] sm:$0xff] %vm2206, %v2202
      %2214 = vst.msk [vmem:[#allocation3 + $0x71] sm:$0xff] %vm2206, %v2203
      %2215 = vst.msk [vmem:[#allocation3 + $0x81] sm:$0xff] %vm2206, %v2204
      %2216 = vst.msk [vmem:[#allocation3 + $0x91] sm:$0xff] %vm2206, %v2205
      %v2217 = vld [vmem:[%s5] sm:$0x1]
      %v2219 = vlaneseq
      %v2220 = vshrl.u32 %v2219, 7
      %v2221 = vsub.s32 0, %v2220
      %v2222 = vrot.slane %v2217, %v2221
      %v2224 = vadd.f32 %v2222, 0.0
      %v2225 = vld [vmem:[#allocation3] sm:$0xff]
      %v2226 = vld [vmem:[#allocation3 + $0x10] sm:$0xff]
      %v2227 = vld [vmem:[#allocation3 + $0x20] sm:$0xff]
      %v2228 = vld [vmem:[#allocation3 + $0x30] sm:$0xff]
      %v2229 = vld [vmem:[#allocation3 + $0x40] sm:$0xff]
      %v2230 = vld [vmem:[#allocation3 + $0x50] sm:$0xff]
      %v2231 = vld [vmem:[#allocation3 + $0x60] sm:$0xff]
      %v2232 = vld [vmem:[#allocation3 + $0x70] sm:$0xff]
      %v2233 = vld [vmem:[%s4] sm:$0x7]
      %v2235 = vsel %vm2206, %v2225, 0
      %v2238 = vsel %vm2206, %v2226, 0
      %v2241 = vsel %vm2206, %v2227, 0
      %v2244 = vsel %vm2206, %v2228, 0
      %v2247 = vsel %vm2206, %v2229, 0
      %v2250 = vsel %vm2206, %v2230, 0
      %v2253 = vsel %vm2206, %v2231, 0
      %v2256 = vsel %vm2206, %v2232, 0
      %vm2258 = vcmask 1042432
      %v2260 = vsel %vm2258, %v2233, 0
      %2262 = vmatprep.subr.mxu0 0.0
      %2263 = vmatpush1.msra.mxu0 %v2260
      %2264 = vmatprep.subr.mxu0 0.0
      %2265 = vmatpush1.msra.mxu0 0.0
      %2266 = vmatprep.subr.mxu0 0.0
      %2267 = vmatpush1.msra.mxu0 0.0
      %2268 = vmatprep.subr.mxu0 0.0
      %2269 = vmatpush1.msra.mxu0 0.0
      %2270 = vmatprep.subr.mxu0 0.0
      %2271 = vmatpush1.msra.mxu0 0.0
      %2272 = vmatprep.subr.mxu0 0.0
      %2273 = vmatpush1.msra.mxu0 0.0
      %2274 = vmatprep.subr.mxu0 0.0
      %2275 = vmatpush1.msra.mxu0 0.0
      %2276 = vmatprep.subr.mxu0 0.0
      %2277 = vmatpush1.msra.mxu0 0.0
      %2278 = vmatprep.subr.mxu0 0.0
      %2279 = vmatpush1.msra.mxu0 0.0
      %2280 = vmatprep.subr.mxu0 0.0
      %2281 = vmatpush1.msra.mxu0 0.0
      %2282 = vmatprep.subr.mxu0 0.0
      %2283 = vmatpush1.msra.mxu0 0.0
      %2284 = vmatprep.subr.mxu0 0.0
      %2285 = vmatpush1.msra.mxu0 0.0
      %2286 = vmatprep.subr.mxu0 0.0
      %2287 = vmatpush1.msra.mxu0 0.0
      %2288 = vmatprep.subr.mxu0 0.0
      %2289 = vmatpush1.msra.mxu0 0.0
      %2290 = vmatprep.subr.mxu0 0.0
      %2291 = vmatpush1.msra.mxu0 0.0
      %2292 = vmatprep.subr.mxu0 0.0
      %2293 = vmatpush1.msra.mxu0 0.0
      %2294 = vmatprep.subr.mxu0 0.0
      %2295 = vmatpush1.msra.mxu0 0.0
      %2296 = vmatprep.subr.mxu0 0.0
      %2297 = vmatpush1.msra.mxu0 0.0
      %2298 = vmatprep.subr.mxu0 0.0
      %2299 = vmatpush1.msra.mxu0 0.0
      %2300 = vmatprep.subr.mxu0 0.0
      %2301 = vmatpush1.msra.mxu0 0.0
      %2302 = vmatprep.subr.mxu0 0.0
      %2303 = vmatpush1.msra.mxu0 0.0
      %2304 = vmatprep.subr.mxu0 0.0
      %2305 = vmatpush1.msra.mxu0 0.0
      %2306 = vmatprep.subr.mxu0 0.0
      %2307 = vmatpush1.msra.mxu0 0.0
      %2308 = vmatprep.subr.mxu0 0.0
      %2309 = vmatpush1.msra.mxu0 0.0
      %2310 = vmatprep.subr.mxu0 0.0
      %2311 = vmatpush1.msra.mxu0 0.0
      %2312 = vmatprep.subr.mxu0 0.0
      %2313 = vmatpush1.msra.mxu0 0.0
      %2314 = vmatprep.subr.mxu0 0.0
      %2315 = vmatpush1.msra.mxu0 0.0
      %2316 = vmatprep.subr.mxu0 0.0
      %2317 = vmatpush1.msra.mxu0 0.0
      %2318 = vmatprep.subr.mxu0 0.0
      %2319 = vmatpush1.msra.mxu0 0.0
      %2320 = vmatprep.subr.mxu0 0.0
      %2321 = vmatpush1.msra.mxu0 0.0
      %2322 = vmatprep.subr.mxu0 0.0
      %2323 = vmatpush1.msra.mxu0 0.0
      %2324 = vmatprep.subr.mxu0 0.0
      %2325 = vmatpush1.msra.mxu0 0.0
      %2326 = vmatprep.mubr.f32.mxu0 0.0
      %2327 = vmatmul.mubr.f32.gmra.mrb[0].mxu0 %v2235
      %v2328 = vpop.f32.mrb[0].mxu0
      %v2329 = vadd.f32 0.0, %v2328
      %v2330 = vpop.f32.mrb[0].mxu0
      %2331 = vmatprep.mubr.f32.mxu0 0.0
      %2332 = vmatmul.mubr.f32.gmra.mrb[0].mxu0 %v2238
      %v2333 = vpop.f32.mrb[0].mxu0
      %v2334 = vadd.f32 0.0, %v2333
      %v2335 = vpop.f32.mrb[0].mxu0
      %2336 = vmatprep.mubr.f32.mxu0 0.0
      %2337 = vmatmul.mubr.f32.gmra.mrb[0].mxu0 %v2241
      %v2338 = vpop.f32.mrb[0].mxu0
      %v2339 = vadd.f32 0.0, %v2338
      %v2340 = vpop.f32.mrb[0].mxu0
      %2341 = vmatprep.mubr.f32.mxu0 0.0
      %2342 = vmatmul.mubr.f32.gmra.mrb[0].mxu0 %v2244
      %v2343 = vpop.f32.mrb[0].mxu0
      %v2344 = vadd.f32 0.0, %v2343
      %v2345 = vpop.f32.mrb[0].mxu0
      %2346 = vmatprep.mubr.f32.mxu0 0.0
      %2347 = vmatmul.mubr.f32.gmra.mrb[0].mxu0 %v2247
      %v2348 = vpop.f32.mrb[0].mxu0
      %v2349 = vadd.f32 0.0, %v2348
      %v2350 = vpop.f32.mrb[0].mxu0
      %2351 = vmatprep.mubr.f32.mxu0 0.0
      %2352 = vmatmul.mubr.f32.gmra.mrb[0].mxu0 %v2250
      %v2353 = vpop.f32.mrb[0].mxu0
      %v2354 = vadd.f32 0.0, %v2353
      %v2355 = vpop.f32.mrb[0].mxu0
      %2356 = vmatprep.mubr.f32.mxu0 0.0
      %2357 = vmatmul.mubr.f32.gmra.mrb[0].mxu0 %v2253
      %v2358 = vpop.f32.mrb[0].mxu0
      %v2359 = vadd.f32 0.0, %v2358
      %v2360 = vpop.f32.mrb[0].mxu0
      %2361 = vmatprep.mubr.f32.mxu0 0.0
      %2362 = vmatmul.mubr.f32.gmra.mrb[0].mxu0 %v2256
      %v2363 = vpop.f32.mrb[0].mxu0
      %v2364 = vadd.f32 0.0, %v2363
      %v2365 = vpop.f32.mrb[0].mxu0
      %2366 = vdwg.mxu0
      %v2367 = vadd.f32 %v2224, %v2329
      %v2368 = vadd.f32 %v2224, %v2334
      %v2369 = vadd.f32 %v2224, %v2339
      %v2370 = vadd.f32 %v2224, %v2344
      %v2371 = vadd.f32 %v2224, %v2349
      %v2372 = vadd.f32 %v2224, %v2354
      %v2373 = vadd.f32 %v2224, %v2359
      %v2374 = vadd.f32 %v2224, %v2364
      %v2375 = vld [vmem:[#allocation3 + $0x1] sm:$0xff]
      %v2376 = vld [vmem:[#allocation3 + $0x11] sm:$0xff]
      %v2377 = vld [vmem:[#allocation3 + $0x21] sm:$0xff]
      %v2378 = vld [vmem:[#allocation3 + $0x31] sm:$0xff]
      %v2379 = vld [vmem:[#allocation3 + $0x41] sm:$0xff]
      %v2380 = vld [vmem:[#allocation3 + $0x51] sm:$0xff]
      %v2381 = vld [vmem:[#allocation3 + $0x61] sm:$0xff]
      %v2382 = vld [vmem:[#allocation3 + $0x71] sm:$0xff]
      %s2383 = scalar_lea.vmem %s4, 4
      %v2384 = vld [vmem:[%s2383] sm:$0x7]
      %v2386 = vsel %vm2206, %v2375, 0
      %v2389 = vsel %vm2206, %v2376, 0
      %v2392 = vsel %vm2206, %v2377, 0
      %v2395 = vsel %vm2206, %v2378, 0
      %v2398 = vsel %vm2206, %v2379, 0
      %v2401 = vsel %vm2206, %v2380, 0
      %v2404 = vsel %vm2206, %v2381, 0
      %v2407 = vsel %vm2206, %v2382, 0
      %v2410 = vsel %vm2258, %v2384, 0
      %2412 = vmatprep.subr.mxu0 0.0
      %2413 = vmatpush1.msra.mxu0 %v2410
      %2414 = vmatprep.subr.mxu0 0.0
      %2415 = vmatpush1.msra.mxu0 0.0
      %2416 = vmatprep.subr.mxu0 0.0
      %2417 = vmatpush1.msra.mxu0 0.0
      %2418 = vmatprep.subr.mxu0 0.0
      %2419 = vmatpush1.msra.mxu0 0.0
      %2420 = vmatprep.subr.mxu0 0.0
      %2421 = vmatpush1.msra.mxu0 0.0
      %2422 = vmatprep.subr.mxu0 0.0
      %2423 = vmatpush1.msra.mxu0 0.0
      %2424 = vmatprep.subr.mxu0 0.0
      %2425 = vmatpush1.msra.mxu0 0.0
      %2426 = vmatprep.subr.mxu0 0.0
      %2427 = vmatpush1.msra.mxu0 0.0
      %2428 = vmatprep.subr.mxu0 0.0
      %2429 = vmatpush1.msra.mxu0 0.0
      %2430 = vmatprep.subr.mxu0 0.0
      %2431 = vmatpush1.msra.mxu0 0.0
      %2432 = vmatprep.subr.mxu0 0.0
      %2433 = vmatpush1.msra.mxu0 0.0
      %2434 = vmatprep.subr.mxu0 0.0
      %2435 = vmatpush1.msra.mxu0 0.0
      %2436 = vmatprep.subr.mxu0 0.0
      %2437 = vmatpush1.msra.mxu0 0.0
      %2438 = vmatprep.subr.mxu0 0.0
      %2439 = vmatpush1.msra.mxu0 0.0
      %2440 = vmatprep.subr.mxu0 0.0
      %2441 = vmatpush1.msra.mxu0 0.0
      %2442 = vmatprep.subr.mxu0 0.0
      %2443 = vmatpush1.msra.mxu0 0.0
      %2444 = vmatprep.subr.mxu0 0.0
      %2445 = vmatpush1.msra.mxu0 0.0
      %2446 = vmatprep.subr.mxu0 0.0
      %2447 = vmatpush1.msra.mxu0 0.0
      %2448 = vmatprep.subr.mxu0 0.0
      %2449 = vmatpush1.msra.mxu0 0.0
      %2450 = vmatprep.subr.mxu0 0.0
      %2451 = vmatpush1.msra.mxu0 0.0
      %2452 = vmatprep.subr.mxu0 0.0
      %2453 = vmatpush1.msra.mxu0 0.0
      %2454 = vmatprep.subr.mxu0 0.0
      %2455 = vmatpush1.msra.mxu0 0.0
      %2456 = vmatprep.subr.mxu0 0.0
      %2457 = vmatpush1.msra.mxu0 0.0
      %2458 = vmatprep.subr.mxu0 0.0
      %2459 = vmatpush1.msra.mxu0 0.0
      %2460 = vmatprep.subr.mxu0 0.0
      %2461 = vmatpush1.msra.mxu0 0.0
      %2462 = vmatprep.subr.mxu0 0.0
      %2463 = vmatpush1.msra.mxu0 0.0
      %2464 = vmatprep.subr.mxu0 0.0
      %2465 = vmatpush1.msra.mxu0 0.0
      %2466 = vmatprep.subr.mxu0 0.0
      %2467 = vmatpush1.msra.mxu0 0.0
      %2468 = vmatprep.subr.mxu0 0.0
      %2469 = vmatpush1.msra.mxu0 0.0
      %2470 = vmatprep.subr.mxu0 0.0
      %2471 = vmatpush1.msra.mxu0 0.0
      %2472 = vmatprep.subr.mxu0 0.0
      %2473 = vmatpush1.msra.mxu0 0.0
      %2474 = vmatprep.subr.mxu0 0.0
      %2475 = vmatpush1.msra.mxu0 0.0
      %2476 = vmatprep.mubr.f32.mxu0 0.0
      %2477 = vmatmul.mubr.f32.gmra.mrb[0].mxu0 %v2386
      %v2478 = vpop.f32.mrb[0].mxu0
      %v2479 = vadd.f32 0.0, %v2478
      %v2480 = vpop.f32.mrb[0].mxu0
      %2481 = vmatprep.mubr.f32.mxu0 0.0
      %2482 = vmatmul.mubr.f32.gmra.mrb[0].mxu0 %v2389
      %v2483 = vpop.f32.mrb[0].mxu0
      %v2484 = vadd.f32 0.0, %v2483
      %v2485 = vpop.f32.mrb[0].mxu0
      %2486 = vmatprep.mubr.f32.mxu0 0.0
      %2487 = vmatmul.mubr.f32.gmra.mrb[0].mxu0 %v2392
      %v2488 = vpop.f32.mrb[0].mxu0
      %v2489 = vadd.f32 0.0, %v2488
      %v2490 = vpop.f32.mrb[0].mxu0
      %2491 = vmatprep.mubr.f32.mxu0 0.0
      %2492 = vmatmul.mubr.f32.gmra.mrb[0].mxu0 %v2395
      %v2493 = vpop.f32.mrb[0].mxu0
      %v2494 = vadd.f32 0.0, %v2493
      %v2495 = vpop.f32.mrb[0].mxu0
      %2496 = vmatprep.mubr.f32.mxu0 0.0
      %2497 = vmatmul.mubr.f32.gmra.mrb[0].mxu0 %v2398
      %v2498 = vpop.f32.mrb[0].mxu0
      %v2499 = vadd.f32 0.0, %v2498
      %v2500 = vpop.f32.mrb[0].mxu0
      %2501 = vmatprep.mubr.f32.mxu0 0.0
      %2502 = vmatmul.mubr.f32.gmra.mrb[0].mxu0 %v2401
      %v2503 = vpop.f32.mrb[0].mxu0
      %v2504 = vadd.f32 0.0, %v2503
      %v2505 = vpop.f32.mrb[0].mxu0
      %2506 = vmatprep.mubr.f32.mxu0 0.0
      %2507 = vmatmul.mubr.f32.gmra.mrb[0].mxu0 %v2404
      %v2508 = vpop.f32.mrb[0].mxu0
      %v2509 = vadd.f32 0.0, %v2508
      %v2510 = vpop.f32.mrb[0].mxu0
      %2511 = vmatprep.mubr.f32.mxu0 0.0
      %2512 = vmatmul.mubr.f32.gmra.mrb[0].mxu0 %v2407
      %v2513 = vpop.f32.mrb[0].mxu0
      %v2514 = vadd.f32 0.0, %v2513
      %v2515 = vpop.f32.mrb[0].mxu0
      %2516 = vdwg.mxu0
      %v2517 = vadd.f32 %v2367, %v2479
      %v2518 = vadd.f32 %v2368, %v2484
      %v2519 = vadd.f32 %v2369, %v2489
      %v2520 = vadd.f32 %v2370, %v2494
      %v2521 = vadd.f32 %v2371, %v2499
      %v2522 = vadd.f32 %v2372, %v2504
      %v2523 = vadd.f32 %v2373, %v2509
      %v2524 = vadd.f32 %v2374, %v2514
      %v2525 = vld [vmem:[#allocation3 + $0x2] sm:$0xff]
      %v2526 = vld [vmem:[#allocation3 + $0x12] sm:$0xff]
      %v2527 = vld [vmem:[#allocation3 + $0x22] sm:$0xff]
      %v2528 = vld [vmem:[#allocation3 + $0x32] sm:$0xff]
      %v2529 = vld [vmem:[#allocation3 + $0x42] sm:$0xff]
      %v2530 = vld [vmem:[#allocation3 + $0x52] sm:$0xff]
      %v2531 = vld [vmem:[#allocation3 + $0x62] sm:$0xff]
      %v2532 = vld [vmem:[#allocation3 + $0x72] sm:$0xff]
      %s2533 = scalar_lea.vmem %s4, 8
      %v2534 = vld [vmem:[%s2533] sm:$0x7]
      %v2536 = vsel %vm2206, %v2525, 0
      %v2539 = vsel %vm2206, %v2526, 0
      %v2542 = vsel %vm2206, %v2527, 0
      %v2545 = vsel %vm2206, %v2528, 0
      %v2548 = vsel %vm2206, %v2529, 0
      %v2551 = vsel %vm2206, %v2530, 0
      %v2554 = vsel %vm2206, %v2531, 0
      %v2557 = vsel %vm2206, %v2532, 0
      %v2560 = vsel %vm2258, %v2534, 0
      %2562 = vmatprep.subr.mxu0 0.0
      %2563 = vmatpush1.msra.mxu0 %v2560
      %2564 = vmatprep.subr.mxu0 0.0
      %2565 = vmatpush1.msra.mxu0 0.0
      %2566 = vmatprep.subr.mxu0 0.0
      %2567 = vmatpush1.msra.mxu0 0.0
      %2568 = vmatprep.subr.mxu0 0.0
      %2569 = vmatpush1.msra.mxu0 0.0
      %2570 = vmatprep.subr.mxu0 0.0
      %2571 = vmatpush1.msra.mxu0 0.0
      %2572 = vmatprep.subr.mxu0 0.0
      %2573 = vmatpush1.msra.mxu0 0.0
      %2574 = vmatprep.subr.mxu0 0.0
      %2575 = vmatpush1.msra.mxu0 0.0
      %2576 = vmatprep.subr.mxu0 0.0
      %2577 = vmatpush1.msra.mxu0 0.0
      %2578 = vmatprep.subr.mxu0 0.0
      %2579 = vmatpush1.msra.mxu0 0.0
      %2580 = vmatprep.subr.mxu0 0.0
      %2581 = vmatpush1.msra.mxu0 0.0
      %2582 = vmatprep.subr.mxu0 0.0
      %2583 = vmatpush1.msra.mxu0 0.0
      %2584 = vmatprep.subr.mxu0 0.0
      %2585 = vmatpush1.msra.mxu0 0.0
      %2586 = vmatprep.subr.mxu0 0.0
      %2587 = vmatpush1.msra.mxu0 0.0
      %2588 = vmatprep.subr.mxu0 0.0
      %2589 = vmatpush1.msra.mxu0 0.0
      %2590 = vmatprep.subr.mxu0 0.0
      %2591 = vmatpush1.msra.mxu0 0.0
      %2592 = vmatprep.subr.mxu0 0.0
      %2593 = vmatpush1.msra.mxu0 0.0
      %2594 = vmatprep.subr.mxu0 0.0
      %2595 = vmatpush1.msra.mxu0 0.0
      %2596 = vmatprep.subr.mxu0 0.0
      %2597 = vmatpush1.msra.mxu0 0.0
      %2598 = vmatprep.subr.mxu0 0.0
      %2599 = vmatpush1.msra.mxu0 0.0
      %2600 = vmatprep.subr.mxu0 0.0
      %2601 = vmatpush1.msra.mxu0 0.0
      %2602 = vmatprep.subr.mxu0 0.0
      %2603 = vmatpush1.msra.mxu0 0.0
      %2604 = vmatprep.subr.mxu0 0.0
      %2605 = vmatpush1.msra.mxu0 0.0
      %2606 = vmatprep.subr.mxu0 0.0
      %2607 = vmatpush1.msra.mxu0 0.0
      %2608 = vmatprep.subr.mxu0 0.0
      %2609 = vmatpush1.msra.mxu0 0.0
      %2610 = vmatprep.subr.mxu0 0.0
      %2611 = vmatpush1.msra.mxu0 0.0
      %2612 = vmatprep.subr.mxu0 0.0
      %2613 = vmatpush1.msra.mxu0 0.0
      %2614 = vmatprep.subr.mxu0 0.0
      %2615 = vmatpush1.msra.mxu0 0.0
      %2616 = vmatprep.subr.mxu0 0.0
      %2617 = vmatpush1.msra.mxu0 0.0
      %2618 = vmatprep.subr.mxu0 0.0
      %2619 = vmatpush1.msra.mxu0 0.0
      %2620 = vmatprep.subr.mxu0 0.0
      %2621 = vmatpush1.msra.mxu0 0.0
      %2622 = vmatprep.subr.mxu0 0.0
      %2623 = vmatpush1.msra.mxu0 0.0
      %2624 = vmatprep.subr.mxu0 0.0
      %2625 = vmatpush1.msra.mxu0 0.0
      %2626 = vmatprep.mubr.f32.mxu0 0.0
      %2627 = vmatmul.mubr.f32.gmra.mrb[0].mxu0 %v2536
      %v2628 = vpop.f32.mrb[0].mxu0
      %v2629 = vadd.f32 0.0, %v2628
      %v2630 = vpop.f32.mrb[0].mxu0
      %2631 = vmatprep.mubr.f32.mxu0 0.0
      %2632 = vmatmul.mubr.f32.gmra.mrb[0].mxu0 %v2539
      %v2633 = vpop.f32.mrb[0].mxu0
      %v2634 = vadd.f32 0.0, %v2633
      %v2635 = vpop.f32.mrb[0].mxu0
      %2636 = vmatprep.mubr.f32.mxu0 0.0
      %2637 = vmatmul.mubr.f32.gmra.mrb[0].mxu0 %v2542
      %v2638 = vpop.f32.mrb[0].mxu0
      %v2639 = vadd.f32 0.0, %v2638
      %v2640 = vpop.f32.mrb[0].mxu0
      %2641 = vmatprep.mubr.f32.mxu0 0.0
      %2642 = vmatmul.mubr.f32.gmra.mrb[0].mxu0 %v2545
      %v2643 = vpop.f32.mrb[0].mxu0
      %v2644 = vadd.f32 0.0, %v2643
      %v2645 = vpop.f32.mrb[0].mxu0
      %2646 = vmatprep.mubr.f32.mxu0 0.0
      %2647 = vmatmul.mubr.f32.gmra.mrb[0].mxu0 %v2548
      %v2648 = vpop.f32.mrb[0].mxu0
      %v2649 = vadd.f32 0.0, %v2648
      %v2650 = vpop.f32.mrb[0].mxu0
      %2651 = vmatprep.mubr.f32.mxu0 0.0
      %2652 = vmatmul.mubr.f32.gmra.mrb[0].mxu0 %v2551
      %v2653 = vpop.f32.mrb[0].mxu0
      %v2654 = vadd.f32 0.0, %v2653
      %v2655 = vpop.f32.mrb[0].mxu0
      %2656 = vmatprep.mubr.f32.mxu0 0.0
      %2657 = vmatmul.mubr.f32.gmra.mrb[0].mxu0 %v2554
      %v2658 = vpop.f32.mrb[0].mxu0
      %v2659 = vadd.f32 0.0, %v2658
      %v2660 = vpop.f32.mrb[0].mxu0
      %2661 = vmatprep.mubr.f32.mxu0 0.0
      %2662 = vmatmul.mubr.f32.gmra.mrb[0].mxu0 %v2557
      %v2663 = vpop.f32.mrb[0].mxu0
      %v2664 = vadd.f32 0.0, %v2663
      %v2665 = vpop.f32.mrb[0].mxu0
      %2666 = vdwg.mxu0
      %v2667 = vadd.f32 %v2517, %v2629
      %v2668 = vadd.f32 %v2518, %v2634
      %v2669 = vadd.f32 %v2519, %v2639
      %v2670 = vadd.f32 %v2520, %v2644
      %v2671 = vadd.f32 %v2521, %v2649
      %v2672 = vadd.f32 %v2522, %v2654
      %v2673 = vadd.f32 %v2523, %v2659
      %v2674 = vadd.f32 %v2524, %v2664
      %s2675 = scalar_lea.vmem [#allocation3], 16
      %v2676 = vld [vmem:[%s2675] sm:$0xff]
      %v2677 = vld [vmem:[%s2675 + $0x10] sm:$0xff]
      %v2678 = vld [vmem:[%s2675 + $0x20] sm:$0xff]
      %v2679 = vld [vmem:[%s2675 + $0x30] sm:$0xff]
      %v2680 = vld [vmem:[%s2675 + $0x40] sm:$0xff]
      %v2681 = vld [vmem:[%s2675 + $0x50] sm:$0xff]
      %v2682 = vld [vmem:[%s2675 + $0x60] sm:$0xff]
      %v2683 = vld [vmem:[%s2675 + $0x70] sm:$0xff]
      %s2684 = scalar_lea.vmem %s4, 12
      %v2685 = vld [vmem:[%s2684] sm:$0x7]
      %v2687 = vsel %vm2206, %v2676, 0
      %v2690 = vsel %vm2206, %v2677, 0
      %v2693 = vsel %vm2206, %v2678, 0
      %v2696 = vsel %vm2206, %v2679, 0
      %v2699 = vsel %vm2206, %v2680, 0
      %v2702 = vsel %vm2206, %v2681, 0
      %v2705 = vsel %vm2206, %v2682, 0
      %v2708 = vsel %vm2206, %v2683, 0
      %v2711 = vsel %vm2258, %v2685, 0
      %2713 = vmatprep.subr.mxu0 0.0
      %2714 = vmatpush1.msra.mxu0 %v2711
      %2715 = vmatprep.subr.mxu0 0.0
      %2716 = vmatpush1.msra.mxu0 0.0
      %2717 = vmatprep.subr.mxu0 0.0
      %2718 = vmatpush1.msra.mxu0 0.0
      %2719 = vmatprep.subr.mxu0 0.0
      %2720 = vmatpush1.msra.mxu0 0.0
      %2721 = vmatprep.subr.mxu0 0.0
      %2722 = vmatpush1.msra.mxu0 0.0
      %2723 = vmatprep.subr.mxu0 0.0
      %2724 = vmatpush1.msra.mxu0 0.0
      %2725 = vmatprep.subr.mxu0 0.0
      %2726 = vmatpush1.msra.mxu0 0.0
      %2727 = vmatprep.subr.mxu0 0.0
      %2728 = vmatpush1.msra.mxu0 0.0
      %2729 = vmatprep.subr.mxu0 0.0
      %2730 = vmatpush1.msra.mxu0 0.0
      %2731 = vmatprep.subr.mxu0 0.0
      %2732 = vmatpush1.msra.mxu0 0.0
      %2733 = vmatprep.subr.mxu0 0.0
      %2734 = vmatpush1.msra.mxu0 0.0
      %2735 = vmatprep.subr.mxu0 0.0
      %2736 = vmatpush1.msra.mxu0 0.0
      %2737 = vmatprep.subr.mxu0 0.0
      %2738 = vmatpush1.msra.mxu0 0.0
      %2739 = vmatprep.subr.mxu0 0.0
      %2740 = vmatpush1.msra.mxu0 0.0
      %2741 = vmatprep.subr.mxu0 0.0
      %2742 = vmatpush1.msra.mxu0 0.0
      %2743 = vmatprep.subr.mxu0 0.0
      %2744 = vmatpush1.msra.mxu0 0.0
      %2745 = vmatprep.subr.mxu0 0.0
      %2746 = vmatpush1.msra.mxu0 0.0
      %2747 = vmatprep.subr.mxu0 0.0
      %2748 = vmatpush1.msra.mxu0 0.0
      %2749 = vmatprep.subr.mxu0 0.0
      %2750 = vmatpush1.msra.mxu0 0.0
      %2751 = vmatprep.subr.mxu0 0.0
      %2752 = vmatpush1.msra.mxu0 0.0
      %2753 = vmatprep.subr.mxu0 0.0
      %2754 = vmatpush1.msra.mxu0 0.0
      %2755 = vmatprep.subr.mxu0 0.0
      %2756 = vmatpush1.msra.mxu0 0.0
      %2757 = vmatprep.subr.mxu0 0.0
      %2758 = vmatpush1.msra.mxu0 0.0
      %2759 = vmatprep.subr.mxu0 0.0
      %2760 = vmatpush1.msra.mxu0 0.0
      %2761 = vmatprep.subr.mxu0 0.0
      %2762 = vmatpush1.msra.mxu0 0.0
      %2763 = vmatprep.subr.mxu0 0.0
      %2764 = vmatpush1.msra.mxu0 0.0
      %2765 = vmatprep.subr.mxu0 0.0
      %2766 = vmatpush1.msra.mxu0 0.0
      %2767 = vmatprep.subr.mxu0 0.0
      %2768 = vmatpush1.msra.mxu0 0.0
      %2769 = vmatprep.subr.mxu0 0.0
      %2770 = vmatpush1.msra.mxu0 0.0
      %2771 = vmatprep.subr.mxu0 0.0
      %2772 = vmatpush1.msra.mxu0 0.0
      %2773 = vmatprep.subr.mxu0 0.0
      %2774 = vmatpush1.msra.mxu0 0.0
      %2775 = vmatprep.subr.mxu0 0.0
      %2776 = vmatpush1.msra.mxu0 0.0
      %2777 = vmatprep.mubr.f32.mxu0 0.0
      %2778 = vmatmul.mubr.f32.gmra.mrb[0].mxu0 %v2687
      %v2779 = vpop.f32.mrb[0].mxu0
      %v2780 = vadd.f32 0.0, %v2779
      %v2781 = vpop.f32.mrb[0].mxu0
      %2782 = vmatprep.mubr.f32.mxu0 0.0
      %2783 = vmatmul.mubr.f32.gmra.mrb[0].mxu0 %v2690
      %v2784 = vpop.f32.mrb[0].mxu0
      %v2785 = vadd.f32 0.0, %v2784
      %v2786 = vpop.f32.mrb[0].mxu0
      %2787 = vmatprep.mubr.f32.mxu0 0.0
      %2788 = vmatmul.mubr.f32.gmra.mrb[0].mxu0 %v2693
      %v2789 = vpop.f32.mrb[0].mxu0
      %v2790 = vadd.f32 0.0, %v2789
      %v2791 = vpop.f32.mrb[0].mxu0
      %2792 = vmatprep.mubr.f32.mxu0 0.0
      %2793 = vmatmul.mubr.f32.gmra.mrb[0].mxu0 %v2696
      %v2794 = vpop.f32.mrb[0].mxu0
      %v2795 = vadd.f32 0.0, %v2794
      %v2796 = vpop.f32.mrb[0].mxu0
      %2797 = vmatprep.mubr.f32.mxu0 0.0
      %2798 = vmatmul.mubr.f32.gmra.mrb[0].mxu0 %v2699
      %v2799 = vpop.f32.mrb[0].mxu0
      %v2800 = vadd.f32 0.0, %v2799
      %v2801 = vpop.f32.mrb[0].mxu0
      %2802 = vmatprep.mubr.f32.mxu0 0.0
      %2803 = vmatmul.mubr.f32.gmra.mrb[0].mxu0 %v2702
      %v2804 = vpop.f32.mrb[0].mxu0
      %v2805 = vadd.f32 0.0, %v2804
      %v2806 = vpop.f32.mrb[0].mxu0
      %2807 = vmatprep.mubr.f32.mxu0 0.0
      %2808 = vmatmul.mubr.f32.gmra.mrb[0].mxu0 %v2705
      %v2809 = vpop.f32.mrb[0].mxu0
      %v2810 = vadd.f32 0.0, %v2809
      %v2811 = vpop.f32.mrb[0].mxu0
      %2812 = vmatprep.mubr.f32.mxu0 0.0
      %2813 = vmatmul.mubr.f32.gmra.mrb[0].mxu0 %v2708
      %v2814 = vpop.f32.mrb[0].mxu0
      %v2815 = vadd.f32 0.0, %v2814
      %v2816 = vpop.f32.mrb[0].mxu0
      %2817 = vdwg.mxu0
      %v2818 = vadd.f32 %v2667, %v2780
      %v2819 = vadd.f32 %v2668, %v2785
      %v2820 = vadd.f32 %v2669, %v2790
      %v2821 = vadd.f32 %v2670, %v2795
      %v2822 = vadd.f32 %v2671, %v2800
      %v2823 = vadd.f32 %v2672, %v2805
      %v2824 = vadd.f32 %v2673, %v2810
      %v2825 = vadd.f32 %v2674, %v2815
      %v2826 = vld [vmem:[%s2675 + $0x1] sm:$0xff]
      %v2827 = vld [vmem:[%s2675 + $0x11] sm:$0xff]
      %v2828 = vld [vmem:[%s2675 + $0x21] sm:$0xff]
      %v2829 = vld [vmem:[%s2675 + $0x31] sm:$0xff]
      %v2830 = vld [vmem:[%s2675 + $0x41] sm:$0xff]
      %v2831 = vld [vmem:[%s2675 + $0x51] sm:$0xff]
      %v2832 = vld [vmem:[%s2675 + $0x61] sm:$0xff]
      %v2833 = vld [vmem:[%s2675 + $0x71] sm:$0xff]
      %s2834 = scalar_lea.vmem %s4, 16
      %v2835 = vld [vmem:[%s2834] sm:$0x7]
      %v2837 = vsel %vm2206, %v2826, 0
      %v2840 = vsel %vm2206, %v2827, 0
      %v2843 = vsel %vm2206, %v2828, 0
      %v2846 = vsel %vm2206, %v2829, 0
      %v2849 = vsel %vm2206, %v2830, 0
      %v2852 = vsel %vm2206, %v2831, 0
      %v2855 = vsel %vm2206, %v2832, 0
      %v2858 = vsel %vm2206, %v2833, 0
      %v2861 = vsel %vm2258, %v2835, 0
      %2863 = vmatprep.subr.mxu0 0.0
      %2864 = vmatpush1.msra.mxu0 %v2861
      %2865 = vmatprep.subr.mxu0 0.0
      %2866 = vmatpush1.msra.mxu0 0.0
      %2867 = vmatprep.subr.mxu0 0.0
      %2868 = vmatpush1.msra.mxu0 0.0
      %2869 = vmatprep.subr.mxu0 0.0
      %2870 = vmatpush1.msra.mxu0 0.0
      %2871 = vmatprep.subr.mxu0 0.0
      %2872 = vmatpush1.msra.mxu0 0.0
      %2873 = vmatprep.subr.mxu0 0.0
      %2874 = vmatpush1.msra.mxu0 0.0
      %2875 = vmatprep.subr.mxu0 0.0
      %2876 = vmatpush1.msra.mxu0 0.0
      %2877 = vmatprep.subr.mxu0 0.0
      %2878 = vmatpush1.msra.mxu0 0.0
      %2879 = vmatprep.subr.mxu0 0.0
      %2880 = vmatpush1.msra.mxu0 0.0
      %2881 = vmatprep.subr.mxu0 0.0
      %2882 = vmatpush1.msra.mxu0 0.0
      %2883 = vmatprep.subr.mxu0 0.0
      %2884 = vmatpush1.msra.mxu0 0.0
      %2885 = vmatprep.subr.mxu0 0.0
      %2886 = vmatpush1.msra.mxu0 0.0
      %2887 = vmatprep.subr.mxu0 0.0
      %2888 = vmatpush1.msra.mxu0 0.0
      %2889 = vmatprep.subr.mxu0 0.0
      %2890 = vmatpush1.msra.mxu0 0.0
      %2891 = vmatprep.subr.mxu0 0.0
      %2892 = vmatpush1.msra.mxu0 0.0
      %2893 = vmatprep.subr.mxu0 0.0
      %2894 = vmatpush1.msra.mxu0 0.0
      %2895 = vmatprep.subr.mxu0 0.0
      %2896 = vmatpush1.msra.mxu0 0.0
      %2897 = vmatprep.subr.mxu0 0.0
      %2898 = vmatpush1.msra.mxu0 0.0
      %2899 = vmatprep.subr.mxu0 0.0
      %2900 = vmatpush1.msra.mxu0 0.0
      %2901 = vmatprep.subr.mxu0 0.0
      %2902 = vmatpush1.msra.mxu0 0.0
      %2903 = vmatprep.subr.mxu0 0.0
      %2904 = vmatpush1.msra.mxu0 0.0
      %2905 = vmatprep.subr.mxu0 0.0
      %2906 = vmatpush1.msra.mxu0 0.0
      %2907 = vmatprep.subr.mxu0 0.0
      %2908 = vmatpush1.msra.mxu0 0.0
      %2909 = vmatprep.subr.mxu0 0.0
      %2910 = vmatpush1.msra.mxu0 0.0
      %2911 = vmatprep.subr.mxu0 0.0
      %2912 = vmatpush1.msra.mxu0 0.0
      %2913 = vmatprep.subr.mxu0 0.0
      %2914 = vmatpush1.msra.mxu0 0.0
      %2915 = vmatprep.subr.mxu0 0.0
      %2916 = vmatpush1.msra.mxu0 0.0
      %2917 = vmatprep.subr.mxu0 0.0
      %2918 = vmatpush1.msra.mxu0 0.0
      %2919 = vmatprep.subr.mxu0 0.0
      %2920 = vmatpush1.msra.mxu0 0.0
      %2921 = vmatprep.subr.mxu0 0.0
      %2922 = vmatpush1.msra.mxu0 0.0
      %2923 = vmatprep.subr.mxu0 0.0
      %2924 = vmatpush1.msra.mxu0 0.0
      %2925 = vmatprep.subr.mxu0 0.0
      %2926 = vmatpush1.msra.mxu0 0.0
      %2927 = vmatprep.mubr.f32.mxu0 0.0
      %2928 = vmatmul.mubr.f32.gmra.mrb[0].mxu0 %v2837
      %v2929 = vpop.f32.mrb[0].mxu0
      %v2930 = vadd.f32 0.0, %v2929
      %v2931 = vpop.f32.mrb[0].mxu0
      %2932 = vmatprep.mubr.f32.mxu0 0.0
      %2933 = vmatmul.mubr.f32.gmra.mrb[0].mxu0 %v2840
      %v2934 = vpop.f32.mrb[0].mxu0
      %v2935 = vadd.f32 0.0, %v2934
      %v2936 = vpop.f32.mrb[0].mxu0
      %2937 = vmatprep.mubr.f32.mxu0 0.0
      %2938 = vmatmul.mubr.f32.gmra.mrb[0].mxu0 %v2843
      %v2939 = vpop.f32.mrb[0].mxu0
      %v2940 = vadd.f32 0.0, %v2939
      %v2941 = vpop.f32.mrb[0].mxu0
      %2942 = vmatprep.mubr.f32.mxu0 0.0
      %2943 = vmatmul.mubr.f32.gmra.mrb[0].mxu0 %v2846
      %v2944 = vpop.f32.mrb[0].mxu0
      %v2945 = vadd.f32 0.0, %v2944
      %v2946 = vpop.f32.mrb[0].mxu0
      %2947 = vmatprep.mubr.f32.mxu0 0.0
      %2948 = vmatmul.mubr.f32.gmra.mrb[0].mxu0 %v2849
      %v2949 = vpop.f32.mrb[0].mxu0
      %v2950 = vadd.f32 0.0, %v2949
      %v2951 = vpop.f32.mrb[0].mxu0
      %2952 = vmatprep.mubr.f32.mxu0 0.0
      %2953 = vmatmul.mubr.f32.gmra.mrb[0].mxu0 %v2852
      %v2954 = vpop.f32.mrb[0].mxu0
      %v2955 = vadd.f32 0.0, %v2954
      %v2956 = vpop.f32.mrb[0].mxu0
      %2957 = vmatprep.mubr.f32.mxu0 0.0
      %2958 = vmatmul.mubr.f32.gmra.mrb[0].mxu0 %v2855
      %v2959 = vpop.f32.mrb[0].mxu0
      %v2960 = vadd.f32 0.0, %v2959
      %v2961 = vpop.f32.mrb[0].mxu0
      %2962 = vmatprep.mubr.f32.mxu0 0.0
      %2963 = vmatmul.mubr.f32.gmra.mrb[0].mxu0 %v2858
      %v2964 = vpop.f32.mrb[0].mxu0
      %v2965 = vadd.f32 0.0, %v2964
      %v2966 = vpop.f32.mrb[0].mxu0
      %2967 = vdwg.mxu0
      %v2968 = vadd.f32 %v2818, %v2930
      %v2969 = vadd.f32 %v2819, %v2935
      %v2970 = vadd.f32 %v2820, %v2940
      %v2971 = vadd.f32 %v2821, %v2945
      %v2972 = vadd.f32 %v2822, %v2950
      %v2973 = vadd.f32 %v2823, %v2955
      %v2974 = vadd.f32 %v2824, %v2960
      %v2975 = vadd.f32 %v2825, %v2965
      %v2976 = vld [vmem:[%s2675 + $0x2] sm:$0xff]
      %v2977 = vld [vmem:[%s2675 + $0x12] sm:$0xff]
      %v2978 = vld [vmem:[%s2675 + $0x22] sm:$0xff]
      %v2979 = vld [vmem:[%s2675 + $0x32] sm:$0xff]
      %v2980 = vld [vmem:[%s2675 + $0x42] sm:$0xff]
      %v2981 = vld [vmem:[%s2675 + $0x52] sm:$0xff]
      %v2982 = vld [vmem:[%s2675 + $0x62] sm:$0xff]
      %v2983 = vld [vmem:[%s2675 + $0x72] sm:$0xff]
      %s2984 = scalar_lea.vmem %s4, 20
      %v2985 = vld [vmem:[%s2984] sm:$0x7]
      %v2987 = vsel %vm2206, %v2976, 0
      %v2990 = vsel %vm2206, %v2977, 0
      %v2993 = vsel %vm2206, %v2978, 0
      %v2996 = vsel %vm2206, %v2979, 0
      %v2999 = vsel %vm2206, %v2980, 0
      %v3002 = vsel %vm2206, %v2981, 0
      %v3005 = vsel %vm2206, %v2982, 0
      %v3008 = vsel %vm2206, %v2983, 0
      %v3011 = vsel %vm2258, %v2985, 0
      %3013 = vmatprep.subr.mxu0 0.0
      %3014 = vmatpush1.msra.mxu0 %v3011
      %3015 = vmatprep.subr.mxu0 0.0
      %3016 = vmatpush1.msra.mxu0 0.0
      %3017 = vmatprep.subr.mxu0 0.0
      %3018 = vmatpush1.msra.mxu0 0.0
      %3019 = vmatprep.subr.mxu0 0.0
      %3020 = vmatpush1.msra.mxu0 0.0
      %3021 = vmatprep.subr.mxu0 0.0
      %3022 = vmatpush1.msra.mxu0 0.0
      %3023 = vmatprep.subr.mxu0 0.0
      %3024 = vmatpush1.msra.mxu0 0.0
      %3025 = vmatprep.subr.mxu0 0.0
      %3026 = vmatpush1.msra.mxu0 0.0
      %3027 = vmatprep.subr.mxu0 0.0
      %3028 = vmatpush1.msra.mxu0 0.0
      %3029 = vmatprep.subr.mxu0 0.0
      %3030 = vmatpush1.msra.mxu0 0.0
      %3031 = vmatprep.subr.mxu0 0.0
      %3032 = vmatpush1.msra.mxu0 0.0
      %3033 = vmatprep.subr.mxu0 0.0
      %3034 = vmatpush1.msra.mxu0 0.0
      %3035 = vmatprep.subr.mxu0 0.0
      %3036 = vmatpush1.msra.mxu0 0.0
      %3037 = vmatprep.subr.mxu0 0.0
      %3038 = vmatpush1.msra.mxu0 0.0
      %3039 = vmatprep.subr.mxu0 0.0
      %3040 = vmatpush1.msra.mxu0 0.0
      %3041 = vmatprep.subr.mxu0 0.0
      %3042 = vmatpush1.msra.mxu0 0.0
      %3043 = vmatprep.subr.mxu0 0.0
      %3044 = vmatpush1.msra.mxu0 0.0
      %3045 = vmatprep.subr.mxu0 0.0
      %3046 = vmatpush1.msra.mxu0 0.0
      %3047 = vmatprep.subr.mxu0 0.0
      %3048 = vmatpush1.msra.mxu0 0.0
      %3049 = vmatprep.subr.mxu0 0.0
      %3050 = vmatpush1.msra.mxu0 0.0
      %3051 = vmatprep.subr.mxu0 0.0
      %3052 = vmatpush1.msra.mxu0 0.0
      %3053 = vmatprep.subr.mxu0 0.0
      %3054 = vmatpush1.msra.mxu0 0.0
      %3055 = vmatprep.subr.mxu0 0.0
      %3056 = vmatpush1.msra.mxu0 0.0
      %3057 = vmatprep.subr.mxu0 0.0
      %3058 = vmatpush1.msra.mxu0 0.0
      %3059 = vmatprep.subr.mxu0 0.0
      %3060 = vmatpush1.msra.mxu0 0.0
      %3061 = vmatprep.subr.mxu0 0.0
      %3062 = vmatpush1.msra.mxu0 0.0
      %3063 = vmatprep.subr.mxu0 0.0
      %3064 = vmatpush1.msra.mxu0 0.0
      %3065 = vmatprep.subr.mxu0 0.0
      %3066 = vmatpush1.msra.mxu0 0.0
      %3067 = vmatprep.subr.mxu0 0.0
      %3068 = vmatpush1.msra.mxu0 0.0
      %3069 = vmatprep.subr.mxu0 0.0
      %3070 = vmatpush1.msra.mxu0 0.0
      %3071 = vmatprep.subr.mxu0 0.0
      %3072 = vmatpush1.msra.mxu0 0.0
      %3073 = vmatprep.subr.mxu0 0.0
      %3074 = vmatpush1.msra.mxu0 0.0
      %3075 = vmatprep.subr.mxu0 0.0
      %3076 = vmatpush1.msra.mxu0 0.0
      %3077 = vmatprep.mubr.f32.mxu0 0.0
      %3078 = vmatmul.mubr.f32.gmra.mrb[0].mxu0 %v2987
      %v3079 = vpop.f32.mrb[0].mxu0
      %v3080 = vadd.f32 0.0, %v3079
      %v3081 = vpop.f32.mrb[0].mxu0
      %3082 = vmatprep.mubr.f32.mxu0 0.0
      %3083 = vmatmul.mubr.f32.gmra.mrb[0].mxu0 %v2990
      %v3084 = vpop.f32.mrb[0].mxu0
      %v3085 = vadd.f32 0.0, %v3084
      %v3086 = vpop.f32.mrb[0].mxu0
      %3087 = vmatprep.mubr.f32.mxu0 0.0
      %3088 = vmatmul.mubr.f32.gmra.mrb[0].mxu0 %v2993
      %v3089 = vpop.f32.mrb[0].mxu0
      %v3090 = vadd.f32 0.0, %v3089
      %v3091 = vpop.f32.mrb[0].mxu0
      %3092 = vmatprep.mubr.f32.mxu0 0.0
      %3093 = vmatmul.mubr.f32.gmra.mrb[0].mxu0 %v2996
      %v3094 = vpop.f32.mrb[0].mxu0
      %v3095 = vadd.f32 0.0, %v3094
      %v3096 = vpop.f32.mrb[0].mxu0
      %3097 = vmatprep.mubr.f32.mxu0 0.0
      %3098 = vmatmul.mubr.f32.gmra.mrb[0].mxu0 %v2999
      %v3099 = vpop.f32.mrb[0].mxu0
      %v3100 = vadd.f32 0.0, %v3099
      %v3101 = vpop.f32.mrb[0].mxu0
      %3102 = vmatprep.mubr.f32.mxu0 0.0
      %3103 = vmatmul.mubr.f32.gmra.mrb[0].mxu0 %v3002
      %v3104 = vpop.f32.mrb[0].mxu0
      %v3105 = vadd.f32 0.0, %v3104
      %v3106 = vpop.f32.mrb[0].mxu0
      %3107 = vmatprep.mubr.f32.mxu0 0.0
      %3108 = vmatmul.mubr.f32.gmra.mrb[0].mxu0 %v3005
      %v3109 = vpop.f32.mrb[0].mxu0
      %v3110 = vadd.f32 0.0, %v3109
      %v3111 = vpop.f32.mrb[0].mxu0
      %3112 = vmatprep.mubr.f32.mxu0 0.0
      %3113 = vmatmul.mubr.f32.gmra.mrb[0].mxu0 %v3008
      %v3114 = vpop.f32.mrb[0].mxu0
      %v3115 = vadd.f32 0.0, %v3114
      %v3116 = vpop.f32.mrb[0].mxu0
      %3117 = vdwg.mxu0
      %v3118 = vadd.f32 %v2968, %v3080
      %v3119 = vadd.f32 %v2969, %v3085
      %v3120 = vadd.f32 %v2970, %v3090
      %v3121 = vadd.f32 %v2971, %v3095
      %v3122 = vadd.f32 %v2972, %v3100
      %v3123 = vadd.f32 %v2973, %v3105
      %v3124 = vadd.f32 %v2974, %v3110
      %v3125 = vadd.f32 %v2975, %v3115
      %s3126 = scalar_lea.vmem [#allocation3], 32
      %v3127 = vld [vmem:[%s3126] sm:$0xff]
      %v3128 = vld [vmem:[%s3126 + $0x10] sm:$0xff]
      %v3129 = vld [vmem:[%s3126 + $0x20] sm:$0xff]
      %v3130 = vld [vmem:[%s3126 + $0x30] sm:$0xff]
      %v3131 = vld [vmem:[%s3126 + $0x40] sm:$0xff]
      %v3132 = vld [vmem:[%s3126 + $0x50] sm:$0xff]
      %v3133 = vld [vmem:[%s3126 + $0x60] sm:$0xff]
      %v3134 = vld [vmem:[%s3126 + $0x70] sm:$0xff]
      %s3135 = scalar_lea.vmem %s4, 24
      %v3136 = vld [vmem:[%s3135] sm:$0x7]
      %v3138 = vsel %vm2206, %v3127, 0
      %v3141 = vsel %vm2206, %v3128, 0
      %v3144 = vsel %vm2206, %v3129, 0
      %v3147 = vsel %vm2206, %v3130, 0
      %v3150 = vsel %vm2206, %v3131, 0
      %v3153 = vsel %vm2206, %v3132, 0
      %v3156 = vsel %vm2206, %v3133, 0
      %v3159 = vsel %vm2206, %v3134, 0
      %v3162 = vsel %vm2258, %v3136, 0
      %3164 = vmatprep.subr.mxu0 0.0
      %3165 = vmatpush1.msra.mxu0 %v3162
      %3166 = vmatprep.subr.mxu0 0.0
      %3167 = vmatpush1.msra.mxu0 0.0
      %3168 = vmatprep.subr.mxu0 0.0
      %3169 = vmatpush1.msra.mxu0 0.0
      %3170 = vmatprep.subr.mxu0 0.0
      %3171 = vmatpush1.msra.mxu0 0.0
      %3172 = vmatprep.subr.mxu0 0.0
      %3173 = vmatpush1.msra.mxu0 0.0
      %3174 = vmatprep.subr.mxu0 0.0
      %3175 = vmatpush1.msra.mxu0 0.0
      %3176 = vmatprep.subr.mxu0 0.0
      %3177 = vmatpush1.msra.mxu0 0.0
      %3178 = vmatprep.subr.mxu0 0.0
      %3179 = vmatpush1.msra.mxu0 0.0
      %3180 = vmatprep.subr.mxu0 0.0
      %3181 = vmatpush1.msra.mxu0 0.0
      %3182 = vmatprep.subr.mxu0 0.0
      %3183 = vmatpush1.msra.mxu0 0.0
      %3184 = vmatprep.subr.mxu0 0.0
      %3185 = vmatpush1.msra.mxu0 0.0
      %3186 = vmatprep.subr.mxu0 0.0
      %3187 = vmatpush1.msra.mxu0 0.0
      %3188 = vmatprep.subr.mxu0 0.0
      %3189 = vmatpush1.msra.mxu0 0.0
      %3190 = vmatprep.subr.mxu0 0.0
      %3191 = vmatpush1.msra.mxu0 0.0
      %3192 = vmatprep.subr.mxu0 0.0
      %3193 = vmatpush1.msra.mxu0 0.0
      %3194 = vmatprep.subr.mxu0 0.0
      %3195 = vmatpush1.msra.mxu0 0.0
      %3196 = vmatprep.subr.mxu0 0.0
      %3197 = vmatpush1.msra.mxu0 0.0
      %3198 = vmatprep.subr.mxu0 0.0
      %3199 = vmatpush1.msra.mxu0 0.0
      %3200 = vmatprep.subr.mxu0 0.0
      %3201 = vmatpush1.msra.mxu0 0.0
      %3202 = vmatprep.subr.mxu0 0.0
      %3203 = vmatpush1.msra.mxu0 0.0
      %3204 = vmatprep.subr.mxu0 0.0
      %3205 = vmatpush1.msra.mxu0 0.0
      %3206 = vmatprep.subr.mxu0 0.0
      %3207 = vmatpush1.msra.mxu0 0.0
      %3208 = vmatprep.subr.mxu0 0.0
      %3209 = vmatpush1.msra.mxu0 0.0
      %3210 = vmatprep.subr.mxu0 0.0
      %3211 = vmatpush1.msra.mxu0 0.0
      %3212 = vmatprep.subr.mxu0 0.0
      %3213 = vmatpush1.msra.mxu0 0.0
      %3214 = vmatprep.subr.mxu0 0.0
      %3215 = vmatpush1.msra.mxu0 0.0
      %3216 = vmatprep.subr.mxu0 0.0
      %3217 = vmatpush1.msra.mxu0 0.0
      %3218 = vmatprep.subr.mxu0 0.0
      %3219 = vmatpush1.msra.mxu0 0.0
      %3220 = vmatprep.subr.mxu0 0.0
      %3221 = vmatpush1.msra.mxu0 0.0
      %3222 = vmatprep.subr.mxu0 0.0
      %3223 = vmatpush1.msra.mxu0 0.0
      %3224 = vmatprep.subr.mxu0 0.0
      %3225 = vmatpush1.msra.mxu0 0.0
      %3226 = vmatprep.subr.mxu0 0.0
      %3227 = vmatpush1.msra.mxu0 0.0
      %3228 = vmatprep.mubr.f32.mxu0 0.0
      %3229 = vmatmul.mubr.f32.gmra.mrb[0].mxu0 %v3138
      %v3230 = vpop.f32.mrb[0].mxu0
      %v3231 = vadd.f32 0.0, %v3230
      %v3232 = vpop.f32.mrb[0].mxu0
      %3233 = vmatprep.mubr.f32.mxu0 0.0
      %3234 = vmatmul.mubr.f32.gmra.mrb[0].mxu0 %v3141
      %v3235 = vpop.f32.mrb[0].mxu0
      %v3236 = vadd.f32 0.0, %v3235
      %v3237 = vpop.f32.mrb[0].mxu0
      %3238 = vmatprep.mubr.f32.mxu0 0.0
      %3239 = vmatmul.mubr.f32.gmra.mrb[0].mxu0 %v3144
      %v3240 = vpop.f32.mrb[0].mxu0
      %v3241 = vadd.f32 0.0, %v3240
      %v3242 = vpop.f32.mrb[0].mxu0
      %3243 = vmatprep.mubr.f32.mxu0 0.0
      %3244 = vmatmul.mubr.f32.gmra.mrb[0].mxu0 %v3147
      %v3245 = vpop.f32.mrb[0].mxu0
      %v3246 = vadd.f32 0.0, %v3245
      %v3247 = vpop.f32.mrb[0].mxu0
      %3248 = vmatprep.mubr.f32.mxu0 0.0
      %3249 = vmatmul.mubr.f32.gmra.mrb[0].mxu0 %v3150
      %v3250 = vpop.f32.mrb[0].mxu0
      %v3251 = vadd.f32 0.0, %v3250
      %v3252 = vpop.f32.mrb[0].mxu0
      %3253 = vmatprep.mubr.f32.mxu0 0.0
      %3254 = vmatmul.mubr.f32.gmra.mrb[0].mxu0 %v3153
      %v3255 = vpop.f32.mrb[0].mxu0
      %v3256 = vadd.f32 0.0, %v3255
      %v3257 = vpop.f32.mrb[0].mxu0
      %3258 = vmatprep.mubr.f32.mxu0 0.0
      %3259 = vmatmul.mubr.f32.gmra.mrb[0].mxu0 %v3156
      %v3260 = vpop.f32.mrb[0].mxu0
      %v3261 = vadd.f32 0.0, %v3260
      %v3262 = vpop.f32.mrb[0].mxu0
      %3263 = vmatprep.mubr.f32.mxu0 0.0
      %3264 = vmatmul.mubr.f32.gmra.mrb[0].mxu0 %v3159
      %v3265 = vpop.f32.mrb[0].mxu0
      %v3266 = vadd.f32 0.0, %v3265
      %v3267 = vpop.f32.mrb[0].mxu0
      %3268 = vdwg.mxu0
      %v3269 = vadd.f32 %v3118, %v3231
      %v3270 = vadd.f32 %v3119, %v3236
      %v3271 = vadd.f32 %v3120, %v3241
      %v3272 = vadd.f32 %v3121, %v3246
      %v3273 = vadd.f32 %v3122, %v3251
      %v3274 = vadd.f32 %v3123, %v3256
      %v3275 = vadd.f32 %v3124, %v3261
      %v3276 = vadd.f32 %v3125, %v3266
      %v3277 = vld [vmem:[%s3126 + $0x1] sm:$0xff]
      %v3278 = vld [vmem:[%s3126 + $0x11] sm:$0xff]
      %v3279 = vld [vmem:[%s3126 + $0x21] sm:$0xff]
      %v3280 = vld [vmem:[%s3126 + $0x31] sm:$0xff]
      %v3281 = vld [vmem:[%s3126 + $0x41] sm:$0xff]
      %v3282 = vld [vmem:[%s3126 + $0x51] sm:$0xff]
      %v3283 = vld [vmem:[%s3126 + $0x61] sm:$0xff]
      %v3284 = vld [vmem:[%s3126 + $0x71] sm:$0xff]
      %s3285 = scalar_lea.vmem %s4, 28
      %v3286 = vld [vmem:[%s3285] sm:$0x7]
      %v3288 = vsel %vm2206, %v3277, 0
      %v3291 = vsel %vm2206, %v3278, 0
      %v3294 = vsel %vm2206, %v3279, 0
      %v3297 = vsel %vm2206, %v3280, 0
      %v3300 = vsel %vm2206, %v3281, 0
      %v3303 = vsel %vm2206, %v3282, 0
      %v3306 = vsel %vm2206, %v3283, 0
      %v3309 = vsel %vm2206, %v3284, 0
      %v3312 = vsel %vm2258, %v3286, 0
      %3314 = vmatprep.subr.mxu0 0.0
      %3315 = vmatpush1.msra.mxu0 %v3312
      %3316 = vmatprep.subr.mxu0 0.0
      %3317 = vmatpush1.msra.mxu0 0.0
      %3318 = vmatprep.subr.mxu0 0.0
      %3319 = vmatpush1.msra.mxu0 0.0
      %3320 = vmatprep.subr.mxu0 0.0
      %3321 = vmatpush1.msra.mxu0 0.0
      %3322 = vmatprep.subr.mxu0 0.0
      %3323 = vmatpush1.msra.mxu0 0.0
      %3324 = vmatprep.subr.mxu0 0.0
      %3325 = vmatpush1.msra.mxu0 0.0
      %3326 = vmatprep.subr.mxu0 0.0
      %3327 = vmatpush1.msra.mxu0 0.0
      %3328 = vmatprep.subr.mxu0 0.0
      %3329 = vmatpush1.msra.mxu0 0.0
      %3330 = vmatprep.subr.mxu0 0.0
      %3331 = vmatpush1.msra.mxu0 0.0
      %3332 = vmatprep.subr.mxu0 0.0
      %3333 = vmatpush1.msra.mxu0 0.0
      %3334 = vmatprep.subr.mxu0 0.0
      %3335 = vmatpush1.msra.mxu0 0.0
      %3336 = vmatprep.subr.mxu0 0.0
      %3337 = vmatpush1.msra.mxu0 0.0
      %3338 = vmatprep.subr.mxu0 0.0
      %3339 = vmatpush1.msra.mxu0 0.0
      %3340 = vmatprep.subr.mxu0 0.0
      %3341 = vmatpush1.msra.mxu0 0.0
      %3342 = vmatprep.subr.mxu0 0.0
      %3343 = vmatpush1.msra.mxu0 0.0
      %3344 = vmatprep.subr.mxu0 0.0
      %3345 = vmatpush1.msra.mxu0 0.0
      %3346 = vmatprep.subr.mxu0 0.0
      %3347 = vmatpush1.msra.mxu0 0.0
      %3348 = vmatprep.subr.mxu0 0.0
      %3349 = vmatpush1.msra.mxu0 0.0
      %3350 = vmatprep.subr.mxu0 0.0
      %3351 = vmatpush1.msra.mxu0 0.0
      %3352 = vmatprep.subr.mxu0 0.0
      %3353 = vmatpush1.msra.mxu0 0.0
      %3354 = vmatprep.subr.mxu0 0.0
      %3355 = vmatpush1.msra.mxu0 0.0
      %3356 = vmatprep.subr.mxu0 0.0
      %3357 = vmatpush1.msra.mxu0 0.0
      %3358 = vmatprep.subr.mxu0 0.0
      %3359 = vmatpush1.msra.mxu0 0.0
      %3360 = vmatprep.subr.mxu0 0.0
      %3361 = vmatpush1.msra.mxu0 0.0
      %3362 = vmatprep.subr.mxu0 0.0
      %3363 = vmatpush1.msra.mxu0 0.0
      %3364 = vmatprep.subr.mxu0 0.0
      %3365 = vmatpush1.msra.mxu0 0.0
      %3366 = vmatprep.subr.mxu0 0.0
      %3367 = vmatpush1.msra.mxu0 0.0
      %3368 = vmatprep.subr.mxu0 0.0
      %3369 = vmatpush1.msra.mxu0 0.0
      %3370 = vmatprep.subr.mxu0 0.0
      %3371 = vmatpush1.msra.mxu0 0.0
      %3372 = vmatprep.subr.mxu0 0.0
      %3373 = vmatpush1.msra.mxu0 0.0
      %3374 = vmatprep.subr.mxu0 0.0
      %3375 = vmatpush1.msra.mxu0 0.0
      %3376 = vmatprep.subr.mxu0 0.0
      %3377 = vmatpush1.msra.mxu0 0.0
      %3378 = vmatprep.mubr.f32.mxu0 0.0
      %3379 = vmatmul.mubr.f32.gmra.mrb[0].mxu0 %v3288
      %v3380 = vpop.f32.mrb[0].mxu0
      %v3381 = vadd.f32 0.0, %v3380
      %v3382 = vpop.f32.mrb[0].mxu0
      %3383 = vmatprep.mubr.f32.mxu0 0.0
      %3384 = vmatmul.mubr.f32.gmra.mrb[0].mxu0 %v3291
      %v3385 = vpop.f32.mrb[0].mxu0
      %v3386 = vadd.f32 0.0, %v3385
      %v3387 = vpop.f32.mrb[0].mxu0
      %3388 = vmatprep.mubr.f32.mxu0 0.0
      %3389 = vmatmul.mubr.f32.gmra.mrb[0].mxu0 %v3294
      %v3390 = vpop.f32.mrb[0].mxu0
      %v3391 = vadd.f32 0.0, %v3390
      %v3392 = vpop.f32.mrb[0].mxu0
      %3393 = vmatprep.mubr.f32.mxu0 0.0
      %3394 = vmatmul.mubr.f32.gmra.mrb[0].mxu0 %v3297
      %v3395 = vpop.f32.mrb[0].mxu0
      %v3396 = vadd.f32 0.0, %v3395
      %v3397 = vpop.f32.mrb[0].mxu0
      %3398 = vmatprep.mubr.f32.mxu0 0.0
      %3399 = vmatmul.mubr.f32.gmra.mrb[0].mxu0 %v3300
      %v3400 = vpop.f32.mrb[0].mxu0
      %v3401 = vadd.f32 0.0, %v3400
      %v3402 = vpop.f32.mrb[0].mxu0
      %3403 = vmatprep.mubr.f32.mxu0 0.0
      %3404 = vmatmul.mubr.f32.gmra.mrb[0].mxu0 %v3303
      %v3405 = vpop.f32.mrb[0].mxu0
      %v3406 = vadd.f32 0.0, %v3405
      %v3407 = vpop.f32.mrb[0].mxu0
      %3408 = vmatprep.mubr.f32.mxu0 0.0
      %3409 = vmatmul.mubr.f32.gmra.mrb[0].mxu0 %v3306
      %v3410 = vpop.f32.mrb[0].mxu0
      %v3411 = vadd.f32 0.0, %v3410
      %v3412 = vpop.f32.mrb[0].mxu0
      %3413 = vmatprep.mubr.f32.mxu0 0.0
      %3414 = vmatmul.mubr.f32.gmra.mrb[0].mxu0 %v3309
      %v3415 = vpop.f32.mrb[0].mxu0
      %v3416 = vadd.f32 0.0, %v3415
      %v3417 = vpop.f32.mrb[0].mxu0
      %3418 = vdwg.mxu0
      %v3419 = vadd.f32 %v3269, %v3381
      %v3420 = vadd.f32 %v3270, %v3386
      %v3421 = vadd.f32 %v3271, %v3391
      %v3422 = vadd.f32 %v3272, %v3396
      %v3423 = vadd.f32 %v3273, %v3401
      %v3424 = vadd.f32 %v3274, %v3406
      %v3425 = vadd.f32 %v3275, %v3411
      %v3426 = vadd.f32 %v3276, %v3416
      %v3427 = vld [vmem:[%s3126 + $0x2] sm:$0xff]
      %v3428 = vld [vmem:[%s3126 + $0x12] sm:$0xff]
      %v3429 = vld [vmem:[%s3126 + $0x22] sm:$0xff]
      %v3430 = vld [vmem:[%s3126 + $0x32] sm:$0xff]
      %v3431 = vld [vmem:[%s3126 + $0x42] sm:$0xff]
      %v3432 = vld [vmem:[%s3126 + $0x52] sm:$0xff]
      %v3433 = vld [vmem:[%s3126 + $0x62] sm:$0xff]
      %v3434 = vld [vmem:[%s3126 + $0x72] sm:$0xff]
      %s3435 = scalar_lea.vmem %s4, 32
      %v3436 = vld [vmem:[%s3435] sm:$0x7]
      %v3438 = vsel %vm2206, %v3427, 0
      %v3441 = vsel %vm2206, %v3428, 0
      %v3444 = vsel %vm2206, %v3429, 0
      %v3447 = vsel %vm2206, %v3430, 0
      %v3450 = vsel %vm2206, %v3431, 0
      %v3453 = vsel %vm2206, %v3432, 0
      %v3456 = vsel %vm2206, %v3433, 0
      %v3459 = vsel %vm2206, %v3434, 0
      %v3462 = vsel %vm2258, %v3436, 0
      %3464 = vmatprep.subr.mxu0 0.0
      %3465 = vmatpush1.msra.mxu0 %v3462
      %3466 = vmatprep.subr.mxu0 0.0
      %3467 = vmatpush1.msra.mxu0 0.0
      %3468 = vmatprep.subr.mxu0 0.0
      %3469 = vmatpush1.msra.mxu0 0.0
      %3470 = vmatprep.subr.mxu0 0.0
      %3471 = vmatpush1.msra.mxu0 0.0
      %3472 = vmatprep.subr.mxu0 0.0
      %3473 = vmatpush1.msra.mxu0 0.0
      %3474 = vmatprep.subr.mxu0 0.0
      %3475 = vmatpush1.msra.mxu0 0.0
      %3476 = vmatprep.subr.mxu0 0.0
      %3477 = vmatpush1.msra.mxu0 0.0
      %3478 = vmatprep.subr.mxu0 0.0
      %3479 = vmatpush1.msra.mxu0 0.0
      %3480 = vmatprep.subr.mxu0 0.0
      %3481 = vmatpush1.msra.mxu0 0.0
      %3482 = vmatprep.subr.mxu0 0.0
      %3483 = vmatpush1.msra.mxu0 0.0
      %3484 = vmatprep.subr.mxu0 0.0
      %3485 = vmatpush1.msra.mxu0 0.0
      %3486 = vmatprep.subr.mxu0 0.0
      %3487 = vmatpush1.msra.mxu0 0.0
      %3488 = vmatprep.subr.mxu0 0.0
      %3489 = vmatpush1.msra.mxu0 0.0
      %3490 = vmatprep.subr.mxu0 0.0
      %3491 = vmatpush1.msra.mxu0 0.0
      %3492 = vmatprep.subr.mxu0 0.0
      %3493 = vmatpush1.msra.mxu0 0.0
      %3494 = vmatprep.subr.mxu0 0.0
      %3495 = vmatpush1.msra.mxu0 0.0
      %3496 = vmatprep.subr.mxu0 0.0
      %3497 = vmatpush1.msra.mxu0 0.0
      %3498 = vmatprep.subr.mxu0 0.0
      %3499 = vmatpush1.msra.mxu0 0.0
      %3500 = vmatprep.subr.mxu0 0.0
      %3501 = vmatpush1.msra.mxu0 0.0
      %3502 = vmatprep.subr.mxu0 0.0
      %3503 = vmatpush1.msra.mxu0 0.0
      %3504 = vmatprep.subr.mxu0 0.0
      %3505 = vmatpush1.msra.mxu0 0.0
      %3506 = vmatprep.subr.mxu0 0.0
      %3507 = vmatpush1.msra.mxu0 0.0
      %3508 = vmatprep.subr.mxu0 0.0
      %3509 = vmatpush1.msra.mxu0 0.0
      %3510 = vmatprep.subr.mxu0 0.0
      %3511 = vmatpush1.msra.mxu0 0.0
      %3512 = vmatprep.subr.mxu0 0.0
      %3513 = vmatpush1.msra.mxu0 0.0
      %3514 = vmatprep.subr.mxu0 0.0
      %3515 = vmatpush1.msra.mxu0 0.0
      %3516 = vmatprep.subr.mxu0 0.0
      %3517 = vmatpush1.msra.mxu0 0.0
      %3518 = vmatprep.subr.mxu0 0.0
      %3519 = vmatpush1.msra.mxu0 0.0
      %3520 = vmatprep.subr.mxu0 0.0
      %3521 = vmatpush1.msra.mxu0 0.0
      %3522 = vmatprep.subr.mxu0 0.0
      %3523 = vmatpush1.msra.mxu0 0.0
      %3524 = vmatprep.subr.mxu0 0.0
      %3525 = vmatpush1.msra.mxu0 0.0
      %3526 = vmatprep.subr.mxu0 0.0
      %3527 = vmatpush1.msra.mxu0 0.0
      %3528 = vmatprep.mubr.f32.mxu0 0.0
      %3529 = vmatmul.mubr.f32.gmra.mrb[0].mxu0 %v3438
      %v3530 = vpop.f32.mrb[0].mxu0
      %v3531 = vadd.f32 0.0, %v3530
      %v3532 = vpop.f32.mrb[0].mxu0
      %3533 = vmatprep.mubr.f32.mxu0 0.0
      %3534 = vmatmul.mubr.f32.gmra.mrb[0].mxu0 %v3441
      %v3535 = vpop.f32.mrb[0].mxu0
      %v3536 = vadd.f32 0.0, %v3535
      %v3537 = vpop.f32.mrb[0].mxu0
      %3538 = vmatprep.mubr.f32.mxu0 0.0
      %3539 = vmatmul.mubr.f32.gmra.mrb[0].mxu0 %v3444
      %v3540 = vpop.f32.mrb[0].mxu0
      %v3541 = vadd.f32 0.0, %v3540
      %v3542 = vpop.f32.mrb[0].mxu0
      %3543 = vmatprep.mubr.f32.mxu0 0.0
      %3544 = vmatmul.mubr.f32.gmra.mrb[0].mxu0 %v3447
      %v3545 = vpop.f32.mrb[0].mxu0
      %v3546 = vadd.f32 0.0, %v3545
      %v3547 = vpop.f32.mrb[0].mxu0
      %3548 = vmatprep.mubr.f32.mxu0 0.0
      %3549 = vmatmul.mubr.f32.gmra.mrb[0].mxu0 %v3450
      %v3550 = vpop.f32.mrb[0].mxu0
      %v3551 = vadd.f32 0.0, %v3550
      %v3552 = vpop.f32.mrb[0].mxu0
      %3553 = vmatprep.mubr.f32.mxu0 0.0
      %3554 = vmatmul.mubr.f32.gmra.mrb[0].mxu0 %v3453
      %v3555 = vpop.f32.mrb[0].mxu0
      %v3556 = vadd.f32 0.0, %v3555
      %v3557 = vpop.f32.mrb[0].mxu0
      %3558 = vmatprep.mubr.f32.mxu0 0.0
      %3559 = vmatmul.mubr.f32.gmra.mrb[0].mxu0 %v3456
      %v3560 = vpop.f32.mrb[0].mxu0
      %v3561 = vadd.f32 0.0, %v3560
      %v3562 = vpop.f32.mrb[0].mxu0
      %3563 = vmatprep.mubr.f32.mxu0 0.0
      %3564 = vmatmul.mubr.f32.gmra.mrb[0].mxu0 %v3459
      %v3565 = vpop.f32.mrb[0].mxu0
      %v3566 = vadd.f32 0.0, %v3565
      %v3567 = vpop.f32.mrb[0].mxu0
      %3568 = vdwg.mxu0
      %v3569 = vadd.f32 %v3419, %v3531
      %v3570 = vadd.f32 %v3420, %v3536
      %v3571 = vadd.f32 %v3421, %v3541
      %v3572 = vadd.f32 %v3422, %v3546
      %v3573 = vadd.f32 %v3423, %v3551
      %v3574 = vadd.f32 %v3424, %v3556
      %v3575 = vadd.f32 %v3425, %v3561
      %v3576 = vadd.f32 %v3426, %v3566
      %v3577 = vxor.u32 %v3569, 2147483648
      %v3578 = vxor.u32 %v3570, 2147483648
      %v3579 = vxor.u32 %v3571, 2147483648
      %v3580 = vxor.u32 %v3572, 2147483648
      %v3581 = vxor.u32 %v3573, 2147483648
      %v3582 = vxor.u32 %v3574, 2147483648
      %v3583 = vxor.u32 %v3575, 2147483648
      %v3584 = vxor.u32 %v3576, 2147483648
      %v3585 = vmul.f32 %v3577, 1.442695
      %v3586 = vpow.pop %v3585
      %v3587 = vmul.f32 %v3578, 1.442695
      %v3588 = vpow.pop %v3587
      %v3589 = vmul.f32 %v3579, 1.442695
      %v3590 = vpow.pop %v3589
      %v3591 = vmul.f32 %v3580, 1.442695
      %v3592 = vpow.pop %v3591
      %v3593 = vmul.f32 %v3581, 1.442695
      %v3594 = vpow.pop %v3593
      %v3595 = vmul.f32 %v3582, 1.442695
      %v3596 = vpow.pop %v3595
      %v3597 = vmul.f32 %v3583, 1.442695
      %v3598 = vpow.pop %v3597
      %v3599 = vmul.f32 %v3584, 1.442695
      %v3600 = vpow.pop %v3599
      %v3601 = vadd.f32 %v3586, 1.0
      %v3602 = vadd.f32 %v3588, 1.0
      %v3603 = vadd.f32 %v3590, 1.0
      %v3604 = vadd.f32 %v3592, 1.0
      %v3605 = vadd.f32 %v3594, 1.0
      %v3606 = vadd.f32 %v3596, 1.0
      %v3607 = vadd.f32 %v3598, 1.0
      %v3608 = vadd.f32 %v3600, 1.0
      %v3609 = vrcp.pop %v3601
      %v3610 = vmul.f32 1.0, %v3609
      %v3611 = vrcp.pop %v3602
      %v3612 = vmul.f32 1.0, %v3611
      %v3613 = vrcp.pop %v3603
      %v3614 = vmul.f32 1.0, %v3613
      %v3615 = vrcp.pop %v3604
      %v3616 = vmul.f32 1.0, %v3615
      %v3617 = vrcp.pop %v3605
      %v3618 = vmul.f32 1.0, %v3617
      %v3619 = vrcp.pop %v3606
      %v3620 = vmul.f32 1.0, %v3619
      %v3621 = vrcp.pop %v3607
      %v3622 = vmul.f32 1.0, %v3621
      %v3623 = vrcp.pop %v3608
      %v3624 = vmul.f32 1.0, %v3623
      %v3625 = vmul.f32 %v3610, 2.0
      %v3626 = vmul.f32 %v3612, 2.0
      %v3627 = vmul.f32 %v3614, 2.0
      %v3628 = vmul.f32 %v3616, 2.0
      %v3629 = vmul.f32 %v3618, 2.0
      %v3630 = vmul.f32 %v3620, 2.0
      %v3631 = vmul.f32 %v3622, 2.0
      %v3632 = vmul.f32 %v3624, 2.0
      %v3633 = vsub.f32 %v3625, 1.0
      %v3634 = vsub.f32 %v3626, 1.0
      %v3635 = vsub.f32 %v3627, 1.0
      %v3636 = vsub.f32 %v3628, 1.0
      %v3637 = vsub.f32 %v3629, 1.0
      %v3638 = vsub.f32 %v3630, 1.0
      %v3639 = vsub.f32 %v3631, 1.0
      %v3640 = vsub.f32 %v3632, 1.0
      %v3641 = vld [vmem:[%s448 + $0x1] sm:$0xff]
      %v3642 = vld [vmem:[%s448 + $0x11] sm:$0xff]
      %v3643 = vld [vmem:[%s448 + $0x21] sm:$0xff]
      %v3644 = vld [vmem:[%s448 + $0x31] sm:$0xff]
      %v3645 = vld [vmem:[%s448 + $0x41] sm:$0xff]
      %v3646 = vld [vmem:[%s448 + $0x51] sm:$0xff]
      %v3647 = vld [vmem:[%s448 + $0x61] sm:$0xff]
      %v3648 = vld [vmem:[%s448 + $0x71] sm:$0xff]
      %v3649 = vmul.f32 %v3633, 1.442695
      %v3650 = vpow.pop %v3649
      %v3651 = vmul.f32 %v3634, 1.442695
      %v3652 = vpow.pop %v3651
      %v3653 = vmul.f32 %v3635, 1.442695
      %v3654 = vpow.pop %v3653
      %v3655 = vmul.f32 %v3636, 1.442695
      %v3656 = vpow.pop %v3655
      %v3657 = vmul.f32 %v3637, 1.442695
      %v3658 = vpow.pop %v3657
      %v3659 = vmul.f32 %v3638, 1.442695
      %v3660 = vpow.pop %v3659
      %v3661 = vmul.f32 %v3639, 1.442695
      %v3662 = vpow.pop %v3661
      %v3663 = vmul.f32 %v3640, 1.442695
      %v3664 = vpow.pop %v3663
      %3673 = vrot.lane.b32.xlu0 %v3650, 3
      %v3674 = vpop.permute.xlu0 %3673
      %3675 = vrot.lane.b32.xlu0 %v3652, 3
      %v3676 = vpop.permute.xlu0 %3675
      %3677 = vrot.lane.b32.xlu0 %v3654, 3
      %v3678 = vpop.permute.xlu0 %3677
      %3679 = vrot.lane.b32.xlu0 %v3656, 3
      %v3680 = vpop.permute.xlu0 %3679
      %3681 = vrot.lane.b32.xlu0 %v3658, 3
      %v3682 = vpop.permute.xlu0 %3681
      %3683 = vrot.lane.b32.xlu0 %v3660, 3
      %v3684 = vpop.permute.xlu0 %3683
      %3685 = vrot.lane.b32.xlu0 %v3662, 3
      %v3686 = vpop.permute.xlu0 %3685
      %3687 = vrot.lane.b32.xlu0 %v3664, 3
      %v3688 = vpop.permute.xlu0 %3687
      %v3697 = vmul.f32 %v3641, %v3674
      %v3698 = vmul.f32 %v3642, %v3676
      %v3699 = vmul.f32 %v3643, %v3678
      %v3700 = vmul.f32 %v3644, %v3680
      %v3701 = vmul.f32 %v3645, %v3682
      %v3702 = vmul.f32 %v3646, %v3684
      %v3703 = vmul.f32 %v3647, %v3686
      %v3704 = vmul.f32 %v3648, %v3688
      %3713 = vrot.lane.b32.xlu0 %v3569, 122
      %v3714 = vpop.permute.xlu0 %3713
      %3715 = vrot.lane.b32.xlu0 %v3570, 122
      %v3716 = vpop.permute.xlu0 %3715
      %3717 = vrot.lane.b32.xlu0 %v3571, 122
      %v3718 = vpop.permute.xlu0 %3717
      %3719 = vrot.lane.b32.xlu0 %v3572, 122
      %v3720 = vpop.permute.xlu0 %3719
      %3721 = vrot.lane.b32.xlu0 %v3573, 122
      %v3722 = vpop.permute.xlu0 %3721
      %3723 = vrot.lane.b32.xlu0 %v3574, 122
      %v3724 = vpop.permute.xlu0 %3723
      %3725 = vrot.lane.b32.xlu0 %v3575, 122
      %v3726 = vpop.permute.xlu0 %3725
      %3727 = vrot.lane.b32.xlu0 %v3576, 122
      %v3728 = vpop.permute.xlu0 %3727
      %v3737 = vadd.f32 %v3697, %v3714
      %v3738 = vadd.f32 %v3698, %v3716
      %v3739 = vadd.f32 %v3699, %v3718
      %v3740 = vadd.f32 %v3700, %v3720
      %v3741 = vadd.f32 %v3701, %v3722
      %v3742 = vadd.f32 %v3702, %v3724
      %v3743 = vadd.f32 %v3703, %v3726
      %v3744 = vadd.f32 %v3704, %v3728
      %v3745 = vsel %vm2206, %v2197, %v3737
      %v3746 = vsel %vm2206, %v2198, %v3738
      %v3747 = vsel %vm2206, %v2199, %v3739
      %v3748 = vsel %vm2206, %v2200, %v3740
      %v3749 = vsel %vm2206, %v2201, %v3741
      %v3750 = vsel %vm2206, %v2202, %v3742
      %v3751 = vsel %vm2206, %v2203, %v3743
      %v3752 = vsel %vm2206, %v2204, %v3744
      %3753 = vst.msk [vmem:[%s251] sm:$0xff] %vm314, %v3745
      %3754 = vst.msk [vmem:[%s251 + $0x8] sm:$0xff] %vm314, %v3746
      %3755 = vst.msk [vmem:[%s251 + $0x10] sm:$0xff] %vm314, %v3747
      %3756 = vst.msk [vmem:[%s251 + $0x18] sm:$0xff] %vm314, %v3748
      %3757 = vst.msk [vmem:[%s251 + $0x20] sm:$0xff] %vm314, %v3749
      %3758 = vst.msk [vmem:[%s251 + $0x28] sm:$0xff] %vm314, %v3750
      %3759 = vst.msk [vmem:[%s251 + $0x30] sm:$0xff] %vm314, %v3751
      %3760 = vst.msk [vmem:[%s251 + $0x38] sm:$0xff] %vm314, %v3752
      %p3761 = scmp.lt.s32.totalorder %s17, 1
      %s3762 = scalar_select %p3761, %s17, 1
      %s3763 = smul.addr %s3762, 8
      %s3764 = smul.addr %s3763, 8
      %s3765 = scalar_lea.vmem %s6, %s3764
      // Predicated region
      $region49: #{_lambda_.2} parent=43 // pred_check
        %p3766 = pneg %p166
      $region50: #{_lambda_.2} parent=43 // pred_check_branch
        %3768 = sbr.rel (%p3766) target = $region52
      $region51: #{_lambda_.2} parent=43 // pred_region
        _
      $region52: #{_lambda_.2} parent=43 // pred_fallthru
        _
    $region44: #{_lambda_.2} parent=5 // pred_fallthru
      _
    %p3769 = scmp.le.s32.totalorder 2, %s12
    // Predicated region
    $region53: #{_lambda_.2} parent=5 // pred_check
      %p3770 = pneg %p3769
    $region54: #{_lambda_.2} parent=5 // pred_check_branch
      %3772 = sbr.rel (%p3770) target = $region56
    $region55: #{_lambda_.2} parent=5 // pred_region
      %s3773 = ssub.s32 %s12, 2
      // Predicated region
      $region57: #{_lambda_.2} parent=55 // pred_check
        %p3774 = pneg %p172
      $region58: #{_lambda_.2} parent=55 // pred_check_branch
        %3776 = sbr.rel (%p3774) target = $region60
      $region59: #{_lambda_.2} parent=55 // pred_region
        %p3777 = scmp.lt.s32.totalorder %s18, 1
        %s3778 = scalar_select %p3777, %s18, 1
        %s3779 = smul.addr %s3778, 8
        %s3780 = smul.addr %s3779, 8
        %s3781 = scalar_lea.vmem %s6, %s3780
      $region60: #{_lambda_.2} parent=55 // pred_fallthru
        _
    $region56: #{_lambda_.2} parent=5 // pred_fallthru
      _
  $region6: #{_lambda_.2} parent=0 // loop_footer
    %s16 = sadd.s32 1, %s12
  $region7: #{_lambda_.2} parent=0 // loop_footer_branch
    %11 = sbr.rel target = $region3
  $region8: #{_lambda_.2} parent=0 // loop_exit
    _

</llo_original>
